<compile_context>
chip_gen: v5e
topology: v5e:2x2
jax: 0.10.0
libtpu: 0.0.40
codegen_flags: <defaults>
</compile_context>

<pallas_src>
import functools

import jax
import jax.numpy as jnp
from jax.experimental import pallas as pl
from jax.experimental.pallas import tpu as pltpu

_BN_EPS = 1e-5
_LAYER_STRIDES = (1, 2, 2, 2)


def _round_up(x, m):
    return ((x + m - 1) // m) * m


def _pick_tm(m, tm_default=512):
    """Row tile for GEMM grids: as large as possible (amortize the ~0.35us
    per-grid-step overhead, long MXU weight-stationary runs) while always
    leaving >=2 blocks so the 'parallel' axis can use both v7x TensorCores."""
    tm = min(tm_default, _round_up(m, 8))
    if m > 8 and _round_up(m, tm) // tm < 2:
        tm = _round_up((m + 1) // 2, 8)
    return tm


# -----------------------------------------------------------------------------
# Pallas kernels
# -----------------------------------------------------------------------------
def _gemm_bias_act_kernel(x_ref, w_ref, b_ref, o_ref, *, apply_relu):
    """out = maybe_relu(x @ w + bias). x/w bf16, f32 accumulation + epilogue."""
    acc = jnp.dot(x_ref[...], w_ref[...], preferred_element_type=jnp.float32)
    acc = acc + b_ref[...]
    if apply_relu:
        acc = jnp.maximum(acc, 0.0)
    o_ref[...] = acc.astype(o_ref.dtype)


def _direct_conv_kernel(x_ref, w_ref, b_ref, o_ref, *, starts, m_rows,
                        apply_relu):
    """Direct convolution: sum over the kh*kw window offsets of shifted
    (m_rows, Cin) x (Cin, Cout) bf16 MXU matmuls, accumulated in f32.

    x_ref: (1, R, Cin) bf16 flattened (polyphase) planes
    w_ref: (KK, Cin, Cout) bf16, BN scale pre-folded
    b_ref: (1, Cout) f32 folded BN bias
    o_ref: (1, m_rows, Cout) bf16  (m_rows = Ho*Ws; junk cols sliced outside)
    """
    s0 = starts[0]
    acc = jnp.dot(x_ref[0, s0:s0 + m_rows, :], w_ref[0],
                  preferred_element_type=jnp.float32)
    for k in range(1, len(starts)):
        s = starts[k]
        acc = acc + jnp.dot(x_ref[0, s:s + m_rows, :], w_ref[k],
                            preferred_element_type=jnp.float32)
    acc = acc + b_ref[...]                                    # f32 epilogue
    if apply_relu:
        acc = jnp.maximum(acc, 0.0)
    o_ref[0] = acc.astype(o_ref.dtype)


def _window_max_kernel(x_ref, o_ref, *, starts, m_rows):
    """MaxPool via shifted contiguous reads of the (-inf padded) planes."""
    s0 = starts[0]
    acc = x_ref[0, s0:s0 + m_rows, :]
    for s in starts[1:]:
        acc = jnp.maximum(acc, x_ref[0, s:s + m_rows, :])
    o_ref[0] = acc


def _avgpool_fc_kernel(x_ref, w_ref, b_ref, o_ref):
    """Fused AdaptiveAvgPool2d((1,1)) + flatten + Linear for one batch block."""
    feat = jnp.mean(x_ref[...].astype(jnp.float32), axis=1)      # (tb, C) f32
    acc = jnp.dot(feat.astype(jnp.bfloat16), w_ref[...],
                  preferred_element_type=jnp.float32)
    o_ref[...] = acc + b_ref[...]


# -----------------------------------------------------------------------------
# Wrapper-side layout helpers (plain JAX, no blow-up beyond ~1x the activation)
# -----------------------------------------------------------------------------
def _build_planes(x, kh, kw, stride, pad, pad_value):
    """Rearrange an NHWC activation so every conv/pool window offset becomes a
    contiguous row slice of a per-image flattened 2D array.

    stride == 1: a single spatially padded plane.
    stride == 2: 4 polyphase (row/col parity) planes stacked along rows, so
        the strided window reads become stride-1 contiguous slices.

    Returns (planes [N, R, C], starts, m_rows, Ho, Wo, Ws): for window offset k
    the kernel operand is planes[n, starts[k] : starts[k]+m_rows, :] and output
    position (a, b) (valid for b < Wo) lives at flattened row a*Ws + b.
    """
    N, H, W, C = x.shape
    Ho = (H + 2 * pad - kh) // stride + 1
    Wo = (W + 2 * pad - kw) // stride + 1
    xp = jnp.pad(x, ((0, 0), (pad, pad), (pad, pad), (0, 0)),
                 constant_values=pad_value)
    if stride == 1:
        Ws = W + 2 * pad
        PR = Ho + kh                                  # row slack for overhang
        plane = jnp.pad(xp, ((0, 0), (0, PR - xp.shape[1]), (0, 0), (0, 0)),
                        constant_values=pad_value)
        planes = plane.reshape(N, PR * Ws, C)
        starts = [i * Ws + j for i in range(kh) for j in range(kw)]
    elif stride == 2:
        r_max = (kh - 1) // 2
        c_max = (kw - 1) // 2
        Ws = Wo + c_max
        PR = Ho + r_max + 1
        planes_list = []
        for p in range(2):
            for q in range(2):
                plane = xp[:, p::2, q::2, :][:, :PR, :Ws, :]
                plane = jnp.pad(
                    plane,
                    ((0, 0), (0, PR - plane.shape[1]),
                     (0, Ws - plane.shape[2]), (0, 0)),
                    constant_values=pad_value)
                planes_list.append(plane)
        planes = jnp.stack(planes_list, axis=1).reshape(N, 4 * PR * Ws, C)
        starts = [((i % 2) * 2 + (j % 2)) * (PR * Ws)
                  + (i // 2) * Ws + (j // 2)
                  for i in range(kh) for j in range(kw)]
    else:
        raise NotImplementedError("stride must be 1 or 2")
    return planes, starts, Ho * Ws, Ho, Wo, Ws


def _im2col_bf16(x, kh, kw, stride, pad):
    """[N*Ho*Wo, kh*kw*C] bf16 patches (only used for the tiny-Cin 7x7 stem)."""
    N, H, W, C = x.shape
    xp = jnp.pad(x, ((0, 0), (pad, pad), (pad, pad), (0, 0)))
    Ho = (H + 2 * pad - kh) // stride + 1
    Wo = (W + 2 * pad - kw) // stride + 1
    cols = []
    for i in range(kh):
        for j in range(kw):
            cols.append(xp[:, i:i + stride * Ho:stride,
                           j:j + stride * Wo:stride, :])
    patches = jnp.stack(cols, axis=3).reshape(N * Ho * Wo, kh * kw * C)
    return patches.astype(jnp.bfloat16), Ho, Wo


# -----------------------------------------------------------------------------
# Pallas wrappers
# -----------------------------------------------------------------------------
def conv3x3_bn_relu(x, w_stack, bias, *, stride):
    """SingleConvBlock: conv3x3(pad=1, no bias) + folded BN + ReLU (bf16 I/O)."""
    planes, starts, m_rows, Ho, Wo, Ws = _build_planes(
        x.astype(jnp.bfloat16), 3, 3, stride, 1, 0.0)
    N, R, cin = planes.shape
    KK, _, cout = w_stack.shape
    out = pl.pallas_call(
        functools.partial(_direct_conv_kernel, starts=tuple(starts),
                          m_rows=m_rows, apply_relu=True),
        out_shape=jax.ShapeDtypeStruct((N, m_rows, cout), jnp.bfloat16),
        grid=(N,),
        in_specs=[
            pl.BlockSpec((1, R, cin), lambda n: (n, 0, 0)),
            pl.BlockSpec((KK, cin, cout), lambda n: (0, 0, 0)),
            pl.BlockSpec((1, cout), lambda n: (0, 0)),
        ],
        out_specs=pl.BlockSpec((1, m_rows, cout), lambda n: (n, 0, 0)),
        compiler_params=pltpu.CompilerParams(
            dimension_semantics=("parallel",)),
    )(planes, w_stack, bias)
    # Drop the (Ws - Wo) junk columns introduced by the flattened-row trick.
    return out.reshape(N, Ho, Ws, cout)[:, :, :Wo, :]


def maxpool_3x3_s2(x):
    """MaxPool2d(kernel=3, stride=2, padding=1) via in-kernel shifted max.
    -inf spatial padding is safe: every 3x3/stride-2/pad-1 window contains at
    least one real element."""
    planes, starts, m_rows, Ho, Wo, Ws = _build_planes(x, 3, 3, 2, 1, -jnp.inf)
    N, R, C = planes.shape
    out = pl.pallas_call(
        functools.partial(_window_max_kernel, starts=tuple(starts),
                          m_rows=m_rows),
        out_shape=jax.ShapeDtypeStruct((N, m_rows, C), x.dtype),
        grid=(N,),
        in_specs=[pl.BlockSpec((1, R, C), lambda n: (n, 0, 0))],
        out_specs=pl.BlockSpec((1, m_rows, C), lambda n: (n, 0, 0)),
        compiler_params=pltpu.CompilerParams(
            dimension_semantics=("parallel",)),
    )(planes)
    return out.reshape(N, Ho, Ws, C)[:, :, :Wo, :]


def conv7x7_bn_relu(x, w_gemm, bias):
    """Stem conv (7x7, stride 2, pad 3, Cin=3) as a bf16 im2col GEMM.
    K stays at 147 (full-array dim, no 147->256 zero padding); Cin=3 would make
    per-offset direct-conv matmuls MXU-hostile, and the patch blow-up only
    applies to the tiny 3-channel input."""
    N = x.shape[0]
    patches, Ho, Wo = _im2col_bf16(x, 7, 7, 2, 3)
    M, K = patches.shape
    Kw, cout = w_gemm.shape
    tm = _pick_tm(M)
    Mp = _round_up(M, tm)
    if Mp != M:
        patches = jnp.pad(patches, ((0, Mp - M), (0, 0)))
    out = pl.pallas_call(
        functools.partial(_gemm_bias_act_kernel, apply_relu=True),
        out_shape=jax.ShapeDtypeStruct((Mp, cout), jnp.bfloat16),
        grid=(Mp // tm,),
        in_specs=[
            pl.BlockSpec((tm, K), lambda i: (i, 0)),
            pl.BlockSpec((Kw, cout), lambda i: (0, 0)),
            pl.BlockSpec((1, cout), lambda i: (0, 0)),
        ],
        out_specs=pl.BlockSpec((tm, cout), lambda i: (i, 0)),
        compiler_params=pltpu.CompilerParams(
            dimension_semantics=("parallel",)),
    )(patches, w_gemm, bias)
    return out[:M].reshape(N, Ho, Wo, cout)


def avgpool_fc(x, fc_w, fc_b, num_classes):
    """Fused AdaptiveAvgPool2d((1,1)) + flatten + Linear, gridded over batch."""
    N, H, W, C = x.shape
    HW = H * W
    xf = x.reshape(N, HW, C)
    tb = min(128, _round_up(N, 8))
    Np = _round_up(N, tb)
    if Np != N:
        xf = jnp.pad(xf, ((0, Np - N), (0, 0), (0, 0)))
    Kc, ncp = fc_w.shape
    out = pl.pallas_call(
        _avgpool_fc_kernel,
        out_shape=jax.ShapeDtypeStruct((Np, ncp), jnp.float32),
        grid=(Np // tb,),
        in_specs=[
            pl.BlockSpec((tb, HW, C), lambda i: (i, 0, 0)),
            pl.BlockSpec((Kc, ncp), lambda i: (0, 0)),
            pl.BlockSpec((1, ncp), lambda i: (0, 0)),
        ],
        out_specs=pl.BlockSpec((tb, ncp), lambda i: (i, 0)),
        compiler_params=pltpu.CompilerParams(
            dimension_semantics=("parallel",)),
    )(xf, fc_w, fc_b)
    return out[:N, :num_classes]


# -----------------------------------------------------------------------------
# Parameters: random conv weights + inference-mode BatchNorm stats, BN folded
# into bf16 MXU weights (f32 bias).  NOTE: real PyTorch weights
# [cout, cin, kh, kw] must be permuted to (kh, kw, cin, cout) before folding.
# -----------------------------------------------------------------------------
def _fold_bn(w, gamma, beta, mean, var):
    scale = gamma / jnp.sqrt(var + _BN_EPS)
    return w * scale, (beta - mean * scale)[None, :]


def init_raw_params(key, num_classes, w_scale=0.05):
    def conv_bn(k, kh, kw, cin, cout):
        kw_, kg, kb, km, kv = jax.random.split(k, 5)
        return dict(
            w=jax.random.normal(kw_, (kh, kw, cin, cout), jnp.float32) * w_scale,
            gamma=0.5 + jax.random.uniform(kg, (cout,), jnp.float32),
            beta=jax.random.normal(kb, (cout,), jnp.float32) * 0.1,
            mean=jax.random.normal(km, (cout,), jnp.float32) * 0.1,
            var=0.5 + jax.random.uniform(kv, (cout,), jnp.float32),
        )

    keys = jax.random.split(key, 6)
    raw = {"conv1": conv_bn(keys[0], 7, 7, 3, 64), "layers": []}
    cfg = [(64, 64), (64, 128), (128, 256), (256, 512)]
    for i, (cin, cout) in enumerate(cfg):
        raw["layers"].append(conv_bn(keys[1 + i], 3, 3, cin, cout))
    kfw, kfb = jax.random.split(keys[5])
    raw["fc"] = dict(
        w=jax.random.normal(kfw, (512, num_classes), jnp.float32) * w_scale,
        b=jax.random.normal(kfb, (num_classes,), jnp.float32) * w_scale,
    )
    return raw


def prep_params(raw, num_classes):
    p = {}
    c1 = raw["conv1"]
    w, b = _fold_bn(c1["w"], c1["gamma"], c1["beta"], c1["mean"], c1["var"])
    p["conv1_w"] = w.reshape(7 * 7 * 3, 64).astype(jnp.bfloat16)
    p["conv1_b"] = b
    for li, lp in enumerate(raw["layers"], start=1):
        w, b = _fold_bn(lp["w"], lp["gamma"], lp["beta"], lp["mean"], lp["var"])
        kh, kw_, cin, cout = lp["w"].shape
        p[f"l{li}_w"] = w.reshape(kh * kw_, cin, cout).astype(jnp.bfloat16)
        p[f"l{li}_b"] = b
    ncp = _round_up(num_classes, 128)                  # lane-dense FC output
    p["fc_w"] = jnp.pad(raw["fc"]["w"],
                        ((0, 0), (0, ncp - num_classes))).astype(jnp.bfloat16)
    p["fc_b"] = jnp.pad(raw["fc"]["b"], (0, ncp - num_classes))[None, :]
    return p


# -----------------------------------------------------------------------------
# Forward pass (Pallas) and pure-JAX f32 reference
# -----------------------------------------------------------------------------
def resnet6_forward(x_nchw, params, num_classes):
    x = jnp.transpose(x_nchw, (0, 2, 3, 1)).astype(jnp.float32)   # -> NHWC
    x = conv7x7_bn_relu(x, params["conv1_w"], params["conv1_b"])  # bf16 out
    x = maxpool_3x3_s2(x)
    for li, stride in enumerate(_LAYER_STRIDES, start=1):
        x = conv3x3_bn_relu(x, params[f"l{li}_w"], params[f"l{li}_b"],
                            stride=stride)
    return avgpool_fc(x, params["fc_w"], params["fc_b"], num_classes)


def _ref_conv_bn_relu(x, cp, stride, pad):
    y = jax.lax.conv_general_dilated(
        x, cp["w"], window_strides=(stride, stride),
        padding=((pad, pad), (pad, pad)),
        dimension_numbers=("NHWC", "HWIO", "NHWC"),
        precision=jax.lax.Precision.HIGHEST)
    scale = cp["gamma"] / jnp.sqrt(cp["var"] + _BN_EPS)
    y = y * scale + (cp["beta"] - cp["mean"] * scale)
    return jnp.maximum(y, 0.0)


def resnet6_reference(x_nchw, raw):
    x = jnp.transpose(x_nchw, (0, 2, 3, 1)).astype(jnp.float32)
    x = _ref_conv_bn_relu(x, raw["conv1"], 2, 3)
    x = jax.lax.reduce_window(x, -jnp.inf, jax.lax.max, (1, 3, 3, 1),
                              (1, 2, 2, 1), ((0, 0), (1, 1), (1, 1), (0, 0)))
    for cp, stride in zip(raw["layers"], _LAYER_STRIDES):
        x = _ref_conv_bn_relu(x, cp, stride, 1)
    feat = jnp.mean(x, axis=(1, 2))
    return feat @ raw["fc"]["w"] + raw["fc"]["b"]


# -----------------------------------------------------------------------------
if __name__ == "__main__":
    NUM_CLASSES = 16   # small stand-in for the default 1000
    key = jax.random.PRNGKey(0)
    k_x, k_p = jax.random.split(key)

    # NCHW, 3 input channels (as implied by the module).
    x = jax.random.normal(k_x, (2, 3, 16, 16), jnp.float32)

    raw = init_raw_params(k_p, NUM_CLASSES)
    params = prep_params(raw, NUM_CLASSES)

    fwd = jax.jit(functools.partial(resnet6_forward, num_classes=NUM_CLASSES))
    out = fwd(x, params)
    jax.block_until_ready(out)

    assert out.shape == (2, NUM_CLASSES)
    assert bool(jnp.all(jnp.isfinite(out)))

    # Loose tolerance: activations/weights are carried in bf16 (f32 MXU accum),
    # so ~1e-2 relative deviation from the f32 reference is expected.
    ref = jax.jit(resnet6_reference)(x, raw)
    assert bool(jnp.allclose(out, ref, rtol=0.15, atol=0.75)), \
        "Pallas forward deviates from f32 reference beyond bf16 tolerance"
    print("KERNEL_OK")
</pallas_src>

<mosaic_0001>
module attributes {stable_mosaic.version = 11 : i64} {
  func.func @_gemm_bias_act_kernel(%arg0: i32, %arg1: memref<64x147xbf16, #tpu.memory_space<vmem>>, %arg2: memref<147x64xbf16, #tpu.memory_space<vmem>>, %arg3: memref<1x64xf32, #tpu.memory_space<vmem>>, %arg4: memref<64x64xbf16, #tpu.memory_space<vmem>>) attributes {dimension_semantics = [#tpu.dimension_semantics<parallel>], iteration_bounds = array<i64: 2>, scalar_prefetch = 0 : i64, scratch_operands = 0 : i64, tpu.core_type = #tpu.core_type<tc>, window_params = [{transform_indices = @transform_0, window_bounds = array<i64: 64, 147>}, {pipeline_mode = #tpu.pipeline_mode<synchronous>, transform_indices = @transform_1, window_bounds = array<i64: 147, 64>}, {pipeline_mode = #tpu.pipeline_mode<synchronous>, transform_indices = @transform_2, window_bounds = array<i64: 1, 64>}, {transform_indices = @transform_3, window_bounds = array<i64: 64, 64>}]} {
    %c0 = arith.constant 0 : index
    %c0_0 = arith.constant 0 : index
    %0 = vector.load %arg1[%c0, %c0_0] : memref<64x147xbf16, #tpu.memory_space<vmem>>, vector<64x147xbf16>
    %c0_1 = arith.constant 0 : index
    %c0_2 = arith.constant 0 : index
    %1 = vector.load %arg2[%c0_1, %c0_2] : memref<147x64xbf16, #tpu.memory_space<vmem>>, vector<147x64xbf16>
    %cst = arith.constant dense<0.000000e+00> : vector<64x64xf32>
    %2 = tpu.matmul %0, %1, %cst {dimension_numbers = #tpu.dot_dimension_numbers<[1], [0], [0], [1], [0, 0, 1, 1], [], []>} : vector<64x147xbf16>, vector<147x64xbf16>, vector<64x64xf32> -> vector<64x64xf32>
    %c0_3 = arith.constant 0 : index
    %c0_4 = arith.constant 0 : index
    %3 = vector.load %arg3[%c0_3, %c0_4] : memref<1x64xf32, #tpu.memory_space<vmem>>, vector<1x64xf32>
    %4 = vector.broadcast %3 : vector<1x64xf32> to vector<64x64xf32>
    %5 = arith.addf %2, %4 : vector<64x64xf32>
    %cst_5 = arith.constant 0.000000e+00 : f32
    %6 = vector.broadcast %cst_5 : f32 to vector<64x64xf32>
    %7 = arith.maximumf %5, %6 : vector<64x64xf32>
    %8 = arith.truncf %7 : vector<64x64xf32> to vector<64x64xbf16>
    %c0_6 = arith.constant 0 : index
    %c0_7 = arith.constant 0 : index
    %9 = vector.load %arg4[%c0_6, %c0_7] : memref<64x64xbf16, #tpu.memory_space<vmem>>, vector<64x64xbf16>
    tpu.vector_store %arg4[%c0_6, %c0_7], %8 {strides = array<i32>} : memref<64x64xbf16, #tpu.memory_space<vmem>>, vector<64x64xbf16>,
    return
  }
  func.func @transform_0(%arg0: i32) -> (i32, i32) {
    %c0_i32 = arith.constant 0 : i32
    %c0_i32_0 = arith.constant 0 : i32
    return %arg0, %c0_i32 : i32, i32
  }
  func.func @transform_1(%arg0: i32) -> (i32, i32) {
    %c0_i32 = arith.constant 0 : i32
    %c0_i32_0 = arith.constant 0 : i32
    %c0_i32_1 = arith.constant 0 : i32
    return %c0_i32, %c0_i32_0 : i32, i32
  }
  func.func @transform_2(%arg0: i32) -> (i32, i32) {
    %c0_i32 = arith.constant 0 : i32
    %c0_i32_0 = arith.constant 0 : i32
    %c0_i32_1 = arith.constant 0 : i32
    return %c0_i32, %c0_i32_0 : i32, i32
  }
  func.func @transform_3(%arg0: i32) -> (i32, i32) {
    %c0_i32 = arith.constant 0 : i32
    %c0_i32_0 = arith.constant 0 : i32
    return %arg0, %c0_i32 : i32, i32
  }
}

module attributes {stable_mosaic.version = 11 : i64} {
  func.func @_window_max_kernel(%arg0: i32, %arg1: memref<1x120x64xbf16, #tpu.memory_space<vmem>>, %arg2: memref<1x20x64xbf16, #tpu.memory_space<vmem>>) attributes {dimension_semantics = [#tpu.dimension_semantics<parallel>], iteration_bounds = array<i64: 2>, scalar_prefetch = 0 : i64, scratch_operands = 0 : i64, tpu.core_type = #tpu.core_type<tc>, window_params = [{transform_indices = @transform_0, window_bounds = array<i64: 1, 120, 64>}, {transform_indices = @transform_1, window_bounds = array<i64: 1, 20, 64>}]} {
    %c0 = arith.constant 0 : index
    %c0_0 = arith.constant 0 : index
    %c0_1 = arith.constant 0 : index
    %0 = vector.load %arg1[%c0, %c0_0, %c0_1] : memref<1x120x64xbf16, #tpu.memory_space<vmem>>, vector<1x20x64xbf16>
    %1 = vector.shape_cast %0 : vector<1x20x64xbf16> to vector<20x64xbf16>
    %c0_2 = arith.constant 0 : index
    %c30 = arith.constant 30 : index
    %c0_3 = arith.constant 0 : index
    %2 = vector.load %arg1[%c0_2, %c30, %c0_3] : memref<1x120x64xbf16, #tpu.memory_space<vmem>>, vector<1x20x64xbf16>
    %3 = vector.shape_cast %2 : vector<1x20x64xbf16> to vector<20x64xbf16>
    %4 = arith.maximumf %1, %3 : vector<20x64xbf16>
    %c0_4 = arith.constant 0 : index
    %c1 = arith.constant 1 : index
    %c0_5 = arith.constant 0 : index
    %5 = vector.load %arg1[%c0_4, %c1, %c0_5] : memref<1x120x64xbf16, #tpu.memory_space<vmem>>, vector<1x20x64xbf16>
    %6 = vector.shape_cast %5 : vector<1x20x64xbf16> to vector<20x64xbf16>
    %7 = arith.maximumf %4, %6 : vector<20x64xbf16>
    %c0_6 = arith.constant 0 : index
    %c60 = arith.constant 60 : index
    %c0_7 = arith.constant 0 : index
    %8 = vector.load %arg1[%c0_6, %c60, %c0_7] : memref<1x120x64xbf16, #tpu.memory_space<vmem>>, vector<1x20x64xbf16>
    %9 = vector.shape_cast %8 : vector<1x20x64xbf16> to vector<20x64xbf16>
    %10 = arith.maximumf %7, %9 : vector<20x64xbf16>
    %c0_8 = arith.constant 0 : index
    %c90 = arith.constant 90 : index
    %c0_9 = arith.constant 0 : index
    %11 = vector.load %arg1[%c0_8, %c90, %c0_9] : memref<1x120x64xbf16, #tpu.memory_space<vmem>>, vector<1x20x64xbf16>
    %12 = vector.shape_cast %11 : vector<1x20x64xbf16> to vector<20x64xbf16>
    %13 = arith.maximumf %10, %12 : vector<20x64xbf16>
    %c0_10 = arith.constant 0 : index
    %c61 = arith.constant 61 : index
    %c0_11 = arith.constant 0 : index
    %14 = vector.load %arg1[%c0_10, %c61, %c0_11] : memref<1x120x64xbf16, #tpu.memory_space<vmem>>, vector<1x20x64xbf16>
    %15 = vector.shape_cast %14 : vector<1x20x64xbf16> to vector<20x64xbf16>
    %16 = arith.maximumf %13, %15 : vector<20x64xbf16>
    %c0_12 = arith.constant 0 : index
    %c5 = arith.constant 5 : index
    %c0_13 = arith.constant 0 : index
    %17 = vector.load %arg1[%c0_12, %c5, %c0_13] : memref<1x120x64xbf16, #tpu.memory_space<vmem>>, vector<1x20x64xbf16>
    %18 = vector.shape_cast %17 : vector<1x20x64xbf16> to vector<20x64xbf16>
    %19 = arith.maximumf %16, %18 : vector<20x64xbf16>
    %c0_14 = arith.constant 0 : index
    %c35 = arith.constant 35 : index
    %c0_15 = arith.constant 0 : index
    %20 = vector.load %arg1[%c0_14, %c35, %c0_15] : memref<1x120x64xbf16, #tpu.memory_space<vmem>>, vector<1x20x64xbf16>
    %21 = vector.shape_cast %20 : vector<1x20x64xbf16> to vector<20x64xbf16>
    %22 = arith.maximumf %19, %21 : vector<20x64xbf16>
    %c0_16 = arith.constant 0 : index
    %c6 = arith.constant 6 : index
    %c0_17 = arith.constant 0 : index
    %23 = vector.load %arg1[%c0_16, %c6, %c0_17] : memref<1x120x64xbf16, #tpu.memory_space<vmem>>, vector<1x20x64xbf16>
    %24 = vector.shape_cast %23 : vector<1x20x64xbf16> to vector<20x64xbf16>
    %25 = arith.maximumf %22, %24 : vector<20x64xbf16>
    %c0_18 = arith.constant 0 : index
    %c0_19 = arith.constant 0 : index
    %c0_20 = arith.constant 0 : index
    %26 = vector.load %arg2[%c0_18, %c0_19, %c0_20] : memref<1x20x64xbf16, #tpu.memory_space<vmem>>, vector<1x20x64xbf16>
    %27 = vector.shape_cast %26 : vector<1x20x64xbf16> to vector<20x64xbf16>
    %28 = vector.shape_cast %25 : vector<20x64xbf16> to vector<1x20x64xbf16>
    tpu.vector_store %arg2[%c0_18, %c0_19, %c0_20], %28 {strides = array<i32>} : memref<1x20x64xbf16, #tpu.memory_space<vmem>>, vector<1x20x64xbf16>,
    return
  }
  func.func @transform_0(%arg0: i32) -> (i32, i32, i32) {
    %c0_i32 = arith.constant 0 : i32
    %c0_i32_0 = arith.constant 0 : i32
    %c0_i32_1 = arith.constant 0 : i32
    return %arg0, %c0_i32, %c0_i32_0 : i32, i32, i32
  }
  func.func @transform_1(%arg0: i32) -> (i32, i32, i32) {
    %c0_i32 = arith.constant 0 : i32
    %c0_i32_0 = arith.constant 0 : i32
    %c0_i32_1 = arith.constant 0 : i32
    return %arg0, %c0_i32, %c0_i32_0 : i32, i32, i32
  }
}

module attributes {stable_mosaic.version = 11 : i64} {
  func.func @_direct_conv_kernel(%arg0: i32, %arg1: memref<1x42x64xbf16, #tpu.memory_space<vmem>>, %arg2: memref<9x64x64xbf16, #tpu.memory_space<vmem>>, %arg3: memref<1x64xf32, #tpu.memory_space<vmem>>, %arg4: memref<1x24x64xbf16, #tpu.memory_space<vmem>>) attributes {dimension_semantics = [#tpu.dimension_semantics<parallel>], iteration_bounds = array<i64: 2>, scalar_prefetch = 0 : i64, scratch_operands = 0 : i64, tpu.core_type = #tpu.core_type<tc>, window_params = [{transform_indices = @transform_0, window_bounds = array<i64: 1, 42, 64>}, {pipeline_mode = #tpu.pipeline_mode<synchronous>, transform_indices = @transform_1, window_bounds = array<i64: 9, 64, 64>}, {pipeline_mode = #tpu.pipeline_mode<synchronous>, transform_indices = @transform_2, window_bounds = array<i64: 1, 64>}, {transform_indices = @transform_3, window_bounds = array<i64: 1, 24, 64>}]} {
    %c0 = arith.constant 0 : index
    %c0_0 = arith.constant 0 : index
    %c0_1 = arith.constant 0 : index
    %0 = vector.load %arg1[%c0, %c0_0, %c0_1] : memref<1x42x64xbf16, #tpu.memory_space<vmem>>, vector<1x24x64xbf16>
    %1 = vector.shape_cast %0 : vector<1x24x64xbf16> to vector<24x64xbf16>
    %c0_2 = arith.constant 0 : index
    %c0_3 = arith.constant 0 : index
    %c0_4 = arith.constant 0 : index
    %2 = vector.load %arg2[%c0_2, %c0_3, %c0_4] : memref<9x64x64xbf16, #tpu.memory_space<vmem>>, vector<1x64x64xbf16>
    %3 = vector.shape_cast %2 : vector<1x64x64xbf16> to vector<64x64xbf16>
    %cst = arith.constant dense<0.000000e+00> : vector<24x64xf32>
    %4 = tpu.matmul %1, %3, %cst {dimension_numbers = #tpu.dot_dimension_numbers<[1], [0], [0], [1], [0, 0, 1, 1], [], []>} : vector<24x64xbf16>, vector<64x64xbf16>, vector<24x64xf32> -> vector<24x64xf32>
    %c0_5 = arith.constant 0 : index
    %c1 = arith.constant 1 : index
    %c0_6 = arith.constant 0 : index
    %5 = vector.load %arg1[%c0_5, %c1, %c0_6] : memref<1x42x64xbf16, #tpu.memory_space<vmem>>, vector<1x24x64xbf16>
    %6 = vector.shape_cast %5 : vector<1x24x64xbf16> to vector<24x64xbf16>
    %c1_7 = arith.constant 1 : index
    %c0_8 = arith.constant 0 : index
    %c0_9 = arith.constant 0 : index
    %7 = vector.load %arg2[%c1_7, %c0_8, %c0_9] : memref<9x64x64xbf16, #tpu.memory_space<vmem>>, vector<1x64x64xbf16>
    %8 = vector.shape_cast %7 : vector<1x64x64xbf16> to vector<64x64xbf16>
    %cst_10 = arith.constant dense<0.000000e+00> : vector<24x64xf32>
    %9 = tpu.matmul %6, %8, %cst_10 {dimension_numbers = #tpu.dot_dimension_numbers<[1], [0], [0], [1], [0, 0, 1, 1], [], []>} : vector<24x64xbf16>, vector<64x64xbf16>, vector<24x64xf32> -> vector<24x64xf32>
    %10 = arith.addf %4, %9 : vector<24x64xf32>
    %c0_11 = arith.constant 0 : index
    %c2 = arith.constant 2 : index
    %c0_12 = arith.constant 0 : index
    %11 = vector.load %arg1[%c0_11, %c2, %c0_12] : memref<1x42x64xbf16, #tpu.memory_space<vmem>>, vector<1x24x64xbf16>
    %12 = vector.shape_cast %11 : vector<1x24x64xbf16> to vector<24x64xbf16>
    %c2_13 = arith.constant 2 : index
    %c0_14 = arith.constant 0 : index
    %c0_15 = arith.constant 0 : index
    %13 = vector.load %arg2[%c2_13, %c0_14, %c0_15] : memref<9x64x64xbf16, #tpu.memory_space<vmem>>, vector<1x64x64xbf16>
    %14 = vector.shape_cast %13 : vector<1x64x64xbf16> to vector<64x64xbf16>
    %cst_16 = arith.constant dense<0.000000e+00> : vector<24x64xf32>
    %15 = tpu.matmul %12, %14, %cst_16 {dimension_numbers = #tpu.dot_dimension_numbers<[1], [0], [0], [1], [0, 0, 1, 1], [], []>} : vector<24x64xbf16>, vector<64x64xbf16>, vector<24x64xf32> -> vector<24x64xf32>
    %16 = arith.addf %10, %15 : vector<24x64xf32>
    %c0_17 = arith.constant 0 : index
    %c6 = arith.constant 6 : index
    %c0_18 = arith.constant 0 : index
    %17 = vector.load %arg1[%c0_17, %c6, %c0_18] : memref<1x42x64xbf16, #tpu.memory_space<vmem>>, vector<1x24x64xbf16>
    %18 = vector.shape_cast %17 : vector<1x24x64xbf16> to vector<24x64xbf16>
    %c3 = arith.constant 3 : index
    %c0_19 = arith.constant 0 : index
    %c0_20 = arith.constant 0 : index
    %19 = vector.load %arg2[%c3, %c0_19, %c0_20] : memref<9x64x64xbf16, #tpu.memory_space<vmem>>, vector<1x64x64xbf16>
    %20 = vector.shape_cast %19 : vector<1x64x64xbf16> to vector<64x64xbf16>
    %cst_21 = arith.constant dense<0.000000e+00> : vector<24x64xf32>
    %21 = tpu.matmul %18, %20, %cst_21 {dimension_numbers = #tpu.dot_dimension_numbers<[1], [0], [0], [1], [0, 0, 1, 1], [], []>} : vector<24x64xbf16>, vector<64x64xbf16>, vector<24x64xf32> -> vector<24x64xf32>
    %22 = arith.addf %16, %21 : vector<24x64xf32>
    %c0_22 = arith.constant 0 : index
    %c7 = arith.constant 7 : index
    %c0_23 = arith.constant 0 : index
    %23 = vector.load %arg1[%c0_22, %c7, %c0_23] : memref<1x42x64xbf16, #tpu.memory_space<vmem>>, vector<1x24x64xbf16>
    %24 = vector.shape_cast %23 : vector<1x24x64xbf16> to vector<24x64xbf16>
    %c4 = arith.constant 4 : index
    %c0_24 = arith.constant 0 : index
    %c0_25 = arith.constant 0 : index
    %25 = vector.load %arg2[%c4, %c0_24, %c0_25] : memref<9x64x64xbf16, #tpu.memory_space<vmem>>, vector<1x64x64xbf16>
    %26 = vector.shape_cast %25 : vector<1x64x64xbf16> to vector<64x64xbf16>
    %cst_26 = arith.constant dense<0.000000e+00> : vector<24x64xf32>
    %27 = tpu.matmul %24, %26, %cst_26 {dimension_numbers = #tpu.dot_dimension_numbers<[1], [0], [0], [1], [0, 0, 1, 1], [], []>} : vector<24x64xbf16>, vector<64x64xbf16>, vector<24x64xf32> -> vector<24x64xf32>
    %28 = arith.addf %22, %27 : vector<24x64xf32>
    %c0_27 = arith.constant 0 : index
    %c8 = arith.constant 8 : index
    %c0_28 = arith.constant 0 : index
    %29 = vector.load %arg1[%c0_27, %c8, %c0_28] : memref<1x42x64xbf16, #tpu.memory_space<vmem>>, vector<1x24x64xbf16>
    %30 = vector.shape_cast %29 : vector<1x24x64xbf16> to vector<24x64xbf16>
    %c5 = arith.constant 5 : index
    %c0_29 = arith.constant 0 : index
    %c0_30 = arith.constant 0 : index
    %31 = vector.load %arg2[%c5, %c0_29, %c0_30] : memref<9x64x64xbf16, #tpu.memory_space<vmem>>, vector<1x64x64xbf16>
    %32 = vector.shape_cast %31 : vector<1x64x64xbf16> to vector<64x64xbf16>
    %cst_31 = arith.constant dense<0.000000e+00> : vector<24x64xf32>
    %33 = tpu.matmul %30, %32, %cst_31 {dimension_numbers = #tpu.dot_dimension_numbers<[1], [0], [0], [1], [0, 0, 1, 1], [], []>} : vector<24x64xbf16>, vector<64x64xbf16>, vector<24x64xf32> -> vector<24x64xf32>
    %34 = arith.addf %28, %33 : vector<24x64xf32>
    %c0_32 = arith.constant 0 : index
    %c12 = arith.constant 12 : index
    %c0_33 = arith.constant 0 : index
    %35 = vector.load %arg1[%c0_32, %c12, %c0_33] : memref<1x42x64xbf16, #tpu.memory_space<vmem>>, vector<1x24x64xbf16>
    %36 = vector.shape_cast %35 : vector<1x24x64xbf16> to vector<24x64xbf16>
    %c6_34 = arith.constant 6 : index
    %c0_35 = arith.constant 0 : index
    %c0_36 = arith.constant 0 : index
    %37 = vector.load %arg2[%c6_34, %c0_35, %c0_36] : memref<9x64x64xbf16, #tpu.memory_space<vmem>>, vector<1x64x64xbf16>
    %38 = vector.shape_cast %37 : vector<1x64x64xbf16> to vector<64x64xbf16>
    %cst_37 = arith.constant dense<0.000000e+00> : vector<24x64xf32>
    %39 = tpu.matmul %36, %38, %cst_37 {dimension_numbers = #tpu.dot_dimension_numbers<[1], [0], [0], [1], [0, 0, 1, 1], [], []>} : vector<24x64xbf16>, vector<64x64xbf16>, vector<24x64xf32> -> vector<24x64xf32>
    %40 = arith.addf %34, %39 : vector<24x64xf32>
    %c0_38 = arith.constant 0 : index
    %c13 = arith.constant 13 : index
    %c0_39 = arith.constant 0 : index
    %41 = vector.load %arg1[%c0_38, %c13, %c0_39] : memref<1x42x64xbf16, #tpu.memory_space<vmem>>, vector<1x24x64xbf16>
    %42 = vector.shape_cast %41 : vector<1x24x64xbf16> to vector<24x64xbf16>
    %c7_40 = arith.constant 7 : index
    %c0_41 = arith.constant 0 : index
    %c0_42 = arith.constant 0 : index
    %43 = vector.load %arg2[%c7_40, %c0_41, %c0_42] : memref<9x64x64xbf16, #tpu.memory_space<vmem>>, vector<1x64x64xbf16>
    %44 = vector.shape_cast %43 : vector<1x64x64xbf16> to vector<64x64xbf16>
    %cst_43 = arith.constant dense<0.000000e+00> : vector<24x64xf32>
    %45 = tpu.matmul %42, %44, %cst_43 {dimension_numbers = #tpu.dot_dimension_numbers<[1], [0], [0], [1], [0, 0, 1, 1], [], []>} : vector<24x64xbf16>, vector<64x64xbf16>, vector<24x64xf32> -> vector<24x64xf32>
    %46 = arith.addf %40, %45 : vector<24x64xf32>
    %c0_44 = arith.constant 0 : index
    %c14 = arith.constant 14 : index
    %c0_45 = arith.constant 0 : index
    %47 = vector.load %arg1[%c0_44, %c14, %c0_45] : memref<1x42x64xbf16, #tpu.memory_space<vmem>>, vector<1x24x64xbf16>
    %48 = vector.shape_cast %47 : vector<1x24x64xbf16> to vector<24x64xbf16>
    %c8_46 = arith.constant 8 : index
    %c0_47 = arith.constant 0 : index
    %c0_48 = arith.constant 0 : index
    %49 = vector.load %arg2[%c8_46, %c0_47, %c0_48] : memref<9x64x64xbf16, #tpu.memory_space<vmem>>, vector<1x64x64xbf16>
    %50 = vector.shape_cast %49 : vector<1x64x64xbf16> to vector<64x64xbf16>
    %cst_49 = arith.constant dense<0.000000e+00> : vector<24x64xf32>
    %51 = tpu.matmul %48, %50, %cst_49 {dimension_numbers = #tpu.dot_dimension_numbers<[1], [0], [0], [1], [0, 0, 1, 1], [], []>} : vector<24x64xbf16>, vector<64x64xbf16>, vector<24x64xf32> -> vector<24x64xf32>
    %52 = arith.addf %46, %51 : vector<24x64xf32>
    %c0_50 = arith.constant 0 : index
    %c0_51 = arith.constant 0 : index
    %53 = vector.load %arg3[%c0_50, %c0_51] : memref<1x64xf32, #tpu.memory_space<vmem>>, vector<1x64xf32>
    %54 = vector.broadcast %53 : vector<1x64xf32> to vector<24x64xf32>
    %55 = arith.addf %52, %54 : vector<24x64xf32>
    %cst_52 = arith.constant 0.000000e+00 : f32
    %56 = vector.broadcast %cst_52 : f32 to vector<24x64xf32>
    %57 = arith.maximumf %55, %56 : vector<24x64xf32>
    %58 = arith.truncf %57 : vector<24x64xf32> to vector<24x64xbf16>
    %c0_53 = arith.constant 0 : index
    %c0_54 = arith.constant 0 : index
    %c0_55 = arith.constant 0 : index
    %59 = vector.load %arg4[%c0_53, %c0_54, %c0_55] : memref<1x24x64xbf16, #tpu.memory_space<vmem>>, vector<1x24x64xbf16>
    %60 = vector.shape_cast %59 : vector<1x24x64xbf16> to vector<24x64xbf16>
    %61 = vector.shape_cast %58 : vector<24x64xbf16> to vector<1x24x64xbf16>
    tpu.vector_store %arg4[%c0_53, %c0_54, %c0_55], %61 {strides = array<i32>} : memref<1x24x64xbf16, #tpu.memory_space<vmem>>, vector<1x24x64xbf16>,
    return
  }
  func.func @transform_0(%arg0: i32) -> (i32, i32, i32) {
    %c0_i32 = arith.constant 0 : i32
    %c0_i32_0 = arith.constant 0 : i32
    %c0_i32_1 = arith.constant 0 : i32
    return %arg0, %c0_i32, %c0_i32_0 : i32, i32, i32
  }
  func.func @transform_1(%arg0: i32) -> (i32, i32, i32) {
    %c0_i32 = arith.constant 0 : i32
    %c0_i32_0 = arith.constant 0 : i32
    %c0_i32_1 = arith.constant 0 : i32
    %c0_i32_2 = arith.constant 0 : i32
    return %c0_i32, %c0_i32_0, %c0_i32_1 : i32, i32, i32
  }
  func.func @transform_2(%arg0: i32) -> (i32, i32) {
    %c0_i32 = arith.constant 0 : i32
    %c0_i32_0 = arith.constant 0 : i32
    %c0_i32_1 = arith.constant 0 : i32
    return %c0_i32, %c0_i32_0 : i32, i32
  }
  func.func @transform_3(%arg0: i32) -> (i32, i32, i32) {
    %c0_i32 = arith.constant 0 : i32
    %c0_i32_0 = arith.constant 0 : i32
    %c0_i32_1 = arith.constant 0 : i32
    return %arg0, %c0_i32, %c0_i32_0 : i32, i32, i32
  }
}

module attributes {stable_mosaic.version = 11 : i64} {
  func.func @_direct_conv_kernel(%arg0: i32, %arg1: memref<1x48x64xbf16, #tpu.memory_space<vmem>>, %arg2: memref<9x64x128xbf16, #tpu.memory_space<vmem>>, %arg3: memref<1x128xf32, #tpu.memory_space<vmem>>, %arg4: memref<1x6x128xbf16, #tpu.memory_space<vmem>>) attributes {dimension_semantics = [#tpu.dimension_semantics<parallel>], iteration_bounds = array<i64: 2>, scalar_prefetch = 0 : i64, scratch_operands = 0 : i64, tpu.core_type = #tpu.core_type<tc>, window_params = [{transform_indices = @transform_0, window_bounds = array<i64: 1, 48, 64>}, {pipeline_mode = #tpu.pipeline_mode<synchronous>, transform_indices = @transform_1, window_bounds = array<i64: 9, 64, 128>}, {pipeline_mode = #tpu.pipeline_mode<synchronous>, transform_indices = @transform_2, window_bounds = array<i64: 1, 128>}, {transform_indices = @transform_3, window_bounds = array<i64: 1, 6, 128>}]} {
    %c0 = arith.constant 0 : index
    %c0_0 = arith.constant 0 : index
    %c0_1 = arith.constant 0 : index
    %0 = vector.load %arg1[%c0, %c0_0, %c0_1] : memref<1x48x64xbf16, #tpu.memory_space<vmem>>, vector<1x6x64xbf16>
    %1 = vector.shape_cast %0 : vector<1x6x64xbf16> to vector<6x64xbf16>
    %c0_2 = arith.constant 0 : index
    %c0_3 = arith.constant 0 : index
    %c0_4 = arith.constant 0 : index
    %2 = vector.load %arg2[%c0_2, %c0_3, %c0_4] : memref<9x64x128xbf16, #tpu.memory_space<vmem>>, vector<1x64x128xbf16>
    %3 = vector.shape_cast %2 : vector<1x64x128xbf16> to vector<64x128xbf16>
    %cst = arith.constant dense<0.000000e+00> : vector<6x128xf32>
    %4 = tpu.matmul %1, %3, %cst {dimension_numbers = #tpu.dot_dimension_numbers<[1], [0], [0], [1], [0, 0, 1, 1], [], []>} : vector<6x64xbf16>, vector<64x128xbf16>, vector<6x128xf32> -> vector<6x128xf32>
    %c0_5 = arith.constant 0 : index
    %c12 = arith.constant 12 : index
    %c0_6 = arith.constant 0 : index
    %5 = vector.load %arg1[%c0_5, %c12, %c0_6] : memref<1x48x64xbf16, #tpu.memory_space<vmem>>, vector<1x6x64xbf16>
    %6 = vector.shape_cast %5 : vector<1x6x64xbf16> to vector<6x64xbf16>
    %c1 = arith.constant 1 : index
    %c0_7 = arith.constant 0 : index
    %c0_8 = arith.constant 0 : index
    %7 = vector.load %arg2[%c1, %c0_7, %c0_8] : memref<9x64x128xbf16, #tpu.memory_space<vmem>>, vector<1x64x128xbf16>
    %8 = vector.shape_cast %7 : vector<1x64x128xbf16> to vector<64x128xbf16>
    %cst_9 = arith.constant dense<0.000000e+00> : vector<6x128xf32>
    %9 = tpu.matmul %6, %8, %cst_9 {dimension_numbers = #tpu.dot_dimension_numbers<[1], [0], [0], [1], [0, 0, 1, 1], [], []>} : vector<6x64xbf16>, vector<64x128xbf16>, vector<6x128xf32> -> vector<6x128xf32>
    %10 = arith.addf %4, %9 : vector<6x128xf32>
    %c0_10 = arith.constant 0 : index
    %c1_11 = arith.constant 1 : index
    %c0_12 = arith.constant 0 : index
    %11 = vector.load %arg1[%c0_10, %c1_11, %c0_12] : memref<1x48x64xbf16, #tpu.memory_space<vmem>>, vector<1x6x64xbf16>
    %12 = vector.shape_cast %11 : vector<1x6x64xbf16> to vector<6x64xbf16>
    %c2 = arith.constant 2 : index
    %c0_13 = arith.constant 0 : index
    %c0_14 = arith.constant 0 : index
    %13 = vector.load %arg2[%c2, %c0_13, %c0_14] : memref<9x64x128xbf16, #tpu.memory_space<vmem>>, vector<1x64x128xbf16>
    %14 = vector.shape_cast %13 : vector<1x64x128xbf16> to vector<64x128xbf16>
    %cst_15 = arith.constant dense<0.000000e+00> : vector<6x128xf32>
    %15 = tpu.matmul %12, %14, %cst_15 {dimension_numbers = #tpu.dot_dimension_numbers<[1], [0], [0], [1], [0, 0, 1, 1], [], []>} : vector<6x64xbf16>, vector<64x128xbf16>, vector<6x128xf32> -> vector<6x128xf32>
    %16 = arith.addf %10, %15 : vector<6x128xf32>
    %c0_16 = arith.constant 0 : index
    %c24 = arith.constant 24 : index
    %c0_17 = arith.constant 0 : index
    %17 = vector.load %arg1[%c0_16, %c24, %c0_17] : memref<1x48x64xbf16, #tpu.memory_space<vmem>>, vector<1x6x64xbf16>
    %18 = vector.shape_cast %17 : vector<1x6x64xbf16> to vector<6x64xbf16>
    %c3 = arith.constant 3 : index
    %c0_18 = arith.constant 0 : index
    %c0_19 = arith.constant 0 : index
    %19 = vector.load %arg2[%c3, %c0_18, %c0_19] : memref<9x64x128xbf16, #tpu.memory_space<vmem>>, vector<1x64x128xbf16>
    %20 = vector.shape_cast %19 : vector<1x64x128xbf16> to vector<64x128xbf16>
    %cst_20 = arith.constant dense<0.000000e+00> : vector<6x128xf32>
    %21 = tpu.matmul %18, %20, %cst_20 {dimension_numbers = #tpu.dot_dimension_numbers<[1], [0], [0], [1], [0, 0, 1, 1], [], []>} : vector<6x64xbf16>, vector<64x128xbf16>, vector<6x128xf32> -> vector<6x128xf32>
    %22 = arith.addf %16, %21 : vector<6x128xf32>
    %c0_21 = arith.constant 0 : index
    %c36 = arith.constant 36 : index
    %c0_22 = arith.constant 0 : index
    %23 = vector.load %arg1[%c0_21, %c36, %c0_22] : memref<1x48x64xbf16, #tpu.memory_space<vmem>>, vector<1x6x64xbf16>
    %24 = vector.shape_cast %23 : vector<1x6x64xbf16> to vector<6x64xbf16>
    %c4 = arith.constant 4 : index
    %c0_23 = arith.constant 0 : index
    %c0_24 = arith.constant 0 : index
    %25 = vector.load %arg2[%c4, %c0_23, %c0_24] : memref<9x64x128xbf16, #tpu.memory_space<vmem>>, vector<1x64x128xbf16>
    %26 = vector.shape_cast %25 : vector<1x64x128xbf16> to vector<64x128xbf16>
    %cst_25 = arith.constant dense<0.000000e+00> : vector<6x128xf32>
    %27 = tpu.matmul %24, %26, %cst_25 {dimension_numbers = #tpu.dot_dimension_numbers<[1], [0], [0], [1], [0, 0, 1, 1], [], []>} : vector<6x64xbf16>, vector<64x128xbf16>, vector<6x128xf32> -> vector<6x128xf32>
    %28 = arith.addf %22, %27 : vector<6x128xf32>
    %c0_26 = arith.constant 0 : index
    %c25 = arith.constant 25 : index
    %c0_27 = arith.constant 0 : index
    %29 = vector.load %arg1[%c0_26, %c25, %c0_27] : memref<1x48x64xbf16, #tpu.memory_space<vmem>>, vector<1x6x64xbf16>
    %30 = vector.shape_cast %29 : vector<1x6x64xbf16> to vector<6x64xbf16>
    %c5 = arith.constant 5 : index
    %c0_28 = arith.constant 0 : index
    %c0_29 = arith.constant 0 : index
    %31 = vector.load %arg2[%c5, %c0_28, %c0_29] : memref<9x64x128xbf16, #tpu.memory_space<vmem>>, vector<1x64x128xbf16>
    %32 = vector.shape_cast %31 : vector<1x64x128xbf16> to vector<64x128xbf16>
    %cst_30 = arith.constant dense<0.000000e+00> : vector<6x128xf32>
    %33 = tpu.matmul %30, %32, %cst_30 {dimension_numbers = #tpu.dot_dimension_numbers<[1], [0], [0], [1], [0, 0, 1, 1], [], []>} : vector<6x64xbf16>, vector<64x128xbf16>, vector<6x128xf32> -> vector<6x128xf32>
    %34 = arith.addf %28, %33 : vector<6x128xf32>
    %c0_31 = arith.constant 0 : index
    %c3_32 = arith.constant 3 : index
    %c0_33 = arith.constant 0 : index
    %35 = vector.load %arg1[%c0_31, %c3_32, %c0_33] : memref<1x48x64xbf16, #tpu.memory_space<vmem>>, vector<1x6x64xbf16>
    %36 = vector.shape_cast %35 : vector<1x6x64xbf16> to vector<6x64xbf16>
    %c6 = arith.constant 6 : index
    %c0_34 = arith.constant 0 : index
    %c0_35 = arith.constant 0 : index
    %37 = vector.load %arg2[%c6, %c0_34, %c0_35] : memref<9x64x128xbf16, #tpu.memory_space<vmem>>, vector<1x64x128xbf16>
    %38 = vector.shape_cast %37 : vector<1x64x128xbf16> to vector<64x128xbf16>
    %cst_36 = arith.constant dense<0.000000e+00> : vector<6x128xf32>
    %39 = tpu.matmul %36, %38, %cst_36 {dimension_numbers = #tpu.dot_dimension_numbers<[1], [0], [0], [1], [0, 0, 1, 1], [], []>} : vector<6x64xbf16>, vector<64x128xbf16>, vector<6x128xf32> -> vector<6x128xf32>
    %40 = arith.addf %34, %39 : vector<6x128xf32>
    %c0_37 = arith.constant 0 : index
    %c15 = arith.constant 15 : index
    %c0_38 = arith.constant 0 : index
    %41 = vector.load %arg1[%c0_37, %c15, %c0_38] : memref<1x48x64xbf16, #tpu.memory_space<vmem>>, vector<1x6x64xbf16>
    %42 = vector.shape_cast %41 : vector<1x6x64xbf16> to vector<6x64xbf16>
    %c7 = arith.constant 7 : index
    %c0_39 = arith.constant 0 : index
    %c0_40 = arith.constant 0 : index
    %43 = vector.load %arg2[%c7, %c0_39, %c0_40] : memref<9x64x128xbf16, #tpu.memory_space<vmem>>, vector<1x64x128xbf16>
    %44 = vector.shape_cast %43 : vector<1x64x128xbf16> to vector<64x128xbf16>
    %cst_41 = arith.constant dense<0.000000e+00> : vector<6x128xf32>
    %45 = tpu.matmul %42, %44, %cst_41 {dimension_numbers = #tpu.dot_dimension_numbers<[1], [0], [0], [1], [0, 0, 1, 1], [], []>} : vector<6x64xbf16>, vector<64x128xbf16>, vector<6x128xf32> -> vector<6x128xf32>
    %46 = arith.addf %40, %45 : vector<6x128xf32>
    %c0_42 = arith.constant 0 : index
    %c4_43 = arith.constant 4 : index
    %c0_44 = arith.constant 0 : index
    %47 = vector.load %arg1[%c0_42, %c4_43, %c0_44] : memref<1x48x64xbf16, #tpu.memory_space<vmem>>, vector<1x6x64xbf16>
    %48 = vector.shape_cast %47 : vector<1x6x64xbf16> to vector<6x64xbf16>
    %c8 = arith.constant 8 : index
    %c0_45 = arith.constant 0 : index
    %c0_46 = arith.constant 0 : index
    %49 = vector.load %arg2[%c8, %c0_45, %c0_46] : memref<9x64x128xbf16, #tpu.memory_space<vmem>>, vector<1x64x128xbf16>
    %50 = vector.shape_cast %49 : vector<1x64x128xbf16> to vector<64x128xbf16>
    %cst_47 = arith.constant dense<0.000000e+00> : vector<6x128xf32>
    %51 = tpu.matmul %48, %50, %cst_47 {dimension_numbers = #tpu.dot_dimension_numbers<[1], [0], [0], [1], [0, 0, 1, 1], [], []>} : vector<6x64xbf16>, vector<64x128xbf16>, vector<6x128xf32> -> vector<6x128xf32>
    %52 = arith.addf %46, %51 : vector<6x128xf32>
    %c0_48 = arith.constant 0 : index
    %c0_49 = arith.constant 0 : index
    %53 = vector.load %arg3[%c0_48, %c0_49] : memref<1x128xf32, #tpu.memory_space<vmem>>, vector<1x128xf32>
    %54 = vector.broadcast %53 : vector<1x128xf32> to vector<6x128xf32>
    %55 = arith.addf %52, %54 : vector<6x128xf32>
    %cst_50 = arith.constant 0.000000e+00 : f32
    %56 = vector.broadcast %cst_50 : f32 to vector<6x128xf32>
    %57 = arith.maximumf %55, %56 : vector<6x128xf32>
    %58 = arith.truncf %57 : vector<6x128xf32> to vector<6x128xbf16>
    %c0_51 = arith.constant 0 : index
    %c0_52 = arith.constant 0 : index
    %c0_53 = arith.constant 0 : index
    %59 = vector.load %arg4[%c0_51, %c0_52, %c0_53] : memref<1x6x128xbf16, #tpu.memory_space<vmem>>, vector<1x6x128xbf16>
    %60 = vector.shape_cast %59 : vector<1x6x128xbf16> to vector<6x128xbf16>
    %61 = vector.shape_cast %58 : vector<6x128xbf16> to vector<1x6x128xbf16>
    tpu.vector_store %arg4[%c0_51, %c0_52, %c0_53], %61 {strides = array<i32>} : memref<1x6x128xbf16, #tpu.memory_space<vmem>>, vector<1x6x128xbf16>,
    return
  }
  func.func @transform_0(%arg0: i32) -> (i32, i32, i32) {
    %c0_i32 = arith.constant 0 : i32
    %c0_i32_0 = arith.constant 0 : i32
    %c0_i32_1 = arith.constant 0 : i32
    return %arg0, %c0_i32, %c0_i32_0 : i32, i32, i32
  }
  func.func @transform_1(%arg0: i32) -> (i32, i32, i32) {
    %c0_i32 = arith.constant 0 : i32
    %c0_i32_0 = arith.constant 0 : i32
    %c0_i32_1 = arith.constant 0 : i32
    %c0_i32_2 = arith.constant 0 : i32
    return %c0_i32, %c0_i32_0, %c0_i32_1 : i32, i32, i32
  }
  func.func @transform_2(%arg0: i32) -> (i32, i32) {
    %c0_i32 = arith.constant 0 : i32
    %c0_i32_0 = arith.constant 0 : i32
    %c0_i32_1 = arith.constant 0 : i32
    return %c0_i32, %c0_i32_0 : i32, i32
  }
  func.func @transform_3(%arg0: i32) -> (i32, i32, i32) {
    %c0_i32 = arith.constant 0 : i32
    %c0_i32_0 = arith.constant 0 : i32
    %c0_i32_1 = arith.constant 0 : i32
    return %arg0, %c0_i32, %c0_i32_0 : i32, i32, i32
  }
}

module attributes {stable_mosaic.version = 11 : i64} {
  func.func @_direct_conv_kernel(%arg0: i32, %arg1: memref<1x24x128xbf16, #tpu.memory_space<vmem>>, %arg2: memref<9x128x256xbf16, #tpu.memory_space<vmem>>, %arg3: memref<1x256xf32, #tpu.memory_space<vmem>>, %arg4: memref<1x2x256xbf16, #tpu.memory_space<vmem>>) attributes {dimension_semantics = [#tpu.dimension_semantics<parallel>], iteration_bounds = array<i64: 2>, scalar_prefetch = 0 : i64, scratch_operands = 0 : i64, tpu.core_type = #tpu.core_type<tc>, window_params = [{transform_indices = @transform_0, window_bounds = array<i64: 1, 24, 128>}, {pipeline_mode = #tpu.pipeline_mode<synchronous>, transform_indices = @transform_1, window_bounds = array<i64: 9, 128, 256>}, {pipeline_mode = #tpu.pipeline_mode<synchronous>, transform_indices = @transform_2, window_bounds = array<i64: 1, 256>}, {transform_indices = @transform_3, window_bounds = array<i64: 1, 2, 256>}]} {
    %c0 = arith.constant 0 : index
    %c0_0 = arith.constant 0 : index
    %c0_1 = arith.constant 0 : index
    %0 = vector.load %arg1[%c0, %c0_0, %c0_1] : memref<1x24x128xbf16, #tpu.memory_space<vmem>>, vector<1x2x128xbf16>
    %1 = vector.shape_cast %0 : vector<1x2x128xbf16> to vector<2x128xbf16>
    %c0_2 = arith.constant 0 : index
    %c0_3 = arith.constant 0 : index
    %c0_4 = arith.constant 0 : index
    %2 = vector.load %arg2[%c0_2, %c0_3, %c0_4] : memref<9x128x256xbf16, #tpu.memory_space<vmem>>, vector<1x128x256xbf16>
    %3 = vector.shape_cast %2 : vector<1x128x256xbf16> to vector<128x256xbf16>
    %cst = arith.constant dense<0.000000e+00> : vector<2x256xf32>
    %4 = tpu.matmul %1, %3, %cst {dimension_numbers = #tpu.dot_dimension_numbers<[1], [0], [0], [1], [0, 0, 1, 1], [], []>} : vector<2x128xbf16>, vector<128x256xbf16>, vector<2x256xf32> -> vector<2x256xf32>
    %c0_5 = arith.constant 0 : index
    %c6 = arith.constant 6 : index
    %c0_6 = arith.constant 0 : index
    %5 = vector.load %arg1[%c0_5, %c6, %c0_6] : memref<1x24x128xbf16, #tpu.memory_space<vmem>>, vector<1x2x128xbf16>
    %6 = vector.shape_cast %5 : vector<1x2x128xbf16> to vector<2x128xbf16>
    %c1 = arith.constant 1 : index
    %c0_7 = arith.constant 0 : index
    %c0_8 = arith.constant 0 : index
    %7 = vector.load %arg2[%c1, %c0_7, %c0_8] : memref<9x128x256xbf16, #tpu.memory_space<vmem>>, vector<1x128x256xbf16>
    %8 = vector.shape_cast %7 : vector<1x128x256xbf16> to vector<128x256xbf16>
    %cst_9 = arith.constant dense<0.000000e+00> : vector<2x256xf32>
    %9 = tpu.matmul %6, %8, %cst_9 {dimension_numbers = #tpu.dot_dimension_numbers<[1], [0], [0], [1], [0, 0, 1, 1], [], []>} : vector<2x128xbf16>, vector<128x256xbf16>, vector<2x256xf32> -> vector<2x256xf32>
    %10 = arith.addf %4, %9 : vector<2x256xf32>
    %c0_10 = arith.constant 0 : index
    %c1_11 = arith.constant 1 : index
    %c0_12 = arith.constant 0 : index
    %11 = vector.load %arg1[%c0_10, %c1_11, %c0_12] : memref<1x24x128xbf16, #tpu.memory_space<vmem>>, vector<1x2x128xbf16>
    %12 = vector.shape_cast %11 : vector<1x2x128xbf16> to vector<2x128xbf16>
    %c2 = arith.constant 2 : index
    %c0_13 = arith.constant 0 : index
    %c0_14 = arith.constant 0 : index
    %13 = vector.load %arg2[%c2, %c0_13, %c0_14] : memref<9x128x256xbf16, #tpu.memory_space<vmem>>, vector<1x128x256xbf16>
    %14 = vector.shape_cast %13 : vector<1x128x256xbf16> to vector<128x256xbf16>
    %cst_15 = arith.constant dense<0.000000e+00> : vector<2x256xf32>
    %15 = tpu.matmul %12, %14, %cst_15 {dimension_numbers = #tpu.dot_dimension_numbers<[1], [0], [0], [1], [0, 0, 1, 1], [], []>} : vector<2x128xbf16>, vector<128x256xbf16>, vector<2x256xf32> -> vector<2x256xf32>
    %16 = arith.addf %10, %15 : vector<2x256xf32>
    %c0_16 = arith.constant 0 : index
    %c12 = arith.constant 12 : index
    %c0_17 = arith.constant 0 : index
    %17 = vector.load %arg1[%c0_16, %c12, %c0_17] : memref<1x24x128xbf16, #tpu.memory_space<vmem>>, vector<1x2x128xbf16>
    %18 = vector.shape_cast %17 : vector<1x2x128xbf16> to vector<2x128xbf16>
    %c3 = arith.constant 3 : index
    %c0_18 = arith.constant 0 : index
    %c0_19 = arith.constant 0 : index
    %19 = vector.load %arg2[%c3, %c0_18, %c0_19] : memref<9x128x256xbf16, #tpu.memory_space<vmem>>, vector<1x128x256xbf16>
    %20 = vector.shape_cast %19 : vector<1x128x256xbf16> to vector<128x256xbf16>
    %cst_20 = arith.constant dense<0.000000e+00> : vector<2x256xf32>
    %21 = tpu.matmul %18, %20, %cst_20 {dimension_numbers = #tpu.dot_dimension_numbers<[1], [0], [0], [1], [0, 0, 1, 1], [], []>} : vector<2x128xbf16>, vector<128x256xbf16>, vector<2x256xf32> -> vector<2x256xf32>
    %22 = arith.addf %16, %21 : vector<2x256xf32>
    %c0_21 = arith.constant 0 : index
    %c18 = arith.constant 18 : index
    %c0_22 = arith.constant 0 : index
    %23 = vector.load %arg1[%c0_21, %c18, %c0_22] : memref<1x24x128xbf16, #tpu.memory_space<vmem>>, vector<1x2x128xbf16>
    %24 = vector.shape_cast %23 : vector<1x2x128xbf16> to vector<2x128xbf16>
    %c4 = arith.constant 4 : index
    %c0_23 = arith.constant 0 : index
    %c0_24 = arith.constant 0 : index
    %25 = vector.load %arg2[%c4, %c0_23, %c0_24] : memref<9x128x256xbf16, #tpu.memory_space<vmem>>, vector<1x128x256xbf16>
    %26 = vector.shape_cast %25 : vector<1x128x256xbf16> to vector<128x256xbf16>
    %cst_25 = arith.constant dense<0.000000e+00> : vector<2x256xf32>
    %27 = tpu.matmul %24, %26, %cst_25 {dimension_numbers = #tpu.dot_dimension_numbers<[1], [0], [0], [1], [0, 0, 1, 1], [], []>} : vector<2x128xbf16>, vector<128x256xbf16>, vector<2x256xf32> -> vector<2x256xf32>
    %28 = arith.addf %22, %27 : vector<2x256xf32>
    %c0_26 = arith.constant 0 : index
    %c13 = arith.constant 13 : index
    %c0_27 = arith.constant 0 : index
    %29 = vector.load %arg1[%c0_26, %c13, %c0_27] : memref<1x24x128xbf16, #tpu.memory_space<vmem>>, vector<1x2x128xbf16>
    %30 = vector.shape_cast %29 : vector<1x2x128xbf16> to vector<2x128xbf16>
    %c5 = arith.constant 5 : index
    %c0_28 = arith.constant 0 : index
    %c0_29 = arith.constant 0 : index
    %31 = vector.load %arg2[%c5, %c0_28, %c0_29] : memref<9x128x256xbf16, #tpu.memory_space<vmem>>, vector<1x128x256xbf16>
    %32 = vector.shape_cast %31 : vector<1x128x256xbf16> to vector<128x256xbf16>
    %cst_30 = arith.constant dense<0.000000e+00> : vector<2x256xf32>
    %33 = tpu.matmul %30, %32, %cst_30 {dimension_numbers = #tpu.dot_dimension_numbers<[1], [0], [0], [1], [0, 0, 1, 1], [], []>} : vector<2x128xbf16>, vector<128x256xbf16>, vector<2x256xf32> -> vector<2x256xf32>
    %34 = arith.addf %28, %33 : vector<2x256xf32>
    %c0_31 = arith.constant 0 : index
    %c2_32 = arith.constant 2 : index
    %c0_33 = arith.constant 0 : index
    %35 = vector.load %arg1[%c0_31, %c2_32, %c0_33] : memref<1x24x128xbf16, #tpu.memory_space<vmem>>, vector<1x2x128xbf16>
    %36 = vector.shape_cast %35 : vector<1x2x128xbf16> to vector<2x128xbf16>
    %c6_34 = arith.constant 6 : index
    %c0_35 = arith.constant 0 : index
    %c0_36 = arith.constant 0 : index
    %37 = vector.load %arg2[%c6_34, %c0_35, %c0_36] : memref<9x128x256xbf16, #tpu.memory_space<vmem>>, vector<1x128x256xbf16>
    %38 = vector.shape_cast %37 : vector<1x128x256xbf16> to vector<128x256xbf16>
    %cst_37 = arith.constant dense<0.000000e+00> : vector<2x256xf32>
    %39 = tpu.matmul %36, %38, %cst_37 {dimension_numbers = #tpu.dot_dimension_numbers<[1], [0], [0], [1], [0, 0, 1, 1], [], []>} : vector<2x128xbf16>, vector<128x256xbf16>, vector<2x256xf32> -> vector<2x256xf32>
    %40 = arith.addf %34, %39 : vector<2x256xf32>
    %c0_38 = arith.constant 0 : index
    %c8 = arith.constant 8 : index
    %c0_39 = arith.constant 0 : index
    %41 = vector.load %arg1[%c0_38, %c8, %c0_39] : memref<1x24x128xbf16, #tpu.memory_space<vmem>>, vector<1x2x128xbf16>
    %42 = vector.shape_cast %41 : vector<1x2x128xbf16> to vector<2x128xbf16>
    %c7 = arith.constant 7 : index
    %c0_40 = arith.constant 0 : index
    %c0_41 = arith.constant 0 : index
    %43 = vector.load %arg2[%c7, %c0_40, %c0_41] : memref<9x128x256xbf16, #tpu.memory_space<vmem>>, vector<1x128x256xbf16>
    %44 = vector.shape_cast %43 : vector<1x128x256xbf16> to vector<128x256xbf16>
    %cst_42 = arith.constant dense<0.000000e+00> : vector<2x256xf32>
    %45 = tpu.matmul %42, %44, %cst_42 {dimension_numbers = #tpu.dot_dimension_numbers<[1], [0], [0], [1], [0, 0, 1, 1], [], []>} : vector<2x128xbf16>, vector<128x256xbf16>, vector<2x256xf32> -> vector<2x256xf32>
    %46 = arith.addf %40, %45 : vector<2x256xf32>
    %c0_43 = arith.constant 0 : index
    %c3_44 = arith.constant 3 : index
    %c0_45 = arith.constant 0 : index
    %47 = vector.load %arg1[%c0_43, %c3_44, %c0_45] : memref<1x24x128xbf16, #tpu.memory_space<vmem>>, vector<1x2x128xbf16>
    %48 = vector.shape_cast %47 : vector<1x2x128xbf16> to vector<2x128xbf16>
    %c8_46 = arith.constant 8 : index
    %c0_47 = arith.constant 0 : index
    %c0_48 = arith.constant 0 : index
    %49 = vector.load %arg2[%c8_46, %c0_47, %c0_48] : memref<9x128x256xbf16, #tpu.memory_space<vmem>>, vector<1x128x256xbf16>
    %50 = vector.shape_cast %49 : vector<1x128x256xbf16> to vector<128x256xbf16>
    %cst_49 = arith.constant dense<0.000000e+00> : vector<2x256xf32>
    %51 = tpu.matmul %48, %50, %cst_49 {dimension_numbers = #tpu.dot_dimension_numbers<[1], [0], [0], [1], [0, 0, 1, 1], [], []>} : vector<2x128xbf16>, vector<128x256xbf16>, vector<2x256xf32> -> vector<2x256xf32>
    %52 = arith.addf %46, %51 : vector<2x256xf32>
    %c0_50 = arith.constant 0 : index
    %c0_51 = arith.constant 0 : index
    %53 = vector.load %arg3[%c0_50, %c0_51] : memref<1x256xf32, #tpu.memory_space<vmem>>, vector<1x256xf32>
    %54 = vector.broadcast %53 : vector<1x256xf32> to vector<2x256xf32>
    %55 = arith.addf %52, %54 : vector<2x256xf32>
    %cst_52 = arith.constant 0.000000e+00 : f32
    %56 = vector.broadcast %cst_52 : f32 to vector<2x256xf32>
    %57 = arith.maximumf %55, %56 : vector<2x256xf32>
    %58 = arith.truncf %57 : vector<2x256xf32> to vector<2x256xbf16>
    %c0_53 = arith.constant 0 : index
    %c0_54 = arith.constant 0 : index
    %c0_55 = arith.constant 0 : index
    %59 = vector.load %arg4[%c0_53, %c0_54, %c0_55] : memref<1x2x256xbf16, #tpu.memory_space<vmem>>, vector<1x2x256xbf16>
    %60 = vector.shape_cast %59 : vector<1x2x256xbf16> to vector<2x256xbf16>
    %61 = vector.shape_cast %58 : vector<2x256xbf16> to vector<1x2x256xbf16>
    tpu.vector_store %arg4[%c0_53, %c0_54, %c0_55], %61 {strides = array<i32>} : memref<1x2x256xbf16, #tpu.memory_space<vmem>>, vector<1x2x256xbf16>,
    return
  }
  func.func @transform_0(%arg0: i32) -> (i32, i32, i32) {
    %c0_i32 = arith.constant 0 : i32
    %c0_i32_0 = arith.constant 0 : i32
    %c0_i32_1 = arith.constant 0 : i32
    return %arg0, %c0_i32, %c0_i32_0 : i32, i32, i32
  }
  func.func @transform_1(%arg0: i32) -> (i32, i32, i32) {
    %c0_i32 = arith.constant 0 : i32
    %c0_i32_0 = arith.constant 0 : i32
    %c0_i32_1 = arith.constant 0 : i32
    %c0_i32_2 = arith.constant 0 : i32
    return %c0_i32, %c0_i32_0, %c0_i32_1 : i32, i32, i32
  }
  func.func @transform_2(%arg0: i32) -> (i32, i32) {
    %c0_i32 = arith.constant 0 : i32
    %c0_i32_0 = arith.constant 0 : i32
    %c0_i32_1 = arith.constant 0 : i32
    return %c0_i32, %c0_i32_0 : i32, i32
  }
  func.func @transform_3(%arg0: i32) -> (i32, i32, i32) {
    %c0_i32 = arith.constant 0 : i32
    %c0_i32_0 = arith.constant 0 : i32
    %c0_i32_1 = arith.constant 0 : i32
    return %arg0, %c0_i32, %c0_i32_0 : i32, i32, i32
  }
}

module attributes {stable_mosaic.version = 11 : i64} {
  func.func @_direct_conv_kernel(%arg0: i32, %arg1: memref<1x24x256xbf16, #tpu.memory_space<vmem>>, %arg2: memref<9x256x512xbf16, #tpu.memory_space<vmem>>, %arg3: memref<1x512xf32, #tpu.memory_space<vmem>>, %arg4: memref<1x2x512xbf16, #tpu.memory_space<vmem>>) attributes {dimension_semantics = [#tpu.dimension_semantics<parallel>], iteration_bounds = array<i64: 2>, scalar_prefetch = 0 : i64, scratch_operands = 0 : i64, tpu.core_type = #tpu.core_type<tc>, window_params = [{transform_indices = @transform_0, window_bounds = array<i64: 1, 24, 256>}, {pipeline_mode = #tpu.pipeline_mode<synchronous>, transform_indices = @transform_1, window_bounds = array<i64: 9, 256, 512>}, {pipeline_mode = #tpu.pipeline_mode<synchronous>, transform_indices = @transform_2, window_bounds = array<i64: 1, 512>}, {transform_indices = @transform_3, window_bounds = array<i64: 1, 2, 512>}]} {
    %c0 = arith.constant 0 : index
    %c0_0 = arith.constant 0 : index
    %c0_1 = arith.constant 0 : index
    %0 = vector.load %arg1[%c0, %c0_0, %c0_1] : memref<1x24x256xbf16, #tpu.memory_space<vmem>>, vector<1x2x256xbf16>
    %1 = vector.shape_cast %0 : vector<1x2x256xbf16> to vector<2x256xbf16>
    %c0_2 = arith.constant 0 : index
    %c0_3 = arith.constant 0 : index
    %c0_4 = arith.constant 0 : index
    %2 = vector.load %arg2[%c0_2, %c0_3, %c0_4] : memref<9x256x512xbf16, #tpu.memory_space<vmem>>, vector<1x256x512xbf16>
    %3 = vector.shape_cast %2 : vector<1x256x512xbf16> to vector<256x512xbf16>
    %cst = arith.constant dense<0.000000e+00> : vector<2x512xf32>
    %4 = tpu.matmul %1, %3, %cst {dimension_numbers = #tpu.dot_dimension_numbers<[1], [0], [0], [1], [0, 0, 1, 1], [], []>} : vector<2x256xbf16>, vector<256x512xbf16>, vector<2x512xf32> -> vector<2x512xf32>
    %c0_5 = arith.constant 0 : index
    %c6 = arith.constant 6 : index
    %c0_6 = arith.constant 0 : index
    %5 = vector.load %arg1[%c0_5, %c6, %c0_6] : memref<1x24x256xbf16, #tpu.memory_space<vmem>>, vector<1x2x256xbf16>
    %6 = vector.shape_cast %5 : vector<1x2x256xbf16> to vector<2x256xbf16>
    %c1 = arith.constant 1 : index
    %c0_7 = arith.constant 0 : index
    %c0_8 = arith.constant 0 : index
    %7 = vector.load %arg2[%c1, %c0_7, %c0_8] : memref<9x256x512xbf16, #tpu.memory_space<vmem>>, vector<1x256x512xbf16>
    %8 = vector.shape_cast %7 : vector<1x256x512xbf16> to vector<256x512xbf16>
    %cst_9 = arith.constant dense<0.000000e+00> : vector<2x512xf32>
    %9 = tpu.matmul %6, %8, %cst_9 {dimension_numbers = #tpu.dot_dimension_numbers<[1], [0], [0], [1], [0, 0, 1, 1], [], []>} : vector<2x256xbf16>, vector<256x512xbf16>, vector<2x512xf32> -> vector<2x512xf32>
    %10 = arith.addf %4, %9 : vector<2x512xf32>
    %c0_10 = arith.constant 0 : index
    %c1_11 = arith.constant 1 : index
    %c0_12 = arith.constant 0 : index
    %11 = vector.load %arg1[%c0_10, %c1_11, %c0_12] : memref<1x24x256xbf16, #tpu.memory_space<vmem>>, vector<1x2x256xbf16>
    %12 = vector.shape_cast %11 : vector<1x2x256xbf16> to vector<2x256xbf16>
    %c2 = arith.constant 2 : index
    %c0_13 = arith.constant 0 : index
    %c0_14 = arith.constant 0 : index
    %13 = vector.load %arg2[%c2, %c0_13, %c0_14] : memref<9x256x512xbf16, #tpu.memory_space<vmem>>, vector<1x256x512xbf16>
    %14 = vector.shape_cast %13 : vector<1x256x512xbf16> to vector<256x512xbf16>
    %cst_15 = arith.constant dense<0.000000e+00> : vector<2x512xf32>
    %15 = tpu.matmul %12, %14, %cst_15 {dimension_numbers = #tpu.dot_dimension_numbers<[1], [0], [0], [1], [0, 0, 1, 1], [], []>} : vector<2x256xbf16>, vector<256x512xbf16>, vector<2x512xf32> -> vector<2x512xf32>
    %16 = arith.addf %10, %15 : vector<2x512xf32>
    %c0_16 = arith.constant 0 : index
    %c12 = arith.constant 12 : index
    %c0_17 = arith.constant 0 : index
    %17 = vector.load %arg1[%c0_16, %c12, %c0_17] : memref<1x24x256xbf16, #tpu.memory_space<vmem>>, vector<1x2x256xbf16>
    %18 = vector.shape_cast %17 : vector<1x2x256xbf16> to vector<2x256xbf16>
    %c3 = arith.constant 3 : index
    %c0_18 = arith.constant 0 : index
    %c0_19 = arith.constant 0 : index
    %19 = vector.load %arg2[%c3, %c0_18, %c0_19] : memref<9x256x512xbf16, #tpu.memory_space<vmem>>, vector<1x256x512xbf16>
    %20 = vector.shape_cast %19 : vector<1x256x512xbf16> to vector<256x512xbf16>
    %cst_20 = arith.constant dense<0.000000e+00> : vector<2x512xf32>
    %21 = tpu.matmul %18, %20, %cst_20 {dimension_numbers = #tpu.dot_dimension_numbers<[1], [0], [0], [1], [0, 0, 1, 1], [], []>} : vector<2x256xbf16>, vector<256x512xbf16>, vector<2x512xf32> -> vector<2x512xf32>
    %22 = arith.addf %16, %21 : vector<2x512xf32>
    %c0_21 = arith.constant 0 : index
    %c18 = arith.constant 18 : index
    %c0_22 = arith.constant 0 : index
    %23 = vector.load %arg1[%c0_21, %c18, %c0_22] : memref<1x24x256xbf16, #tpu.memory_space<vmem>>, vector<1x2x256xbf16>
    %24 = vector.shape_cast %23 : vector<1x2x256xbf16> to vector<2x256xbf16>
    %c4 = arith.constant 4 : index
    %c0_23 = arith.constant 0 : index
    %c0_24 = arith.constant 0 : index
    %25 = vector.load %arg2[%c4, %c0_23, %c0_24] : memref<9x256x512xbf16, #tpu.memory_space<vmem>>, vector<1x256x512xbf16>
    %26 = vector.shape_cast %25 : vector<1x256x512xbf16> to vector<256x512xbf16>
    %cst_25 = arith.constant dense<0.000000e+00> : vector<2x512xf32>
    %27 = tpu.matmul %24, %26, %cst_25 {dimension_numbers = #tpu.dot_dimension_numbers<[1], [0], [0], [1], [0, 0, 1, 1], [], []>} : vector<2x256xbf16>, vector<256x512xbf16>, vector<2x512xf32> -> vector<2x512xf32>
    %28 = arith.addf %22, %27 : vector<2x512xf32>
    %c0_26 = arith.constant 0 : index
    %c13 = arith.constant 13 : index
    %c0_27 = arith.constant 0 : index
    %29 = vector.load %arg1[%c0_26, %c13, %c0_27] : memref<1x24x256xbf16, #tpu.memory_space<vmem>>, vector<1x2x256xbf16>
    %30 = vector.shape_cast %29 : vector<1x2x256xbf16> to vector<2x256xbf16>
    %c5 = arith.constant 5 : index
    %c0_28 = arith.constant 0 : index
    %c0_29 = arith.constant 0 : index
    %31 = vector.load %arg2[%c5, %c0_28, %c0_29] : memref<9x256x512xbf16, #tpu.memory_space<vmem>>, vector<1x256x512xbf16>
    %32 = vector.shape_cast %31 : vector<1x256x512xbf16> to vector<256x512xbf16>
    %cst_30 = arith.constant dense<0.000000e+00> : vector<2x512xf32>
    %33 = tpu.matmul %30, %32, %cst_30 {dimension_numbers = #tpu.dot_dimension_numbers<[1], [0], [0], [1], [0, 0, 1, 1], [], []>} : vector<2x256xbf16>, vector<256x512xbf16>, vector<2x512xf32> -> vector<2x512xf32>
    %34 = arith.addf %28, %33 : vector<2x512xf32>
    %c0_31 = arith.constant 0 : index
    %c2_32 = arith.constant 2 : index
    %c0_33 = arith.constant 0 : index
    %35 = vector.load %arg1[%c0_31, %c2_32, %c0_33] : memref<1x24x256xbf16, #tpu.memory_space<vmem>>, vector<1x2x256xbf16>
    %36 = vector.shape_cast %35 : vector<1x2x256xbf16> to vector<2x256xbf16>
    %c6_34 = arith.constant 6 : index
    %c0_35 = arith.constant 0 : index
    %c0_36 = arith.constant 0 : index
    %37 = vector.load %arg2[%c6_34, %c0_35, %c0_36] : memref<9x256x512xbf16, #tpu.memory_space<vmem>>, vector<1x256x512xbf16>
    %38 = vector.shape_cast %37 : vector<1x256x512xbf16> to vector<256x512xbf16>
    %cst_37 = arith.constant dense<0.000000e+00> : vector<2x512xf32>
    %39 = tpu.matmul %36, %38, %cst_37 {dimension_numbers = #tpu.dot_dimension_numbers<[1], [0], [0], [1], [0, 0, 1, 1], [], []>} : vector<2x256xbf16>, vector<256x512xbf16>, vector<2x512xf32> -> vector<2x512xf32>
    %40 = arith.addf %34, %39 : vector<2x512xf32>
    %c0_38 = arith.constant 0 : index
    %c8 = arith.constant 8 : index
    %c0_39 = arith.constant 0 : index
    %41 = vector.load %arg1[%c0_38, %c8, %c0_39] : memref<1x24x256xbf16, #tpu.memory_space<vmem>>, vector<1x2x256xbf16>
    %42 = vector.shape_cast %41 : vector<1x2x256xbf16> to vector<2x256xbf16>
    %c7 = arith.constant 7 : index
    %c0_40 = arith.constant 0 : index
    %c0_41 = arith.constant 0 : index
    %43 = vector.load %arg2[%c7, %c0_40, %c0_41] : memref<9x256x512xbf16, #tpu.memory_space<vmem>>, vector<1x256x512xbf16>
    %44 = vector.shape_cast %43 : vector<1x256x512xbf16> to vector<256x512xbf16>
    %cst_42 = arith.constant dense<0.000000e+00> : vector<2x512xf32>
    %45 = tpu.matmul %42, %44, %cst_42 {dimension_numbers = #tpu.dot_dimension_numbers<[1], [0], [0], [1], [0, 0, 1, 1], [], []>} : vector<2x256xbf16>, vector<256x512xbf16>, vector<2x512xf32> -> vector<2x512xf32>
    %46 = arith.addf %40, %45 : vector<2x512xf32>
    %c0_43 = arith.constant 0 : index
    %c3_44 = arith.constant 3 : index
    %c0_45 = arith.constant 0 : index
    %47 = vector.load %arg1[%c0_43, %c3_44, %c0_45] : memref<1x24x256xbf16, #tpu.memory_space<vmem>>, vector<1x2x256xbf16>
    %48 = vector.shape_cast %47 : vector<1x2x256xbf16> to vector<2x256xbf16>
    %c8_46 = arith.constant 8 : index
    %c0_47 = arith.constant 0 : index
    %c0_48 = arith.constant 0 : index
    %49 = vector.load %arg2[%c8_46, %c0_47, %c0_48] : memref<9x256x512xbf16, #tpu.memory_space<vmem>>, vector<1x256x512xbf16>
    %50 = vector.shape_cast %49 : vector<1x256x512xbf16> to vector<256x512xbf16>
    %cst_49 = arith.constant dense<0.000000e+00> : vector<2x512xf32>
    %51 = tpu.matmul %48, %50, %cst_49 {dimension_numbers = #tpu.dot_dimension_numbers<[1], [0], [0], [1], [0, 0, 1, 1], [], []>} : vector<2x256xbf16>, vector<256x512xbf16>, vector<2x512xf32> -> vector<2x512xf32>
    %52 = arith.addf %46, %51 : vector<2x512xf32>
    %c0_50 = arith.constant 0 : index
    %c0_51 = arith.constant 0 : index
    %53 = vector.load %arg3[%c0_50, %c0_51] : memref<1x512xf32, #tpu.memory_space<vmem>>, vector<1x512xf32>
    %54 = vector.broadcast %53 : vector<1x512xf32> to vector<2x512xf32>
    %55 = arith.addf %52, %54 : vector<2x512xf32>
    %cst_52 = arith.constant 0.000000e+00 : f32
    %56 = vector.broadcast %cst_52 : f32 to vector<2x512xf32>
    %57 = arith.maximumf %55, %56 : vector<2x512xf32>
    %58 = arith.truncf %57 : vector<2x512xf32> to vector<2x512xbf16>
    %c0_53 = arith.constant 0 : index
    %c0_54 = arith.constant 0 : index
    %c0_55 = arith.constant 0 : index
    %59 = vector.load %arg4[%c0_53, %c0_54, %c0_55] : memref<1x2x512xbf16, #tpu.memory_space<vmem>>, vector<1x2x512xbf16>
    %60 = vector.shape_cast %59 : vector<1x2x512xbf16> to vector<2x512xbf16>
    %61 = vector.shape_cast %58 : vector<2x512xbf16> to vector<1x2x512xbf16>
    tpu.vector_store %arg4[%c0_53, %c0_54, %c0_55], %61 {strides = array<i32>} : memref<1x2x512xbf16, #tpu.memory_space<vmem>>, vector<1x2x512xbf16>,
    return
  }
  func.func @transform_0(%arg0: i32) -> (i32, i32, i32) {
    %c0_i32 = arith.constant 0 : i32
    %c0_i32_0 = arith.constant 0 : i32
    %c0_i32_1 = arith.constant 0 : i32
    return %arg0, %c0_i32, %c0_i32_0 : i32, i32, i32
  }
  func.func @transform_1(%arg0: i32) -> (i32, i32, i32) {
    %c0_i32 = arith.constant 0 : i32
    %c0_i32_0 = arith.constant 0 : i32
    %c0_i32_1 = arith.constant 0 : i32
    %c0_i32_2 = arith.constant 0 : i32
    return %c0_i32, %c0_i32_0, %c0_i32_1 : i32, i32, i32
  }
  func.func @transform_2(%arg0: i32) -> (i32, i32) {
    %c0_i32 = arith.constant 0 : i32
    %c0_i32_0 = arith.constant 0 : i32
    %c0_i32_1 = arith.constant 0 : i32
    return %c0_i32, %c0_i32_0 : i32, i32
  }
  func.func @transform_3(%arg0: i32) -> (i32, i32, i32) {
    %c0_i32 = arith.constant 0 : i32
    %c0_i32_0 = arith.constant 0 : i32
    %c0_i32_1 = arith.constant 0 : i32
    return %arg0, %c0_i32, %c0_i32_0 : i32, i32, i32
  }
}

module attributes {stable_mosaic.version = 11 : i64} {
  func.func @_avgpool_fc_kernel(%arg0: i32, %arg1: memref<8x1x512xbf16, #tpu.memory_space<vmem>>, %arg2: memref<512x128xbf16, #tpu.memory_space<vmem>>, %arg3: memref<1x128xf32, #tpu.memory_space<vmem>>, %arg4: memref<8x128xf32, #tpu.memory_space<vmem>>) attributes {dimension_semantics = [#tpu.dimension_semantics<parallel>], iteration_bounds = array<i64: 1>, scalar_prefetch = 0 : i64, scratch_operands = 0 : i64, tpu.core_type = #tpu.core_type<tc>, window_params = [{transform_indices = @transform_0, window_bounds = array<i64: 8, 1, 512>}, {pipeline_mode = #tpu.pipeline_mode<synchronous>, transform_indices = @transform_1, window_bounds = array<i64: 512, 128>}, {pipeline_mode = #tpu.pipeline_mode<synchronous>, transform_indices = @transform_2, window_bounds = array<i64: 1, 128>}, {transform_indices = @transform_3, window_bounds = array<i64: 8, 128>}]} {
    %c0 = arith.constant 0 : index
    %c0_0 = arith.constant 0 : index
    %c0_1 = arith.constant 0 : index
    %0 = vector.load %arg1[%c0, %c0_0, %c0_1] : memref<8x1x512xbf16, #tpu.memory_space<vmem>>, vector<8x1x512xbf16>
    %1 = arith.extf %0 : vector<8x1x512xbf16> to vector<8x1x512xf32>
    %cst = arith.constant dense<0.000000e+00> : vector<8x512xf32>
    %2 = vector.multi_reduction <add>, %1, %cst [1] : vector<8x1x512xf32> to vector<8x512xf32>
    %cst_2 = arith.constant 1.000000e+00 : f32
    %3 = vector.broadcast %cst_2 : f32 to vector<8x512xf32>
    %4 = arith.divf %2, %3 : vector<8x512xf32>
    %5 = arith.truncf %4 : vector<8x512xf32> to vector<8x512xbf16>
    %c0_3 = arith.constant 0 : index
    %c0_4 = arith.constant 0 : index
    %6 = vector.load %arg2[%c0_3, %c0_4] : memref<512x128xbf16, #tpu.memory_space<vmem>>, vector<512x128xbf16>
    %cst_5 = arith.constant dense<0.000000e+00> : vector<8x128xf32>
    %7 = tpu.matmul %5, %6, %cst_5 {dimension_numbers = #tpu.dot_dimension_numbers<[1], [0], [0], [1], [0, 0, 1, 1], [], []>} : vector<8x512xbf16>, vector<512x128xbf16>, vector<8x128xf32> -> vector<8x128xf32>
    %c0_6 = arith.constant 0 : index
    %c0_7 = arith.constant 0 : index
    %8 = vector.load %arg3[%c0_6, %c0_7] : memref<1x128xf32, #tpu.memory_space<vmem>>, vector<1x128xf32>
    %9 = vector.broadcast %8 : vector<1x128xf32> to vector<8x128xf32>
    %10 = arith.addf %7, %9 : vector<8x128xf32>
    %c0_8 = arith.constant 0 : index
    %c0_9 = arith.constant 0 : index
    %11 = vector.load %arg4[%c0_8, %c0_9] : memref<8x128xf32, #tpu.memory_space<vmem>>, vector<8x128xf32>
    tpu.vector_store %arg4[%c0_8, %c0_9], %10 {strides = array<i32>} : memref<8x128xf32, #tpu.memory_space<vmem>>, vector<8x128xf32>,
    return
  }
  func.func @transform_0(%arg0: i32) -> (i32, i32, i32) {
    %c0_i32 = arith.constant 0 : i32
    %c0_i32_0 = arith.constant 0 : i32
    %c0_i32_1 = arith.constant 0 : i32
    return %arg0, %c0_i32, %c0_i32_0 : i32, i32, i32
  }
  func.func @transform_1(%arg0: i32) -> (i32, i32) {
    %c0_i32 = arith.constant 0 : i32
    %c0_i32_0 = arith.constant 0 : i32
    %c0_i32_1 = arith.constant 0 : i32
    return %c0_i32, %c0_i32_0 : i32, i32
  }
  func.func @transform_2(%arg0: i32) -> (i32, i32) {
    %c0_i32 = arith.constant 0 : i32
    %c0_i32_0 = arith.constant 0 : i32
    %c0_i32_1 = arith.constant 0 : i32
    return %c0_i32, %c0_i32_0 : i32, i32
  }
  func.func @transform_3(%arg0: i32) -> (i32, i32) {
    %c0_i32 = arith.constant 0 : i32
    %c0_i32_0 = arith.constant 0 : i32
    return %arg0, %c0_i32 : i32, i32
  }
}

</mosaic_0001>

<llo_original>
// kernel: resnet6_forward.7
$region0: #{resnet6_forward.7}
  #allocation0 [shape = 'u32[]', space=smem, size = 0x4, offset = 0x4, fixed_abs, tag = 'smem constant byte address 0x4 - core index']
  #allocation1 [shape = 'u32[72,128]{1,0:T(1,128)}', space=vmem, size = 0x9000, scoped, tag = 'internal scratch']
  %s0 = inlined_call_operand.vmem [shape: bf16[128,147], index: 0, kind: input, shape index: {}]
  %s1 = inlined_call_operand.vmem [shape: bf16[147,64], index: 1, kind: input, shape index: {}]
  %s2 = inlined_call_operand.vmem [shape: f32[1,64], index: 2, kind: input, shape index: {}]
  %s3 = inlined_call_operand.vmem [shape: bf16[128,64], index: 3, kind: output, shape index: {}]
  %s4 = sld [smem:[#allocation0]]
  $region45: #{resnet6_forward.7} parent=0
    _
  %s6 = ssub.s32 1, %s4
  %s7 = scalar_select 0, %s6, %s4
  loop: start=0, step=1, limit=4
  $region2: #{resnet6_forward.7} parent=0 // loop_pre_header
    _
  $region3: #{resnet6_forward.7} parent=0 // loop_header
    %s9 = sphi 0, %s13
    %p10 = scmp.ge.s32.totalorder %s9, 4
    %s19 = sphi 0, %s21
    %s22 = sphi 0, %s19
    %s23 = sphi 0, %s22
    %s39 = sphi 0, %s23
    %s43 = sphi 0, %s43
    %s45 = sphi 0, %s43
    %s46 = sphi 0, %s45
    %s60 = sphi 0, %s46
    %s64 = sphi 0, %s64
    %s66 = sphi 0, %s64
    %s67 = sphi 0, %s66
    %s81 = sphi 0, %s67
    %s87 = sphi 0, %s89
    %s90 = sphi 0, %s87
    %s91 = sphi 0, %s90
    %s107 = sphi 0, %s91
  $region4: #{resnet6_forward.7} parent=0 // loop_header_branch
    %12 = sbr.rel (%p10) target = $region8
  $region5: #{resnet6_forward.7} parent=0 // loop_body
    %s14 = ssub.s32 %s9, 1
    %s15 = ssub.s32 %s9, 2
    %s16 = sadd.s32 %s9, 1
    %s17 = ssub.s32 %s9, %s16
    %p18 = scmp.eq.s32.totalorder %s17, 0
    %s20 = sadd.s32 %s19, 1
    %s21 = scalar_select %p18, %s19, %s20
    %p24 = pneg %p18
    %p25 = scmp.eq.s32.totalorder %s9, 1
    %p26 = por %p24, %p25
    %p27 = scmp.ne.s32.totalorder %s19, %s22
    %p28 = scmp.eq.s32.totalorder %s9, 0
    %p29 = por %p27, %p28
    %p30 = scmp.ne.s32.totalorder %s19, %s22
    %p31 = scmp.eq.s32.totalorder %s14, 1
    %p32 = por %p30, %p31
    %p33 = scmp.ne.s32.totalorder %s22, %s23
    %p34 = scmp.eq.s32.totalorder %s14, 0
    %p35 = por %p33, %p34
    %p36 = scmp.ne.s32.totalorder %s22, %s23
    %p37 = scmp.eq.s32.totalorder %s15, 1
    %p38 = por %p36, %p37
    %p40 = scmp.ne.s32.totalorder %s23, %s39
    %p41 = scmp.eq.s32.totalorder %s15, 0
    %p42 = por %p40, %p41
    %s44 = sadd.s32 %s43, 1
    %p47 = scmp.eq.s32.totalorder %s9, 1
    %p48 = scmp.ne.s32.totalorder %s43, %s45
    %p49 = scmp.eq.s32.totalorder %s9, 0
    %p50 = por %p48, %p49
    %p51 = scmp.ne.s32.totalorder %s43, %s45
    %p52 = scmp.eq.s32.totalorder %s14, 1
    %p53 = por %p51, %p52
    %p54 = scmp.ne.s32.totalorder %s45, %s46
    %p55 = scmp.eq.s32.totalorder %s14, 0
    %p56 = por %p54, %p55
    %p57 = scmp.ne.s32.totalorder %s45, %s46
    %p58 = scmp.eq.s32.totalorder %s15, 1
    %p59 = por %p57, %p58
    %p61 = scmp.ne.s32.totalorder %s46, %s60
    %p62 = scmp.eq.s32.totalorder %s15, 0
    %p63 = por %p61, %p62
    %s65 = sadd.s32 %s64, 1
    %p68 = scmp.eq.s32.totalorder %s9, 1
    %p69 = scmp.ne.s32.totalorder %s64, %s66
    %p70 = scmp.eq.s32.totalorder %s9, 0
    %p71 = por %p69, %p70
    %p72 = scmp.ne.s32.totalorder %s64, %s66
    %p73 = scmp.eq.s32.totalorder %s14, 1
    %p74 = por %p72, %p73
    %p75 = scmp.ne.s32.totalorder %s66, %s67
    %p76 = scmp.eq.s32.totalorder %s14, 0
    %p77 = por %p75, %p76
    %p78 = scmp.ne.s32.totalorder %s66, %s67
    %p79 = scmp.eq.s32.totalorder %s15, 1
    %p80 = por %p78, %p79
    %p82 = scmp.ne.s32.totalorder %s67, %s81
    %p83 = scmp.eq.s32.totalorder %s15, 0
    %p84 = por %p82, %p83
    %s85 = ssub.s32 %s9, %s16
    %p86 = scmp.eq.s32.totalorder %s85, 0
    %s88 = sadd.s32 %s87, 1
    %s89 = scalar_select %p86, %s87, %s88
    %p92 = pneg %p86
    %p93 = scmp.eq.s32.totalorder %s9, 1
    %p94 = por %p92, %p93
    %p95 = scmp.ne.s32.totalorder %s87, %s90
    %p96 = scmp.eq.s32.totalorder %s9, 0
    %p97 = por %p95, %p96
    %p98 = scmp.ne.s32.totalorder %s87, %s90
    %p99 = scmp.eq.s32.totalorder %s14, 1
    %p100 = por %p98, %p99
    %p101 = scmp.ne.s32.totalorder %s90, %s91
    %p102 = scmp.eq.s32.totalorder %s14, 0
    %p103 = por %p101, %p102
    %p104 = scmp.ne.s32.totalorder %s90, %s91
    %p105 = scmp.eq.s32.totalorder %s15, 1
    %p106 = por %p104, %p105
    %p108 = scmp.ne.s32.totalorder %s91, %s107
    %p109 = scmp.eq.s32.totalorder %s15, 0
    %p110 = por %p108, %p109
    %p111 = scmp.le.s32.totalorder 1, %s9
    %p112 = scmp.lt.s32.totalorder %s9, 3
    %p113 = pnand %p111, %p112
    %p114 = pneg %p113
    // Predicated region
    $region9: #{resnet6_forward.7} parent=5 // pred_check
      _
    $region10: #{resnet6_forward.7} parent=5 // pred_check_branch
      %116 = sbr.rel (%p113) target = $region12
    $region11: #{resnet6_forward.7} parent=5 // pred_region
      %s117 = ssub.s32 %s9, 1
      // Predicated region
      $region13: #{resnet6_forward.7} parent=11 // pred_check
        %p118 = pneg %p56
      $region14: #{resnet6_forward.7} parent=11 // pred_check_branch
        %120 = sbr.rel (%p118) target = $region16
      $region15: #{resnet6_forward.7} parent=11 // pred_region
        _
      $region16: #{resnet6_forward.7} parent=11 // pred_fallthru
        _
      // Predicated region
      $region17: #{resnet6_forward.7} parent=11 // pred_check
        %p121 = pneg %p77
      $region18: #{resnet6_forward.7} parent=11 // pred_check_branch
        %123 = sbr.rel (%p121) target = $region20
      $region19: #{resnet6_forward.7} parent=11 // pred_region
        _
      $region20: #{resnet6_forward.7} parent=11 // pred_fallthru
        _
    $region12: #{resnet6_forward.7} parent=5 // pred_fallthru
      _
    %p124 = scmp.lt.s32.totalorder %s9, 2
    // Predicated region
    $region21: #{resnet6_forward.7} parent=5 // pred_check
      %p125 = pneg %p124
    $region22: #{resnet6_forward.7} parent=5 // pred_check_branch
      %127 = sbr.rel (%p125) target = $region24
    $region23: #{resnet6_forward.7} parent=5 // pred_region
      // Predicated region
      $region25: #{resnet6_forward.7} parent=23 // pred_check
        %p128 = pneg %p29
      $region26: #{resnet6_forward.7} parent=23 // pred_check_branch
        %130 = sbr.rel (%p128) target = $region28
      $region27: #{resnet6_forward.7} parent=23 // pred_region
        %s131 = smul.u32 8, %s9
        %p132 = scmp.lt.s32.totalorder %s131, 15
        %s133 = scalar_select %p132, %s131, 15
        %s134 = smul.addr %s133, 2
        %s135 = smul.addr %s134, 4
        %s136 = scalar_lea.vmem %s0, %s135
        %s137 = smul.u32 8, %s9
      $region28: #{resnet6_forward.7} parent=23 // pred_fallthru
        _
    $region24: #{resnet6_forward.7} parent=5 // pred_fallthru
      _
    %p138 = scmp.le.s32.totalorder 1, %s9
    %p139 = scmp.lt.s32.totalorder %s9, 3
    %p140 = pnand %p138, %p139
    %p141 = pneg %p140
    // Predicated region
    $region29: #{resnet6_forward.7} parent=5 // pred_check
      _
    $region30: #{resnet6_forward.7} parent=5 // pred_check_branch
      %143 = sbr.rel (%p140) target = $region32
    $region31: #{resnet6_forward.7} parent=5 // pred_region
      %s144 = ssub.s32 %s9, 1
      %s145 = smul.u32 8, %s14
      %p146 = scmp.lt.s32.totalorder %s145, 15
      %s147 = scalar_select %p146, %s145, 15
      %s148 = smul.addr %s147, 2
      %s149 = smul.addr %s148, 4
      %s150 = scalar_lea.vmem %s0, %s149
      %p151 = pneg %p35
      %p152 = pneg %p32
      %p153 = pneg %p56
      %p154 = pneg %p53
      %p155 = pneg %p77
      %p156 = pneg %p74
      %p157 = pneg %p103
      %p158 = pneg %p100
      %s159 = smul.u32 8, %s14
      %p160 = scmp.lt.s32.totalorder %s159, 15
      %s161 = scalar_select %p160, %s159, 15
      %s162 = smul.addr %s161, 4
      %s163 = scalar_lea.vmem %s3, %s162
      %s164 = smul.u32 8, %s14
      %p165 = scmp.lt.s32.totalorder %s164, 15
      %s166 = scalar_select %p165, %s164, 15
      %s167 = smul.addr %s166, 2
      %s168 = smul.addr %s167, 4
      %s169 = scalar_lea.vmem %s0, %s168
      %s170 = smul.u32 8, %s14
      %s171 = smul.u32 8, %s14
      %p172 = scmp.lt.s32.totalorder %s171, 15
      %s173 = scalar_select %p172, %s171, 15
      %s174 = smul.addr %s173, 4
      %s175 = scalar_lea.vmem %s3, %s174
      %s176 = smul.u32 8, %s14
      %v178 = vld [vmem:[%s169] sm:$0xff]
      %v179 = vld [vmem:[%s169 + $0x8] sm:$0xff]
      %v180 = vld [vmem:[%s169 + $0x10] sm:$0xff]
      %v181 = vld [vmem:[%s169 + $0x18] sm:$0xff]
      %v182 = vld [vmem:[%s169 + $0x20] sm:$0xff]
      %v183 = vld [vmem:[%s169 + $0x28] sm:$0xff]
      %v184 = vld [vmem:[%s169 + $0x30] sm:$0xff]
      %v185 = vld [vmem:[%s169 + $0x38] sm:$0xff]
      %v186 = vld [vmem:[%s1] sm:$0xf]
      %v187 = vld [vmem:[%s1 + $0x4] sm:$0xf]
      %v188 = vld [vmem:[%s1 + $0x8] sm:$0xf]
      %v189 = vld [vmem:[%s1 + $0xc] sm:$0xf]
      %v190 = vld [vmem:[%s1 + $0x10] sm:$0xf]
      %v191 = vld [vmem:[%s1 + $0x14] sm:$0xf]
      %v192 = vld [vmem:[%s1 + $0x18] sm:$0xf]
      %v193 = vld [vmem:[%s1 + $0x1c] sm:$0xf]
      %v194 = vld [vmem:[%s1 + $0x20] sm:$0xf]
      %v195 = vld [vmem:[%s1 + $0x24] sm:$0xf]
      %v196 = vld [vmem:[%s1 + $0x28] sm:$0xf]
      %v197 = vld [vmem:[%s1 + $0x2c] sm:$0xf]
      %v198 = vld [vmem:[%s1 + $0x30] sm:$0xf]
      %v199 = vld [vmem:[%s1 + $0x34] sm:$0xf]
      %v200 = vld [vmem:[%s1 + $0x38] sm:$0xf]
      %v201 = vld [vmem:[%s1 + $0x3c] sm:$0xf]
      %v202 = vld [vmem:[%s1 + $0x40] sm:$0xf]
      %v203 = vld [vmem:[%s1 + $0x44] sm:$0xf]
      %v204 = vld [vmem:[%s1 + $0x48] sm:$0x3]
      %v205 = vld [vmem:[%s2] sm:$0x1]
      %v207 = vperm.slane %v205, 0
      %v217 = vunpack.c.l.b16 %v178
      %v218 = vunpack.c.h.b16 %v178
      %v219 = vunpack.c.l.b16 %v179
      %v220 = vunpack.c.h.b16 %v179
      %v221 = vunpack.c.l.b16 %v180
      %v222 = vunpack.c.h.b16 %v180
      %v223 = vunpack.c.l.b16 %v181
      %v224 = vunpack.c.h.b16 %v181
      %v225 = vunpack.c.l.b16 %v182
      %v226 = vunpack.c.h.b16 %v182
      %v227 = vunpack.c.l.b16 %v183
      %v228 = vunpack.c.h.b16 %v183
      %v229 = vunpack.c.l.b16 %v184
      %v230 = vunpack.c.h.b16 %v184
      %v231 = vunpack.c.l.b16 %v185
      %v232 = vunpack.c.h.b16 %v185
      %v233 = vpack.c.b16 %v219, %v217
      %v234 = vpack.c.b16 %v220, %v218
      %v235 = vpack.c.b16 %v223, %v221
      %v236 = vpack.c.b16 %v224, %v222
      %v237 = vpack.c.b16 %v227, %v225
      %v238 = vpack.c.b16 %v228, %v226
      %v239 = vpack.c.b16 %v231, %v229
      %v240 = vpack.c.b16 %v232, %v230
      %v264 = vunpack.c.l.b16 %v186
      %v265 = vunpack.c.l.b16 %v187
      %v266 = vunpack.c.l.b16 %v188
      %v267 = vunpack.c.l.b16 %v189
      %v268 = vunpack.c.l.b16 %v190
      %v269 = vunpack.c.l.b16 %v191
      %v270 = vunpack.c.l.b16 %v192
      %v271 = vunpack.c.l.b16 %v193
      %v272 = vunpack.c.l.b16 %v194
      %v273 = vunpack.c.l.b16 %v195
      %v274 = vunpack.c.l.b16 %v196
      %v275 = vunpack.c.l.b16 %v197
      %v276 = vunpack.c.l.b16 %v198
      %v277 = vunpack.c.l.b16 %v199
      %v278 = vunpack.c.l.b16 %v200
      %v279 = vunpack.c.l.b16 %v201
      %v280 = vunpack.c.l.b16 %v202
      %v281 = vunpack.c.l.b16 %v203
      %v282 = vunpack.c.l.b16 %v204
      %v283 = vpack.c.b16 %v265, %v264
      %v284 = vpack.c.b16 %v267, %v266
      %v285 = vpack.c.b16 %v269, %v268
      %v286 = vpack.c.b16 %v271, %v270
      %v287 = vpack.c.b16 %v273, %v272
      %v288 = vpack.c.b16 %v275, %v274
      %v289 = vpack.c.b16 %v277, %v276
      %v290 = vpack.c.b16 %v279, %v278
      %v291 = vpack.c.b16 %v281, %v280
      %v292 = vpack.c.b16 %v282, %v282
      %vm302 = vcmask 154624
      %v304 = vsel %vm302, %v234, 0
      %v307 = vsel %vm302, %v236, 0
      %v310 = vsel %vm302, %v238, 0
      %v313 = vsel %vm302, %v240, 0
      %vm315 = vcmask 1040384
      %vm316 = vcmask 1041408
      %v317 = vsel %vm315, 4294967295, 65535
      %v318 = vsel %vm316, %v317, 0
      %v320 = vand.u32 %v292, %v318
      %322 = vmatpush.bf16.msra.mxu0 %v290
      %323 = vmatpush.bf16.msra.mxu0 %v289
      %324 = vmatpush.bf16.msra.mxu0 %v288
      %325 = vmatpush.bf16.msra.mxu0 %v287
      %326 = vmatpush.bf16.msra.mxu0 %v286
      %327 = vmatpush.bf16.msra.mxu0 %v285
      %328 = vmatpush.bf16.msra.mxu0 %v284
      %329 = vmatpush.bf16.msra.mxu0 %v283
      %330 = vmatmul.bf16.gmra.mxu0 %v233
      %v331 = vpop.f32.mrf.mxu0
      %v332 = vadd.f32 %v207, %v331
      %v333 = vpop.f32.mrf.mxu0
      %v334 = vadd.f32 %v207, %v333
      %335 = vmatmul.bf16.gmra.mxu0 %v235
      %v336 = vpop.f32.mrf.mxu0
      %v337 = vadd.f32 %v207, %v336
      %v338 = vpop.f32.mrf.mxu0
      %v339 = vadd.f32 %v207, %v338
      %340 = vmatmul.bf16.gmra.mxu0 %v237
      %v341 = vpop.f32.mrf.mxu0
      %v342 = vadd.f32 %v207, %v341
      %v343 = vpop.f32.mrf.mxu0
      %v344 = vadd.f32 %v207, %v343
      %345 = vmatmul.bf16.gmra.mxu0 %v239
      %v346 = vpop.f32.mrf.mxu0
      %v347 = vadd.f32 %v207, %v346
      %v348 = vpop.f32.mrf.mxu0
      %v349 = vadd.f32 %v207, %v348
      %350 = vdwg.mxu0
      %351 = vmatpush.bf16.msra.mxu0 0
      %352 = vmatpush.bf16.msra.mxu0 0
      %353 = vmatpush.bf16.msra.mxu0 0
      %354 = vmatpush.bf16.msra.mxu0 0
      %355 = vmatpush.bf16.msra.mxu0 0
      %356 = vmatpush.bf16.msra.mxu0 0
      %357 = vmatpush.bf16.msra.mxu0 %v320
      %358 = vmatpush.bf16.msra.mxu0 %v291
      %359 = vmatmul.bf16.gmra.mxu0 %v304
      %v360 = vpop.f32.mrf.mxu0
      %v361 = vadd.f32 %v332, %v360
      %v362 = vpop.f32.mrf.mxu0
      %v363 = vadd.f32 %v334, %v362
      %364 = vmatmul.bf16.gmra.mxu0 %v307
      %v365 = vpop.f32.mrf.mxu0
      %v366 = vadd.f32 %v337, %v365
      %v367 = vpop.f32.mrf.mxu0
      %v368 = vadd.f32 %v339, %v367
      %369 = vmatmul.bf16.gmra.mxu0 %v310
      %v370 = vpop.f32.mrf.mxu0
      %v371 = vadd.f32 %v342, %v370
      %v372 = vpop.f32.mrf.mxu0
      %v373 = vadd.f32 %v344, %v372
      %374 = vmatmul.bf16.gmra.mxu0 %v313
      %v375 = vpop.f32.mrf.mxu0
      %v376 = vadd.f32 %v347, %v375
      %v377 = vpop.f32.mrf.mxu0
      %v378 = vadd.f32 %v349, %v377
      %379 = vdwg.mxu0
      %v380 = vmax.f32 %v361, 0.0
      %v381 = vmax.f32 %v363, 0.0
      %v382 = vmax.f32 %v366, 0.0
      %v383 = vmax.f32 %v368, 0.0
      %v384 = vmax.f32 %v371, 0.0
      %v385 = vmax.f32 %v373, 0.0
      %v386 = vmax.f32 %v376, 0.0
      %v387 = vmax.f32 %v378, 0.0
      %v388 = vpack.c.bf16 %v380, %v380
      %v389 = vpack.c.bf16 %v381, %v381
      %v390 = vpack.c.bf16 %v382, %v382
      %v391 = vpack.c.bf16 %v383, %v383
      %v392 = vpack.c.bf16 %v384, %v384
      %v393 = vpack.c.bf16 %v385, %v385
      %v394 = vpack.c.bf16 %v386, %v386
      %v395 = vpack.c.bf16 %v387, %v387
      %vm396 = vcmask 519168
      %397 = vst.msk [vmem:[%s175] sm:$0xf] %vm396, %v388
      %398 = vst.msk [vmem:[%s175 + $0x4] sm:$0xf] %vm396, %v389
      %399 = vst.msk [vmem:[%s175 + $0x8] sm:$0xf] %vm396, %v390
      %400 = vst.msk [vmem:[%s175 + $0xc] sm:$0xf] %vm396, %v391
      %401 = vst.msk [vmem:[%s175 + $0x10] sm:$0xf] %vm396, %v392
      %402 = vst.msk [vmem:[%s175 + $0x14] sm:$0xf] %vm396, %v393
      %403 = vst.msk [vmem:[%s175 + $0x18] sm:$0xf] %vm396, %v394
      %404 = vst.msk [vmem:[%s175 + $0x1c] sm:$0xf] %vm396, %v395
      %s405 = smul.u32 8, %s14
      %p406 = scmp.lt.s32.totalorder %s405, 15
      %s407 = scalar_select %p406, %s405, 15
      %s408 = smul.addr %s407, 4
      %s409 = scalar_lea.vmem %s3, %s408
      // Predicated region
      $region33: #{resnet6_forward.7} parent=31 // pred_check
        %p410 = pneg %p100
      $region34: #{resnet6_forward.7} parent=31 // pred_check_branch
        %412 = sbr.rel (%p410) target = $region36
      $region35: #{resnet6_forward.7} parent=31 // pred_region
        %s413 = smul.u32 8, %s14
      $region36: #{resnet6_forward.7} parent=31 // pred_fallthru
        _
    $region32: #{resnet6_forward.7} parent=5 // pred_fallthru
      _
    %p414 = scmp.le.s32.totalorder 2, %s9
    // Predicated region
    $region37: #{resnet6_forward.7} parent=5 // pred_check
      %p415 = pneg %p414
    $region38: #{resnet6_forward.7} parent=5 // pred_check_branch
      %417 = sbr.rel (%p415) target = $region40
    $region39: #{resnet6_forward.7} parent=5 // pred_region
      %s418 = ssub.s32 %s9, 2
      // Predicated region
      $region41: #{resnet6_forward.7} parent=39 // pred_check
        %p419 = pneg %p106
      $region42: #{resnet6_forward.7} parent=39 // pred_check_branch
        %421 = sbr.rel (%p419) target = $region44
      $region43: #{resnet6_forward.7} parent=39 // pred_region
        %s422 = smul.u32 8, %s15
        %p423 = scmp.lt.s32.totalorder %s422, 15
        %s424 = scalar_select %p423, %s422, 15
        %s425 = smul.addr %s424, 4
        %s426 = scalar_lea.vmem %s3, %s425
      $region44: #{resnet6_forward.7} parent=39 // pred_fallthru
        _
    $region40: #{resnet6_forward.7} parent=5 // pred_fallthru
      _
  $region6: #{resnet6_forward.7} parent=0 // loop_footer
    %s13 = sadd.s32 1, %s9
  $region7: #{resnet6_forward.7} parent=0 // loop_footer_branch
    %8 = sbr.rel target = $region3
  $region8: #{resnet6_forward.7} parent=0 // loop_exit
    _

// kernel: resnet6_forward.8
$region0: #{resnet6_forward.8}
  #allocation0 [shape = 'u32[]', space=smem, size = 0x4, offset = 0x4, fixed_abs, tag = 'smem constant byte address 0x4 - core index']
  #allocation1 [shape = 'u32[72,128]{1,0:T(1,128)}', space=vmem, size = 0x9000, scoped, tag = 'internal scratch']
  %s0 = inlined_call_operand.vmem [shape: bf16[2,120,64], index: 0, kind: input, shape index: {}]
  %s1 = inlined_call_operand.vmem [shape: bf16[2,20,64], index: 1, kind: output, shape index: {}]
  %s2 = sld [smem:[#allocation0]]
  $region37: #{resnet6_forward.8} parent=0
    _
  %s4 = ssub.s32 1, %s2
  %s5 = scalar_select 0, %s4, %s2
  loop: start=0, step=1, limit=4
  $region2: #{resnet6_forward.8} parent=0 // loop_pre_header
    _
  $region3: #{resnet6_forward.8} parent=0 // loop_header
    %s7 = sphi 0, %s11
    %p8 = scmp.ge.s32.totalorder %s7, 4
    %s17 = sphi 0, %s19
    %s20 = sphi 0, %s17
    %s21 = sphi 0, %s20
    %s37 = sphi 0, %s21
    %s43 = sphi 0, %s45
    %s46 = sphi 0, %s43
    %s47 = sphi 0, %s46
    %s63 = sphi 0, %s47
  $region4: #{resnet6_forward.8} parent=0 // loop_header_branch
    %10 = sbr.rel (%p8) target = $region8
  $region5: #{resnet6_forward.8} parent=0 // loop_body
    %s12 = ssub.s32 %s7, 1
    %s13 = ssub.s32 %s7, 2
    %s14 = sadd.s32 %s7, 1
    %s15 = ssub.s32 %s7, %s14
    %p16 = scmp.eq.s32.totalorder %s15, 0
    %s18 = sadd.s32 %s17, 1
    %s19 = scalar_select %p16, %s17, %s18
    %p22 = pneg %p16
    %p23 = scmp.eq.s32.totalorder %s7, 1
    %p24 = por %p22, %p23
    %p25 = scmp.ne.s32.totalorder %s17, %s20
    %p26 = scmp.eq.s32.totalorder %s7, 0
    %p27 = por %p25, %p26
    %p28 = scmp.ne.s32.totalorder %s17, %s20
    %p29 = scmp.eq.s32.totalorder %s12, 1
    %p30 = por %p28, %p29
    %p31 = scmp.ne.s32.totalorder %s20, %s21
    %p32 = scmp.eq.s32.totalorder %s12, 0
    %p33 = por %p31, %p32
    %p34 = scmp.ne.s32.totalorder %s20, %s21
    %p35 = scmp.eq.s32.totalorder %s13, 1
    %p36 = por %p34, %p35
    %p38 = scmp.ne.s32.totalorder %s21, %s37
    %p39 = scmp.eq.s32.totalorder %s13, 0
    %p40 = por %p38, %p39
    %s41 = ssub.s32 %s7, %s14
    %p42 = scmp.eq.s32.totalorder %s41, 0
    %s44 = sadd.s32 %s43, 1
    %s45 = scalar_select %p42, %s43, %s44
    %p48 = pneg %p42
    %p49 = scmp.eq.s32.totalorder %s7, 1
    %p50 = por %p48, %p49
    %p51 = scmp.ne.s32.totalorder %s43, %s46
    %p52 = scmp.eq.s32.totalorder %s7, 0
    %p53 = por %p51, %p52
    %p54 = scmp.ne.s32.totalorder %s43, %s46
    %p55 = scmp.eq.s32.totalorder %s12, 1
    %p56 = por %p54, %p55
    %p57 = scmp.ne.s32.totalorder %s46, %s47
    %p58 = scmp.eq.s32.totalorder %s12, 0
    %p59 = por %p57, %p58
    %p60 = scmp.ne.s32.totalorder %s46, %s47
    %p61 = scmp.eq.s32.totalorder %s13, 1
    %p62 = por %p60, %p61
    %p64 = scmp.ne.s32.totalorder %s47, %s63
    %p65 = scmp.eq.s32.totalorder %s13, 0
    %p66 = por %p64, %p65
    %p67 = scmp.le.s32.totalorder 1, %s7
    %p68 = scmp.lt.s32.totalorder %s7, 3
    %p69 = pnand %p67, %p68
    %p70 = pneg %p69
    // Predicated region
    $region9: #{resnet6_forward.8} parent=5 // pred_check
      _
    $region10: #{resnet6_forward.8} parent=5 // pred_check_branch
      %72 = sbr.rel (%p69) target = $region12
    $region11: #{resnet6_forward.8} parent=5 // pred_region
      %s73 = ssub.s32 %s7, 1
    $region12: #{resnet6_forward.8} parent=5 // pred_fallthru
      _
    %p74 = scmp.lt.s32.totalorder %s7, 2
    // Predicated region
    $region13: #{resnet6_forward.8} parent=5 // pred_check
      %p75 = pneg %p74
    $region14: #{resnet6_forward.8} parent=5 // pred_check_branch
      %77 = sbr.rel (%p75) target = $region16
    $region15: #{resnet6_forward.8} parent=5 // pred_region
      // Predicated region
      $region17: #{resnet6_forward.8} parent=15 // pred_check
        %p78 = pneg %p27
      $region18: #{resnet6_forward.8} parent=15 // pred_check_branch
        %80 = sbr.rel (%p78) target = $region20
      $region19: #{resnet6_forward.8} parent=15 // pred_region
        %p81 = scmp.lt.s32.totalorder %s7, 1
        %s82 = scalar_select %p81, %s7, 1
        %s83 = smul.addr %s82, 15
        %s84 = smul.addr %s83, 4
        %s85 = scalar_lea.vmem %s0, %s84
      $region20: #{resnet6_forward.8} parent=15 // pred_fallthru
        _
    $region16: #{resnet6_forward.8} parent=5 // pred_fallthru
      _
    %p86 = scmp.le.s32.totalorder 1, %s7
    %p87 = scmp.lt.s32.totalorder %s7, 3
    %p88 = pnand %p86, %p87
    %p89 = pneg %p88
    // Predicated region
    $region21: #{resnet6_forward.8} parent=5 // pred_check
      _
    $region22: #{resnet6_forward.8} parent=5 // pred_check_branch
      %91 = sbr.rel (%p88) target = $region24
    $region23: #{resnet6_forward.8} parent=5 // pred_region
      %s92 = ssub.s32 %s7, 1
      %p93 = scmp.lt.s32.totalorder %s12, 1
      %s94 = scalar_select %p93, %s12, 1
      %s95 = smul.addr %s94, 15
      %s96 = smul.addr %s95, 4
      %s97 = scalar_lea.vmem %s0, %s96
      %p98 = pneg %p33
      %p99 = pneg %p30
      %p100 = pneg %p59
      %p101 = pneg %p56
      %p102 = scmp.lt.s32.totalorder %s12, 1
      %s103 = scalar_select %p102, %s12, 1
      %s104 = smul.addr %s103, 3
      %s105 = smul.addr %s104, 4
      %s106 = scalar_lea.vmem %s1, %s105
      %p107 = scmp.lt.s32.totalorder %s12, 1
      %s108 = scalar_select %p107, %s12, 1
      %s109 = smul.addr %s108, 15
      %s110 = smul.addr %s109, 4
      %s111 = scalar_lea.vmem %s0, %s110
      %p112 = scmp.lt.s32.totalorder %s12, 1
      %s113 = scalar_select %p112, %s12, 1
      %s114 = smul.addr %s113, 3
      %s115 = smul.addr %s114, 4
      %s116 = scalar_lea.vmem %s1, %s115
      %v117 = vld [vmem:[%s111] sm:$0xf]
      %v118 = vld [vmem:[%s111 + $0x4] sm:$0xf]
      %v119 = vld [vmem:[%s111 + $0x8] sm:$0x3]
      %v120 = vld [vmem:[%s111 + $0xc] sm:$0x8]
      %v121 = vld [vmem:[%s111 + $0x10] sm:$0xf]
      %v122 = vld [vmem:[%s111 + $0x14] sm:$0xf]
      %v123 = vld [vmem:[%s111 + $0x18] sm:$0x1]
      %v124 = vunpack.c.l.bf16 %v117
      %v125 = vunpack.c.l.bf16 %v118
      %v126 = vunpack.c.l.bf16 %v119
      %v127 = vunpack.c.l.bf16 %v120
      %v128 = vunpack.c.l.bf16 %v121
      %v129 = vunpack.c.l.bf16 %v122
      %v130 = vunpack.c.l.bf16 %v123
      %vm135 = vcmask 1041408
      %v136 = vrot.slane %v127, 6
      %v137 = vrot.slane %v128, 6
      %v138 = vsel %vm135, %v136, %v137
      %v139 = vrot.slane %v129, 6
      %v140 = vsel %vm135, %v137, %v139
      %v141 = vrot.slane %v130, 6
      %v142 = vsel %vm135, %v139, %v141
      %v146 = vmax.f32 %v124, %v138
      %v147 = vmax.f32 %v125, %v140
      %v148 = vmax.f32 %v126, %v142
      %v149 = vpack.c.bf16 %v146, %v146
      %v150 = vpack.c.bf16 %v147, %v147
      %v151 = vpack.c.bf16 %v148, %v148
      %v152 = vld [vmem:[%s111 + $0x8] sm:$0x7]
      %v153 = vunpack.c.l.bf16 %v149
      %v154 = vunpack.c.l.bf16 %v150
      %v155 = vunpack.c.l.bf16 %v151
      %v156 = vunpack.c.l.bf16 %v152
      %vm160 = vcmask 1046528
      %v161 = vrot.slane %v124, 1
      %v162 = vrot.slane %v125, 1
      %v163 = vsel %vm160, %v161, %v162
      %v164 = vrot.slane %v156, 1
      %v165 = vsel %vm160, %v162, %v164
      %v169 = vmax.f32 %v153, %v163
      %v170 = vmax.f32 %v154, %v165
      %v171 = vmax.f32 %v155, %v164
      %v172 = vpack.c.bf16 %v169, %v169
      %v173 = vpack.c.bf16 %v170, %v170
      %v174 = vpack.c.bf16 %v171, %v171
      %v175 = vld [vmem:[%s111 + $0x1c] sm:$0xc]
      %v176 = vld [vmem:[%s111 + $0x20] sm:$0xf]
      %v177 = vld [vmem:[%s111 + $0x24] sm:$0xf]
      %v178 = vunpack.c.l.bf16 %v172
      %v179 = vunpack.c.l.bf16 %v173
      %v180 = vunpack.c.l.bf16 %v174
      %v181 = vunpack.c.l.bf16 %v175
      %v182 = vunpack.c.l.bf16 %v176
      %v183 = vunpack.c.l.bf16 %v177
      %vm187 = vcmask 1043456
      %v188 = vrot.slane %v181, 4
      %v189 = vrot.slane %v182, 4
      %v190 = vsel %vm187, %v188, %v189
      %v191 = vrot.slane %v183, 4
      %v192 = vsel %vm187, %v189, %v191
      %v196 = vmax.f32 %v178, %v190
      %v197 = vmax.f32 %v179, %v192
      %v198 = vmax.f32 %v180, %v191
      %v199 = vpack.c.bf16 %v196, %v196
      %v200 = vpack.c.bf16 %v197, %v197
      %v201 = vpack.c.bf16 %v198, %v198
      %v202 = vld [vmem:[%s111 + $0x2c] sm:$0xe]
      %v203 = vld [vmem:[%s111 + $0x30] sm:$0xf]
      %v204 = vld [vmem:[%s111 + $0x34] sm:$0x7]
      %v205 = vunpack.c.l.bf16 %v199
      %v206 = vunpack.c.l.bf16 %v200
      %v207 = vunpack.c.l.bf16 %v201
      %v208 = vunpack.c.l.bf16 %v202
      %v209 = vunpack.c.l.bf16 %v203
      %v210 = vunpack.c.l.bf16 %v204
      %vm214 = vcmask 1045504
      %v215 = vrot.slane %v208, 2
      %v216 = vrot.slane %v209, 2
      %v217 = vsel %vm214, %v215, %v216
      %v218 = vrot.slane %v210, 2
      %v219 = vsel %vm214, %v216, %v218
      %v223 = vmax.f32 %v205, %v217
      %v224 = vmax.f32 %v206, %v219
      %v225 = vmax.f32 %v207, %v218
      %v226 = vpack.c.bf16 %v223, %v223
      %v227 = vpack.c.bf16 %v224, %v224
      %v228 = vpack.c.bf16 %v225, %v225
      %v229 = vld [vmem:[%s111 + $0x28] sm:$0x1]
      %v230 = vunpack.c.l.bf16 %v226
      %v231 = vunpack.c.l.bf16 %v227
      %v232 = vunpack.c.l.bf16 %v228
      %v233 = vunpack.c.l.bf16 %v229
      %vm235 = vcmask 1042432
      %v236 = vrot.slane %v181, 5
      %v237 = vrot.slane %v182, 5
      %v238 = vsel %vm235, %v236, %v237
      %v239 = vrot.slane %v183, 5
      %v240 = vsel %vm235, %v237, %v239
      %v241 = vrot.slane %v233, 5
      %v242 = vsel %vm235, %v239, %v241
      %v246 = vmax.f32 %v230, %v238
      %v247 = vmax.f32 %v231, %v240
      %v248 = vmax.f32 %v232, %v242
      %v249 = vpack.c.bf16 %v246, %v246
      %v250 = vpack.c.bf16 %v247, %v247
      %v251 = vpack.c.bf16 %v248, %v248
      %v252 = vld [vmem:[%s111] sm:$0xc]
      %v253 = vld [vmem:[%s111 + $0x8] sm:$0xf]
      %v254 = vld [vmem:[%s111 + $0xc] sm:$0x1]
      %v255 = vunpack.c.l.bf16 %v249
      %v256 = vunpack.c.l.bf16 %v250
      %v257 = vunpack.c.l.bf16 %v251
      %v258 = vunpack.c.l.bf16 %v252
      %v259 = vunpack.c.l.bf16 %v253
      %v260 = vunpack.c.l.bf16 %v254
      %v264 = vrot.slane %v258, 5
      %v265 = vrot.slane %v125, 5
      %v266 = vsel %vm235, %v264, %v265
      %v267 = vrot.slane %v259, 5
      %v268 = vsel %vm235, %v265, %v267
      %v269 = vrot.slane %v260, 5
      %v270 = vsel %vm235, %v267, %v269
      %v274 = vmax.f32 %v255, %v266
      %v275 = vmax.f32 %v256, %v268
      %v276 = vmax.f32 %v257, %v270
      %v277 = vpack.c.bf16 %v274, %v274
      %v278 = vpack.c.bf16 %v275, %v275
      %v279 = vpack.c.bf16 %v276, %v276
      %v280 = vld [vmem:[%s111 + $0x10] sm:$0xe]
      %v281 = vld [vmem:[%s111 + $0x18] sm:$0xf]
      %v282 = vunpack.c.l.bf16 %v277
      %v283 = vunpack.c.l.bf16 %v278
      %v284 = vunpack.c.l.bf16 %v279
      %v285 = vunpack.c.l.bf16 %v280
      %v286 = vunpack.c.l.bf16 %v281
      %vm289 = vcmask 1044480
      %v290 = vrot.slane %v285, 3
      %v291 = vrot.slane %v129, 3
      %v292 = vsel %vm289, %v290, %v291
      %v293 = vrot.slane %v286, 3
      %v294 = vsel %vm289, %v291, %v293
      %v298 = vmax.f32 %v282, %v292
      %v299 = vmax.f32 %v283, %v294
      %v300 = vmax.f32 %v284, %v293
      %v301 = vpack.c.bf16 %v298, %v298
      %v302 = vpack.c.bf16 %v299, %v299
      %v303 = vpack.c.bf16 %v300, %v300
      %v304 = vld [vmem:[%s111] sm:$0x8]
      %v305 = vunpack.c.l.bf16 %v301
      %v306 = vunpack.c.l.bf16 %v302
      %v307 = vunpack.c.l.bf16 %v303
      %v308 = vunpack.c.l.bf16 %v304
      %v310 = vrot.slane %v308, 6
      %v311 = vrot.slane %v125, 6
      %v312 = vsel %vm135, %v310, %v311
      %v313 = vrot.slane %v259, 6
      %v314 = vsel %vm135, %v311, %v313
      %v315 = vrot.slane %v260, 6
      %v316 = vsel %vm135, %v313, %v315
      %v320 = vmax.f32 %v305, %v312
      %v321 = vmax.f32 %v306, %v314
      %v322 = vmax.f32 %v307, %v316
      %v323 = vpack.c.bf16 %v320, %v320
      %v324 = vpack.c.bf16 %v321, %v321
      %v325 = vpack.c.bf16 %v322, %v322
      %vm326 = vcmask 519168
      %327 = vst.msk [vmem:[%s116] sm:$0xf] %vm326, %v323
      %328 = vst.msk [vmem:[%s116 + $0x4] sm:$0xf] %vm326, %v324
      %vm329 = vcmask 517120
      %330 = vst.msk [vmem:[%s116 + $0x8] sm:$0x3] %vm329, %v325
      %p331 = scmp.lt.s32.totalorder %s12, 1
      %s332 = scalar_select %p331, %s12, 1
      %s333 = smul.addr %s332, 3
      %s334 = smul.addr %s333, 4
      %s335 = scalar_lea.vmem %s1, %s334
      // Predicated region
      $region25: #{resnet6_forward.8} parent=23 // pred_check
        %p336 = pneg %p56
      $region26: #{resnet6_forward.8} parent=23 // pred_check_branch
        %338 = sbr.rel (%p336) target = $region28
      $region27: #{resnet6_forward.8} parent=23 // pred_region
        _
      $region28: #{resnet6_forward.8} parent=23 // pred_fallthru
        _
    $region24: #{resnet6_forward.8} parent=5 // pred_fallthru
      _
    %p339 = scmp.le.s32.totalorder 2, %s7
    // Predicated region
    $region29: #{resnet6_forward.8} parent=5 // pred_check
      %p340 = pneg %p339
    $region30: #{resnet6_forward.8} parent=5 // pred_check_branch
      %342 = sbr.rel (%p340) target = $region32
    $region31: #{resnet6_forward.8} parent=5 // pred_region
      %s343 = ssub.s32 %s7, 2
      // Predicated region
      $region33: #{resnet6_forward.8} parent=31 // pred_check
        %p344 = pneg %p62
      $region34: #{resnet6_forward.8} parent=31 // pred_check_branch
        %346 = sbr.rel (%p344) target = $region36
      $region35: #{resnet6_forward.8} parent=31 // pred_region
        %p347 = scmp.lt.s32.totalorder %s13, 1
        %s348 = scalar_select %p347, %s13, 1
        %s349 = smul.addr %s348, 3
        %s350 = smul.addr %s349, 4
        %s351 = scalar_lea.vmem %s1, %s350
      $region36: #{resnet6_forward.8} parent=31 // pred_fallthru
        _
    $region32: #{resnet6_forward.8} parent=5 // pred_fallthru
      _
  $region6: #{resnet6_forward.8} parent=0 // loop_footer
    %s11 = sadd.s32 1, %s7
  $region7: #{resnet6_forward.8} parent=0 // loop_footer_branch
    %6 = sbr.rel target = $region3
  $region8: #{resnet6_forward.8} parent=0 // loop_exit
    _

// kernel: resnet6_forward.9
$region0: #{resnet6_forward.9}
  #allocation0 [shape = 'u32[]', space=smem, size = 0x4, offset = 0x4, fixed_abs, tag = 'smem constant byte address 0x4 - core index']
  #allocation1 [shape = 'u32[72,128]{1,0:T(1,128)}', space=vmem, size = 0x9000, scoped, tag = 'internal scratch']
  %s0 = inlined_call_operand.vmem [shape: bf16[2,42,64], index: 0, kind: input, shape index: {}]
  %s1 = inlined_call_operand.vmem [shape: bf16[9,64,64], index: 1, kind: input, shape index: {}]
  %s2 = inlined_call_operand.vmem [shape: f32[1,64], index: 2, kind: input, shape index: {}]
  %s3 = inlined_call_operand.vmem [shape: bf16[2,24,64], index: 3, kind: output, shape index: {}]
  %s4 = sld [smem:[#allocation0]]
  $region45: #{resnet6_forward.9} parent=0
    _
  %s6 = ssub.s32 1, %s4
  %s7 = scalar_select 0, %s6, %s4
  loop: start=0, step=1, limit=4
  $region2: #{resnet6_forward.9} parent=0 // loop_pre_header
    _
  $region3: #{resnet6_forward.9} parent=0 // loop_header
    %s9 = sphi 0, %s13
    %p10 = scmp.ge.s32.totalorder %s9, 4
    %s19 = sphi 0, %s21
    %s22 = sphi 0, %s19
    %s23 = sphi 0, %s22
    %s39 = sphi 0, %s23
    %s43 = sphi 0, %s43
    %s45 = sphi 0, %s43
    %s46 = sphi 0, %s45
    %s60 = sphi 0, %s46
    %s64 = sphi 0, %s64
    %s66 = sphi 0, %s64
    %s67 = sphi 0, %s66
    %s81 = sphi 0, %s67
    %s87 = sphi 0, %s89
    %s90 = sphi 0, %s87
    %s91 = sphi 0, %s90
    %s107 = sphi 0, %s91
  $region4: #{resnet6_forward.9} parent=0 // loop_header_branch
    %12 = sbr.rel (%p10) target = $region8
  $region5: #{resnet6_forward.9} parent=0 // loop_body
    %s14 = ssub.s32 %s9, 1
    %s15 = ssub.s32 %s9, 2
    %s16 = sadd.s32 %s9, 1
    %s17 = ssub.s32 %s9, %s16
    %p18 = scmp.eq.s32.totalorder %s17, 0
    %s20 = sadd.s32 %s19, 1
    %s21 = scalar_select %p18, %s19, %s20
    %p24 = pneg %p18
    %p25 = scmp.eq.s32.totalorder %s9, 1
    %p26 = por %p24, %p25
    %p27 = scmp.ne.s32.totalorder %s19, %s22
    %p28 = scmp.eq.s32.totalorder %s9, 0
    %p29 = por %p27, %p28
    %p30 = scmp.ne.s32.totalorder %s19, %s22
    %p31 = scmp.eq.s32.totalorder %s14, 1
    %p32 = por %p30, %p31
    %p33 = scmp.ne.s32.totalorder %s22, %s23
    %p34 = scmp.eq.s32.totalorder %s14, 0
    %p35 = por %p33, %p34
    %p36 = scmp.ne.s32.totalorder %s22, %s23
    %p37 = scmp.eq.s32.totalorder %s15, 1
    %p38 = por %p36, %p37
    %p40 = scmp.ne.s32.totalorder %s23, %s39
    %p41 = scmp.eq.s32.totalorder %s15, 0
    %p42 = por %p40, %p41
    %s44 = sadd.s32 %s43, 1
    %p47 = scmp.eq.s32.totalorder %s9, 1
    %p48 = scmp.ne.s32.totalorder %s43, %s45
    %p49 = scmp.eq.s32.totalorder %s9, 0
    %p50 = por %p48, %p49
    %p51 = scmp.ne.s32.totalorder %s43, %s45
    %p52 = scmp.eq.s32.totalorder %s14, 1
    %p53 = por %p51, %p52
    %p54 = scmp.ne.s32.totalorder %s45, %s46
    %p55 = scmp.eq.s32.totalorder %s14, 0
    %p56 = por %p54, %p55
    %p57 = scmp.ne.s32.totalorder %s45, %s46
    %p58 = scmp.eq.s32.totalorder %s15, 1
    %p59 = por %p57, %p58
    %p61 = scmp.ne.s32.totalorder %s46, %s60
    %p62 = scmp.eq.s32.totalorder %s15, 0
    %p63 = por %p61, %p62
    %s65 = sadd.s32 %s64, 1
    %p68 = scmp.eq.s32.totalorder %s9, 1
    %p69 = scmp.ne.s32.totalorder %s64, %s66
    %p70 = scmp.eq.s32.totalorder %s9, 0
    %p71 = por %p69, %p70
    %p72 = scmp.ne.s32.totalorder %s64, %s66
    %p73 = scmp.eq.s32.totalorder %s14, 1
    %p74 = por %p72, %p73
    %p75 = scmp.ne.s32.totalorder %s66, %s67
    %p76 = scmp.eq.s32.totalorder %s14, 0
    %p77 = por %p75, %p76
    %p78 = scmp.ne.s32.totalorder %s66, %s67
    %p79 = scmp.eq.s32.totalorder %s15, 1
    %p80 = por %p78, %p79
    %p82 = scmp.ne.s32.totalorder %s67, %s81
    %p83 = scmp.eq.s32.totalorder %s15, 0
    %p84 = por %p82, %p83
    %s85 = ssub.s32 %s9, %s16
    %p86 = scmp.eq.s32.totalorder %s85, 0
    %s88 = sadd.s32 %s87, 1
    %s89 = scalar_select %p86, %s87, %s88
    %p92 = pneg %p86
    %p93 = scmp.eq.s32.totalorder %s9, 1
    %p94 = por %p92, %p93
    %p95 = scmp.ne.s32.totalorder %s87, %s90
    %p96 = scmp.eq.s32.totalorder %s9, 0
    %p97 = por %p95, %p96
    %p98 = scmp.ne.s32.totalorder %s87, %s90
    %p99 = scmp.eq.s32.totalorder %s14, 1
    %p100 = por %p98, %p99
    %p101 = scmp.ne.s32.totalorder %s90, %s91
    %p102 = scmp.eq.s32.totalorder %s14, 0
    %p103 = por %p101, %p102
    %p104 = scmp.ne.s32.totalorder %s90, %s91
    %p105 = scmp.eq.s32.totalorder %s15, 1
    %p106 = por %p104, %p105
    %p108 = scmp.ne.s32.totalorder %s91, %s107
    %p109 = scmp.eq.s32.totalorder %s15, 0
    %p110 = por %p108, %p109
    %p111 = scmp.le.s32.totalorder 1, %s9
    %p112 = scmp.lt.s32.totalorder %s9, 3
    %p113 = pnand %p111, %p112
    %p114 = pneg %p113
    // Predicated region
    $region9: #{resnet6_forward.9} parent=5 // pred_check
      _
    $region10: #{resnet6_forward.9} parent=5 // pred_check_branch
      %116 = sbr.rel (%p113) target = $region12
    $region11: #{resnet6_forward.9} parent=5 // pred_region
      %s117 = ssub.s32 %s9, 1
      // Predicated region
      $region13: #{resnet6_forward.9} parent=11 // pred_check
        %p118 = pneg %p56
      $region14: #{resnet6_forward.9} parent=11 // pred_check_branch
        %120 = sbr.rel (%p118) target = $region16
      $region15: #{resnet6_forward.9} parent=11 // pred_region
        _
      $region16: #{resnet6_forward.9} parent=11 // pred_fallthru
        _
      // Predicated region
      $region17: #{resnet6_forward.9} parent=11 // pred_check
        %p121 = pneg %p77
      $region18: #{resnet6_forward.9} parent=11 // pred_check_branch
        %123 = sbr.rel (%p121) target = $region20
      $region19: #{resnet6_forward.9} parent=11 // pred_region
        _
      $region20: #{resnet6_forward.9} parent=11 // pred_fallthru
        _
    $region12: #{resnet6_forward.9} parent=5 // pred_fallthru
      _
    %p124 = scmp.lt.s32.totalorder %s9, 2
    // Predicated region
    $region21: #{resnet6_forward.9} parent=5 // pred_check
      %p125 = pneg %p124
    $region22: #{resnet6_forward.9} parent=5 // pred_check_branch
      %127 = sbr.rel (%p125) target = $region24
    $region23: #{resnet6_forward.9} parent=5 // pred_region
      // Predicated region
      $region25: #{resnet6_forward.9} parent=23 // pred_check
        %p128 = pneg %p29
      $region26: #{resnet6_forward.9} parent=23 // pred_check_branch
        %130 = sbr.rel (%p128) target = $region28
      $region27: #{resnet6_forward.9} parent=23 // pred_region
        %p131 = scmp.lt.s32.totalorder %s9, 1
        %s132 = scalar_select %p131, %s9, 1
        %s133 = smul.addr %s132, 6
        %s134 = smul.addr %s133, 4
        %s135 = scalar_lea.vmem %s0, %s134
      $region28: #{resnet6_forward.9} parent=23 // pred_fallthru
        _
    $region24: #{resnet6_forward.9} parent=5 // pred_fallthru
      _
    %p136 = scmp.le.s32.totalorder 1, %s9
    %p137 = scmp.lt.s32.totalorder %s9, 3
    %p138 = pnand %p136, %p137
    %p139 = pneg %p138
    // Predicated region
    $region29: #{resnet6_forward.9} parent=5 // pred_check
      _
    $region30: #{resnet6_forward.9} parent=5 // pred_check_branch
      %141 = sbr.rel (%p138) target = $region32
    $region31: #{resnet6_forward.9} parent=5 // pred_region
      %s142 = ssub.s32 %s9, 1
      %p143 = scmp.lt.s32.totalorder %s14, 1
      %s144 = scalar_select %p143, %s14, 1
      %s145 = smul.addr %s144, 6
      %s146 = smul.addr %s145, 4
      %s147 = scalar_lea.vmem %s0, %s146
      %p148 = pneg %p35
      %p149 = pneg %p32
      %p150 = pneg %p56
      %p151 = pneg %p53
      %p152 = pneg %p77
      %p153 = pneg %p74
      %p154 = pneg %p103
      %p155 = pneg %p100
      %p156 = scmp.lt.s32.totalorder %s14, 1
      %s157 = scalar_select %p156, %s14, 1
      %s158 = smul.addr %s157, 3
      %s159 = smul.addr %s158, 4
      %s160 = scalar_lea.vmem %s3, %s159
      %p161 = scmp.lt.s32.totalorder %s14, 1
      %s162 = scalar_select %p161, %s14, 1
      %s163 = smul.addr %s162, 6
      %s164 = smul.addr %s163, 4
      %s165 = scalar_lea.vmem %s0, %s164
      %p166 = scmp.lt.s32.totalorder %s14, 1
      %s167 = scalar_select %p166, %s14, 1
      %s168 = smul.addr %s167, 3
      %s169 = smul.addr %s168, 4
      %s170 = scalar_lea.vmem %s3, %s169
      %v172 = vld [vmem:[%s165] sm:$0xf]
      %v173 = vld [vmem:[%s165 + $0x4] sm:$0xf]
      %v174 = vld [vmem:[%s165 + $0x8] sm:$0xf]
      %v175 = vld [vmem:[%s1] sm:$0xf]
      %v176 = vld [vmem:[%s1 + $0x4] sm:$0xf]
      %v177 = vld [vmem:[%s1 + $0x8] sm:$0xf]
      %v178 = vld [vmem:[%s1 + $0xc] sm:$0xf]
      %v179 = vld [vmem:[%s1 + $0x10] sm:$0xf]
      %v180 = vld [vmem:[%s1 + $0x14] sm:$0xf]
      %v181 = vld [vmem:[%s1 + $0x18] sm:$0xf]
      %v182 = vld [vmem:[%s1 + $0x1c] sm:$0xf]
      %v183 = vld [vmem:[%s165 + $0xc] sm:$0x1]
      %s184 = scalar_lea.vmem %s1, 32
      %v185 = vld [vmem:[%s184] sm:$0xf]
      %v186 = vld [vmem:[%s184 + $0x4] sm:$0xf]
      %v187 = vld [vmem:[%s184 + $0x8] sm:$0xf]
      %v188 = vld [vmem:[%s184 + $0xc] sm:$0xf]
      %v189 = vld [vmem:[%s184 + $0x10] sm:$0xf]
      %v190 = vld [vmem:[%s184 + $0x14] sm:$0xf]
      %v191 = vld [vmem:[%s184 + $0x18] sm:$0xf]
      %v192 = vld [vmem:[%s184 + $0x1c] sm:$0xf]
      %v197 = vunpack.c.l.b16 %v172
      %v198 = vunpack.c.l.b16 %v173
      %v199 = vunpack.c.l.b16 %v174
      %v200 = vunpack.c.l.b16 %v183
      %v201 = vpack.c.b16 %v198, %v197
      %v202 = vpack.c.b16 %v200, %v199
      %vm203 = vsmask.f32 7424
      %v205 = vshrl.u32 %v201, 16
      %v207 = vshll.u32 %v201, 16
      %v209 = vrot.slane %v207, 1
      %v210 = vor.u32 %v205, %v209
      %v212 = vshll.u32 %v202, 16
      %v214 = vrot.slane %v212, 1
      %v215 = vsel %vm203, %v210, %v214
      %v216 = vshrl.u32 %v202, 16
      %v218 = vor.u32 %v216, %v214
      %v227 = vunpack.c.l.b16 %v185
      %v228 = vunpack.c.l.b16 %v186
      %v229 = vunpack.c.l.b16 %v187
      %v230 = vunpack.c.l.b16 %v188
      %v231 = vunpack.c.l.b16 %v189
      %v232 = vunpack.c.l.b16 %v190
      %v233 = vunpack.c.l.b16 %v191
      %v234 = vunpack.c.l.b16 %v192
      %v235 = vpack.c.b16 %v228, %v227
      %v236 = vpack.c.b16 %v230, %v229
      %v237 = vpack.c.b16 %v232, %v231
      %v238 = vpack.c.b16 %v234, %v233
      %vm243 = vcmask 523264
      %v245 = vsel %vm243, %v215, 0
      %v248 = vsel %vm243, %v218, 0
      %250 = vmatpush.bf16.msra.mxu0 0
      %251 = vmatpush.bf16.msra.mxu0 0
      %252 = vmatpush.bf16.msra.mxu0 0
      %253 = vmatpush.bf16.msra.mxu0 0
      %254 = vmatpush.bf16.msra.mxu0 %v238
      %255 = vmatpush.bf16.msra.mxu0 %v237
      %256 = vmatpush.bf16.msra.mxu0 %v236
      %257 = vmatpush.bf16.msra.mxu0 %v235
      %258 = vmatmul.bf16.gmra.mxu0 %v245
      %v259 = vpop.f32.mrf.mxu0
      %v260 = vadd.f32 0.0, %v259
      %v261 = vpop.f32.mrf.mxu0
      %v262 = vadd.f32 0.0, %v261
      %263 = vmatmul.bf16.gmra.mxu0 %v248
      %v264 = vpop.f32.mrf.mxu0
      %v265 = vadd.f32 0.0, %v264
      %v266 = vpop.f32.mrf.mxu0
      %267 = vdwg.mxu0
      %v268 = vpack.c.b16 %v199, %v199
      %v277 = vunpack.c.l.b16 %v175
      %v278 = vunpack.c.l.b16 %v176
      %v279 = vunpack.c.l.b16 %v177
      %v280 = vunpack.c.l.b16 %v178
      %v281 = vunpack.c.l.b16 %v179
      %v282 = vunpack.c.l.b16 %v180
      %v283 = vunpack.c.l.b16 %v181
      %v284 = vunpack.c.l.b16 %v182
      %v285 = vpack.c.b16 %v278, %v277
      %v286 = vpack.c.b16 %v280, %v279
      %v287 = vpack.c.b16 %v282, %v281
      %v288 = vpack.c.b16 %v284, %v283
      %v293 = vsel %vm243, %v201, 0
      %v296 = vsel %vm243, %v268, 0
      %298 = vmatpush.bf16.msra.mxu0 0
      %299 = vmatpush.bf16.msra.mxu0 0
      %300 = vmatpush.bf16.msra.mxu0 0
      %301 = vmatpush.bf16.msra.mxu0 0
      %302 = vmatpush.bf16.msra.mxu0 %v288
      %303 = vmatpush.bf16.msra.mxu0 %v287
      %304 = vmatpush.bf16.msra.mxu0 %v286
      %305 = vmatpush.bf16.msra.mxu0 %v285
      %306 = vmatmul.bf16.gmra.mxu0 %v293
      %v307 = vpop.f32.mrf.mxu0
      %v308 = vadd.f32 %v260, %v307
      %v309 = vpop.f32.mrf.mxu0
      %v310 = vadd.f32 %v262, %v309
      %311 = vmatmul.bf16.gmra.mxu0 %v296
      %v312 = vpop.f32.mrf.mxu0
      %v313 = vadd.f32 %v265, %v312
      %v314 = vpop.f32.mrf.mxu0
      %315 = vdwg.mxu0
      %v316 = vld [vmem:[%s165] sm:$0xe]
      %s317 = scalar_lea.vmem %s1, 64
      %v318 = vld [vmem:[%s317] sm:$0xf]
      %v319 = vld [vmem:[%s317 + $0x4] sm:$0xf]
      %v320 = vld [vmem:[%s317 + $0x8] sm:$0xf]
      %v321 = vld [vmem:[%s317 + $0xc] sm:$0xf]
      %v322 = vld [vmem:[%s317 + $0x10] sm:$0xf]
      %v323 = vld [vmem:[%s317 + $0x14] sm:$0xf]
      %v324 = vld [vmem:[%s317 + $0x18] sm:$0xf]
      %v325 = vld [vmem:[%s317 + $0x1c] sm:$0xf]
      %v327 = vunpack.c.l.b16 %v316
      %v328 = vpack.c.b16 %v198, %v327
      %vm329 = vcmask 1046528
      %v330 = vrot.slane %v328, 1
      %v331 = vrot.slane %v202, 1
      %v332 = vsel %vm329, %v330, %v331
      %v341 = vunpack.c.l.b16 %v318
      %v342 = vunpack.c.l.b16 %v319
      %v343 = vunpack.c.l.b16 %v320
      %v344 = vunpack.c.l.b16 %v321
      %v345 = vunpack.c.l.b16 %v322
      %v346 = vunpack.c.l.b16 %v323
      %v347 = vunpack.c.l.b16 %v324
      %v348 = vunpack.c.l.b16 %v325
      %v349 = vpack.c.b16 %v342, %v341
      %v350 = vpack.c.b16 %v344, %v343
      %v351 = vpack.c.b16 %v346, %v345
      %v352 = vpack.c.b16 %v348, %v347
      %v358 = vsel %vm243, %v332, 0
      %v361 = vsel %vm243, %v331, 0
      %363 = vmatpush.bf16.msra.mxu0 0
      %364 = vmatpush.bf16.msra.mxu0 0
      %365 = vmatpush.bf16.msra.mxu0 0
      %366 = vmatpush.bf16.msra.mxu0 0
      %367 = vmatpush.bf16.msra.mxu0 %v352
      %368 = vmatpush.bf16.msra.mxu0 %v351
      %369 = vmatpush.bf16.msra.mxu0 %v350
      %370 = vmatpush.bf16.msra.mxu0 %v349
      %371 = vmatmul.bf16.gmra.mxu0 %v358
      %v372 = vpop.f32.mrf.mxu0
      %v373 = vadd.f32 0.0, %v372
      %v374 = vpop.f32.mrf.mxu0
      %v375 = vadd.f32 0.0, %v374
      %376 = vmatmul.bf16.gmra.mxu0 %v361
      %v377 = vpop.f32.mrf.mxu0
      %v378 = vadd.f32 0.0, %v377
      %v379 = vpop.f32.mrf.mxu0
      %380 = vdwg.mxu0
      %v381 = vadd.f32 %v308, %v373
      %v382 = vadd.f32 %v310, %v375
      %v383 = vadd.f32 %v313, %v378
      %v384 = vld [vmem:[%s165] sm:$0x8]
      %v385 = vld [vmem:[%s165 + $0xc] sm:$0x7]
      %s386 = scalar_lea.vmem %s1, 96
      %v387 = vld [vmem:[%s386] sm:$0xf]
      %v388 = vld [vmem:[%s386 + $0x4] sm:$0xf]
      %v389 = vld [vmem:[%s386 + $0x8] sm:$0xf]
      %v390 = vld [vmem:[%s386 + $0xc] sm:$0xf]
      %v391 = vld [vmem:[%s386 + $0x10] sm:$0xf]
      %v392 = vld [vmem:[%s386 + $0x14] sm:$0xf]
      %v393 = vld [vmem:[%s386 + $0x18] sm:$0xf]
      %v394 = vld [vmem:[%s386 + $0x1c] sm:$0xf]
      %v397 = vunpack.c.l.b16 %v384
      %v398 = vunpack.c.l.b16 %v385
      %v399 = vpack.c.b16 %v198, %v397
      %v400 = vpack.c.b16 %v398, %v199
      %vm401 = vcmask 1044480
      %v402 = vrot.slane %v399, 3
      %v403 = vrot.slane %v400, 3
      %v404 = vsel %vm401, %v402, %v403
      %v413 = vunpack.c.l.b16 %v387
      %v414 = vunpack.c.l.b16 %v388
      %v415 = vunpack.c.l.b16 %v389
      %v416 = vunpack.c.l.b16 %v390
      %v417 = vunpack.c.l.b16 %v391
      %v418 = vunpack.c.l.b16 %v392
      %v419 = vunpack.c.l.b16 %v393
      %v420 = vunpack.c.l.b16 %v394
      %v421 = vpack.c.b16 %v414, %v413
      %v422 = vpack.c.b16 %v416, %v415
      %v423 = vpack.c.b16 %v418, %v417
      %v424 = vpack.c.b16 %v420, %v419
      %v430 = vsel %vm243, %v404, 0
      %v433 = vsel %vm243, %v403, 0
      %435 = vmatpush.bf16.msra.mxu0 0
      %436 = vmatpush.bf16.msra.mxu0 0
      %437 = vmatpush.bf16.msra.mxu0 0
      %438 = vmatpush.bf16.msra.mxu0 0
      %439 = vmatpush.bf16.msra.mxu0 %v424
      %440 = vmatpush.bf16.msra.mxu0 %v423
      %441 = vmatpush.bf16.msra.mxu0 %v422
      %442 = vmatpush.bf16.msra.mxu0 %v421
      %443 = vmatmul.bf16.gmra.mxu0 %v430
      %v444 = vpop.f32.mrf.mxu0
      %v445 = vadd.f32 0.0, %v444
      %v446 = vpop.f32.mrf.mxu0
      %v447 = vadd.f32 0.0, %v446
      %448 = vmatmul.bf16.gmra.mxu0 %v433
      %v449 = vpop.f32.mrf.mxu0
      %v450 = vadd.f32 0.0, %v449
      %v451 = vpop.f32.mrf.mxu0
      %452 = vdwg.mxu0
      %v453 = vadd.f32 %v381, %v445
      %v454 = vadd.f32 %v382, %v447
      %v455 = vadd.f32 %v383, %v450
      %v456 = vld [vmem:[%s165 + $0xc] sm:$0xf]
      %s457 = scalar_lea.vmem %s1, 128
      %v458 = vld [vmem:[%s457] sm:$0xf]
      %v459 = vld [vmem:[%s457 + $0x4] sm:$0xf]
      %v460 = vld [vmem:[%s457 + $0x8] sm:$0xf]
      %v461 = vld [vmem:[%s457 + $0xc] sm:$0xf]
      %v462 = vld [vmem:[%s457 + $0x10] sm:$0xf]
      %v463 = vld [vmem:[%s457 + $0x14] sm:$0xf]
      %v464 = vld [vmem:[%s457 + $0x18] sm:$0xf]
      %v465 = vld [vmem:[%s457 + $0x1c] sm:$0xf]
      %v467 = vunpack.c.l.b16 %v456
      %v468 = vpack.c.b16 %v467, %v199
      %vm469 = vsmask.f32 4352
      %v471 = vshrl.u32 %v399, 16
      %v473 = vrot.slane %v471, 3
      %v474 = vshll.u32 %v399, 16
      %v476 = vrot.slane %v474, 4
      %v477 = vor.u32 %v473, %v476
      %v479 = vshrl.u32 %v468, 16
      %v481 = vrot.slane %v479, 3
      %v482 = vshll.u32 %v468, 16
      %v484 = vrot.slane %v482, 4
      %v485 = vor.u32 %v481, %v484
      %v486 = vsel %vm469, %v477, %v485
      %v495 = vunpack.c.l.b16 %v458
      %v496 = vunpack.c.l.b16 %v459
      %v497 = vunpack.c.l.b16 %v460
      %v498 = vunpack.c.l.b16 %v461
      %v499 = vunpack.c.l.b16 %v462
      %v500 = vunpack.c.l.b16 %v463
      %v501 = vunpack.c.l.b16 %v464
      %v502 = vunpack.c.l.b16 %v465
      %v503 = vpack.c.b16 %v496, %v495
      %v504 = vpack.c.b16 %v498, %v497
      %v505 = vpack.c.b16 %v500, %v499
      %v506 = vpack.c.b16 %v502, %v501
      %v512 = vsel %vm243, %v486, 0
      %v515 = vsel %vm243, %v485, 0
      %517 = vmatpush.bf16.msra.mxu0 0
      %518 = vmatpush.bf16.msra.mxu0 0
      %519 = vmatpush.bf16.msra.mxu0 0
      %520 = vmatpush.bf16.msra.mxu0 0
      %521 = vmatpush.bf16.msra.mxu0 %v506
      %522 = vmatpush.bf16.msra.mxu0 %v505
      %523 = vmatpush.bf16.msra.mxu0 %v504
      %524 = vmatpush.bf16.msra.mxu0 %v503
      %525 = vmatmul.bf16.gmra.mxu0 %v512
      %v526 = vpop.f32.mrf.mxu0
      %v527 = vadd.f32 0.0, %v526
      %v528 = vpop.f32.mrf.mxu0
      %v529 = vadd.f32 0.0, %v528
      %530 = vmatmul.bf16.gmra.mxu0 %v515
      %v531 = vpop.f32.mrf.mxu0
      %v532 = vadd.f32 0.0, %v531
      %v533 = vpop.f32.mrf.mxu0
      %534 = vdwg.mxu0
      %v535 = vadd.f32 %v453, %v527
      %v536 = vadd.f32 %v454, %v529
      %v537 = vadd.f32 %v455, %v532
      %s538 = scalar_lea.vmem %s1, 160
      %v539 = vld [vmem:[%s538] sm:$0xf]
      %v540 = vld [vmem:[%s538 + $0x4] sm:$0xf]
      %v541 = vld [vmem:[%s538 + $0x8] sm:$0xf]
      %v542 = vld [vmem:[%s538 + $0xc] sm:$0xf]
      %v543 = vld [vmem:[%s538 + $0x10] sm:$0xf]
      %v544 = vld [vmem:[%s538 + $0x14] sm:$0xf]
      %v545 = vld [vmem:[%s538 + $0x18] sm:$0xf]
      %v546 = vld [vmem:[%s538 + $0x1c] sm:$0xf]
      %v547 = vpack.c.b16 %v199, %v198
      %v548 = vpack.c.b16 %v467, %v467
      %v557 = vunpack.c.l.b16 %v539
      %v558 = vunpack.c.l.b16 %v540
      %v559 = vunpack.c.l.b16 %v541
      %v560 = vunpack.c.l.b16 %v542
      %v561 = vunpack.c.l.b16 %v543
      %v562 = vunpack.c.l.b16 %v544
      %v563 = vunpack.c.l.b16 %v545
      %v564 = vunpack.c.l.b16 %v546
      %v565 = vpack.c.b16 %v558, %v557
      %v566 = vpack.c.b16 %v560, %v559
      %v567 = vpack.c.b16 %v562, %v561
      %v568 = vpack.c.b16 %v564, %v563
      %v574 = vsel %vm243, %v547, 0
      %v577 = vsel %vm243, %v548, 0
      %579 = vmatpush.bf16.msra.mxu0 0
      %580 = vmatpush.bf16.msra.mxu0 0
      %581 = vmatpush.bf16.msra.mxu0 0
      %582 = vmatpush.bf16.msra.mxu0 0
      %583 = vmatpush.bf16.msra.mxu0 %v568
      %584 = vmatpush.bf16.msra.mxu0 %v567
      %585 = vmatpush.bf16.msra.mxu0 %v566
      %586 = vmatpush.bf16.msra.mxu0 %v565
      %587 = vmatmul.bf16.gmra.mxu0 %v574
      %v588 = vpop.f32.mrf.mxu0
      %v589 = vadd.f32 0.0, %v588
      %v590 = vpop.f32.mrf.mxu0
      %v591 = vadd.f32 0.0, %v590
      %592 = vmatmul.bf16.gmra.mxu0 %v577
      %v593 = vpop.f32.mrf.mxu0
      %v594 = vadd.f32 0.0, %v593
      %v595 = vpop.f32.mrf.mxu0
      %596 = vdwg.mxu0
      %v597 = vadd.f32 %v535, %v589
      %v598 = vadd.f32 %v536, %v591
      %v599 = vadd.f32 %v537, %v594
      %v600 = vld [vmem:[%s165 + $0x4] sm:$0xc]
      %v601 = vld [vmem:[%s165 + $0x8] sm:$0xf]
      %v602 = vld [vmem:[%s165 + $0xc] sm:$0xf]
      %v603 = vld [vmem:[%s165 + $0x10] sm:$0x3]
      %s604 = scalar_lea.vmem %s1, 192
      %v605 = vld [vmem:[%s604] sm:$0xf]
      %v606 = vld [vmem:[%s604 + $0x4] sm:$0xf]
      %v607 = vld [vmem:[%s604 + $0x8] sm:$0xf]
      %v608 = vld [vmem:[%s604 + $0xc] sm:$0xf]
      %v609 = vld [vmem:[%s604 + $0x10] sm:$0xf]
      %v610 = vld [vmem:[%s604 + $0x14] sm:$0xf]
      %v611 = vld [vmem:[%s604 + $0x18] sm:$0xf]
      %v612 = vld [vmem:[%s604 + $0x1c] sm:$0xf]
      %v617 = vunpack.c.l.b16 %v600
      %v618 = vunpack.c.l.b16 %v601
      %v619 = vunpack.c.l.b16 %v602
      %v620 = vunpack.c.l.b16 %v603
      %v621 = vpack.c.b16 %v618, %v617
      %v622 = vpack.c.b16 %v620, %v619
      %vm623 = vcmask 1045504
      %v624 = vrot.slane %v621, 2
      %v625 = vrot.slane %v622, 2
      %v626 = vsel %vm623, %v624, %v625
      %v635 = vunpack.c.l.b16 %v605
      %v636 = vunpack.c.l.b16 %v606
      %v637 = vunpack.c.l.b16 %v607
      %v638 = vunpack.c.l.b16 %v608
      %v639 = vunpack.c.l.b16 %v609
      %v640 = vunpack.c.l.b16 %v610
      %v641 = vunpack.c.l.b16 %v611
      %v642 = vunpack.c.l.b16 %v612
      %v643 = vpack.c.b16 %v636, %v635
      %v644 = vpack.c.b16 %v638, %v637
      %v645 = vpack.c.b16 %v640, %v639
      %v646 = vpack.c.b16 %v642, %v641
      %v652 = vsel %vm243, %v626, 0
      %v655 = vsel %vm243, %v625, 0
      %657 = vmatpush.bf16.msra.mxu0 0
      %658 = vmatpush.bf16.msra.mxu0 0
      %659 = vmatpush.bf16.msra.mxu0 0
      %660 = vmatpush.bf16.msra.mxu0 0
      %661 = vmatpush.bf16.msra.mxu0 %v646
      %662 = vmatpush.bf16.msra.mxu0 %v645
      %663 = vmatpush.bf16.msra.mxu0 %v644
      %664 = vmatpush.bf16.msra.mxu0 %v643
      %665 = vmatmul.bf16.gmra.mxu0 %v652
      %v666 = vpop.f32.mrf.mxu0
      %v667 = vadd.f32 0.0, %v666
      %v668 = vpop.f32.mrf.mxu0
      %v669 = vadd.f32 0.0, %v668
      %670 = vmatmul.bf16.gmra.mxu0 %v655
      %v671 = vpop.f32.mrf.mxu0
      %v672 = vadd.f32 0.0, %v671
      %v673 = vpop.f32.mrf.mxu0
      %674 = vdwg.mxu0
      %v675 = vadd.f32 %v597, %v667
      %v676 = vadd.f32 %v598, %v669
      %v677 = vadd.f32 %v599, %v672
      %v678 = vld [vmem:[%s165 + $0x10] sm:$0x7]
      %s679 = scalar_lea.vmem %s1, 224
      %v680 = vld [vmem:[%s679] sm:$0xf]
      %v681 = vld [vmem:[%s679 + $0x4] sm:$0xf]
      %v682 = vld [vmem:[%s679 + $0x8] sm:$0xf]
      %v683 = vld [vmem:[%s679 + $0xc] sm:$0xf]
      %v684 = vld [vmem:[%s679 + $0x10] sm:$0xf]
      %v685 = vld [vmem:[%s679 + $0x14] sm:$0xf]
      %v686 = vld [vmem:[%s679 + $0x18] sm:$0xf]
      %v687 = vld [vmem:[%s679 + $0x1c] sm:$0xf]
      %v689 = vunpack.c.l.b16 %v678
      %v690 = vpack.c.b16 %v689, %v619
      %vm691 = vsmask.f32 5376
      %v693 = vshrl.u32 %v621, 16
      %v695 = vrot.slane %v693, 2
      %v696 = vshll.u32 %v621, 16
      %v698 = vrot.slane %v696, 3
      %v699 = vor.u32 %v695, %v698
      %v701 = vshrl.u32 %v690, 16
      %v703 = vrot.slane %v701, 2
      %v704 = vshll.u32 %v690, 16
      %v706 = vrot.slane %v704, 3
      %v707 = vor.u32 %v703, %v706
      %v708 = vsel %vm691, %v699, %v707
      %v717 = vunpack.c.l.b16 %v680
      %v718 = vunpack.c.l.b16 %v681
      %v719 = vunpack.c.l.b16 %v682
      %v720 = vunpack.c.l.b16 %v683
      %v721 = vunpack.c.l.b16 %v684
      %v722 = vunpack.c.l.b16 %v685
      %v723 = vunpack.c.l.b16 %v686
      %v724 = vunpack.c.l.b16 %v687
      %v725 = vpack.c.b16 %v718, %v717
      %v726 = vpack.c.b16 %v720, %v719
      %v727 = vpack.c.b16 %v722, %v721
      %v728 = vpack.c.b16 %v724, %v723
      %v734 = vsel %vm243, %v708, 0
      %v737 = vsel %vm243, %v707, 0
      %739 = vmatpush.bf16.msra.mxu0 0
      %740 = vmatpush.bf16.msra.mxu0 0
      %741 = vmatpush.bf16.msra.mxu0 0
      %742 = vmatpush.bf16.msra.mxu0 0
      %743 = vmatpush.bf16.msra.mxu0 %v728
      %744 = vmatpush.bf16.msra.mxu0 %v727
      %745 = vmatpush.bf16.msra.mxu0 %v726
      %746 = vmatpush.bf16.msra.mxu0 %v725
      %747 = vmatmul.bf16.gmra.mxu0 %v734
      %v748 = vpop.f32.mrf.mxu0
      %v749 = vadd.f32 0.0, %v748
      %v750 = vpop.f32.mrf.mxu0
      %v751 = vadd.f32 0.0, %v750
      %752 = vmatmul.bf16.gmra.mxu0 %v737
      %v753 = vpop.f32.mrf.mxu0
      %v754 = vadd.f32 0.0, %v753
      %v755 = vpop.f32.mrf.mxu0
      %756 = vdwg.mxu0
      %v757 = vadd.f32 %v675, %v749
      %v758 = vadd.f32 %v676, %v751
      %v759 = vadd.f32 %v677, %v754
      %v760 = vld [vmem:[%s165 + $0x4] sm:$0x8]
      %s761 = scalar_lea.vmem %s1, 256
      %v762 = vld [vmem:[%s761] sm:$0xf]
      %v763 = vld [vmem:[%s761 + $0x4] sm:$0xf]
      %v764 = vld [vmem:[%s761 + $0x8] sm:$0xf]
      %v765 = vld [vmem:[%s761 + $0xc] sm:$0xf]
      %v766 = vld [vmem:[%s761 + $0x10] sm:$0xf]
      %v767 = vld [vmem:[%s761 + $0x14] sm:$0xf]
      %v768 = vld [vmem:[%s761 + $0x18] sm:$0xf]
      %v769 = vld [vmem:[%s761 + $0x1c] sm:$0xf]
      %v771 = vunpack.c.l.b16 %v760
      %v772 = vpack.c.b16 %v618, %v771
      %v773 = vrot.slane %v772, 3
      %v774 = vrot.slane %v690, 3
      %v775 = vsel %vm401, %v773, %v774
      %v784 = vunpack.c.l.b16 %v762
      %v785 = vunpack.c.l.b16 %v763
      %v786 = vunpack.c.l.b16 %v764
      %v787 = vunpack.c.l.b16 %v765
      %v788 = vunpack.c.l.b16 %v766
      %v789 = vunpack.c.l.b16 %v767
      %v790 = vunpack.c.l.b16 %v768
      %v791 = vunpack.c.l.b16 %v769
      %v792 = vpack.c.b16 %v785, %v784
      %v793 = vpack.c.b16 %v787, %v786
      %v794 = vpack.c.b16 %v789, %v788
      %v795 = vpack.c.b16 %v791, %v790
      %v801 = vsel %vm243, %v775, 0
      %v804 = vsel %vm243, %v774, 0
      %806 = vmatpush.bf16.msra.mxu0 0
      %807 = vmatpush.bf16.msra.mxu0 0
      %808 = vmatpush.bf16.msra.mxu0 0
      %809 = vmatpush.bf16.msra.mxu0 0
      %810 = vmatpush.bf16.msra.mxu0 %v795
      %811 = vmatpush.bf16.msra.mxu0 %v794
      %812 = vmatpush.bf16.msra.mxu0 %v793
      %813 = vmatpush.bf16.msra.mxu0 %v792
      %814 = vmatmul.bf16.gmra.mxu0 %v801
      %v815 = vpop.f32.mrf.mxu0
      %v816 = vadd.f32 0.0, %v815
      %v817 = vpop.f32.mrf.mxu0
      %v818 = vadd.f32 0.0, %v817
      %819 = vmatmul.bf16.gmra.mxu0 %v804
      %v820 = vpop.f32.mrf.mxu0
      %v821 = vadd.f32 0.0, %v820
      %v822 = vpop.f32.mrf.mxu0
      %823 = vdwg.mxu0
      %v824 = vadd.f32 %v757, %v816
      %v825 = vadd.f32 %v758, %v818
      %v826 = vadd.f32 %v759, %v821
      %v827 = vld [vmem:[%s2] sm:$0x1]
      %v829 = vperm.slane %v827, 0
      %v831 = vadd.f32 %v824, %v829
      %v832 = vadd.f32 %v825, %v829
      %v833 = vadd.f32 %v826, %v829
      %v834 = vmax.f32 %v831, 0.0
      %v835 = vmax.f32 %v832, 0.0
      %v836 = vmax.f32 %v833, 0.0
      %v837 = vpack.c.bf16 %v834, %v834
      %v838 = vpack.c.bf16 %v835, %v835
      %v839 = vpack.c.bf16 %v836, %v836
      %vm840 = vcmask 519168
      %841 = vst.msk [vmem:[%s170] sm:$0xf] %vm840, %v837
      %842 = vst.msk [vmem:[%s170 + $0x4] sm:$0xf] %vm840, %v838
      %843 = vst.msk [vmem:[%s170 + $0x8] sm:$0xf] %vm840, %v839
      %p844 = scmp.lt.s32.totalorder %s14, 1
      %s845 = scalar_select %p844, %s14, 1
      %s846 = smul.addr %s845, 3
      %s847 = smul.addr %s846, 4
      %s848 = scalar_lea.vmem %s3, %s847
      // Predicated region
      $region33: #{resnet6_forward.9} parent=31 // pred_check
        %p849 = pneg %p100
      $region34: #{resnet6_forward.9} parent=31 // pred_check_branch
        %851 = sbr.rel (%p849) target = $region36
      $region35: #{resnet6_forward.9} parent=31 // pred_region
        _
      $region36: #{resnet6_forward.9} parent=31 // pred_fallthru
        _
    $region32: #{resnet6_forward.9} parent=5 // pred_fallthru
      _
    %p852 = scmp.le.s32.totalorder 2, %s9
    // Predicated region
    $region37: #{resnet6_forward.9} parent=5 // pred_check
      %p853 = pneg %p852
    $region38: #{resnet6_forward.9} parent=5 // pred_check_branch
      %855 = sbr.rel (%p853) target = $region40
    $region39: #{resnet6_forward.9} parent=5 // pred_region
      %s856 = ssub.s32 %s9, 2
      // Predicated region
      $region41: #{resnet6_forward.9} parent=39 // pred_check
        %p857 = pneg %p106
      $region42: #{resnet6_forward.9} parent=39 // pred_check_branch
        %859 = sbr.rel (%p857) target = $region44
      $region43: #{resnet6_forward.9} parent=39 // pred_region
        %p860 = scmp.lt.s32.totalorder %s15, 1
        %s861 = scalar_select %p860, %s15, 1
        %s862 = smul.addr %s861, 3
        %s863 = smul.addr %s862, 4
        %s864 = scalar_lea.vmem %s3, %s863
      $region44: #{resnet6_forward.9} parent=39 // pred_fallthru
        _
    $region40: #{resnet6_forward.9} parent=5 // pred_fallthru
      _
  $region6: #{resnet6_forward.9} parent=0 // loop_footer
    %s13 = sadd.s32 1, %s9
  $region7: #{resnet6_forward.9} parent=0 // loop_footer_branch
    %8 = sbr.rel target = $region3
  $region8: #{resnet6_forward.9} parent=0 // loop_exit
    _

// kernel: resnet6_forward.10
$region0: #{resnet6_forward.10}
  #allocation0 [shape = 'u32[]', space=smem, size = 0x4, offset = 0x4, fixed_abs, tag = 'smem constant byte address 0x4 - core index']
  #allocation1 [shape = 'u32[72,128]{1,0:T(1,128)}', space=vmem, size = 0x9000, scoped, tag = 'internal scratch']
  %s0 = inlined_call_operand.vmem [shape: bf16[2,48,64], index: 0, kind: input, shape index: {}]
  %s1 = inlined_call_operand.vmem [shape: bf16[9,64,128], index: 1, kind: input, shape index: {}]
  %s2 = inlined_call_operand.vmem [shape: f32[1,128], index: 2, kind: input, shape index: {}]
  %s3 = inlined_call_operand.vmem [shape: bf16[2,6,128], index: 3, kind: output, shape index: {}]
  %s4 = sld [smem:[#allocation0]]
  $region45: #{resnet6_forward.10} parent=0
    _
  %s6 = ssub.s32 1, %s4
  %s7 = scalar_select 0, %s6, %s4
  loop: start=0, step=1, limit=4
  $region2: #{resnet6_forward.10} parent=0 // loop_pre_header
    _
  $region3: #{resnet6_forward.10} parent=0 // loop_header
    %s9 = sphi 0, %s13
    %p10 = scmp.ge.s32.totalorder %s9, 4
    %s19 = sphi 0, %s21
    %s22 = sphi 0, %s19
    %s23 = sphi 0, %s22
    %s39 = sphi 0, %s23
    %s43 = sphi 0, %s43
    %s45 = sphi 0, %s43
    %s46 = sphi 0, %s45
    %s60 = sphi 0, %s46
    %s64 = sphi 0, %s64
    %s66 = sphi 0, %s64
    %s67 = sphi 0, %s66
    %s81 = sphi 0, %s67
    %s87 = sphi 0, %s89
    %s90 = sphi 0, %s87
    %s91 = sphi 0, %s90
    %s107 = sphi 0, %s91
  $region4: #{resnet6_forward.10} parent=0 // loop_header_branch
    %12 = sbr.rel (%p10) target = $region8
  $region5: #{resnet6_forward.10} parent=0 // loop_body
    %s14 = ssub.s32 %s9, 1
    %s15 = ssub.s32 %s9, 2
    %s16 = sadd.s32 %s9, 1
    %s17 = ssub.s32 %s9, %s16
    %p18 = scmp.eq.s32.totalorder %s17, 0
    %s20 = sadd.s32 %s19, 1
    %s21 = scalar_select %p18, %s19, %s20
    %p24 = pneg %p18
    %p25 = scmp.eq.s32.totalorder %s9, 1
    %p26 = por %p24, %p25
    %p27 = scmp.ne.s32.totalorder %s19, %s22
    %p28 = scmp.eq.s32.totalorder %s9, 0
    %p29 = por %p27, %p28
    %p30 = scmp.ne.s32.totalorder %s19, %s22
    %p31 = scmp.eq.s32.totalorder %s14, 1
    %p32 = por %p30, %p31
    %p33 = scmp.ne.s32.totalorder %s22, %s23
    %p34 = scmp.eq.s32.totalorder %s14, 0
    %p35 = por %p33, %p34
    %p36 = scmp.ne.s32.totalorder %s22, %s23
    %p37 = scmp.eq.s32.totalorder %s15, 1
    %p38 = por %p36, %p37
    %p40 = scmp.ne.s32.totalorder %s23, %s39
    %p41 = scmp.eq.s32.totalorder %s15, 0
    %p42 = por %p40, %p41
    %s44 = sadd.s32 %s43, 1
    %p47 = scmp.eq.s32.totalorder %s9, 1
    %p48 = scmp.ne.s32.totalorder %s43, %s45
    %p49 = scmp.eq.s32.totalorder %s9, 0
    %p50 = por %p48, %p49
    %p51 = scmp.ne.s32.totalorder %s43, %s45
    %p52 = scmp.eq.s32.totalorder %s14, 1
    %p53 = por %p51, %p52
    %p54 = scmp.ne.s32.totalorder %s45, %s46
    %p55 = scmp.eq.s32.totalorder %s14, 0
    %p56 = por %p54, %p55
    %p57 = scmp.ne.s32.totalorder %s45, %s46
    %p58 = scmp.eq.s32.totalorder %s15, 1
    %p59 = por %p57, %p58
    %p61 = scmp.ne.s32.totalorder %s46, %s60
    %p62 = scmp.eq.s32.totalorder %s15, 0
    %p63 = por %p61, %p62
    %s65 = sadd.s32 %s64, 1
    %p68 = scmp.eq.s32.totalorder %s9, 1
    %p69 = scmp.ne.s32.totalorder %s64, %s66
    %p70 = scmp.eq.s32.totalorder %s9, 0
    %p71 = por %p69, %p70
    %p72 = scmp.ne.s32.totalorder %s64, %s66
    %p73 = scmp.eq.s32.totalorder %s14, 1
    %p74 = por %p72, %p73
    %p75 = scmp.ne.s32.totalorder %s66, %s67
    %p76 = scmp.eq.s32.totalorder %s14, 0
    %p77 = por %p75, %p76
    %p78 = scmp.ne.s32.totalorder %s66, %s67
    %p79 = scmp.eq.s32.totalorder %s15, 1
    %p80 = por %p78, %p79
    %p82 = scmp.ne.s32.totalorder %s67, %s81
    %p83 = scmp.eq.s32.totalorder %s15, 0
    %p84 = por %p82, %p83
    %s85 = ssub.s32 %s9, %s16
    %p86 = scmp.eq.s32.totalorder %s85, 0
    %s88 = sadd.s32 %s87, 1
    %s89 = scalar_select %p86, %s87, %s88
    %p92 = pneg %p86
    %p93 = scmp.eq.s32.totalorder %s9, 1
    %p94 = por %p92, %p93
    %p95 = scmp.ne.s32.totalorder %s87, %s90
    %p96 = scmp.eq.s32.totalorder %s9, 0
    %p97 = por %p95, %p96
    %p98 = scmp.ne.s32.totalorder %s87, %s90
    %p99 = scmp.eq.s32.totalorder %s14, 1
    %p100 = por %p98, %p99
    %p101 = scmp.ne.s32.totalorder %s90, %s91
    %p102 = scmp.eq.s32.totalorder %s14, 0
    %p103 = por %p101, %p102
    %p104 = scmp.ne.s32.totalorder %s90, %s91
    %p105 = scmp.eq.s32.totalorder %s15, 1
    %p106 = por %p104, %p105
    %p108 = scmp.ne.s32.totalorder %s91, %s107
    %p109 = scmp.eq.s32.totalorder %s15, 0
    %p110 = por %p108, %p109
    %p111 = scmp.le.s32.totalorder 1, %s9
    %p112 = scmp.lt.s32.totalorder %s9, 3
    %p113 = pnand %p111, %p112
    %p114 = pneg %p113
    // Predicated region
    $region9: #{resnet6_forward.10} parent=5 // pred_check
      _
    $region10: #{resnet6_forward.10} parent=5 // pred_check_branch
      %116 = sbr.rel (%p113) target = $region12
    $region11: #{resnet6_forward.10} parent=5 // pred_region
      %s117 = ssub.s32 %s9, 1
      // Predicated region
      $region13: #{resnet6_forward.10} parent=11 // pred_check
        %p118 = pneg %p56
      $region14: #{resnet6_forward.10} parent=11 // pred_check_branch
        %120 = sbr.rel (%p118) target = $region16
      $region15: #{resnet6_forward.10} parent=11 // pred_region
        _
      $region16: #{resnet6_forward.10} parent=11 // pred_fallthru
        _
      // Predicated region
      $region17: #{resnet6_forward.10} parent=11 // pred_check
        %p121 = pneg %p77
      $region18: #{resnet6_forward.10} parent=11 // pred_check_branch
        %123 = sbr.rel (%p121) target = $region20
      $region19: #{resnet6_forward.10} parent=11 // pred_region
        _
      $region20: #{resnet6_forward.10} parent=11 // pred_fallthru
        _
    $region12: #{resnet6_forward.10} parent=5 // pred_fallthru
      _
    %p124 = scmp.lt.s32.totalorder %s9, 2
    // Predicated region
    $region21: #{resnet6_forward.10} parent=5 // pred_check
      %p125 = pneg %p124
    $region22: #{resnet6_forward.10} parent=5 // pred_check_branch
      %127 = sbr.rel (%p125) target = $region24
    $region23: #{resnet6_forward.10} parent=5 // pred_region
      // Predicated region
      $region25: #{resnet6_forward.10} parent=23 // pred_check
        %p128 = pneg %p29
      $region26: #{resnet6_forward.10} parent=23 // pred_check_branch
        %130 = sbr.rel (%p128) target = $region28
      $region27: #{resnet6_forward.10} parent=23 // pred_region
        %p131 = scmp.lt.s32.totalorder %s9, 1
        %s132 = scalar_select %p131, %s9, 1
        %s133 = smul.addr %s132, 6
        %s134 = smul.addr %s133, 4
        %s135 = scalar_lea.vmem %s0, %s134
      $region28: #{resnet6_forward.10} parent=23 // pred_fallthru
        _
    $region24: #{resnet6_forward.10} parent=5 // pred_fallthru
      _
    %p136 = scmp.le.s32.totalorder 1, %s9
    %p137 = scmp.lt.s32.totalorder %s9, 3
    %p138 = pnand %p136, %p137
    %p139 = pneg %p138
    // Predicated region
    $region29: #{resnet6_forward.10} parent=5 // pred_check
      _
    $region30: #{resnet6_forward.10} parent=5 // pred_check_branch
      %141 = sbr.rel (%p138) target = $region32
    $region31: #{resnet6_forward.10} parent=5 // pred_region
      %s142 = ssub.s32 %s9, 1
      %p143 = scmp.lt.s32.totalorder %s14, 1
      %s144 = scalar_select %p143, %s14, 1
      %s145 = smul.addr %s144, 6
      %s146 = smul.addr %s145, 4
      %s147 = scalar_lea.vmem %s0, %s146
      %p148 = pneg %p35
      %p149 = pneg %p32
      %p150 = pneg %p56
      %p151 = pneg %p53
      %p152 = pneg %p77
      %p153 = pneg %p74
      %p154 = pneg %p103
      %p155 = pneg %p100
      %p156 = scmp.lt.s32.totalorder %s14, 1
      %s157 = scalar_select %p156, %s14, 1
      %s158 = smul.addr %s157, 4
      %s159 = scalar_lea.vmem %s3, %s158
      %p160 = scmp.lt.s32.totalorder %s14, 1
      %s161 = scalar_select %p160, %s14, 1
      %s162 = smul.addr %s161, 6
      %s163 = smul.addr %s162, 4
      %s164 = scalar_lea.vmem %s0, %s163
      %p165 = scmp.lt.s32.totalorder %s14, 1
      %s166 = scalar_select %p165, %s14, 1
      %s167 = smul.addr %s166, 4
      %s168 = scalar_lea.vmem %s3, %s167
      %v170 = vld [vmem:[%s164] sm:$0x7]
      %v171 = vld [vmem:[%s1] sm:$0xf]
      %v172 = vld [vmem:[%s1 + $0x4] sm:$0xf]
      %v173 = vld [vmem:[%s1 + $0x8] sm:$0xf]
      %v174 = vld [vmem:[%s1 + $0xc] sm:$0xf]
      %v175 = vld [vmem:[%s1 + $0x10] sm:$0xf]
      %v176 = vld [vmem:[%s1 + $0x14] sm:$0xf]
      %v177 = vld [vmem:[%s1 + $0x18] sm:$0xf]
      %v178 = vld [vmem:[%s1 + $0x1c] sm:$0xf]
      %v179 = vld [vmem:[%s164 + $0x4] sm:$0xc]
      %v180 = vld [vmem:[%s164 + $0x8] sm:$0x1]
      %s181 = scalar_lea.vmem %s1, 32
      %v182 = vld [vmem:[%s181] sm:$0xf]
      %v183 = vld [vmem:[%s181 + $0x4] sm:$0xf]
      %v184 = vld [vmem:[%s181 + $0x8] sm:$0xf]
      %v185 = vld [vmem:[%s181 + $0xc] sm:$0xf]
      %v186 = vld [vmem:[%s181 + $0x10] sm:$0xf]
      %v187 = vld [vmem:[%s181 + $0x14] sm:$0xf]
      %v188 = vld [vmem:[%s181 + $0x18] sm:$0xf]
      %v189 = vld [vmem:[%s181 + $0x1c] sm:$0xf]
      %v192 = vunpack.c.l.b16 %v179
      %v193 = vunpack.c.l.b16 %v180
      %v194 = vpack.c.b16 %v193, %v192
      %v195 = vrot.slane %v194, 2
      %v204 = vunpack.c.l.b16 %v182
      %v205 = vunpack.c.l.b16 %v183
      %v206 = vunpack.c.l.b16 %v184
      %v207 = vunpack.c.l.b16 %v185
      %v208 = vunpack.c.l.b16 %v186
      %v209 = vunpack.c.l.b16 %v187
      %v210 = vunpack.c.l.b16 %v188
      %v211 = vunpack.c.l.b16 %v189
      %v212 = vpack.c.b16 %v205, %v204
      %v213 = vpack.c.b16 %v207, %v206
      %v214 = vpack.c.b16 %v209, %v208
      %v215 = vpack.c.b16 %v211, %v210
      %vm220 = vcmask 523264
      %v222 = vsel %vm220, %v195, 0
      %224 = vmatpush.bf16.msra.mxu0 0
      %225 = vmatpush.bf16.msra.mxu0 0
      %226 = vmatpush.bf16.msra.mxu0 0
      %227 = vmatpush.bf16.msra.mxu0 0
      %228 = vmatpush.bf16.msra.mxu0 %v215
      %229 = vmatpush.bf16.msra.mxu0 %v214
      %230 = vmatpush.bf16.msra.mxu0 %v213
      %231 = vmatpush.bf16.msra.mxu0 %v212
      %232 = vmatmul.bf16.gmra.mxu0 %v222
      %v233 = vpop.f32.mrf.mxu0
      %v234 = vadd.f32 0.0, %v233
      %v235 = vpop.f32.mrf.mxu0
      %236 = vdwg.mxu0
      %v245 = vunpack.c.l.b16 %v171
      %v246 = vunpack.c.l.b16 %v172
      %v247 = vunpack.c.l.b16 %v173
      %v248 = vunpack.c.l.b16 %v174
      %v249 = vunpack.c.l.b16 %v175
      %v250 = vunpack.c.l.b16 %v176
      %v251 = vunpack.c.l.b16 %v177
      %v252 = vunpack.c.l.b16 %v178
      %v253 = vpack.c.b16 %v246, %v245
      %v254 = vpack.c.b16 %v248, %v247
      %v255 = vpack.c.b16 %v250, %v249
      %v256 = vpack.c.b16 %v252, %v251
      %v262 = vsel %vm220, %v170, 0
      %264 = vmatpush.bf16.msra.mxu0 0
      %265 = vmatpush.bf16.msra.mxu0 0
      %266 = vmatpush.bf16.msra.mxu0 0
      %267 = vmatpush.bf16.msra.mxu0 0
      %268 = vmatpush.bf16.msra.mxu0 %v256
      %269 = vmatpush.bf16.msra.mxu0 %v255
      %270 = vmatpush.bf16.msra.mxu0 %v254
      %271 = vmatpush.bf16.msra.mxu0 %v253
      %272 = vmatmul.bf16.gmra.mxu0 %v262
      %v273 = vpop.f32.mrf.mxu0
      %v274 = vadd.f32 %v234, %v273
      %v275 = vpop.f32.mrf.mxu0
      %276 = vdwg.mxu0
      %v277 = vld [vmem:[%s164] sm:$0xf]
      %s278 = scalar_lea.vmem %s1, 64
      %v279 = vld [vmem:[%s278] sm:$0xf]
      %v280 = vld [vmem:[%s278 + $0x4] sm:$0xf]
      %v281 = vld [vmem:[%s278 + $0x8] sm:$0xf]
      %v282 = vld [vmem:[%s278 + $0xc] sm:$0xf]
      %v283 = vld [vmem:[%s278 + $0x10] sm:$0xf]
      %v284 = vld [vmem:[%s278 + $0x14] sm:$0xf]
      %v285 = vld [vmem:[%s278 + $0x18] sm:$0xf]
      %v286 = vld [vmem:[%s278 + $0x1c] sm:$0xf]
      %v288 = vunpack.c.l.b16 %v277
      %v289 = vpack.c.b16 %v288, %v288
      %v291 = vshrl.u32 %v289, 16
      %v293 = vshll.u32 %v289, 16
      %v295 = vrot.slane %v293, 1
      %v296 = vor.u32 %v291, %v295
      %v305 = vunpack.c.l.b16 %v279
      %v306 = vunpack.c.l.b16 %v280
      %v307 = vunpack.c.l.b16 %v281
      %v308 = vunpack.c.l.b16 %v282
      %v309 = vunpack.c.l.b16 %v283
      %v310 = vunpack.c.l.b16 %v284
      %v311 = vunpack.c.l.b16 %v285
      %v312 = vunpack.c.l.b16 %v286
      %v313 = vpack.c.b16 %v306, %v305
      %v314 = vpack.c.b16 %v308, %v307
      %v315 = vpack.c.b16 %v310, %v309
      %v316 = vpack.c.b16 %v312, %v311
      %v322 = vsel %vm220, %v296, 0
      %324 = vmatpush.bf16.msra.mxu0 0
      %325 = vmatpush.bf16.msra.mxu0 0
      %326 = vmatpush.bf16.msra.mxu0 0
      %327 = vmatpush.bf16.msra.mxu0 0
      %328 = vmatpush.bf16.msra.mxu0 %v316
      %329 = vmatpush.bf16.msra.mxu0 %v315
      %330 = vmatpush.bf16.msra.mxu0 %v314
      %331 = vmatpush.bf16.msra.mxu0 %v313
      %332 = vmatmul.bf16.gmra.mxu0 %v322
      %v333 = vpop.f32.mrf.mxu0
      %v334 = vadd.f32 0.0, %v333
      %v335 = vpop.f32.mrf.mxu0
      %336 = vdwg.mxu0
      %v337 = vadd.f32 %v274, %v334
      %v338 = vld [vmem:[%s164 + $0xc] sm:$0x7]
      %s339 = scalar_lea.vmem %s1, 96
      %v340 = vld [vmem:[%s339] sm:$0xf]
      %v341 = vld [vmem:[%s339 + $0x4] sm:$0xf]
      %v342 = vld [vmem:[%s339 + $0x8] sm:$0xf]
      %v343 = vld [vmem:[%s339 + $0xc] sm:$0xf]
      %v344 = vld [vmem:[%s339 + $0x10] sm:$0xf]
      %v345 = vld [vmem:[%s339 + $0x14] sm:$0xf]
      %v346 = vld [vmem:[%s339 + $0x18] sm:$0xf]
      %v347 = vld [vmem:[%s339 + $0x1c] sm:$0xf]
      %v356 = vunpack.c.l.b16 %v340
      %v357 = vunpack.c.l.b16 %v341
      %v358 = vunpack.c.l.b16 %v342
      %v359 = vunpack.c.l.b16 %v343
      %v360 = vunpack.c.l.b16 %v344
      %v361 = vunpack.c.l.b16 %v345
      %v362 = vunpack.c.l.b16 %v346
      %v363 = vunpack.c.l.b16 %v347
      %v364 = vpack.c.b16 %v357, %v356
      %v365 = vpack.c.b16 %v359, %v358
      %v366 = vpack.c.b16 %v361, %v360
      %v367 = vpack.c.b16 %v363, %v362
      %v373 = vsel %vm220, %v338, 0
      %375 = vmatpush.bf16.msra.mxu0 0
      %376 = vmatpush.bf16.msra.mxu0 0
      %377 = vmatpush.bf16.msra.mxu0 0
      %378 = vmatpush.bf16.msra.mxu0 0
      %379 = vmatpush.bf16.msra.mxu0 %v367
      %380 = vmatpush.bf16.msra.mxu0 %v366
      %381 = vmatpush.bf16.msra.mxu0 %v365
      %382 = vmatpush.bf16.msra.mxu0 %v364
      %383 = vmatmul.bf16.gmra.mxu0 %v373
      %v384 = vpop.f32.mrf.mxu0
      %v385 = vadd.f32 0.0, %v384
      %v386 = vpop.f32.mrf.mxu0
      %387 = vdwg.mxu0
      %v388 = vadd.f32 %v337, %v385
      %v389 = vld [vmem:[%s164 + $0x10] sm:$0xc]
      %v390 = vld [vmem:[%s164 + $0x14] sm:$0x1]
      %s391 = scalar_lea.vmem %s1, 128
      %v392 = vld [vmem:[%s391] sm:$0xf]
      %v393 = vld [vmem:[%s391 + $0x4] sm:$0xf]
      %v394 = vld [vmem:[%s391 + $0x8] sm:$0xf]
      %v395 = vld [vmem:[%s391 + $0xc] sm:$0xf]
      %v396 = vld [vmem:[%s391 + $0x10] sm:$0xf]
      %v397 = vld [vmem:[%s391 + $0x14] sm:$0xf]
      %v398 = vld [vmem:[%s391 + $0x18] sm:$0xf]
      %v399 = vld [vmem:[%s391 + $0x1c] sm:$0xf]
      %v402 = vunpack.c.l.b16 %v389
      %v403 = vunpack.c.l.b16 %v390
      %v404 = vpack.c.b16 %v403, %v402
      %v405 = vrot.slane %v404, 2
      %v414 = vunpack.c.l.b16 %v392
      %v415 = vunpack.c.l.b16 %v393
      %v416 = vunpack.c.l.b16 %v394
      %v417 = vunpack.c.l.b16 %v395
      %v418 = vunpack.c.l.b16 %v396
      %v419 = vunpack.c.l.b16 %v397
      %v420 = vunpack.c.l.b16 %v398
      %v421 = vunpack.c.l.b16 %v399
      %v422 = vpack.c.b16 %v415, %v414
      %v423 = vpack.c.b16 %v417, %v416
      %v424 = vpack.c.b16 %v419, %v418
      %v425 = vpack.c.b16 %v421, %v420
      %v431 = vsel %vm220, %v405, 0
      %433 = vmatpush.bf16.msra.mxu0 0
      %434 = vmatpush.bf16.msra.mxu0 0
      %435 = vmatpush.bf16.msra.mxu0 0
      %436 = vmatpush.bf16.msra.mxu0 0
      %437 = vmatpush.bf16.msra.mxu0 %v425
      %438 = vmatpush.bf16.msra.mxu0 %v424
      %439 = vmatpush.bf16.msra.mxu0 %v423
      %440 = vmatpush.bf16.msra.mxu0 %v422
      %441 = vmatmul.bf16.gmra.mxu0 %v431
      %v442 = vpop.f32.mrf.mxu0
      %v443 = vadd.f32 0.0, %v442
      %v444 = vpop.f32.mrf.mxu0
      %445 = vdwg.mxu0
      %v446 = vadd.f32 %v388, %v443
      %v447 = vld [vmem:[%s164 + $0xc] sm:$0xf]
      %s448 = scalar_lea.vmem %s1, 160
      %v449 = vld [vmem:[%s448] sm:$0xf]
      %v450 = vld [vmem:[%s448 + $0x4] sm:$0xf]
      %v451 = vld [vmem:[%s448 + $0x8] sm:$0xf]
      %v452 = vld [vmem:[%s448 + $0xc] sm:$0xf]
      %v453 = vld [vmem:[%s448 + $0x10] sm:$0xf]
      %v454 = vld [vmem:[%s448 + $0x14] sm:$0xf]
      %v455 = vld [vmem:[%s448 + $0x18] sm:$0xf]
      %v456 = vld [vmem:[%s448 + $0x1c] sm:$0xf]
      %v458 = vunpack.c.l.b16 %v447
      %v459 = vpack.c.b16 %v458, %v458
      %v461 = vshrl.u32 %v459, 16
      %v463 = vshll.u32 %v459, 16
      %v465 = vrot.slane %v463, 1
      %v466 = vor.u32 %v461, %v465
      %v475 = vunpack.c.l.b16 %v449
      %v476 = vunpack.c.l.b16 %v450
      %v477 = vunpack.c.l.b16 %v451
      %v478 = vunpack.c.l.b16 %v452
      %v479 = vunpack.c.l.b16 %v453
      %v480 = vunpack.c.l.b16 %v454
      %v481 = vunpack.c.l.b16 %v455
      %v482 = vunpack.c.l.b16 %v456
      %v483 = vpack.c.b16 %v476, %v475
      %v484 = vpack.c.b16 %v478, %v477
      %v485 = vpack.c.b16 %v480, %v479
      %v486 = vpack.c.b16 %v482, %v481
      %v492 = vsel %vm220, %v466, 0
      %494 = vmatpush.bf16.msra.mxu0 0
      %495 = vmatpush.bf16.msra.mxu0 0
      %496 = vmatpush.bf16.msra.mxu0 0
      %497 = vmatpush.bf16.msra.mxu0 0
      %498 = vmatpush.bf16.msra.mxu0 %v486
      %499 = vmatpush.bf16.msra.mxu0 %v485
      %500 = vmatpush.bf16.msra.mxu0 %v484
      %501 = vmatpush.bf16.msra.mxu0 %v483
      %502 = vmatmul.bf16.gmra.mxu0 %v492
      %v503 = vpop.f32.mrf.mxu0
      %v504 = vadd.f32 0.0, %v503
      %v505 = vpop.f32.mrf.mxu0
      %506 = vdwg.mxu0
      %v507 = vadd.f32 %v446, %v504
      %v508 = vld [vmem:[%s164] sm:$0xe]
      %v509 = vld [vmem:[%s164 + $0x4] sm:$0x1]
      %s510 = scalar_lea.vmem %s1, 192
      %v511 = vld [vmem:[%s510] sm:$0xf]
      %v512 = vld [vmem:[%s510 + $0x4] sm:$0xf]
      %v513 = vld [vmem:[%s510 + $0x8] sm:$0xf]
      %v514 = vld [vmem:[%s510 + $0xc] sm:$0xf]
      %v515 = vld [vmem:[%s510 + $0x10] sm:$0xf]
      %v516 = vld [vmem:[%s510 + $0x14] sm:$0xf]
      %v517 = vld [vmem:[%s510 + $0x18] sm:$0xf]
      %v518 = vld [vmem:[%s510 + $0x1c] sm:$0xf]
      %v521 = vunpack.c.l.b16 %v508
      %v522 = vunpack.c.l.b16 %v509
      %v523 = vpack.c.b16 %v522, %v521
      %v525 = vshrl.u32 %v523, 16
      %v527 = vrot.slane %v525, 1
      %v528 = vshll.u32 %v523, 16
      %v530 = vrot.slane %v528, 2
      %v531 = vor.u32 %v527, %v530
      %v540 = vunpack.c.l.b16 %v511
      %v541 = vunpack.c.l.b16 %v512
      %v542 = vunpack.c.l.b16 %v513
      %v543 = vunpack.c.l.b16 %v514
      %v544 = vunpack.c.l.b16 %v515
      %v545 = vunpack.c.l.b16 %v516
      %v546 = vunpack.c.l.b16 %v517
      %v547 = vunpack.c.l.b16 %v518
      %v548 = vpack.c.b16 %v541, %v540
      %v549 = vpack.c.b16 %v543, %v542
      %v550 = vpack.c.b16 %v545, %v544
      %v551 = vpack.c.b16 %v547, %v546
      %v557 = vsel %vm220, %v531, 0
      %559 = vmatpush.bf16.msra.mxu0 0
      %560 = vmatpush.bf16.msra.mxu0 0
      %561 = vmatpush.bf16.msra.mxu0 0
      %562 = vmatpush.bf16.msra.mxu0 0
      %563 = vmatpush.bf16.msra.mxu0 %v551
      %564 = vmatpush.bf16.msra.mxu0 %v550
      %565 = vmatpush.bf16.msra.mxu0 %v549
      %566 = vmatpush.bf16.msra.mxu0 %v548
      %567 = vmatmul.bf16.gmra.mxu0 %v557
      %v568 = vpop.f32.mrf.mxu0
      %v569 = vadd.f32 0.0, %v568
      %v570 = vpop.f32.mrf.mxu0
      %571 = vdwg.mxu0
      %v572 = vadd.f32 %v507, %v569
      %v573 = vld [vmem:[%s164 + $0x4] sm:$0x8]
      %v574 = vld [vmem:[%s164 + $0x8] sm:$0x7]
      %s575 = scalar_lea.vmem %s1, 224
      %v576 = vld [vmem:[%s575] sm:$0xf]
      %v577 = vld [vmem:[%s575 + $0x4] sm:$0xf]
      %v578 = vld [vmem:[%s575 + $0x8] sm:$0xf]
      %v579 = vld [vmem:[%s575 + $0xc] sm:$0xf]
      %v580 = vld [vmem:[%s575 + $0x10] sm:$0xf]
      %v581 = vld [vmem:[%s575 + $0x14] sm:$0xf]
      %v582 = vld [vmem:[%s575 + $0x18] sm:$0xf]
      %v583 = vld [vmem:[%s575 + $0x1c] sm:$0xf]
      %v586 = vunpack.c.l.b16 %v573
      %v587 = vunpack.c.l.b16 %v574
      %v588 = vpack.c.b16 %v587, %v586
      %v590 = vshrl.u32 %v588, 16
      %v592 = vrot.slane %v590, 3
      %v593 = vshll.u32 %v588, 16
      %v595 = vrot.slane %v593, 4
      %v596 = vor.u32 %v592, %v595
      %v605 = vunpack.c.l.b16 %v576
      %v606 = vunpack.c.l.b16 %v577
      %v607 = vunpack.c.l.b16 %v578
      %v608 = vunpack.c.l.b16 %v579
      %v609 = vunpack.c.l.b16 %v580
      %v610 = vunpack.c.l.b16 %v581
      %v611 = vunpack.c.l.b16 %v582
      %v612 = vunpack.c.l.b16 %v583
      %v613 = vpack.c.b16 %v606, %v605
      %v614 = vpack.c.b16 %v608, %v607
      %v615 = vpack.c.b16 %v610, %v609
      %v616 = vpack.c.b16 %v612, %v611
      %v622 = vsel %vm220, %v596, 0
      %624 = vmatpush.bf16.msra.mxu0 0
      %625 = vmatpush.bf16.msra.mxu0 0
      %626 = vmatpush.bf16.msra.mxu0 0
      %627 = vmatpush.bf16.msra.mxu0 0
      %628 = vmatpush.bf16.msra.mxu0 %v616
      %629 = vmatpush.bf16.msra.mxu0 %v615
      %630 = vmatpush.bf16.msra.mxu0 %v614
      %631 = vmatpush.bf16.msra.mxu0 %v613
      %632 = vmatmul.bf16.gmra.mxu0 %v622
      %v633 = vpop.f32.mrf.mxu0
      %v634 = vadd.f32 0.0, %v633
      %v635 = vpop.f32.mrf.mxu0
      %636 = vdwg.mxu0
      %v637 = vadd.f32 %v572, %v634
      %v638 = vld [vmem:[%s164] sm:$0xc]
      %s639 = scalar_lea.vmem %s1, 256
      %v640 = vld [vmem:[%s639] sm:$0xf]
      %v641 = vld [vmem:[%s639 + $0x4] sm:$0xf]
      %v642 = vld [vmem:[%s639 + $0x8] sm:$0xf]
      %v643 = vld [vmem:[%s639 + $0xc] sm:$0xf]
      %v644 = vld [vmem:[%s639 + $0x10] sm:$0xf]
      %v645 = vld [vmem:[%s639 + $0x14] sm:$0xf]
      %v646 = vld [vmem:[%s639 + $0x18] sm:$0xf]
      %v647 = vld [vmem:[%s639 + $0x1c] sm:$0xf]
      %v649 = vunpack.c.l.b16 %v638
      %v650 = vpack.c.b16 %v522, %v649
      %v651 = vrot.slane %v650, 2
      %v660 = vunpack.c.l.b16 %v640
      %v661 = vunpack.c.l.b16 %v641
      %v662 = vunpack.c.l.b16 %v642
      %v663 = vunpack.c.l.b16 %v643
      %v664 = vunpack.c.l.b16 %v644
      %v665 = vunpack.c.l.b16 %v645
      %v666 = vunpack.c.l.b16 %v646
      %v667 = vunpack.c.l.b16 %v647
      %v668 = vpack.c.b16 %v661, %v660
      %v669 = vpack.c.b16 %v663, %v662
      %v670 = vpack.c.b16 %v665, %v664
      %v671 = vpack.c.b16 %v667, %v666
      %v677 = vsel %vm220, %v651, 0
      %679 = vmatpush.bf16.msra.mxu0 0
      %680 = vmatpush.bf16.msra.mxu0 0
      %681 = vmatpush.bf16.msra.mxu0 0
      %682 = vmatpush.bf16.msra.mxu0 0
      %683 = vmatpush.bf16.msra.mxu0 %v671
      %684 = vmatpush.bf16.msra.mxu0 %v670
      %685 = vmatpush.bf16.msra.mxu0 %v669
      %686 = vmatpush.bf16.msra.mxu0 %v668
      %687 = vmatmul.bf16.gmra.mxu0 %v677
      %v688 = vpop.f32.mrf.mxu0
      %v689 = vadd.f32 0.0, %v688
      %v690 = vpop.f32.mrf.mxu0
      %691 = vdwg.mxu0
      %v692 = vadd.f32 %v637, %v689
      %v693 = vld [vmem:[%s2] sm:$0x1]
      %v695 = vperm.slane %v693, 0
      %v697 = vadd.f32 %v692, %v695
      %v698 = vmax.f32 %v697, 0.0
      %v699 = vpack.c.bf16 %v698, %v698
      %700 = vst [vmem:[%s168] sm:$0x7] %v699
      %p701 = scmp.lt.s32.totalorder %s14, 1
      %s702 = scalar_select %p701, %s14, 1
      %s703 = smul.addr %s702, 4
      %s704 = scalar_lea.vmem %s3, %s703
      // Predicated region
      $region33: #{resnet6_forward.10} parent=31 // pred_check
        %p705 = pneg %p100
      $region34: #{resnet6_forward.10} parent=31 // pred_check_branch
        %707 = sbr.rel (%p705) target = $region36
      $region35: #{resnet6_forward.10} parent=31 // pred_region
        _
      $region36: #{resnet6_forward.10} parent=31 // pred_fallthru
        _
    $region32: #{resnet6_forward.10} parent=5 // pred_fallthru
      _
    %p708 = scmp.le.s32.totalorder 2, %s9
    // Predicated region
    $region37: #{resnet6_forward.10} parent=5 // pred_check
      %p709 = pneg %p708
    $region38: #{resnet6_forward.10} parent=5 // pred_check_branch
      %711 = sbr.rel (%p709) target = $region40
    $region39: #{resnet6_forward.10} parent=5 // pred_region
      %s712 = ssub.s32 %s9, 2
      // Predicated region
      $region41: #{resnet6_forward.10} parent=39 // pred_check
        %p713 = pneg %p106
      $region42: #{resnet6_forward.10} parent=39 // pred_check_branch
        %715 = sbr.rel (%p713) target = $region44
      $region43: #{resnet6_forward.10} parent=39 // pred_region
        %p716 = scmp.lt.s32.totalorder %s15, 1
        %s717 = scalar_select %p716, %s15, 1
        %s718 = smul.addr %s717, 4
        %s719 = scalar_lea.vmem %s3, %s718
      $region44: #{resnet6_forward.10} parent=39 // pred_fallthru
        _
    $region40: #{resnet6_forward.10} parent=5 // pred_fallthru
      _
  $region6: #{resnet6_forward.10} parent=0 // loop_footer
    %s13 = sadd.s32 1, %s9
  $region7: #{resnet6_forward.10} parent=0 // loop_footer_branch
    %8 = sbr.rel target = $region3
  $region8: #{resnet6_forward.10} parent=0 // loop_exit
    _

// kernel: resnet6_forward.11
$region0: #{resnet6_forward.11}
  #allocation0 [shape = 'u32[]', space=smem, size = 0x4, offset = 0x4, fixed_abs, tag = 'smem constant byte address 0x4 - core index']
  #allocation1 [shape = 'u32[72,128]{1,0:T(1,128)}', space=vmem, size = 0x9000, scoped, tag = 'internal scratch']
  %s0 = inlined_call_operand.vmem [shape: bf16[2,24,128], index: 0, kind: input, shape index: {}]
  %s1 = inlined_call_operand.vmem [shape: bf16[9,128,256], index: 1, kind: input, shape index: {}]
  %s2 = inlined_call_operand.vmem [shape: f32[1,256], index: 2, kind: input, shape index: {}]
  %s3 = inlined_call_operand.vmem [shape: bf16[2,2,256], index: 3, kind: output, shape index: {}]
  %s4 = sld [smem:[#allocation0]]
  $region45: #{resnet6_forward.11} parent=0
    _
  %s6 = ssub.s32 1, %s4
  %s7 = scalar_select 0, %s6, %s4
  loop: start=0, step=1, limit=4
  $region2: #{resnet6_forward.11} parent=0 // loop_pre_header
    _
  $region3: #{resnet6_forward.11} parent=0 // loop_header
    %s9 = sphi 0, %s13
    %p10 = scmp.ge.s32.totalorder %s9, 4
    %s19 = sphi 0, %s21
    %s22 = sphi 0, %s19
    %s23 = sphi 0, %s22
    %s39 = sphi 0, %s23
    %s43 = sphi 0, %s43
    %s45 = sphi 0, %s43
    %s46 = sphi 0, %s45
    %s60 = sphi 0, %s46
    %s64 = sphi 0, %s64
    %s66 = sphi 0, %s64
    %s67 = sphi 0, %s66
    %s81 = sphi 0, %s67
    %s87 = sphi 0, %s89
    %s90 = sphi 0, %s87
    %s91 = sphi 0, %s90
    %s107 = sphi 0, %s91
  $region4: #{resnet6_forward.11} parent=0 // loop_header_branch
    %12 = sbr.rel (%p10) target = $region8
  $region5: #{resnet6_forward.11} parent=0 // loop_body
    %s14 = ssub.s32 %s9, 1
    %s15 = ssub.s32 %s9, 2
    %s16 = sadd.s32 %s9, 1
    %s17 = ssub.s32 %s9, %s16
    %p18 = scmp.eq.s32.totalorder %s17, 0
    %s20 = sadd.s32 %s19, 1
    %s21 = scalar_select %p18, %s19, %s20
    %p24 = pneg %p18
    %p25 = scmp.eq.s32.totalorder %s9, 1
    %p26 = por %p24, %p25
    %p27 = scmp.ne.s32.totalorder %s19, %s22
    %p28 = scmp.eq.s32.totalorder %s9, 0
    %p29 = por %p27, %p28
    %p30 = scmp.ne.s32.totalorder %s19, %s22
    %p31 = scmp.eq.s32.totalorder %s14, 1
    %p32 = por %p30, %p31
    %p33 = scmp.ne.s32.totalorder %s22, %s23
    %p34 = scmp.eq.s32.totalorder %s14, 0
    %p35 = por %p33, %p34
    %p36 = scmp.ne.s32.totalorder %s22, %s23
    %p37 = scmp.eq.s32.totalorder %s15, 1
    %p38 = por %p36, %p37
    %p40 = scmp.ne.s32.totalorder %s23, %s39
    %p41 = scmp.eq.s32.totalorder %s15, 0
    %p42 = por %p40, %p41
    %s44 = sadd.s32 %s43, 1
    %p47 = scmp.eq.s32.totalorder %s9, 1
    %p48 = scmp.ne.s32.totalorder %s43, %s45
    %p49 = scmp.eq.s32.totalorder %s9, 0
    %p50 = por %p48, %p49
    %p51 = scmp.ne.s32.totalorder %s43, %s45
    %p52 = scmp.eq.s32.totalorder %s14, 1
    %p53 = por %p51, %p52
    %p54 = scmp.ne.s32.totalorder %s45, %s46
    %p55 = scmp.eq.s32.totalorder %s14, 0
    %p56 = por %p54, %p55
    %p57 = scmp.ne.s32.totalorder %s45, %s46
    %p58 = scmp.eq.s32.totalorder %s15, 1
    %p59 = por %p57, %p58
    %p61 = scmp.ne.s32.totalorder %s46, %s60
    %p62 = scmp.eq.s32.totalorder %s15, 0
    %p63 = por %p61, %p62
    %s65 = sadd.s32 %s64, 1
    %p68 = scmp.eq.s32.totalorder %s9, 1
    %p69 = scmp.ne.s32.totalorder %s64, %s66
    %p70 = scmp.eq.s32.totalorder %s9, 0
    %p71 = por %p69, %p70
    %p72 = scmp.ne.s32.totalorder %s64, %s66
    %p73 = scmp.eq.s32.totalorder %s14, 1
    %p74 = por %p72, %p73
    %p75 = scmp.ne.s32.totalorder %s66, %s67
    %p76 = scmp.eq.s32.totalorder %s14, 0
    %p77 = por %p75, %p76
    %p78 = scmp.ne.s32.totalorder %s66, %s67
    %p79 = scmp.eq.s32.totalorder %s15, 1
    %p80 = por %p78, %p79
    %p82 = scmp.ne.s32.totalorder %s67, %s81
    %p83 = scmp.eq.s32.totalorder %s15, 0
    %p84 = por %p82, %p83
    %s85 = ssub.s32 %s9, %s16
    %p86 = scmp.eq.s32.totalorder %s85, 0
    %s88 = sadd.s32 %s87, 1
    %s89 = scalar_select %p86, %s87, %s88
    %p92 = pneg %p86
    %p93 = scmp.eq.s32.totalorder %s9, 1
    %p94 = por %p92, %p93
    %p95 = scmp.ne.s32.totalorder %s87, %s90
    %p96 = scmp.eq.s32.totalorder %s9, 0
    %p97 = por %p95, %p96
    %p98 = scmp.ne.s32.totalorder %s87, %s90
    %p99 = scmp.eq.s32.totalorder %s14, 1
    %p100 = por %p98, %p99
    %p101 = scmp.ne.s32.totalorder %s90, %s91
    %p102 = scmp.eq.s32.totalorder %s14, 0
    %p103 = por %p101, %p102
    %p104 = scmp.ne.s32.totalorder %s90, %s91
    %p105 = scmp.eq.s32.totalorder %s15, 1
    %p106 = por %p104, %p105
    %p108 = scmp.ne.s32.totalorder %s91, %s107
    %p109 = scmp.eq.s32.totalorder %s15, 0
    %p110 = por %p108, %p109
    %p111 = scmp.le.s32.totalorder 1, %s9
    %p112 = scmp.lt.s32.totalorder %s9, 3
    %p113 = pnand %p111, %p112
    %p114 = pneg %p113
    // Predicated region
    $region9: #{resnet6_forward.11} parent=5 // pred_check
      _
    $region10: #{resnet6_forward.11} parent=5 // pred_check_branch
      %116 = sbr.rel (%p113) target = $region12
    $region11: #{resnet6_forward.11} parent=5 // pred_region
      %s117 = ssub.s32 %s9, 1
      // Predicated region
      $region13: #{resnet6_forward.11} parent=11 // pred_check
        %p118 = pneg %p56
      $region14: #{resnet6_forward.11} parent=11 // pred_check_branch
        %120 = sbr.rel (%p118) target = $region16
      $region15: #{resnet6_forward.11} parent=11 // pred_region
        _
      $region16: #{resnet6_forward.11} parent=11 // pred_fallthru
        _
      // Predicated region
      $region17: #{resnet6_forward.11} parent=11 // pred_check
        %p121 = pneg %p77
      $region18: #{resnet6_forward.11} parent=11 // pred_check_branch
        %123 = sbr.rel (%p121) target = $region20
      $region19: #{resnet6_forward.11} parent=11 // pred_region
        _
      $region20: #{resnet6_forward.11} parent=11 // pred_fallthru
        _
    $region12: #{resnet6_forward.11} parent=5 // pred_fallthru
      _
    %p124 = scmp.lt.s32.totalorder %s9, 2
    // Predicated region
    $region21: #{resnet6_forward.11} parent=5 // pred_check
      %p125 = pneg %p124
    $region22: #{resnet6_forward.11} parent=5 // pred_check_branch
      %127 = sbr.rel (%p125) target = $region24
    $region23: #{resnet6_forward.11} parent=5 // pred_region
      // Predicated region
      $region25: #{resnet6_forward.11} parent=23 // pred_check
        %p128 = pneg %p29
      $region26: #{resnet6_forward.11} parent=23 // pred_check_branch
        %130 = sbr.rel (%p128) target = $region28
      $region27: #{resnet6_forward.11} parent=23 // pred_region
        %p131 = scmp.lt.s32.totalorder %s9, 1
        %s132 = scalar_select %p131, %s9, 1
        %s133 = smul.addr %s132, 3
        %s134 = smul.addr %s133, 4
        %s135 = scalar_lea.vmem %s0, %s134
      $region28: #{resnet6_forward.11} parent=23 // pred_fallthru
        _
    $region24: #{resnet6_forward.11} parent=5 // pred_fallthru
      _
    %p136 = scmp.le.s32.totalorder 1, %s9
    %p137 = scmp.lt.s32.totalorder %s9, 3
    %p138 = pnand %p136, %p137
    %p139 = pneg %p138
    // Predicated region
    $region29: #{resnet6_forward.11} parent=5 // pred_check
      _
    $region30: #{resnet6_forward.11} parent=5 // pred_check_branch
      %141 = sbr.rel (%p138) target = $region32
    $region31: #{resnet6_forward.11} parent=5 // pred_region
      %s142 = ssub.s32 %s9, 1
      %p143 = scmp.lt.s32.totalorder %s14, 1
      %s144 = scalar_select %p143, %s14, 1
      %s145 = smul.addr %s144, 3
      %s146 = smul.addr %s145, 4
      %s147 = scalar_lea.vmem %s0, %s146
      %p148 = pneg %p35
      %p149 = pneg %p32
      %p150 = pneg %p56
      %p151 = pneg %p53
      %p152 = pneg %p77
      %p153 = pneg %p74
      %p154 = pneg %p103
      %p155 = pneg %p100
      %p156 = scmp.lt.s32.totalorder %s14, 1
      %s157 = scalar_select %p156, %s14, 1
      %s158 = smul.addr %s157, 2
      %s159 = scalar_lea.vmem %s3, %s158
      %p160 = scmp.lt.s32.totalorder %s14, 1
      %s161 = scalar_select %p160, %s14, 1
      %s162 = smul.addr %s161, 3
      %s163 = smul.addr %s162, 4
      %s164 = scalar_lea.vmem %s0, %s163
      %p165 = scmp.lt.s32.totalorder %s14, 1
      %s166 = scalar_select %p165, %s14, 1
      %s167 = smul.addr %s166, 2
      %s168 = scalar_lea.vmem %s3, %s167
      %v169 = vld [vmem:[%s164] sm:$0x1]
      %v170 = vld [vmem:[%s1] sm:$0xff]
      %v171 = vld [vmem:[%s1 + $0x8] sm:$0xff]
      %v172 = vld [vmem:[%s1 + $0x10] sm:$0xff]
      %v173 = vld [vmem:[%s1 + $0x18] sm:$0xff]
      %v174 = vld [vmem:[%s1 + $0x20] sm:$0xff]
      %v175 = vld [vmem:[%s1 + $0x28] sm:$0xff]
      %v176 = vld [vmem:[%s1 + $0x30] sm:$0xff]
      %v177 = vld [vmem:[%s1 + $0x38] sm:$0xff]
      %v178 = vld [vmem:[%s1 + $0x40] sm:$0xff]
      %v179 = vld [vmem:[%s1 + $0x48] sm:$0xff]
      %v180 = vld [vmem:[%s1 + $0x50] sm:$0xff]
      %v181 = vld [vmem:[%s1 + $0x58] sm:$0xff]
      %v182 = vld [vmem:[%s1 + $0x60] sm:$0xff]
      %v183 = vld [vmem:[%s1 + $0x68] sm:$0xff]
      %v184 = vld [vmem:[%s1 + $0x70] sm:$0xff]
      %v185 = vld [vmem:[%s1 + $0x78] sm:$0xff]
      %v186 = vld [vmem:[%s164] sm:$0x8]
      %s187 = scalar_lea.vmem %s1, 128
      %v188 = vld [vmem:[%s187] sm:$0xff]
      %v189 = vld [vmem:[%s187 + $0x8] sm:$0xff]
      %v190 = vld [vmem:[%s187 + $0x10] sm:$0xff]
      %v191 = vld [vmem:[%s187 + $0x18] sm:$0xff]
      %v192 = vld [vmem:[%s187 + $0x20] sm:$0xff]
      %v193 = vld [vmem:[%s187 + $0x28] sm:$0xff]
      %v194 = vld [vmem:[%s187 + $0x30] sm:$0xff]
      %v195 = vld [vmem:[%s187 + $0x38] sm:$0xff]
      %v196 = vld [vmem:[%s187 + $0x40] sm:$0xff]
      %v197 = vld [vmem:[%s187 + $0x48] sm:$0xff]
      %v198 = vld [vmem:[%s187 + $0x50] sm:$0xff]
      %v199 = vld [vmem:[%s187 + $0x58] sm:$0xff]
      %v200 = vld [vmem:[%s187 + $0x60] sm:$0xff]
      %v201 = vld [vmem:[%s187 + $0x68] sm:$0xff]
      %v202 = vld [vmem:[%s187 + $0x70] sm:$0xff]
      %v203 = vld [vmem:[%s187 + $0x78] sm:$0xff]
      %v205 = vunpack.c.l.b16 %v186
      %v206 = vpack.c.b16 %v205, %v205
      %v207 = vrot.slane %v206, 3
      %v225 = vunpack.c.l.b16 %v188
      %v226 = vunpack.c.h.b16 %v188
      %v227 = vunpack.c.l.b16 %v189
      %v228 = vunpack.c.h.b16 %v189
      %v229 = vunpack.c.l.b16 %v190
      %v230 = vunpack.c.h.b16 %v190
      %v231 = vunpack.c.l.b16 %v191
      %v232 = vunpack.c.h.b16 %v191
      %v233 = vunpack.c.l.b16 %v192
      %v234 = vunpack.c.h.b16 %v192
      %v235 = vunpack.c.l.b16 %v193
      %v236 = vunpack.c.h.b16 %v193
      %v237 = vunpack.c.l.b16 %v194
      %v238 = vunpack.c.h.b16 %v194
      %v239 = vunpack.c.l.b16 %v195
      %v240 = vunpack.c.h.b16 %v195
      %v241 = vunpack.c.l.b16 %v196
      %v242 = vunpack.c.h.b16 %v196
      %v243 = vunpack.c.l.b16 %v197
      %v244 = vunpack.c.h.b16 %v197
      %v245 = vunpack.c.l.b16 %v198
      %v246 = vunpack.c.h.b16 %v198
      %v247 = vunpack.c.l.b16 %v199
      %v248 = vunpack.c.h.b16 %v199
      %v249 = vunpack.c.l.b16 %v200
      %v250 = vunpack.c.h.b16 %v200
      %v251 = vunpack.c.l.b16 %v201
      %v252 = vunpack.c.h.b16 %v201
      %v253 = vunpack.c.l.b16 %v202
      %v254 = vunpack.c.h.b16 %v202
      %v255 = vunpack.c.l.b16 %v203
      %v256 = vunpack.c.h.b16 %v203
      %v257 = vpack.c.b16 %v227, %v225
      %v258 = vpack.c.b16 %v228, %v226
      %v259 = vpack.c.b16 %v231, %v229
      %v260 = vpack.c.b16 %v232, %v230
      %v261 = vpack.c.b16 %v235, %v233
      %v262 = vpack.c.b16 %v236, %v234
      %v263 = vpack.c.b16 %v239, %v237
      %v264 = vpack.c.b16 %v240, %v238
      %v265 = vpack.c.b16 %v243, %v241
      %v266 = vpack.c.b16 %v244, %v242
      %v267 = vpack.c.b16 %v247, %v245
      %v268 = vpack.c.b16 %v248, %v246
      %v269 = vpack.c.b16 %v251, %v249
      %v270 = vpack.c.b16 %v252, %v250
      %v271 = vpack.c.b16 %v255, %v253
      %v272 = vpack.c.b16 %v256, %v254
      %289 = vmatpush.bf16.msra.mxu0 %v271
      %290 = vmatpush.bf16.msra.mxu0 %v269
      %291 = vmatpush.bf16.msra.mxu0 %v267
      %292 = vmatpush.bf16.msra.mxu0 %v265
      %293 = vmatpush.bf16.msra.mxu0 %v263
      %294 = vmatpush.bf16.msra.mxu0 %v261
      %295 = vmatpush.bf16.msra.mxu0 %v259
      %296 = vmatpush.bf16.msra.mxu0 %v257
      %297 = vmatmul.bf16.gmra.mxu0 %v207
      %v298 = vpop.f32.mrf.mxu0
      %v299 = vadd.f32 0.0, %v298
      %v300 = vpop.f32.mrf.mxu0
      %301 = vdwg.mxu0
      %302 = vmatpush.bf16.msra.mxu0 %v272
      %303 = vmatpush.bf16.msra.mxu0 %v270
      %304 = vmatpush.bf16.msra.mxu0 %v268
      %305 = vmatpush.bf16.msra.mxu0 %v266
      %306 = vmatpush.bf16.msra.mxu0 %v264
      %307 = vmatpush.bf16.msra.mxu0 %v262
      %308 = vmatpush.bf16.msra.mxu0 %v260
      %309 = vmatpush.bf16.msra.mxu0 %v258
      %310 = vmatmul.bf16.gmra.mxu0 %v207
      %v311 = vpop.f32.mrf.mxu0
      %v312 = vadd.f32 0.0, %v311
      %v313 = vpop.f32.mrf.mxu0
      %314 = vdwg.mxu0
      %v331 = vunpack.c.l.b16 %v170
      %v332 = vunpack.c.h.b16 %v170
      %v333 = vunpack.c.l.b16 %v171
      %v334 = vunpack.c.h.b16 %v171
      %v335 = vunpack.c.l.b16 %v172
      %v336 = vunpack.c.h.b16 %v172
      %v337 = vunpack.c.l.b16 %v173
      %v338 = vunpack.c.h.b16 %v173
      %v339 = vunpack.c.l.b16 %v174
      %v340 = vunpack.c.h.b16 %v174
      %v341 = vunpack.c.l.b16 %v175
      %v342 = vunpack.c.h.b16 %v175
      %v343 = vunpack.c.l.b16 %v176
      %v344 = vunpack.c.h.b16 %v176
      %v345 = vunpack.c.l.b16 %v177
      %v346 = vunpack.c.h.b16 %v177
      %v347 = vunpack.c.l.b16 %v178
      %v348 = vunpack.c.h.b16 %v178
      %v349 = vunpack.c.l.b16 %v179
      %v350 = vunpack.c.h.b16 %v179
      %v351 = vunpack.c.l.b16 %v180
      %v352 = vunpack.c.h.b16 %v180
      %v353 = vunpack.c.l.b16 %v181
      %v354 = vunpack.c.h.b16 %v181
      %v355 = vunpack.c.l.b16 %v182
      %v356 = vunpack.c.h.b16 %v182
      %v357 = vunpack.c.l.b16 %v183
      %v358 = vunpack.c.h.b16 %v183
      %v359 = vunpack.c.l.b16 %v184
      %v360 = vunpack.c.h.b16 %v184
      %v361 = vunpack.c.l.b16 %v185
      %v362 = vunpack.c.h.b16 %v185
      %v363 = vpack.c.b16 %v333, %v331
      %v364 = vpack.c.b16 %v334, %v332
      %v365 = vpack.c.b16 %v337, %v335
      %v366 = vpack.c.b16 %v338, %v336
      %v367 = vpack.c.b16 %v341, %v339
      %v368 = vpack.c.b16 %v342, %v340
      %v369 = vpack.c.b16 %v345, %v343
      %v370 = vpack.c.b16 %v346, %v344
      %v371 = vpack.c.b16 %v349, %v347
      %v372 = vpack.c.b16 %v350, %v348
      %v373 = vpack.c.b16 %v353, %v351
      %v374 = vpack.c.b16 %v354, %v352
      %v375 = vpack.c.b16 %v357, %v355
      %v376 = vpack.c.b16 %v358, %v356
      %v377 = vpack.c.b16 %v361, %v359
      %v378 = vpack.c.b16 %v362, %v360
      %395 = vmatpush.bf16.msra.mxu0 %v377
      %396 = vmatpush.bf16.msra.mxu0 %v375
      %397 = vmatpush.bf16.msra.mxu0 %v373
      %398 = vmatpush.bf16.msra.mxu0 %v371
      %399 = vmatpush.bf16.msra.mxu0 %v369
      %400 = vmatpush.bf16.msra.mxu0 %v367
      %401 = vmatpush.bf16.msra.mxu0 %v365
      %402 = vmatpush.bf16.msra.mxu0 %v363
      %403 = vmatmul.bf16.gmra.mxu0 %v169
      %v404 = vpop.f32.mrf.mxu0
      %v405 = vadd.f32 %v299, %v404
      %v406 = vpop.f32.mrf.mxu0
      %407 = vdwg.mxu0
      %408 = vmatpush.bf16.msra.mxu0 %v378
      %409 = vmatpush.bf16.msra.mxu0 %v376
      %410 = vmatpush.bf16.msra.mxu0 %v374
      %411 = vmatpush.bf16.msra.mxu0 %v372
      %412 = vmatpush.bf16.msra.mxu0 %v370
      %413 = vmatpush.bf16.msra.mxu0 %v368
      %414 = vmatpush.bf16.msra.mxu0 %v366
      %415 = vmatpush.bf16.msra.mxu0 %v364
      %416 = vmatmul.bf16.gmra.mxu0 %v169
      %v417 = vpop.f32.mrf.mxu0
      %v418 = vadd.f32 %v312, %v417
      %v419 = vpop.f32.mrf.mxu0
      %420 = vdwg.mxu0
      %v421 = vld [vmem:[%s164] sm:$0x3]
      %s422 = scalar_lea.vmem %s1, 256
      %v423 = vld [vmem:[%s422] sm:$0xff]
      %v424 = vld [vmem:[%s422 + $0x8] sm:$0xff]
      %v425 = vld [vmem:[%s422 + $0x10] sm:$0xff]
      %v426 = vld [vmem:[%s422 + $0x18] sm:$0xff]
      %v427 = vld [vmem:[%s422 + $0x20] sm:$0xff]
      %v428 = vld [vmem:[%s422 + $0x28] sm:$0xff]
      %v429 = vld [vmem:[%s422 + $0x30] sm:$0xff]
      %v430 = vld [vmem:[%s422 + $0x38] sm:$0xff]
      %v431 = vld [vmem:[%s422 + $0x40] sm:$0xff]
      %v432 = vld [vmem:[%s422 + $0x48] sm:$0xff]
      %v433 = vld [vmem:[%s422 + $0x50] sm:$0xff]
      %v434 = vld [vmem:[%s422 + $0x58] sm:$0xff]
      %v435 = vld [vmem:[%s422 + $0x60] sm:$0xff]
      %v436 = vld [vmem:[%s422 + $0x68] sm:$0xff]
      %v437 = vld [vmem:[%s422 + $0x70] sm:$0xff]
      %v438 = vld [vmem:[%s422 + $0x78] sm:$0xff]
      %v440 = vunpack.c.l.b16 %v421
      %v441 = vpack.c.b16 %v440, %v440
      %v443 = vshrl.u32 %v441, 16
      %v445 = vshll.u32 %v441, 16
      %v447 = vrot.slane %v445, 1
      %v448 = vor.u32 %v443, %v447
      %v466 = vunpack.c.l.b16 %v423
      %v467 = vunpack.c.h.b16 %v423
      %v468 = vunpack.c.l.b16 %v424
      %v469 = vunpack.c.h.b16 %v424
      %v470 = vunpack.c.l.b16 %v425
      %v471 = vunpack.c.h.b16 %v425
      %v472 = vunpack.c.l.b16 %v426
      %v473 = vunpack.c.h.b16 %v426
      %v474 = vunpack.c.l.b16 %v427
      %v475 = vunpack.c.h.b16 %v427
      %v476 = vunpack.c.l.b16 %v428
      %v477 = vunpack.c.h.b16 %v428
      %v478 = vunpack.c.l.b16 %v429
      %v479 = vunpack.c.h.b16 %v429
      %v480 = vunpack.c.l.b16 %v430
      %v481 = vunpack.c.h.b16 %v430
      %v482 = vunpack.c.l.b16 %v431
      %v483 = vunpack.c.h.b16 %v431
      %v484 = vunpack.c.l.b16 %v432
      %v485 = vunpack.c.h.b16 %v432
      %v486 = vunpack.c.l.b16 %v433
      %v487 = vunpack.c.h.b16 %v433
      %v488 = vunpack.c.l.b16 %v434
      %v489 = vunpack.c.h.b16 %v434
      %v490 = vunpack.c.l.b16 %v435
      %v491 = vunpack.c.h.b16 %v435
      %v492 = vunpack.c.l.b16 %v436
      %v493 = vunpack.c.h.b16 %v436
      %v494 = vunpack.c.l.b16 %v437
      %v495 = vunpack.c.h.b16 %v437
      %v496 = vunpack.c.l.b16 %v438
      %v497 = vunpack.c.h.b16 %v438
      %v498 = vpack.c.b16 %v468, %v466
      %v499 = vpack.c.b16 %v469, %v467
      %v500 = vpack.c.b16 %v472, %v470
      %v501 = vpack.c.b16 %v473, %v471
      %v502 = vpack.c.b16 %v476, %v474
      %v503 = vpack.c.b16 %v477, %v475
      %v504 = vpack.c.b16 %v480, %v478
      %v505 = vpack.c.b16 %v481, %v479
      %v506 = vpack.c.b16 %v484, %v482
      %v507 = vpack.c.b16 %v485, %v483
      %v508 = vpack.c.b16 %v488, %v486
      %v509 = vpack.c.b16 %v489, %v487
      %v510 = vpack.c.b16 %v492, %v490
      %v511 = vpack.c.b16 %v493, %v491
      %v512 = vpack.c.b16 %v496, %v494
      %v513 = vpack.c.b16 %v497, %v495
      %530 = vmatpush.bf16.msra.mxu0 %v512
      %531 = vmatpush.bf16.msra.mxu0 %v510
      %532 = vmatpush.bf16.msra.mxu0 %v508
      %533 = vmatpush.bf16.msra.mxu0 %v506
      %534 = vmatpush.bf16.msra.mxu0 %v504
      %535 = vmatpush.bf16.msra.mxu0 %v502
      %536 = vmatpush.bf16.msra.mxu0 %v500
      %537 = vmatpush.bf16.msra.mxu0 %v498
      %538 = vmatmul.bf16.gmra.mxu0 %v448
      %v539 = vpop.f32.mrf.mxu0
      %v540 = vadd.f32 0.0, %v539
      %v541 = vpop.f32.mrf.mxu0
      %542 = vdwg.mxu0
      %543 = vmatpush.bf16.msra.mxu0 %v513
      %544 = vmatpush.bf16.msra.mxu0 %v511
      %545 = vmatpush.bf16.msra.mxu0 %v509
      %546 = vmatpush.bf16.msra.mxu0 %v507
      %547 = vmatpush.bf16.msra.mxu0 %v505
      %548 = vmatpush.bf16.msra.mxu0 %v503
      %549 = vmatpush.bf16.msra.mxu0 %v501
      %550 = vmatpush.bf16.msra.mxu0 %v499
      %551 = vmatmul.bf16.gmra.mxu0 %v448
      %v552 = vpop.f32.mrf.mxu0
      %v553 = vadd.f32 0.0, %v552
      %v554 = vpop.f32.mrf.mxu0
      %555 = vdwg.mxu0
      %v556 = vadd.f32 %v405, %v540
      %v557 = vadd.f32 %v418, %v553
      %v558 = vld [vmem:[%s164 + $0x4] sm:$0x4]
      %s559 = scalar_lea.vmem %s1, 384
      %v560 = vld [vmem:[%s559] sm:$0xff]
      %v561 = vld [vmem:[%s559 + $0x8] sm:$0xff]
      %v562 = vld [vmem:[%s559 + $0x10] sm:$0xff]
      %v563 = vld [vmem:[%s559 + $0x18] sm:$0xff]
      %v564 = vld [vmem:[%s559 + $0x20] sm:$0xff]
      %v565 = vld [vmem:[%s559 + $0x28] sm:$0xff]
      %v566 = vld [vmem:[%s559 + $0x30] sm:$0xff]
      %v567 = vld [vmem:[%s559 + $0x38] sm:$0xff]
      %v568 = vld [vmem:[%s559 + $0x40] sm:$0xff]
      %v569 = vld [vmem:[%s559 + $0x48] sm:$0xff]
      %v570 = vld [vmem:[%s559 + $0x50] sm:$0xff]
      %v571 = vld [vmem:[%s559 + $0x58] sm:$0xff]
      %v572 = vld [vmem:[%s559 + $0x60] sm:$0xff]
      %v573 = vld [vmem:[%s559 + $0x68] sm:$0xff]
      %v574 = vld [vmem:[%s559 + $0x70] sm:$0xff]
      %v575 = vld [vmem:[%s559 + $0x78] sm:$0xff]
      %v577 = vunpack.c.l.b16 %v558
      %v578 = vpack.c.b16 %v577, %v577
      %v579 = vrot.slane %v578, 2
      %v597 = vunpack.c.l.b16 %v560
      %v598 = vunpack.c.h.b16 %v560
      %v599 = vunpack.c.l.b16 %v561
      %v600 = vunpack.c.h.b16 %v561
      %v601 = vunpack.c.l.b16 %v562
      %v602 = vunpack.c.h.b16 %v562
      %v603 = vunpack.c.l.b16 %v563
      %v604 = vunpack.c.h.b16 %v563
      %v605 = vunpack.c.l.b16 %v564
      %v606 = vunpack.c.h.b16 %v564
      %v607 = vunpack.c.l.b16 %v565
      %v608 = vunpack.c.h.b16 %v565
      %v609 = vunpack.c.l.b16 %v566
      %v610 = vunpack.c.h.b16 %v566
      %v611 = vunpack.c.l.b16 %v567
      %v612 = vunpack.c.h.b16 %v567
      %v613 = vunpack.c.l.b16 %v568
      %v614 = vunpack.c.h.b16 %v568
      %v615 = vunpack.c.l.b16 %v569
      %v616 = vunpack.c.h.b16 %v569
      %v617 = vunpack.c.l.b16 %v570
      %v618 = vunpack.c.h.b16 %v570
      %v619 = vunpack.c.l.b16 %v571
      %v620 = vunpack.c.h.b16 %v571
      %v621 = vunpack.c.l.b16 %v572
      %v622 = vunpack.c.h.b16 %v572
      %v623 = vunpack.c.l.b16 %v573
      %v624 = vunpack.c.h.b16 %v573
      %v625 = vunpack.c.l.b16 %v574
      %v626 = vunpack.c.h.b16 %v574
      %v627 = vunpack.c.l.b16 %v575
      %v628 = vunpack.c.h.b16 %v575
      %v629 = vpack.c.b16 %v599, %v597
      %v630 = vpack.c.b16 %v600, %v598
      %v631 = vpack.c.b16 %v603, %v601
      %v632 = vpack.c.b16 %v604, %v602
      %v633 = vpack.c.b16 %v607, %v605
      %v634 = vpack.c.b16 %v608, %v606
      %v635 = vpack.c.b16 %v611, %v609
      %v636 = vpack.c.b16 %v612, %v610
      %v637 = vpack.c.b16 %v615, %v613
      %v638 = vpack.c.b16 %v616, %v614
      %v639 = vpack.c.b16 %v619, %v617
      %v640 = vpack.c.b16 %v620, %v618
      %v641 = vpack.c.b16 %v623, %v621
      %v642 = vpack.c.b16 %v624, %v622
      %v643 = vpack.c.b16 %v627, %v625
      %v644 = vpack.c.b16 %v628, %v626
      %661 = vmatpush.bf16.msra.mxu0 %v643
      %662 = vmatpush.bf16.msra.mxu0 %v641
      %663 = vmatpush.bf16.msra.mxu0 %v639
      %664 = vmatpush.bf16.msra.mxu0 %v637
      %665 = vmatpush.bf16.msra.mxu0 %v635
      %666 = vmatpush.bf16.msra.mxu0 %v633
      %667 = vmatpush.bf16.msra.mxu0 %v631
      %668 = vmatpush.bf16.msra.mxu0 %v629
      %669 = vmatmul.bf16.gmra.mxu0 %v579
      %v670 = vpop.f32.mrf.mxu0
      %v671 = vadd.f32 0.0, %v670
      %v672 = vpop.f32.mrf.mxu0
      %673 = vdwg.mxu0
      %674 = vmatpush.bf16.msra.mxu0 %v644
      %675 = vmatpush.bf16.msra.mxu0 %v642
      %676 = vmatpush.bf16.msra.mxu0 %v640
      %677 = vmatpush.bf16.msra.mxu0 %v638
      %678 = vmatpush.bf16.msra.mxu0 %v636
      %679 = vmatpush.bf16.msra.mxu0 %v634
      %680 = vmatpush.bf16.msra.mxu0 %v632
      %681 = vmatpush.bf16.msra.mxu0 %v630
      %682 = vmatmul.bf16.gmra.mxu0 %v579
      %v683 = vpop.f32.mrf.mxu0
      %v684 = vadd.f32 0.0, %v683
      %v685 = vpop.f32.mrf.mxu0
      %686 = vdwg.mxu0
      %v687 = vadd.f32 %v556, %v671
      %v688 = vadd.f32 %v557, %v684
      %v689 = vld [vmem:[%s164 + $0x8] sm:$0x2]
      %s690 = scalar_lea.vmem %s1, 512
      %v691 = vld [vmem:[%s690] sm:$0xff]
      %v692 = vld [vmem:[%s690 + $0x8] sm:$0xff]
      %v693 = vld [vmem:[%s690 + $0x10] sm:$0xff]
      %v694 = vld [vmem:[%s690 + $0x18] sm:$0xff]
      %v695 = vld [vmem:[%s690 + $0x20] sm:$0xff]
      %v696 = vld [vmem:[%s690 + $0x28] sm:$0xff]
      %v697 = vld [vmem:[%s690 + $0x30] sm:$0xff]
      %v698 = vld [vmem:[%s690 + $0x38] sm:$0xff]
      %v699 = vld [vmem:[%s690 + $0x40] sm:$0xff]
      %v700 = vld [vmem:[%s690 + $0x48] sm:$0xff]
      %v701 = vld [vmem:[%s690 + $0x50] sm:$0xff]
      %v702 = vld [vmem:[%s690 + $0x58] sm:$0xff]
      %v703 = vld [vmem:[%s690 + $0x60] sm:$0xff]
      %v704 = vld [vmem:[%s690 + $0x68] sm:$0xff]
      %v705 = vld [vmem:[%s690 + $0x70] sm:$0xff]
      %v706 = vld [vmem:[%s690 + $0x78] sm:$0xff]
      %v708 = vunpack.c.l.b16 %v689
      %v709 = vpack.c.b16 %v708, %v708
      %v710 = vrot.slane %v709, 1
      %v728 = vunpack.c.l.b16 %v691
      %v729 = vunpack.c.h.b16 %v691
      %v730 = vunpack.c.l.b16 %v692
      %v731 = vunpack.c.h.b16 %v692
      %v732 = vunpack.c.l.b16 %v693
      %v733 = vunpack.c.h.b16 %v693
      %v734 = vunpack.c.l.b16 %v694
      %v735 = vunpack.c.h.b16 %v694
      %v736 = vunpack.c.l.b16 %v695
      %v737 = vunpack.c.h.b16 %v695
      %v738 = vunpack.c.l.b16 %v696
      %v739 = vunpack.c.h.b16 %v696
      %v740 = vunpack.c.l.b16 %v697
      %v741 = vunpack.c.h.b16 %v697
      %v742 = vunpack.c.l.b16 %v698
      %v743 = vunpack.c.h.b16 %v698
      %v744 = vunpack.c.l.b16 %v699
      %v745 = vunpack.c.h.b16 %v699
      %v746 = vunpack.c.l.b16 %v700
      %v747 = vunpack.c.h.b16 %v700
      %v748 = vunpack.c.l.b16 %v701
      %v749 = vunpack.c.h.b16 %v701
      %v750 = vunpack.c.l.b16 %v702
      %v751 = vunpack.c.h.b16 %v702
      %v752 = vunpack.c.l.b16 %v703
      %v753 = vunpack.c.h.b16 %v703
      %v754 = vunpack.c.l.b16 %v704
      %v755 = vunpack.c.h.b16 %v704
      %v756 = vunpack.c.l.b16 %v705
      %v757 = vunpack.c.h.b16 %v705
      %v758 = vunpack.c.l.b16 %v706
      %v759 = vunpack.c.h.b16 %v706
      %v760 = vpack.c.b16 %v730, %v728
      %v761 = vpack.c.b16 %v731, %v729
      %v762 = vpack.c.b16 %v734, %v732
      %v763 = vpack.c.b16 %v735, %v733
      %v764 = vpack.c.b16 %v738, %v736
      %v765 = vpack.c.b16 %v739, %v737
      %v766 = vpack.c.b16 %v742, %v740
      %v767 = vpack.c.b16 %v743, %v741
      %v768 = vpack.c.b16 %v746, %v744
      %v769 = vpack.c.b16 %v747, %v745
      %v770 = vpack.c.b16 %v750, %v748
      %v771 = vpack.c.b16 %v751, %v749
      %v772 = vpack.c.b16 %v754, %v752
      %v773 = vpack.c.b16 %v755, %v753
      %v774 = vpack.c.b16 %v758, %v756
      %v775 = vpack.c.b16 %v759, %v757
      %792 = vmatpush.bf16.msra.mxu0 %v774
      %793 = vmatpush.bf16.msra.mxu0 %v772
      %794 = vmatpush.bf16.msra.mxu0 %v770
      %795 = vmatpush.bf16.msra.mxu0 %v768
      %796 = vmatpush.bf16.msra.mxu0 %v766
      %797 = vmatpush.bf16.msra.mxu0 %v764
      %798 = vmatpush.bf16.msra.mxu0 %v762
      %799 = vmatpush.bf16.msra.mxu0 %v760
      %800 = vmatmul.bf16.gmra.mxu0 %v710
      %v801 = vpop.f32.mrf.mxu0
      %v802 = vadd.f32 0.0, %v801
      %v803 = vpop.f32.mrf.mxu0
      %804 = vdwg.mxu0
      %805 = vmatpush.bf16.msra.mxu0 %v775
      %806 = vmatpush.bf16.msra.mxu0 %v773
      %807 = vmatpush.bf16.msra.mxu0 %v771
      %808 = vmatpush.bf16.msra.mxu0 %v769
      %809 = vmatpush.bf16.msra.mxu0 %v767
      %810 = vmatpush.bf16.msra.mxu0 %v765
      %811 = vmatpush.bf16.msra.mxu0 %v763
      %812 = vmatpush.bf16.msra.mxu0 %v761
      %813 = vmatmul.bf16.gmra.mxu0 %v710
      %v814 = vpop.f32.mrf.mxu0
      %v815 = vadd.f32 0.0, %v814
      %v816 = vpop.f32.mrf.mxu0
      %817 = vdwg.mxu0
      %v818 = vadd.f32 %v687, %v802
      %v819 = vadd.f32 %v688, %v815
      %v820 = vld [vmem:[%s164 + $0x4] sm:$0xc]
      %s821 = scalar_lea.vmem %s1, 640
      %v822 = vld [vmem:[%s821] sm:$0xff]
      %v823 = vld [vmem:[%s821 + $0x8] sm:$0xff]
      %v824 = vld [vmem:[%s821 + $0x10] sm:$0xff]
      %v825 = vld [vmem:[%s821 + $0x18] sm:$0xff]
      %v826 = vld [vmem:[%s821 + $0x20] sm:$0xff]
      %v827 = vld [vmem:[%s821 + $0x28] sm:$0xff]
      %v828 = vld [vmem:[%s821 + $0x30] sm:$0xff]
      %v829 = vld [vmem:[%s821 + $0x38] sm:$0xff]
      %v830 = vld [vmem:[%s821 + $0x40] sm:$0xff]
      %v831 = vld [vmem:[%s821 + $0x48] sm:$0xff]
      %v832 = vld [vmem:[%s821 + $0x50] sm:$0xff]
      %v833 = vld [vmem:[%s821 + $0x58] sm:$0xff]
      %v834 = vld [vmem:[%s821 + $0x60] sm:$0xff]
      %v835 = vld [vmem:[%s821 + $0x68] sm:$0xff]
      %v836 = vld [vmem:[%s821 + $0x70] sm:$0xff]
      %v837 = vld [vmem:[%s821 + $0x78] sm:$0xff]
      %v839 = vunpack.c.l.b16 %v820
      %v840 = vpack.c.b16 %v839, %v839
      %v842 = vshrl.u32 %v840, 16
      %v844 = vrot.slane %v842, 2
      %v845 = vshll.u32 %v840, 16
      %v847 = vrot.slane %v845, 3
      %v848 = vor.u32 %v844, %v847
      %v866 = vunpack.c.l.b16 %v822
      %v867 = vunpack.c.h.b16 %v822
      %v868 = vunpack.c.l.b16 %v823
      %v869 = vunpack.c.h.b16 %v823
      %v870 = vunpack.c.l.b16 %v824
      %v871 = vunpack.c.h.b16 %v824
      %v872 = vunpack.c.l.b16 %v825
      %v873 = vunpack.c.h.b16 %v825
      %v874 = vunpack.c.l.b16 %v826
      %v875 = vunpack.c.h.b16 %v826
      %v876 = vunpack.c.l.b16 %v827
      %v877 = vunpack.c.h.b16 %v827
      %v878 = vunpack.c.l.b16 %v828
      %v879 = vunpack.c.h.b16 %v828
      %v880 = vunpack.c.l.b16 %v829
      %v881 = vunpack.c.h.b16 %v829
      %v882 = vunpack.c.l.b16 %v830
      %v883 = vunpack.c.h.b16 %v830
      %v884 = vunpack.c.l.b16 %v831
      %v885 = vunpack.c.h.b16 %v831
      %v886 = vunpack.c.l.b16 %v832
      %v887 = vunpack.c.h.b16 %v832
      %v888 = vunpack.c.l.b16 %v833
      %v889 = vunpack.c.h.b16 %v833
      %v890 = vunpack.c.l.b16 %v834
      %v891 = vunpack.c.h.b16 %v834
      %v892 = vunpack.c.l.b16 %v835
      %v893 = vunpack.c.h.b16 %v835
      %v894 = vunpack.c.l.b16 %v836
      %v895 = vunpack.c.h.b16 %v836
      %v896 = vunpack.c.l.b16 %v837
      %v897 = vunpack.c.h.b16 %v837
      %v898 = vpack.c.b16 %v868, %v866
      %v899 = vpack.c.b16 %v869, %v867
      %v900 = vpack.c.b16 %v872, %v870
      %v901 = vpack.c.b16 %v873, %v871
      %v902 = vpack.c.b16 %v876, %v874
      %v903 = vpack.c.b16 %v877, %v875
      %v904 = vpack.c.b16 %v880, %v878
      %v905 = vpack.c.b16 %v881, %v879
      %v906 = vpack.c.b16 %v884, %v882
      %v907 = vpack.c.b16 %v885, %v883
      %v908 = vpack.c.b16 %v888, %v886
      %v909 = vpack.c.b16 %v889, %v887
      %v910 = vpack.c.b16 %v892, %v890
      %v911 = vpack.c.b16 %v893, %v891
      %v912 = vpack.c.b16 %v896, %v894
      %v913 = vpack.c.b16 %v897, %v895
      %930 = vmatpush.bf16.msra.mxu0 %v912
      %931 = vmatpush.bf16.msra.mxu0 %v910
      %932 = vmatpush.bf16.msra.mxu0 %v908
      %933 = vmatpush.bf16.msra.mxu0 %v906
      %934 = vmatpush.bf16.msra.mxu0 %v904
      %935 = vmatpush.bf16.msra.mxu0 %v902
      %936 = vmatpush.bf16.msra.mxu0 %v900
      %937 = vmatpush.bf16.msra.mxu0 %v898
      %938 = vmatmul.bf16.gmra.mxu0 %v848
      %v939 = vpop.f32.mrf.mxu0
      %v940 = vadd.f32 0.0, %v939
      %v941 = vpop.f32.mrf.mxu0
      %942 = vdwg.mxu0
      %943 = vmatpush.bf16.msra.mxu0 %v913
      %944 = vmatpush.bf16.msra.mxu0 %v911
      %945 = vmatpush.bf16.msra.mxu0 %v909
      %946 = vmatpush.bf16.msra.mxu0 %v907
      %947 = vmatpush.bf16.msra.mxu0 %v905
      %948 = vmatpush.bf16.msra.mxu0 %v903
      %949 = vmatpush.bf16.msra.mxu0 %v901
      %950 = vmatpush.bf16.msra.mxu0 %v899
      %951 = vmatmul.bf16.gmra.mxu0 %v848
      %v952 = vpop.f32.mrf.mxu0
      %v953 = vadd.f32 0.0, %v952
      %v954 = vpop.f32.mrf.mxu0
      %955 = vdwg.mxu0
      %v956 = vadd.f32 %v818, %v940
      %v957 = vadd.f32 %v819, %v953
      %v958 = vld [vmem:[%s164] sm:$0x2]
      %s959 = scalar_lea.vmem %s1, 768
      %v960 = vld [vmem:[%s959] sm:$0xff]
      %v961 = vld [vmem:[%s959 + $0x8] sm:$0xff]
      %v962 = vld [vmem:[%s959 + $0x10] sm:$0xff]
      %v963 = vld [vmem:[%s959 + $0x18] sm:$0xff]
      %v964 = vld [vmem:[%s959 + $0x20] sm:$0xff]
      %v965 = vld [vmem:[%s959 + $0x28] sm:$0xff]
      %v966 = vld [vmem:[%s959 + $0x30] sm:$0xff]
      %v967 = vld [vmem:[%s959 + $0x38] sm:$0xff]
      %v968 = vld [vmem:[%s959 + $0x40] sm:$0xff]
      %v969 = vld [vmem:[%s959 + $0x48] sm:$0xff]
      %v970 = vld [vmem:[%s959 + $0x50] sm:$0xff]
      %v971 = vld [vmem:[%s959 + $0x58] sm:$0xff]
      %v972 = vld [vmem:[%s959 + $0x60] sm:$0xff]
      %v973 = vld [vmem:[%s959 + $0x68] sm:$0xff]
      %v974 = vld [vmem:[%s959 + $0x70] sm:$0xff]
      %v975 = vld [vmem:[%s959 + $0x78] sm:$0xff]
      %v977 = vunpack.c.l.b16 %v958
      %v978 = vpack.c.b16 %v977, %v977
      %v979 = vrot.slane %v978, 1
      %v997 = vunpack.c.l.b16 %v960
      %v998 = vunpack.c.h.b16 %v960
      %v999 = vunpack.c.l.b16 %v961
      %v1000 = vunpack.c.h.b16 %v961
      %v1001 = vunpack.c.l.b16 %v962
      %v1002 = vunpack.c.h.b16 %v962
      %v1003 = vunpack.c.l.b16 %v963
      %v1004 = vunpack.c.h.b16 %v963
      %v1005 = vunpack.c.l.b16 %v964
      %v1006 = vunpack.c.h.b16 %v964
      %v1007 = vunpack.c.l.b16 %v965
      %v1008 = vunpack.c.h.b16 %v965
      %v1009 = vunpack.c.l.b16 %v966
      %v1010 = vunpack.c.h.b16 %v966
      %v1011 = vunpack.c.l.b16 %v967
      %v1012 = vunpack.c.h.b16 %v967
      %v1013 = vunpack.c.l.b16 %v968
      %v1014 = vunpack.c.h.b16 %v968
      %v1015 = vunpack.c.l.b16 %v969
      %v1016 = vunpack.c.h.b16 %v969
      %v1017 = vunpack.c.l.b16 %v970
      %v1018 = vunpack.c.h.b16 %v970
      %v1019 = vunpack.c.l.b16 %v971
      %v1020 = vunpack.c.h.b16 %v971
      %v1021 = vunpack.c.l.b16 %v972
      %v1022 = vunpack.c.h.b16 %v972
      %v1023 = vunpack.c.l.b16 %v973
      %v1024 = vunpack.c.h.b16 %v973
      %v1025 = vunpack.c.l.b16 %v974
      %v1026 = vunpack.c.h.b16 %v974
      %v1027 = vunpack.c.l.b16 %v975
      %v1028 = vunpack.c.h.b16 %v975
      %v1029 = vpack.c.b16 %v999, %v997
      %v1030 = vpack.c.b16 %v1000, %v998
      %v1031 = vpack.c.b16 %v1003, %v1001
      %v1032 = vpack.c.b16 %v1004, %v1002
      %v1033 = vpack.c.b16 %v1007, %v1005
      %v1034 = vpack.c.b16 %v1008, %v1006
      %v1035 = vpack.c.b16 %v1011, %v1009
      %v1036 = vpack.c.b16 %v1012, %v1010
      %v1037 = vpack.c.b16 %v1015, %v1013
      %v1038 = vpack.c.b16 %v1016, %v1014
      %v1039 = vpack.c.b16 %v1019, %v1017
      %v1040 = vpack.c.b16 %v1020, %v1018
      %v1041 = vpack.c.b16 %v1023, %v1021
      %v1042 = vpack.c.b16 %v1024, %v1022
      %v1043 = vpack.c.b16 %v1027, %v1025
      %v1044 = vpack.c.b16 %v1028, %v1026
      %1061 = vmatpush.bf16.msra.mxu0 %v1043
      %1062 = vmatpush.bf16.msra.mxu0 %v1041
      %1063 = vmatpush.bf16.msra.mxu0 %v1039
      %1064 = vmatpush.bf16.msra.mxu0 %v1037
      %1065 = vmatpush.bf16.msra.mxu0 %v1035
      %1066 = vmatpush.bf16.msra.mxu0 %v1033
      %1067 = vmatpush.bf16.msra.mxu0 %v1031
      %1068 = vmatpush.bf16.msra.mxu0 %v1029
      %1069 = vmatmul.bf16.gmra.mxu0 %v979
      %v1070 = vpop.f32.mrf.mxu0
      %v1071 = vadd.f32 0.0, %v1070
      %v1072 = vpop.f32.mrf.mxu0
      %1073 = vdwg.mxu0
      %1074 = vmatpush.bf16.msra.mxu0 %v1044
      %1075 = vmatpush.bf16.msra.mxu0 %v1042
      %1076 = vmatpush.bf16.msra.mxu0 %v1040
      %1077 = vmatpush.bf16.msra.mxu0 %v1038
      %1078 = vmatpush.bf16.msra.mxu0 %v1036
      %1079 = vmatpush.bf16.msra.mxu0 %v1034
      %1080 = vmatpush.bf16.msra.mxu0 %v1032
      %1081 = vmatpush.bf16.msra.mxu0 %v1030
      %1082 = vmatmul.bf16.gmra.mxu0 %v979
      %v1083 = vpop.f32.mrf.mxu0
      %v1084 = vadd.f32 0.0, %v1083
      %v1085 = vpop.f32.mrf.mxu0
      %1086 = vdwg.mxu0
      %v1087 = vadd.f32 %v956, %v1071
      %v1088 = vadd.f32 %v957, %v1084
      %v1089 = vld [vmem:[%s164 + $0x4] sm:$0x1]
      %s1090 = scalar_lea.vmem %s1, 896
      %v1091 = vld [vmem:[%s1090] sm:$0xff]
      %v1092 = vld [vmem:[%s1090 + $0x8] sm:$0xff]
      %v1093 = vld [vmem:[%s1090 + $0x10] sm:$0xff]
      %v1094 = vld [vmem:[%s1090 + $0x18] sm:$0xff]
      %v1095 = vld [vmem:[%s1090 + $0x20] sm:$0xff]
      %v1096 = vld [vmem:[%s1090 + $0x28] sm:$0xff]
      %v1097 = vld [vmem:[%s1090 + $0x30] sm:$0xff]
      %v1098 = vld [vmem:[%s1090 + $0x38] sm:$0xff]
      %v1099 = vld [vmem:[%s1090 + $0x40] sm:$0xff]
      %v1100 = vld [vmem:[%s1090 + $0x48] sm:$0xff]
      %v1101 = vld [vmem:[%s1090 + $0x50] sm:$0xff]
      %v1102 = vld [vmem:[%s1090 + $0x58] sm:$0xff]
      %v1103 = vld [vmem:[%s1090 + $0x60] sm:$0xff]
      %v1104 = vld [vmem:[%s1090 + $0x68] sm:$0xff]
      %v1105 = vld [vmem:[%s1090 + $0x70] sm:$0xff]
      %v1106 = vld [vmem:[%s1090 + $0x78] sm:$0xff]
      %v1123 = vunpack.c.l.b16 %v1091
      %v1124 = vunpack.c.h.b16 %v1091
      %v1125 = vunpack.c.l.b16 %v1092
      %v1126 = vunpack.c.h.b16 %v1092
      %v1127 = vunpack.c.l.b16 %v1093
      %v1128 = vunpack.c.h.b16 %v1093
      %v1129 = vunpack.c.l.b16 %v1094
      %v1130 = vunpack.c.h.b16 %v1094
      %v1131 = vunpack.c.l.b16 %v1095
      %v1132 = vunpack.c.h.b16 %v1095
      %v1133 = vunpack.c.l.b16 %v1096
      %v1134 = vunpack.c.h.b16 %v1096
      %v1135 = vunpack.c.l.b16 %v1097
      %v1136 = vunpack.c.h.b16 %v1097
      %v1137 = vunpack.c.l.b16 %v1098
      %v1138 = vunpack.c.h.b16 %v1098
      %v1139 = vunpack.c.l.b16 %v1099
      %v1140 = vunpack.c.h.b16 %v1099
      %v1141 = vunpack.c.l.b16 %v1100
      %v1142 = vunpack.c.h.b16 %v1100
      %v1143 = vunpack.c.l.b16 %v1101
      %v1144 = vunpack.c.h.b16 %v1101
      %v1145 = vunpack.c.l.b16 %v1102
      %v1146 = vunpack.c.h.b16 %v1102
      %v1147 = vunpack.c.l.b16 %v1103
      %v1148 = vunpack.c.h.b16 %v1103
      %v1149 = vunpack.c.l.b16 %v1104
      %v1150 = vunpack.c.h.b16 %v1104
      %v1151 = vunpack.c.l.b16 %v1105
      %v1152 = vunpack.c.h.b16 %v1105
      %v1153 = vunpack.c.l.b16 %v1106
      %v1154 = vunpack.c.h.b16 %v1106
      %v1155 = vpack.c.b16 %v1125, %v1123
      %v1156 = vpack.c.b16 %v1126, %v1124
      %v1157 = vpack.c.b16 %v1129, %v1127
      %v1158 = vpack.c.b16 %v1130, %v1128
      %v1159 = vpack.c.b16 %v1133, %v1131
      %v1160 = vpack.c.b16 %v1134, %v1132
      %v1161 = vpack.c.b16 %v1137, %v1135
      %v1162 = vpack.c.b16 %v1138, %v1136
      %v1163 = vpack.c.b16 %v1141, %v1139
      %v1164 = vpack.c.b16 %v1142, %v1140
      %v1165 = vpack.c.b16 %v1145, %v1143
      %v1166 = vpack.c.b16 %v1146, %v1144
      %v1167 = vpack.c.b16 %v1149, %v1147
      %v1168 = vpack.c.b16 %v1150, %v1148
      %v1169 = vpack.c.b16 %v1153, %v1151
      %v1170 = vpack.c.b16 %v1154, %v1152
      %1187 = vmatpush.bf16.msra.mxu0 %v1169
      %1188 = vmatpush.bf16.msra.mxu0 %v1167
      %1189 = vmatpush.bf16.msra.mxu0 %v1165
      %1190 = vmatpush.bf16.msra.mxu0 %v1163
      %1191 = vmatpush.bf16.msra.mxu0 %v1161
      %1192 = vmatpush.bf16.msra.mxu0 %v1159
      %1193 = vmatpush.bf16.msra.mxu0 %v1157
      %1194 = vmatpush.bf16.msra.mxu0 %v1155
      %1195 = vmatmul.bf16.gmra.mxu0 %v1089
      %v1196 = vpop.f32.mrf.mxu0
      %v1197 = vadd.f32 0.0, %v1196
      %v1198 = vpop.f32.mrf.mxu0
      %1199 = vdwg.mxu0
      %1200 = vmatpush.bf16.msra.mxu0 %v1170
      %1201 = vmatpush.bf16.msra.mxu0 %v1168
      %1202 = vmatpush.bf16.msra.mxu0 %v1166
      %1203 = vmatpush.bf16.msra.mxu0 %v1164
      %1204 = vmatpush.bf16.msra.mxu0 %v1162
      %1205 = vmatpush.bf16.msra.mxu0 %v1160
      %1206 = vmatpush.bf16.msra.mxu0 %v1158
      %1207 = vmatpush.bf16.msra.mxu0 %v1156
      %1208 = vmatmul.bf16.gmra.mxu0 %v1089
      %v1209 = vpop.f32.mrf.mxu0
      %v1210 = vadd.f32 0.0, %v1209
      %v1211 = vpop.f32.mrf.mxu0
      %1212 = vdwg.mxu0
      %v1213 = vadd.f32 %v1087, %v1197
      %v1214 = vadd.f32 %v1088, %v1210
      %v1215 = vld [vmem:[%s164] sm:$0x6]
      %s1216 = scalar_lea.vmem %s1, 1024
      %v1217 = vld [vmem:[%s1216] sm:$0xff]
      %v1218 = vld [vmem:[%s1216 + $0x8] sm:$0xff]
      %v1219 = vld [vmem:[%s1216 + $0x10] sm:$0xff]
      %v1220 = vld [vmem:[%s1216 + $0x18] sm:$0xff]
      %v1221 = vld [vmem:[%s1216 + $0x20] sm:$0xff]
      %v1222 = vld [vmem:[%s1216 + $0x28] sm:$0xff]
      %v1223 = vld [vmem:[%s1216 + $0x30] sm:$0xff]
      %v1224 = vld [vmem:[%s1216 + $0x38] sm:$0xff]
      %v1225 = vld [vmem:[%s1216 + $0x40] sm:$0xff]
      %v1226 = vld [vmem:[%s1216 + $0x48] sm:$0xff]
      %v1227 = vld [vmem:[%s1216 + $0x50] sm:$0xff]
      %v1228 = vld [vmem:[%s1216 + $0x58] sm:$0xff]
      %v1229 = vld [vmem:[%s1216 + $0x60] sm:$0xff]
      %v1230 = vld [vmem:[%s1216 + $0x68] sm:$0xff]
      %v1231 = vld [vmem:[%s1216 + $0x70] sm:$0xff]
      %v1232 = vld [vmem:[%s1216 + $0x78] sm:$0xff]
      %v1234 = vunpack.c.l.b16 %v1215
      %v1235 = vpack.c.b16 %v1234, %v1234
      %v1237 = vshrl.u32 %v1235, 16
      %v1239 = vrot.slane %v1237, 1
      %v1240 = vshll.u32 %v1235, 16
      %v1242 = vrot.slane %v1240, 2
      %v1243 = vor.u32 %v1239, %v1242
      %v1261 = vunpack.c.l.b16 %v1217
      %v1262 = vunpack.c.h.b16 %v1217
      %v1263 = vunpack.c.l.b16 %v1218
      %v1264 = vunpack.c.h.b16 %v1218
      %v1265 = vunpack.c.l.b16 %v1219
      %v1266 = vunpack.c.h.b16 %v1219
      %v1267 = vunpack.c.l.b16 %v1220
      %v1268 = vunpack.c.h.b16 %v1220
      %v1269 = vunpack.c.l.b16 %v1221
      %v1270 = vunpack.c.h.b16 %v1221
      %v1271 = vunpack.c.l.b16 %v1222
      %v1272 = vunpack.c.h.b16 %v1222
      %v1273 = vunpack.c.l.b16 %v1223
      %v1274 = vunpack.c.h.b16 %v1223
      %v1275 = vunpack.c.l.b16 %v1224
      %v1276 = vunpack.c.h.b16 %v1224
      %v1277 = vunpack.c.l.b16 %v1225
      %v1278 = vunpack.c.h.b16 %v1225
      %v1279 = vunpack.c.l.b16 %v1226
      %v1280 = vunpack.c.h.b16 %v1226
      %v1281 = vunpack.c.l.b16 %v1227
      %v1282 = vunpack.c.h.b16 %v1227
      %v1283 = vunpack.c.l.b16 %v1228
      %v1284 = vunpack.c.h.b16 %v1228
      %v1285 = vunpack.c.l.b16 %v1229
      %v1286 = vunpack.c.h.b16 %v1229
      %v1287 = vunpack.c.l.b16 %v1230
      %v1288 = vunpack.c.h.b16 %v1230
      %v1289 = vunpack.c.l.b16 %v1231
      %v1290 = vunpack.c.h.b16 %v1231
      %v1291 = vunpack.c.l.b16 %v1232
      %v1292 = vunpack.c.h.b16 %v1232
      %v1293 = vpack.c.b16 %v1263, %v1261
      %v1294 = vpack.c.b16 %v1264, %v1262
      %v1295 = vpack.c.b16 %v1267, %v1265
      %v1296 = vpack.c.b16 %v1268, %v1266
      %v1297 = vpack.c.b16 %v1271, %v1269
      %v1298 = vpack.c.b16 %v1272, %v1270
      %v1299 = vpack.c.b16 %v1275, %v1273
      %v1300 = vpack.c.b16 %v1276, %v1274
      %v1301 = vpack.c.b16 %v1279, %v1277
      %v1302 = vpack.c.b16 %v1280, %v1278
      %v1303 = vpack.c.b16 %v1283, %v1281
      %v1304 = vpack.c.b16 %v1284, %v1282
      %v1305 = vpack.c.b16 %v1287, %v1285
      %v1306 = vpack.c.b16 %v1288, %v1286
      %v1307 = vpack.c.b16 %v1291, %v1289
      %v1308 = vpack.c.b16 %v1292, %v1290
      %1325 = vmatpush.bf16.msra.mxu0 %v1307
      %1326 = vmatpush.bf16.msra.mxu0 %v1305
      %1327 = vmatpush.bf16.msra.mxu0 %v1303
      %1328 = vmatpush.bf16.msra.mxu0 %v1301
      %1329 = vmatpush.bf16.msra.mxu0 %v1299
      %1330 = vmatpush.bf16.msra.mxu0 %v1297
      %1331 = vmatpush.bf16.msra.mxu0 %v1295
      %1332 = vmatpush.bf16.msra.mxu0 %v1293
      %1333 = vmatmul.bf16.gmra.mxu0 %v1243
      %v1334 = vpop.f32.mrf.mxu0
      %v1335 = vadd.f32 0.0, %v1334
      %v1336 = vpop.f32.mrf.mxu0
      %1337 = vdwg.mxu0
      %1338 = vmatpush.bf16.msra.mxu0 %v1308
      %1339 = vmatpush.bf16.msra.mxu0 %v1306
      %1340 = vmatpush.bf16.msra.mxu0 %v1304
      %1341 = vmatpush.bf16.msra.mxu0 %v1302
      %1342 = vmatpush.bf16.msra.mxu0 %v1300
      %1343 = vmatpush.bf16.msra.mxu0 %v1298
      %1344 = vmatpush.bf16.msra.mxu0 %v1296
      %1345 = vmatpush.bf16.msra.mxu0 %v1294
      %1346 = vmatmul.bf16.gmra.mxu0 %v1243
      %v1347 = vpop.f32.mrf.mxu0
      %v1348 = vadd.f32 0.0, %v1347
      %v1349 = vpop.f32.mrf.mxu0
      %1350 = vdwg.mxu0
      %v1351 = vadd.f32 %v1213, %v1335
      %v1352 = vadd.f32 %v1214, %v1348
      %v1353 = vld [vmem:[%s2] sm:$0x3]
      %v1355 = vperm.slane %v1353, 0
      %v1356 = vperm.slane %v1353, 1
      %v1359 = vadd.f32 %v1351, %v1355
      %v1360 = vadd.f32 %v1352, %v1356
      %v1361 = vmax.f32 %v1359, 0.0
      %v1362 = vmax.f32 %v1360, 0.0
      %v1363 = vpack.c.bf16 %v1362, %v1361
      %v1365 = vrot.slane %v1363, 3
      %vm1366 = vcmask 1040384
      %v1369 = vsel %vm1366, %v1363, %v1365
      %1371 = vst [vmem:[%s168] sm:$0x3] %v1369
      %p1372 = scmp.lt.s32.totalorder %s14, 1
      %s1373 = scalar_select %p1372, %s14, 1
      %s1374 = smul.addr %s1373, 2
      %s1375 = scalar_lea.vmem %s3, %s1374
      // Predicated region
      $region33: #{resnet6_forward.11} parent=31 // pred_check
        %p1376 = pneg %p100
      $region34: #{resnet6_forward.11} parent=31 // pred_check_branch
        %1378 = sbr.rel (%p1376) target = $region36
      $region35: #{resnet6_forward.11} parent=31 // pred_region
        _
      $region36: #{resnet6_forward.11} parent=31 // pred_fallthru
        _
    $region32: #{resnet6_forward.11} parent=5 // pred_fallthru
      _
    %p1379 = scmp.le.s32.totalorder 2, %s9
    // Predicated region
    $region37: #{resnet6_forward.11} parent=5 // pred_check
      %p1380 = pneg %p1379
    $region38: #{resnet6_forward.11} parent=5 // pred_check_branch
      %1382 = sbr.rel (%p1380) target = $region40
    $region39: #{resnet6_forward.11} parent=5 // pred_region
      %s1383 = ssub.s32 %s9, 2
      // Predicated region
      $region41: #{resnet6_forward.11} parent=39 // pred_check
        %p1384 = pneg %p106
      $region42: #{resnet6_forward.11} parent=39 // pred_check_branch
        %1386 = sbr.rel (%p1384) target = $region44
      $region43: #{resnet6_forward.11} parent=39 // pred_region
        %p1387 = scmp.lt.s32.totalorder %s15, 1
        %s1388 = scalar_select %p1387, %s15, 1
        %s1389 = smul.addr %s1388, 2
        %s1390 = scalar_lea.vmem %s3, %s1389
      $region44: #{resnet6_forward.11} parent=39 // pred_fallthru
        _
    $region40: #{resnet6_forward.11} parent=5 // pred_fallthru
      _
  $region6: #{resnet6_forward.11} parent=0 // loop_footer
    %s13 = sadd.s32 1, %s9
  $region7: #{resnet6_forward.11} parent=0 // loop_footer_branch
    %8 = sbr.rel target = $region3
  $region8: #{resnet6_forward.11} parent=0 // loop_exit
    _

// kernel: resnet6_forward.13
$region0: #{resnet6_forward.13}
  #allocation0 [shape = 'u32[]', space=smem, size = 0x4, offset = 0x4, fixed_abs, tag = 'smem constant byte address 0x4 - core index']
  #allocation1 [shape = 'u32[72,128]{1,0:T(1,128)}', space=vmem, size = 0x9000, scoped, tag = 'internal scratch']
  %s0 = inlined_call_operand.vmem [shape: bf16[8,1,512], index: 0, kind: input, shape index: {}]
  %s1 = inlined_call_operand.vmem [shape: bf16[512,128], index: 1, kind: input, shape index: {}]
  %s2 = inlined_call_operand.vmem [shape: f32[1,128], index: 2, kind: input, shape index: {}]
  %s3 = inlined_call_operand.vmem [shape: f32[8,128], index: 3, kind: output, shape index: {}]
  %s4 = sld [smem:[#allocation0]]
  $region22: #{resnet6_forward.13} parent=0
    _
  %s6 = ssub.s32 1, %s4
  %s7 = scalar_select 0, %s6, %s4
  // Predicated region
  $region2: #{resnet6_forward.13} parent=0 // pred_check
    _
  $region3: #{resnet6_forward.13} parent=0 // pred_check_branch
    %9 = sbr.rel (0) target = $region5
  $region4: #{resnet6_forward.13} parent=0 // pred_region
    _
  $region5: #{resnet6_forward.13} parent=0 // pred_fallthru
    _
  // Predicated region
  $region6: #{resnet6_forward.13} parent=0 // pred_check
    _
  $region7: #{resnet6_forward.13} parent=0 // pred_check_branch
    %11 = sbr.rel (0) target = $region9
  $region8: #{resnet6_forward.13} parent=0 // pred_region
    _
  $region9: #{resnet6_forward.13} parent=0 // pred_fallthru
    _
  // Predicated region
  $region10: #{resnet6_forward.13} parent=0 // pred_check
    _
  $region11: #{resnet6_forward.13} parent=0 // pred_check_branch
    %13 = sbr.rel (0) target = $region13
  $region12: #{resnet6_forward.13} parent=0 // pred_region
    _
  $region13: #{resnet6_forward.13} parent=0 // pred_fallthru
    _
  %v14 = vld [vmem:[%s0] sm:$0xf]
  %v15 = vld [vmem:[%s0 + $0x4] sm:$0xf]
  %v16 = vld [vmem:[%s0 + $0x8] sm:$0xf]
  %v17 = vld [vmem:[%s0 + $0xc] sm:$0xf]
  %v18 = vld [vmem:[%s0 + $0x10] sm:$0xf]
  %v19 = vld [vmem:[%s0 + $0x14] sm:$0xf]
  %v20 = vld [vmem:[%s0 + $0x18] sm:$0xf]
  %v21 = vld [vmem:[%s0 + $0x1c] sm:$0xf]
  %v22 = vunpack.c.l.bf16 %v14
  %v23 = vunpack.c.l.bf16 %v15
  %v24 = vunpack.c.l.bf16 %v16
  %v25 = vunpack.c.l.bf16 %v17
  %v26 = vunpack.c.l.bf16 %v18
  %v27 = vunpack.c.l.bf16 %v19
  %v28 = vunpack.c.l.bf16 %v20
  %v29 = vunpack.c.l.bf16 %v21
  %v30 = vadd.f32 %v22, 0.0
  %v31 = vadd.f32 %v23, 0.0
  %v32 = vadd.f32 %v24, 0.0
  %v33 = vadd.f32 %v25, 0.0
  %v34 = vadd.f32 %v26, 0.0
  %v35 = vadd.f32 %v27, 0.0
  %v36 = vadd.f32 %v28, 0.0
  %v37 = vadd.f32 %v29, 0.0
  %v46 = vperm.slane %v30, 0
  %v47 = vperm.slane %v30, 2
  %v48 = vperm.slane %v30, 4
  %v49 = vperm.slane %v30, 6
  %v50 = vperm.slane %v31, 0
  %v51 = vperm.slane %v31, 2
  %v52 = vperm.slane %v31, 4
  %v53 = vperm.slane %v31, 6
  %v54 = vperm.slane %v32, 0
  %v55 = vperm.slane %v32, 2
  %v56 = vperm.slane %v32, 4
  %v57 = vperm.slane %v32, 6
  %v58 = vperm.slane %v33, 0
  %v59 = vperm.slane %v33, 2
  %v60 = vperm.slane %v33, 4
  %v61 = vperm.slane %v33, 6
  %v62 = vperm.slane %v34, 0
  %v63 = vperm.slane %v34, 2
  %v64 = vperm.slane %v34, 4
  %v65 = vperm.slane %v34, 6
  %v66 = vperm.slane %v35, 0
  %v67 = vperm.slane %v35, 2
  %v68 = vperm.slane %v35, 4
  %v69 = vperm.slane %v35, 6
  %v70 = vperm.slane %v36, 0
  %v71 = vperm.slane %v36, 2
  %v72 = vperm.slane %v36, 4
  %v73 = vperm.slane %v36, 6
  %v74 = vperm.slane %v37, 0
  %v75 = vperm.slane %v37, 2
  %v76 = vperm.slane %v37, 4
  %v77 = vperm.slane %v37, 6
  %v110 = vpack.c.bf16 %v46, %v46
  %v111 = vpack.c.bf16 %v47, %v47
  %v112 = vpack.c.bf16 %v48, %v48
  %v113 = vpack.c.bf16 %v49, %v49
  %v114 = vpack.c.bf16 %v50, %v50
  %v115 = vpack.c.bf16 %v51, %v51
  %v116 = vpack.c.bf16 %v52, %v52
  %v117 = vpack.c.bf16 %v53, %v53
  %v118 = vpack.c.bf16 %v54, %v54
  %v119 = vpack.c.bf16 %v55, %v55
  %v120 = vpack.c.bf16 %v56, %v56
  %v121 = vpack.c.bf16 %v57, %v57
  %v122 = vpack.c.bf16 %v58, %v58
  %v123 = vpack.c.bf16 %v59, %v59
  %v124 = vpack.c.bf16 %v60, %v60
  %v125 = vpack.c.bf16 %v61, %v61
  %v126 = vpack.c.bf16 %v62, %v62
  %v127 = vpack.c.bf16 %v63, %v63
  %v128 = vpack.c.bf16 %v64, %v64
  %v129 = vpack.c.bf16 %v65, %v65
  %v130 = vpack.c.bf16 %v66, %v66
  %v131 = vpack.c.bf16 %v67, %v67
  %v132 = vpack.c.bf16 %v68, %v68
  %v133 = vpack.c.bf16 %v69, %v69
  %v134 = vpack.c.bf16 %v70, %v70
  %v135 = vpack.c.bf16 %v71, %v71
  %v136 = vpack.c.bf16 %v72, %v72
  %v137 = vpack.c.bf16 %v73, %v73
  %v138 = vpack.c.bf16 %v74, %v74
  %v139 = vpack.c.bf16 %v75, %v75
  %v140 = vpack.c.bf16 %v76, %v76
  %v141 = vpack.c.bf16 %v77, %v77
  %v142 = vld [vmem:[%s1] sm:$0xf]
  %v143 = vld [vmem:[%s1 + $0x4] sm:$0xf]
  %v144 = vld [vmem:[%s1 + $0x8] sm:$0xf]
  %v145 = vld [vmem:[%s1 + $0xc] sm:$0xf]
  %v146 = vld [vmem:[%s1 + $0x10] sm:$0xf]
  %v147 = vld [vmem:[%s1 + $0x14] sm:$0xf]
  %v148 = vld [vmem:[%s1 + $0x18] sm:$0xf]
  %v149 = vld [vmem:[%s1 + $0x1c] sm:$0xf]
  %v150 = vld [vmem:[%s1 + $0x20] sm:$0xf]
  %v151 = vld [vmem:[%s1 + $0x24] sm:$0xf]
  %v152 = vld [vmem:[%s1 + $0x28] sm:$0xf]
  %v153 = vld [vmem:[%s1 + $0x2c] sm:$0xf]
  %v154 = vld [vmem:[%s1 + $0x30] sm:$0xf]
  %v155 = vld [vmem:[%s1 + $0x34] sm:$0xf]
  %v156 = vld [vmem:[%s1 + $0x38] sm:$0xf]
  %v157 = vld [vmem:[%s1 + $0x3c] sm:$0xf]
  %v158 = vld [vmem:[%s1 + $0x40] sm:$0xf]
  %v159 = vld [vmem:[%s1 + $0x44] sm:$0xf]
  %v160 = vld [vmem:[%s1 + $0x48] sm:$0xf]
  %v161 = vld [vmem:[%s1 + $0x4c] sm:$0xf]
  %v162 = vld [vmem:[%s1 + $0x50] sm:$0xf]
  %v163 = vld [vmem:[%s1 + $0x54] sm:$0xf]
  %v164 = vld [vmem:[%s1 + $0x58] sm:$0xf]
  %v165 = vld [vmem:[%s1 + $0x5c] sm:$0xf]
  %v166 = vld [vmem:[%s1 + $0x60] sm:$0xf]
  %v167 = vld [vmem:[%s1 + $0x64] sm:$0xf]
  %v168 = vld [vmem:[%s1 + $0x68] sm:$0xf]
  %v169 = vld [vmem:[%s1 + $0x6c] sm:$0xf]
  %v170 = vld [vmem:[%s1 + $0x70] sm:$0xf]
  %v171 = vld [vmem:[%s1 + $0x74] sm:$0xf]
  %v172 = vld [vmem:[%s1 + $0x78] sm:$0xf]
  %v173 = vld [vmem:[%s1 + $0x7c] sm:$0xf]
  %v174 = vld [vmem:[%s1 + $0x80] sm:$0xf]
  %v175 = vld [vmem:[%s1 + $0x84] sm:$0xf]
  %v176 = vld [vmem:[%s1 + $0x88] sm:$0xf]
  %v177 = vld [vmem:[%s1 + $0x8c] sm:$0xf]
  %v178 = vld [vmem:[%s1 + $0x90] sm:$0xf]
  %v179 = vld [vmem:[%s1 + $0x94] sm:$0xf]
  %v180 = vld [vmem:[%s1 + $0x98] sm:$0xf]
  %v181 = vld [vmem:[%s1 + $0x9c] sm:$0xf]
  %v182 = vld [vmem:[%s1 + $0xa0] sm:$0xf]
  %v183 = vld [vmem:[%s1 + $0xa4] sm:$0xf]
  %v184 = vld [vmem:[%s1 + $0xa8] sm:$0xf]
  %v185 = vld [vmem:[%s1 + $0xac] sm:$0xf]
  %v186 = vld [vmem:[%s1 + $0xb0] sm:$0xf]
  %v187 = vld [vmem:[%s1 + $0xb4] sm:$0xf]
  %v188 = vld [vmem:[%s1 + $0xb8] sm:$0xf]
  %v189 = vld [vmem:[%s1 + $0xbc] sm:$0xf]
  %v190 = vld [vmem:[%s1 + $0xc0] sm:$0xf]
  %v191 = vld [vmem:[%s1 + $0xc4] sm:$0xf]
  %v192 = vld [vmem:[%s1 + $0xc8] sm:$0xf]
  %v193 = vld [vmem:[%s1 + $0xcc] sm:$0xf]
  %v194 = vld [vmem:[%s1 + $0xd0] sm:$0xf]
  %v195 = vld [vmem:[%s1 + $0xd4] sm:$0xf]
  %v196 = vld [vmem:[%s1 + $0xd8] sm:$0xf]
  %v197 = vld [vmem:[%s1 + $0xdc] sm:$0xf]
  %v198 = vld [vmem:[%s1 + $0xe0] sm:$0xf]
  %v199 = vld [vmem:[%s1 + $0xe4] sm:$0xf]
  %v200 = vld [vmem:[%s1 + $0xe8] sm:$0xf]
  %v201 = vld [vmem:[%s1 + $0xec] sm:$0xf]
  %v202 = vld [vmem:[%s1 + $0xf0] sm:$0xf]
  %v203 = vld [vmem:[%s1 + $0xf4] sm:$0xf]
  %v204 = vld [vmem:[%s1 + $0xf8] sm:$0xf]
  %v205 = vld [vmem:[%s1 + $0xfc] sm:$0xf]
  %v206 = vld [vmem:[%s2] sm:$0x1]
  %v208 = vperm.slane %v206, 0
  %v242 = vunpack.c.l.b16 %v110
  %v243 = vunpack.c.l.b16 %v111
  %v244 = vunpack.c.l.b16 %v112
  %v245 = vunpack.c.l.b16 %v113
  %v246 = vunpack.c.l.b16 %v114
  %v247 = vunpack.c.l.b16 %v115
  %v248 = vunpack.c.l.b16 %v116
  %v249 = vunpack.c.l.b16 %v117
  %v250 = vunpack.c.l.b16 %v118
  %v251 = vunpack.c.l.b16 %v119
  %v252 = vunpack.c.l.b16 %v120
  %v253 = vunpack.c.l.b16 %v121
  %v254 = vunpack.c.l.b16 %v122
  %v255 = vunpack.c.l.b16 %v123
  %v256 = vunpack.c.l.b16 %v124
  %v257 = vunpack.c.l.b16 %v125
  %v258 = vunpack.c.l.b16 %v126
  %v259 = vunpack.c.l.b16 %v127
  %v260 = vunpack.c.l.b16 %v128
  %v261 = vunpack.c.l.b16 %v129
  %v262 = vunpack.c.l.b16 %v130
  %v263 = vunpack.c.l.b16 %v131
  %v264 = vunpack.c.l.b16 %v132
  %v265 = vunpack.c.l.b16 %v133
  %v266 = vunpack.c.l.b16 %v134
  %v267 = vunpack.c.l.b16 %v135
  %v268 = vunpack.c.l.b16 %v136
  %v269 = vunpack.c.l.b16 %v137
  %v270 = vunpack.c.l.b16 %v138
  %v271 = vunpack.c.l.b16 %v139
  %v272 = vunpack.c.l.b16 %v140
  %v273 = vunpack.c.l.b16 %v141
  %v274 = vrot.slane %v246, 7
  %vm275 = vcmask 1041409
  %v276 = vsel %vm275, %v274, %v242
  %v277 = vrot.slane %v250, 6
  %vm278 = vcmask 1042434
  %v279 = vsel %vm278, %v277, %v276
  %v280 = vrot.slane %v254, 5
  %vm281 = vcmask 1043459
  %v282 = vsel %vm281, %v280, %v279
  %v283 = vrot.slane %v258, 4
  %vm284 = vcmask 1044484
  %v285 = vsel %vm284, %v283, %v282
  %v286 = vrot.slane %v262, 3
  %vm287 = vcmask 1045509
  %v288 = vsel %vm287, %v286, %v285
  %v289 = vrot.slane %v266, 2
  %vm290 = vcmask 1046534
  %v291 = vsel %vm290, %v289, %v288
  %v292 = vrot.slane %v270, 1
  %vm293 = vcmask 1047559
  %v294 = vsel %vm293, %v292, %v291
  %v295 = vrot.slane %v247, 7
  %v296 = vsel %vm275, %v295, %v243
  %v297 = vrot.slane %v251, 6
  %v298 = vsel %vm278, %v297, %v296
  %v299 = vrot.slane %v255, 5
  %v300 = vsel %vm281, %v299, %v298
  %v301 = vrot.slane %v259, 4
  %v302 = vsel %vm284, %v301, %v300
  %v303 = vrot.slane %v263, 3
  %v304 = vsel %vm287, %v303, %v302
  %v305 = vrot.slane %v267, 2
  %v306 = vsel %vm290, %v305, %v304
  %v307 = vrot.slane %v271, 1
  %v308 = vsel %vm293, %v307, %v306
  %v309 = vrot.slane %v248, 7
  %v310 = vsel %vm275, %v309, %v244
  %v311 = vrot.slane %v252, 6
  %v312 = vsel %vm278, %v311, %v310
  %v313 = vrot.slane %v256, 5
  %v314 = vsel %vm281, %v313, %v312
  %v315 = vrot.slane %v260, 4
  %v316 = vsel %vm284, %v315, %v314
  %v317 = vrot.slane %v264, 3
  %v318 = vsel %vm287, %v317, %v316
  %v319 = vrot.slane %v268, 2
  %v320 = vsel %vm290, %v319, %v318
  %v321 = vrot.slane %v272, 1
  %v322 = vsel %vm293, %v321, %v320
  %v323 = vrot.slane %v249, 7
  %v324 = vsel %vm275, %v323, %v245
  %v325 = vrot.slane %v253, 6
  %v326 = vsel %vm278, %v325, %v324
  %v327 = vrot.slane %v257, 5
  %v328 = vsel %vm281, %v327, %v326
  %v329 = vrot.slane %v261, 4
  %v330 = vsel %vm284, %v329, %v328
  %v331 = vrot.slane %v265, 3
  %v332 = vsel %vm287, %v331, %v330
  %v333 = vrot.slane %v269, 2
  %v334 = vsel %vm290, %v333, %v332
  %v335 = vrot.slane %v273, 1
  %v336 = vsel %vm293, %v335, %v334
  %v337 = vpack.c.b16 %v294, %v294
  %v338 = vpack.c.b16 %v308, %v308
  %v339 = vpack.c.b16 %v322, %v322
  %v340 = vpack.c.b16 %v336, %v336
  %v409 = vunpack.c.l.b16 %v142
  %v410 = vunpack.c.l.b16 %v143
  %v411 = vunpack.c.l.b16 %v144
  %v412 = vunpack.c.l.b16 %v145
  %v413 = vunpack.c.l.b16 %v146
  %v414 = vunpack.c.l.b16 %v147
  %v415 = vunpack.c.l.b16 %v148
  %v416 = vunpack.c.l.b16 %v149
  %v417 = vunpack.c.l.b16 %v150
  %v418 = vunpack.c.l.b16 %v151
  %v419 = vunpack.c.l.b16 %v152
  %v420 = vunpack.c.l.b16 %v153
  %v421 = vunpack.c.l.b16 %v154
  %v422 = vunpack.c.l.b16 %v155
  %v423 = vunpack.c.l.b16 %v156
  %v424 = vunpack.c.l.b16 %v157
  %v425 = vunpack.c.l.b16 %v158
  %v426 = vunpack.c.l.b16 %v159
  %v427 = vunpack.c.l.b16 %v160
  %v428 = vunpack.c.l.b16 %v161
  %v429 = vunpack.c.l.b16 %v162
  %v430 = vunpack.c.l.b16 %v163
  %v431 = vunpack.c.l.b16 %v164
  %v432 = vunpack.c.l.b16 %v165
  %v433 = vunpack.c.l.b16 %v166
  %v434 = vunpack.c.l.b16 %v167
  %v435 = vunpack.c.l.b16 %v168
  %v436 = vunpack.c.l.b16 %v169
  %v437 = vunpack.c.l.b16 %v170
  %v438 = vunpack.c.l.b16 %v171
  %v439 = vunpack.c.l.b16 %v172
  %v440 = vunpack.c.l.b16 %v173
  %v441 = vunpack.c.l.b16 %v174
  %v442 = vunpack.c.l.b16 %v175
  %v443 = vunpack.c.l.b16 %v176
  %v444 = vunpack.c.l.b16 %v177
  %v445 = vunpack.c.l.b16 %v178
  %v446 = vunpack.c.l.b16 %v179
  %v447 = vunpack.c.l.b16 %v180
  %v448 = vunpack.c.l.b16 %v181
  %v449 = vunpack.c.l.b16 %v182
  %v450 = vunpack.c.l.b16 %v183
  %v451 = vunpack.c.l.b16 %v184
  %v452 = vunpack.c.l.b16 %v185
  %v453 = vunpack.c.l.b16 %v186
  %v454 = vunpack.c.l.b16 %v187
  %v455 = vunpack.c.l.b16 %v188
  %v456 = vunpack.c.l.b16 %v189
  %v457 = vunpack.c.l.b16 %v190
  %v458 = vunpack.c.l.b16 %v191
  %v459 = vunpack.c.l.b16 %v192
  %v460 = vunpack.c.l.b16 %v193
  %v461 = vunpack.c.l.b16 %v194
  %v462 = vunpack.c.l.b16 %v195
  %v463 = vunpack.c.l.b16 %v196
  %v464 = vunpack.c.l.b16 %v197
  %v465 = vunpack.c.l.b16 %v198
  %v466 = vunpack.c.l.b16 %v199
  %v467 = vunpack.c.l.b16 %v200
  %v468 = vunpack.c.l.b16 %v201
  %v469 = vunpack.c.l.b16 %v202
  %v470 = vunpack.c.l.b16 %v203
  %v471 = vunpack.c.l.b16 %v204
  %v472 = vunpack.c.l.b16 %v205
  %v473 = vpack.c.b16 %v410, %v409
  %v474 = vpack.c.b16 %v412, %v411
  %v475 = vpack.c.b16 %v414, %v413
  %v476 = vpack.c.b16 %v416, %v415
  %v477 = vpack.c.b16 %v418, %v417
  %v478 = vpack.c.b16 %v420, %v419
  %v479 = vpack.c.b16 %v422, %v421
  %v480 = vpack.c.b16 %v424, %v423
  %v481 = vpack.c.b16 %v426, %v425
  %v482 = vpack.c.b16 %v428, %v427
  %v483 = vpack.c.b16 %v430, %v429
  %v484 = vpack.c.b16 %v432, %v431
  %v485 = vpack.c.b16 %v434, %v433
  %v486 = vpack.c.b16 %v436, %v435
  %v487 = vpack.c.b16 %v438, %v437
  %v488 = vpack.c.b16 %v440, %v439
  %v489 = vpack.c.b16 %v442, %v441
  %v490 = vpack.c.b16 %v444, %v443
  %v491 = vpack.c.b16 %v446, %v445
  %v492 = vpack.c.b16 %v448, %v447
  %v493 = vpack.c.b16 %v450, %v449
  %v494 = vpack.c.b16 %v452, %v451
  %v495 = vpack.c.b16 %v454, %v453
  %v496 = vpack.c.b16 %v456, %v455
  %v497 = vpack.c.b16 %v458, %v457
  %v498 = vpack.c.b16 %v460, %v459
  %v499 = vpack.c.b16 %v462, %v461
  %v500 = vpack.c.b16 %v464, %v463
  %v501 = vpack.c.b16 %v466, %v465
  %v502 = vpack.c.b16 %v468, %v467
  %v503 = vpack.c.b16 %v470, %v469
  %v504 = vpack.c.b16 %v472, %v471
  %537 = vmatpush.bf16.msra.mxu0 %v480
  %538 = vmatpush.bf16.msra.mxu0 %v479
  %539 = vmatpush.bf16.msra.mxu0 %v478
  %540 = vmatpush.bf16.msra.mxu0 %v477
  %541 = vmatpush.bf16.msra.mxu0 %v476
  %542 = vmatpush.bf16.msra.mxu0 %v475
  %543 = vmatpush.bf16.msra.mxu0 %v474
  %544 = vmatpush.bf16.msra.mxu0 %v473
  %545 = vmatmul.bf16.gmra.mxu0 %v337
  %v546 = vpop.f32.mrf.mxu0
  %v547 = vadd.f32 %v208, %v546
  %v548 = vpop.f32.mrf.mxu0
  %549 = vdwg.mxu0
  %550 = vmatpush.bf16.msra.mxu0 %v488
  %551 = vmatpush.bf16.msra.mxu0 %v487
  %552 = vmatpush.bf16.msra.mxu0 %v486
  %553 = vmatpush.bf16.msra.mxu0 %v485
  %554 = vmatpush.bf16.msra.mxu0 %v484
  %555 = vmatpush.bf16.msra.mxu0 %v483
  %556 = vmatpush.bf16.msra.mxu0 %v482
  %557 = vmatpush.bf16.msra.mxu0 %v481
  %558 = vmatmul.bf16.gmra.mxu0 %v338
  %v559 = vpop.f32.mrf.mxu0
  %v560 = vadd.f32 %v547, %v559
  %v561 = vpop.f32.mrf.mxu0
  %562 = vdwg.mxu0
  %563 = vmatpush.bf16.msra.mxu0 %v496
  %564 = vmatpush.bf16.msra.mxu0 %v495
  %565 = vmatpush.bf16.msra.mxu0 %v494
  %566 = vmatpush.bf16.msra.mxu0 %v493
  %567 = vmatpush.bf16.msra.mxu0 %v492
  %568 = vmatpush.bf16.msra.mxu0 %v491
  %569 = vmatpush.bf16.msra.mxu0 %v490
  %570 = vmatpush.bf16.msra.mxu0 %v489
  %571 = vmatmul.bf16.gmra.mxu0 %v339
  %v572 = vpop.f32.mrf.mxu0
  %v573 = vadd.f32 %v560, %v572
  %v574 = vpop.f32.mrf.mxu0
  %575 = vdwg.mxu0
  %576 = vmatpush.bf16.msra.mxu0 %v504
  %577 = vmatpush.bf16.msra.mxu0 %v503
  %578 = vmatpush.bf16.msra.mxu0 %v502
  %579 = vmatpush.bf16.msra.mxu0 %v501
  %580 = vmatpush.bf16.msra.mxu0 %v500
  %581 = vmatpush.bf16.msra.mxu0 %v499
  %582 = vmatpush.bf16.msra.mxu0 %v498
  %583 = vmatpush.bf16.msra.mxu0 %v497
  %584 = vmatmul.bf16.gmra.mxu0 %v340
  %v585 = vpop.f32.mrf.mxu0
  %v586 = vadd.f32 %v573, %v585
  %v587 = vpop.f32.mrf.mxu0
  %588 = vdwg.mxu0
  %589 = vst [vmem:[%s3] sm:$0xff] %v586
  // Predicated region
  $region14: #{resnet6_forward.13} parent=0 // pred_check
    _
  $region15: #{resnet6_forward.13} parent=0 // pred_check_branch
    %591 = sbr.rel (0) target = $region17
  $region16: #{resnet6_forward.13} parent=0 // pred_region
    _
  $region17: #{resnet6_forward.13} parent=0 // pred_fallthru
    _
  // Predicated region
  $region18: #{resnet6_forward.13} parent=0 // pred_check
    _
  $region19: #{resnet6_forward.13} parent=0 // pred_check_branch
    %593 = sbr.rel (0) target = $region21
  $region20: #{resnet6_forward.13} parent=0 // pred_region
    _
  $region21: #{resnet6_forward.13} parent=0 // pred_fallthru
    _

// kernel: resnet6_forward.12
$region0: #{resnet6_forward.12}
  #allocation0 [shape = 'u32[]', space=smem, size = 0x4, offset = 0x4, fixed_abs, tag = 'smem constant byte address 0x4 - core index']
  #allocation1 [shape = 'u32[72,128]{1,0:T(1,128)}', space=vmem, size = 0x9000, scoped, tag = 'internal scratch']
  %s0 = inlined_call_operand.vmem [shape: bf16[2,24,256], index: 0, kind: input, shape index: {}]
  %s1 = inlined_call_operand.vmem [shape: bf16[9,256,512], index: 1, kind: input, shape index: {}]
  %s2 = inlined_call_operand.vmem [shape: f32[1,512], index: 2, kind: input, shape index: {}]
  %s3 = inlined_call_operand.vmem [shape: bf16[2,2,512], index: 3, kind: output, shape index: {}]
  %s4 = sld [smem:[#allocation0]]
  $region45: #{resnet6_forward.12} parent=0
    _
  %s6 = ssub.s32 1, %s4
  %s7 = scalar_select 0, %s6, %s4
  loop: start=0, step=1, limit=4
  $region2: #{resnet6_forward.12} parent=0 // loop_pre_header
    _
  $region3: #{resnet6_forward.12} parent=0 // loop_header
    %s9 = sphi 0, %s13
    %p10 = scmp.ge.s32.totalorder %s9, 4
    %s19 = sphi 0, %s21
    %s22 = sphi 0, %s19
    %s23 = sphi 0, %s22
    %s39 = sphi 0, %s23
    %s43 = sphi 0, %s43
    %s45 = sphi 0, %s43
    %s46 = sphi 0, %s45
    %s60 = sphi 0, %s46
    %s64 = sphi 0, %s64
    %s66 = sphi 0, %s64
    %s67 = sphi 0, %s66
    %s81 = sphi 0, %s67
    %s87 = sphi 0, %s89
    %s90 = sphi 0, %s87
    %s91 = sphi 0, %s90
    %s107 = sphi 0, %s91
  $region4: #{resnet6_forward.12} parent=0 // loop_header_branch
    %12 = sbr.rel (%p10) target = $region8
  $region5: #{resnet6_forward.12} parent=0 // loop_body
    %s14 = ssub.s32 %s9, 1
    %s15 = ssub.s32 %s9, 2
    %s16 = sadd.s32 %s9, 1
    %s17 = ssub.s32 %s9, %s16
    %p18 = scmp.eq.s32.totalorder %s17, 0
    %s20 = sadd.s32 %s19, 1
    %s21 = scalar_select %p18, %s19, %s20
    %p24 = pneg %p18
    %p25 = scmp.eq.s32.totalorder %s9, 1
    %p26 = por %p24, %p25
    %p27 = scmp.ne.s32.totalorder %s19, %s22
    %p28 = scmp.eq.s32.totalorder %s9, 0
    %p29 = por %p27, %p28
    %p30 = scmp.ne.s32.totalorder %s19, %s22
    %p31 = scmp.eq.s32.totalorder %s14, 1
    %p32 = por %p30, %p31
    %p33 = scmp.ne.s32.totalorder %s22, %s23
    %p34 = scmp.eq.s32.totalorder %s14, 0
    %p35 = por %p33, %p34
    %p36 = scmp.ne.s32.totalorder %s22, %s23
    %p37 = scmp.eq.s32.totalorder %s15, 1
    %p38 = por %p36, %p37
    %p40 = scmp.ne.s32.totalorder %s23, %s39
    %p41 = scmp.eq.s32.totalorder %s15, 0
    %p42 = por %p40, %p41
    %s44 = sadd.s32 %s43, 1
    %p47 = scmp.eq.s32.totalorder %s9, 1
    %p48 = scmp.ne.s32.totalorder %s43, %s45
    %p49 = scmp.eq.s32.totalorder %s9, 0
    %p50 = por %p48, %p49
    %p51 = scmp.ne.s32.totalorder %s43, %s45
    %p52 = scmp.eq.s32.totalorder %s14, 1
    %p53 = por %p51, %p52
    %p54 = scmp.ne.s32.totalorder %s45, %s46
    %p55 = scmp.eq.s32.totalorder %s14, 0
    %p56 = por %p54, %p55
    %p57 = scmp.ne.s32.totalorder %s45, %s46
    %p58 = scmp.eq.s32.totalorder %s15, 1
    %p59 = por %p57, %p58
    %p61 = scmp.ne.s32.totalorder %s46, %s60
    %p62 = scmp.eq.s32.totalorder %s15, 0
    %p63 = por %p61, %p62
    %s65 = sadd.s32 %s64, 1
    %p68 = scmp.eq.s32.totalorder %s9, 1
    %p69 = scmp.ne.s32.totalorder %s64, %s66
    %p70 = scmp.eq.s32.totalorder %s9, 0
    %p71 = por %p69, %p70
    %p72 = scmp.ne.s32.totalorder %s64, %s66
    %p73 = scmp.eq.s32.totalorder %s14, 1
    %p74 = por %p72, %p73
    %p75 = scmp.ne.s32.totalorder %s66, %s67
    %p76 = scmp.eq.s32.totalorder %s14, 0
    %p77 = por %p75, %p76
    %p78 = scmp.ne.s32.totalorder %s66, %s67
    %p79 = scmp.eq.s32.totalorder %s15, 1
    %p80 = por %p78, %p79
    %p82 = scmp.ne.s32.totalorder %s67, %s81
    %p83 = scmp.eq.s32.totalorder %s15, 0
    %p84 = por %p82, %p83
    %s85 = ssub.s32 %s9, %s16
    %p86 = scmp.eq.s32.totalorder %s85, 0
    %s88 = sadd.s32 %s87, 1
    %s89 = scalar_select %p86, %s87, %s88
    %p92 = pneg %p86
    %p93 = scmp.eq.s32.totalorder %s9, 1
    %p94 = por %p92, %p93
    %p95 = scmp.ne.s32.totalorder %s87, %s90
    %p96 = scmp.eq.s32.totalorder %s9, 0
    %p97 = por %p95, %p96
    %p98 = scmp.ne.s32.totalorder %s87, %s90
    %p99 = scmp.eq.s32.totalorder %s14, 1
    %p100 = por %p98, %p99
    %p101 = scmp.ne.s32.totalorder %s90, %s91
    %p102 = scmp.eq.s32.totalorder %s14, 0
    %p103 = por %p101, %p102
    %p104 = scmp.ne.s32.totalorder %s90, %s91
    %p105 = scmp.eq.s32.totalorder %s15, 1
    %p106 = por %p104, %p105
    %p108 = scmp.ne.s32.totalorder %s91, %s107
    %p109 = scmp.eq.s32.totalorder %s15, 0
    %p110 = por %p108, %p109
    %p111 = scmp.le.s32.totalorder 1, %s9
    %p112 = scmp.lt.s32.totalorder %s9, 3
    %p113 = pnand %p111, %p112
    %p114 = pneg %p113
    // Predicated region
    $region9: #{resnet6_forward.12} parent=5 // pred_check
      _
    $region10: #{resnet6_forward.12} parent=5 // pred_check_branch
      %116 = sbr.rel (%p113) target = $region12
    $region11: #{resnet6_forward.12} parent=5 // pred_region
      %s117 = ssub.s32 %s9, 1
      // Predicated region
      $region13: #{resnet6_forward.12} parent=11 // pred_check
        %p118 = pneg %p56
      $region14: #{resnet6_forward.12} parent=11 // pred_check_branch
        %120 = sbr.rel (%p118) target = $region16
      $region15: #{resnet6_forward.12} parent=11 // pred_region
        _
      $region16: #{resnet6_forward.12} parent=11 // pred_fallthru
        _
      // Predicated region
      $region17: #{resnet6_forward.12} parent=11 // pred_check
        %p121 = pneg %p77
      $region18: #{resnet6_forward.12} parent=11 // pred_check_branch
        %123 = sbr.rel (%p121) target = $region20
      $region19: #{resnet6_forward.12} parent=11 // pred_region
        _
      $region20: #{resnet6_forward.12} parent=11 // pred_fallthru
        _
    $region12: #{resnet6_forward.12} parent=5 // pred_fallthru
      _
    %p124 = scmp.lt.s32.totalorder %s9, 2
    // Predicated region
    $region21: #{resnet6_forward.12} parent=5 // pred_check
      %p125 = pneg %p124
    $region22: #{resnet6_forward.12} parent=5 // pred_check_branch
      %127 = sbr.rel (%p125) target = $region24
    $region23: #{resnet6_forward.12} parent=5 // pred_region
      // Predicated region
      $region25: #{resnet6_forward.12} parent=23 // pred_check
        %p128 = pneg %p29
      $region26: #{resnet6_forward.12} parent=23 // pred_check_branch
        %130 = sbr.rel (%p128) target = $region28
      $region27: #{resnet6_forward.12} parent=23 // pred_region
        %p131 = scmp.lt.s32.totalorder %s9, 1
        %s132 = scalar_select %p131, %s9, 1
        %s133 = smul.addr %s132, 6
        %s134 = smul.addr %s133, 4
        %s135 = scalar_lea.vmem %s0, %s134
      $region28: #{resnet6_forward.12} parent=23 // pred_fallthru
        _
    $region24: #{resnet6_forward.12} parent=5 // pred_fallthru
      _
    %p136 = scmp.le.s32.totalorder 1, %s9
    %p137 = scmp.lt.s32.totalorder %s9, 3
    %p138 = pnand %p136, %p137
    %p139 = pneg %p138
    // Predicated region
    $region29: #{resnet6_forward.12} parent=5 // pred_check
      _
    $region30: #{resnet6_forward.12} parent=5 // pred_check_branch
      %141 = sbr.rel (%p138) target = $region32
    $region31: #{resnet6_forward.12} parent=5 // pred_region
      %s142 = ssub.s32 %s9, 1
      %p143 = scmp.lt.s32.totalorder %s14, 1
      %s144 = scalar_select %p143, %s14, 1
      %s145 = smul.addr %s144, 6
      %s146 = smul.addr %s145, 4
      %s147 = scalar_lea.vmem %s0, %s146
      %p148 = pneg %p35
      %p149 = pneg %p32
      %p150 = pneg %p56
      %p151 = pneg %p53
      %p152 = pneg %p77
      %p153 = pneg %p74
      %p154 = pneg %p103
      %p155 = pneg %p100
      %p156 = scmp.lt.s32.totalorder %s14, 1
      %s157 = scalar_select %p156, %s14, 1
      %s158 = smul.addr %s157, 4
      %s159 = scalar_lea.vmem %s3, %s158
      %p160 = scmp.lt.s32.totalorder %s14, 1
      %s161 = scalar_select %p160, %s14, 1
      %s162 = smul.addr %s161, 6
      %s163 = smul.addr %s162, 4
      %s164 = scalar_lea.vmem %s0, %s163
      %p165 = scmp.lt.s32.totalorder %s14, 1
      %s166 = scalar_select %p165, %s14, 1
      %s167 = smul.addr %s166, 4
      %s168 = scalar_lea.vmem %s3, %s167
      %v169 = vld [vmem:[%s164] sm:$0x11]
      %v170 = vld [vmem:[%s1] sm:$0xff]
      %v171 = vld [vmem:[%s1 + $0x8] sm:$0xff]
      %v172 = vld [vmem:[%s1 + $0x10] sm:$0xff]
      %v173 = vld [vmem:[%s1 + $0x18] sm:$0xff]
      %v174 = vld [vmem:[%s1 + $0x20] sm:$0xff]
      %v175 = vld [vmem:[%s1 + $0x28] sm:$0xff]
      %v176 = vld [vmem:[%s1 + $0x30] sm:$0xff]
      %v177 = vld [vmem:[%s1 + $0x38] sm:$0xff]
      %v178 = vld [vmem:[%s1 + $0x40] sm:$0xff]
      %v179 = vld [vmem:[%s1 + $0x48] sm:$0xff]
      %v180 = vld [vmem:[%s1 + $0x50] sm:$0xff]
      %v181 = vld [vmem:[%s1 + $0x58] sm:$0xff]
      %v182 = vld [vmem:[%s1 + $0x60] sm:$0xff]
      %v183 = vld [vmem:[%s1 + $0x68] sm:$0xff]
      %v184 = vld [vmem:[%s1 + $0x70] sm:$0xff]
      %v185 = vld [vmem:[%s1 + $0x78] sm:$0xff]
      %v186 = vld [vmem:[%s1 + $0x80] sm:$0xff]
      %v187 = vld [vmem:[%s1 + $0x88] sm:$0xff]
      %v188 = vld [vmem:[%s1 + $0x90] sm:$0xff]
      %v189 = vld [vmem:[%s1 + $0x98] sm:$0xff]
      %v190 = vld [vmem:[%s1 + $0xa0] sm:$0xff]
      %v191 = vld [vmem:[%s1 + $0xa8] sm:$0xff]
      %v192 = vld [vmem:[%s1 + $0xb0] sm:$0xff]
      %v193 = vld [vmem:[%s1 + $0xb8] sm:$0xff]
      %v194 = vld [vmem:[%s1 + $0xc0] sm:$0xff]
      %v195 = vld [vmem:[%s1 + $0xc8] sm:$0xff]
      %v196 = vld [vmem:[%s1 + $0xd0] sm:$0xff]
      %v197 = vld [vmem:[%s1 + $0xd8] sm:$0xff]
      %v198 = vld [vmem:[%s1 + $0xe0] sm:$0xff]
      %v199 = vld [vmem:[%s1 + $0xe8] sm:$0xff]
      %v200 = vld [vmem:[%s1 + $0xf0] sm:$0xff]
      %v201 = vld [vmem:[%s1 + $0xf8] sm:$0xff]
      %v202 = vld [vmem:[%s1 + $0x100] sm:$0xff]
      %v203 = vld [vmem:[%s1 + $0x108] sm:$0xff]
      %v204 = vld [vmem:[%s1 + $0x110] sm:$0xff]
      %v205 = vld [vmem:[%s1 + $0x118] sm:$0xff]
      %v206 = vld [vmem:[%s1 + $0x120] sm:$0xff]
      %v207 = vld [vmem:[%s1 + $0x128] sm:$0xff]
      %v208 = vld [vmem:[%s1 + $0x130] sm:$0xff]
      %v209 = vld [vmem:[%s1 + $0x138] sm:$0xff]
      %v210 = vld [vmem:[%s1 + $0x140] sm:$0xff]
      %v211 = vld [vmem:[%s1 + $0x148] sm:$0xff]
      %v212 = vld [vmem:[%s1 + $0x150] sm:$0xff]
      %v213 = vld [vmem:[%s1 + $0x158] sm:$0xff]
      %v214 = vld [vmem:[%s1 + $0x160] sm:$0xff]
      %v215 = vld [vmem:[%s1 + $0x168] sm:$0xff]
      %v216 = vld [vmem:[%s1 + $0x170] sm:$0xff]
      %v217 = vld [vmem:[%s1 + $0x178] sm:$0xff]
      %v218 = vld [vmem:[%s1 + $0x180] sm:$0xff]
      %v219 = vld [vmem:[%s1 + $0x188] sm:$0xff]
      %v220 = vld [vmem:[%s1 + $0x190] sm:$0xff]
      %v221 = vld [vmem:[%s1 + $0x198] sm:$0xff]
      %v222 = vld [vmem:[%s1 + $0x1a0] sm:$0xff]
      %v223 = vld [vmem:[%s1 + $0x1a8] sm:$0xff]
      %v224 = vld [vmem:[%s1 + $0x1b0] sm:$0xff]
      %v225 = vld [vmem:[%s1 + $0x1b8] sm:$0xff]
      %v226 = vld [vmem:[%s1 + $0x1c0] sm:$0xff]
      %v227 = vld [vmem:[%s1 + $0x1c8] sm:$0xff]
      %v228 = vld [vmem:[%s1 + $0x1d0] sm:$0xff]
      %v229 = vld [vmem:[%s1 + $0x1d8] sm:$0xff]
      %v230 = vld [vmem:[%s1 + $0x1e0] sm:$0xff]
      %v231 = vld [vmem:[%s1 + $0x1e8] sm:$0xff]
      %v232 = vld [vmem:[%s1 + $0x1f0] sm:$0xff]
      %v233 = vld [vmem:[%s1 + $0x1f8] sm:$0xff]
      %v234 = vld [vmem:[%s164] sm:$0x88]
      %s235 = scalar_lea.vmem %s1, 512
      %v236 = vld [vmem:[%s235] sm:$0xff]
      %v237 = vld [vmem:[%s235 + $0x8] sm:$0xff]
      %v238 = vld [vmem:[%s235 + $0x10] sm:$0xff]
      %v239 = vld [vmem:[%s235 + $0x18] sm:$0xff]
      %v240 = vld [vmem:[%s235 + $0x20] sm:$0xff]
      %v241 = vld [vmem:[%s235 + $0x28] sm:$0xff]
      %v242 = vld [vmem:[%s235 + $0x30] sm:$0xff]
      %v243 = vld [vmem:[%s235 + $0x38] sm:$0xff]
      %v244 = vld [vmem:[%s235 + $0x40] sm:$0xff]
      %v245 = vld [vmem:[%s235 + $0x48] sm:$0xff]
      %v246 = vld [vmem:[%s235 + $0x50] sm:$0xff]
      %v247 = vld [vmem:[%s235 + $0x58] sm:$0xff]
      %v248 = vld [vmem:[%s235 + $0x60] sm:$0xff]
      %v249 = vld [vmem:[%s235 + $0x68] sm:$0xff]
      %v250 = vld [vmem:[%s235 + $0x70] sm:$0xff]
      %v251 = vld [vmem:[%s235 + $0x78] sm:$0xff]
      %v252 = vld [vmem:[%s235 + $0x80] sm:$0xff]
      %v253 = vld [vmem:[%s235 + $0x88] sm:$0xff]
      %v254 = vld [vmem:[%s235 + $0x90] sm:$0xff]
      %v255 = vld [vmem:[%s235 + $0x98] sm:$0xff]
      %v256 = vld [vmem:[%s235 + $0xa0] sm:$0xff]
      %v257 = vld [vmem:[%s235 + $0xa8] sm:$0xff]
      %v258 = vld [vmem:[%s235 + $0xb0] sm:$0xff]
      %v259 = vld [vmem:[%s235 + $0xb8] sm:$0xff]
      %v260 = vld [vmem:[%s235 + $0xc0] sm:$0xff]
      %v261 = vld [vmem:[%s235 + $0xc8] sm:$0xff]
      %v262 = vld [vmem:[%s235 + $0xd0] sm:$0xff]
      %v263 = vld [vmem:[%s235 + $0xd8] sm:$0xff]
      %v264 = vld [vmem:[%s235 + $0xe0] sm:$0xff]
      %v265 = vld [vmem:[%s235 + $0xe8] sm:$0xff]
      %v266 = vld [vmem:[%s235 + $0xf0] sm:$0xff]
      %v267 = vld [vmem:[%s235 + $0xf8] sm:$0xff]
      %v268 = vld [vmem:[%s235 + $0x100] sm:$0xff]
      %v269 = vld [vmem:[%s235 + $0x108] sm:$0xff]
      %v270 = vld [vmem:[%s235 + $0x110] sm:$0xff]
      %v271 = vld [vmem:[%s235 + $0x118] sm:$0xff]
      %v272 = vld [vmem:[%s235 + $0x120] sm:$0xff]
      %v273 = vld [vmem:[%s235 + $0x128] sm:$0xff]
      %v274 = vld [vmem:[%s235 + $0x130] sm:$0xff]
      %v275 = vld [vmem:[%s235 + $0x138] sm:$0xff]
      %v276 = vld [vmem:[%s235 + $0x140] sm:$0xff]
      %v277 = vld [vmem:[%s235 + $0x148] sm:$0xff]
      %v278 = vld [vmem:[%s235 + $0x150] sm:$0xff]
      %v279 = vld [vmem:[%s235 + $0x158] sm:$0xff]
      %v280 = vld [vmem:[%s235 + $0x160] sm:$0xff]
      %v281 = vld [vmem:[%s235 + $0x168] sm:$0xff]
      %v282 = vld [vmem:[%s235 + $0x170] sm:$0xff]
      %v283 = vld [vmem:[%s235 + $0x178] sm:$0xff]
      %v284 = vld [vmem:[%s235 + $0x180] sm:$0xff]
      %v285 = vld [vmem:[%s235 + $0x188] sm:$0xff]
      %v286 = vld [vmem:[%s235 + $0x190] sm:$0xff]
      %v287 = vld [vmem:[%s235 + $0x198] sm:$0xff]
      %v288 = vld [vmem:[%s235 + $0x1a0] sm:$0xff]
      %v289 = vld [vmem:[%s235 + $0x1a8] sm:$0xff]
      %v290 = vld [vmem:[%s235 + $0x1b0] sm:$0xff]
      %v291 = vld [vmem:[%s235 + $0x1b8] sm:$0xff]
      %v292 = vld [vmem:[%s235 + $0x1c0] sm:$0xff]
      %v293 = vld [vmem:[%s235 + $0x1c8] sm:$0xff]
      %v294 = vld [vmem:[%s235 + $0x1d0] sm:$0xff]
      %v295 = vld [vmem:[%s235 + $0x1d8] sm:$0xff]
      %v296 = vld [vmem:[%s235 + $0x1e0] sm:$0xff]
      %v297 = vld [vmem:[%s235 + $0x1e8] sm:$0xff]
      %v298 = vld [vmem:[%s235 + $0x1f0] sm:$0xff]
      %v299 = vld [vmem:[%s235 + $0x1f8] sm:$0xff]
      %v301 = vunpack.c.l.b16 %v234
      %v302 = vunpack.c.h.b16 %v234
      %v303 = vpack.c.b16 %v301, %v301
      %v304 = vpack.c.b16 %v302, %v302
      %v305 = vrot.slane %v303, 3
      %v306 = vrot.slane %v304, 3
      %v373 = vunpack.c.l.b16 %v236
      %v374 = vunpack.c.h.b16 %v236
      %v375 = vunpack.c.l.b16 %v237
      %v376 = vunpack.c.h.b16 %v237
      %v377 = vunpack.c.l.b16 %v238
      %v378 = vunpack.c.h.b16 %v238
      %v379 = vunpack.c.l.b16 %v239
      %v380 = vunpack.c.h.b16 %v239
      %v381 = vunpack.c.l.b16 %v240
      %v382 = vunpack.c.h.b16 %v240
      %v383 = vunpack.c.l.b16 %v241
      %v384 = vunpack.c.h.b16 %v241
      %v385 = vunpack.c.l.b16 %v242
      %v386 = vunpack.c.h.b16 %v242
      %v387 = vunpack.c.l.b16 %v243
      %v388 = vunpack.c.h.b16 %v243
      %v389 = vunpack.c.l.b16 %v244
      %v390 = vunpack.c.h.b16 %v244
      %v391 = vunpack.c.l.b16 %v245
      %v392 = vunpack.c.h.b16 %v245
      %v393 = vunpack.c.l.b16 %v246
      %v394 = vunpack.c.h.b16 %v246
      %v395 = vunpack.c.l.b16 %v247
      %v396 = vunpack.c.h.b16 %v247
      %v397 = vunpack.c.l.b16 %v248
      %v398 = vunpack.c.h.b16 %v248
      %v399 = vunpack.c.l.b16 %v249
      %v400 = vunpack.c.h.b16 %v249
      %v401 = vunpack.c.l.b16 %v250
      %v402 = vunpack.c.h.b16 %v250
      %v403 = vunpack.c.l.b16 %v251
      %v404 = vunpack.c.h.b16 %v251
      %v405 = vunpack.c.l.b16 %v252
      %v406 = vunpack.c.h.b16 %v252
      %v407 = vunpack.c.l.b16 %v253
      %v408 = vunpack.c.h.b16 %v253
      %v409 = vunpack.c.l.b16 %v254
      %v410 = vunpack.c.h.b16 %v254
      %v411 = vunpack.c.l.b16 %v255
      %v412 = vunpack.c.h.b16 %v255
      %v413 = vunpack.c.l.b16 %v256
      %v414 = vunpack.c.h.b16 %v256
      %v415 = vunpack.c.l.b16 %v257
      %v416 = vunpack.c.h.b16 %v257
      %v417 = vunpack.c.l.b16 %v258
      %v418 = vunpack.c.h.b16 %v258
      %v419 = vunpack.c.l.b16 %v259
      %v420 = vunpack.c.h.b16 %v259
      %v421 = vunpack.c.l.b16 %v260
      %v422 = vunpack.c.h.b16 %v260
      %v423 = vunpack.c.l.b16 %v261
      %v424 = vunpack.c.h.b16 %v261
      %v425 = vunpack.c.l.b16 %v262
      %v426 = vunpack.c.h.b16 %v262
      %v427 = vunpack.c.l.b16 %v263
      %v428 = vunpack.c.h.b16 %v263
      %v429 = vunpack.c.l.b16 %v264
      %v430 = vunpack.c.h.b16 %v264
      %v431 = vunpack.c.l.b16 %v265
      %v432 = vunpack.c.h.b16 %v265
      %v433 = vunpack.c.l.b16 %v266
      %v434 = vunpack.c.h.b16 %v266
      %v435 = vunpack.c.l.b16 %v267
      %v436 = vunpack.c.h.b16 %v267
      %v437 = vunpack.c.l.b16 %v268
      %v438 = vunpack.c.h.b16 %v268
      %v439 = vunpack.c.l.b16 %v269
      %v440 = vunpack.c.h.b16 %v269
      %v441 = vunpack.c.l.b16 %v270
      %v442 = vunpack.c.h.b16 %v270
      %v443 = vunpack.c.l.b16 %v271
      %v444 = vunpack.c.h.b16 %v271
      %v445 = vunpack.c.l.b16 %v272
      %v446 = vunpack.c.h.b16 %v272
      %v447 = vunpack.c.l.b16 %v273
      %v448 = vunpack.c.h.b16 %v273
      %v449 = vunpack.c.l.b16 %v274
      %v450 = vunpack.c.h.b16 %v274
      %v451 = vunpack.c.l.b16 %v275
      %v452 = vunpack.c.h.b16 %v275
      %v453 = vunpack.c.l.b16 %v276
      %v454 = vunpack.c.h.b16 %v276
      %v455 = vunpack.c.l.b16 %v277
      %v456 = vunpack.c.h.b16 %v277
      %v457 = vunpack.c.l.b16 %v278
      %v458 = vunpack.c.h.b16 %v278
      %v459 = vunpack.c.l.b16 %v279
      %v460 = vunpack.c.h.b16 %v279
      %v461 = vunpack.c.l.b16 %v280
      %v462 = vunpack.c.h.b16 %v280
      %v463 = vunpack.c.l.b16 %v281
      %v464 = vunpack.c.h.b16 %v281
      %v465 = vunpack.c.l.b16 %v282
      %v466 = vunpack.c.h.b16 %v282
      %v467 = vunpack.c.l.b16 %v283
      %v468 = vunpack.c.h.b16 %v283
      %v469 = vunpack.c.l.b16 %v284
      %v470 = vunpack.c.h.b16 %v284
      %v471 = vunpack.c.l.b16 %v285
      %v472 = vunpack.c.h.b16 %v285
      %v473 = vunpack.c.l.b16 %v286
      %v474 = vunpack.c.h.b16 %v286
      %v475 = vunpack.c.l.b16 %v287
      %v476 = vunpack.c.h.b16 %v287
      %v477 = vunpack.c.l.b16 %v288
      %v478 = vunpack.c.h.b16 %v288
      %v479 = vunpack.c.l.b16 %v289
      %v480 = vunpack.c.h.b16 %v289
      %v481 = vunpack.c.l.b16 %v290
      %v482 = vunpack.c.h.b16 %v290
      %v483 = vunpack.c.l.b16 %v291
      %v484 = vunpack.c.h.b16 %v291
      %v485 = vunpack.c.l.b16 %v292
      %v486 = vunpack.c.h.b16 %v292
      %v487 = vunpack.c.l.b16 %v293
      %v488 = vunpack.c.h.b16 %v293
      %v489 = vunpack.c.l.b16 %v294
      %v490 = vunpack.c.h.b16 %v294
      %v491 = vunpack.c.l.b16 %v295
      %v492 = vunpack.c.h.b16 %v295
      %v493 = vunpack.c.l.b16 %v296
      %v494 = vunpack.c.h.b16 %v296
      %v495 = vunpack.c.l.b16 %v297
      %v496 = vunpack.c.h.b16 %v297
      %v497 = vunpack.c.l.b16 %v298
      %v498 = vunpack.c.h.b16 %v298
      %v499 = vunpack.c.l.b16 %v299
      %v500 = vunpack.c.h.b16 %v299
      %v501 = vpack.c.b16 %v377, %v373
      %v502 = vpack.c.b16 %v378, %v374
      %v503 = vpack.c.b16 %v379, %v375
      %v504 = vpack.c.b16 %v380, %v376
      %v505 = vpack.c.b16 %v385, %v381
      %v506 = vpack.c.b16 %v386, %v382
      %v507 = vpack.c.b16 %v387, %v383
      %v508 = vpack.c.b16 %v388, %v384
      %v509 = vpack.c.b16 %v393, %v389
      %v510 = vpack.c.b16 %v394, %v390
      %v511 = vpack.c.b16 %v395, %v391
      %v512 = vpack.c.b16 %v396, %v392
      %v513 = vpack.c.b16 %v401, %v397
      %v514 = vpack.c.b16 %v402, %v398
      %v515 = vpack.c.b16 %v403, %v399
      %v516 = vpack.c.b16 %v404, %v400
      %v517 = vpack.c.b16 %v409, %v405
      %v518 = vpack.c.b16 %v410, %v406
      %v519 = vpack.c.b16 %v411, %v407
      %v520 = vpack.c.b16 %v412, %v408
      %v521 = vpack.c.b16 %v417, %v413
      %v522 = vpack.c.b16 %v418, %v414
      %v523 = vpack.c.b16 %v419, %v415
      %v524 = vpack.c.b16 %v420, %v416
      %v525 = vpack.c.b16 %v425, %v421
      %v526 = vpack.c.b16 %v426, %v422
      %v527 = vpack.c.b16 %v427, %v423
      %v528 = vpack.c.b16 %v428, %v424
      %v529 = vpack.c.b16 %v433, %v429
      %v530 = vpack.c.b16 %v434, %v430
      %v531 = vpack.c.b16 %v435, %v431
      %v532 = vpack.c.b16 %v436, %v432
      %v533 = vpack.c.b16 %v441, %v437
      %v534 = vpack.c.b16 %v442, %v438
      %v535 = vpack.c.b16 %v443, %v439
      %v536 = vpack.c.b16 %v444, %v440
      %v537 = vpack.c.b16 %v449, %v445
      %v538 = vpack.c.b16 %v450, %v446
      %v539 = vpack.c.b16 %v451, %v447
      %v540 = vpack.c.b16 %v452, %v448
      %v541 = vpack.c.b16 %v457, %v453
      %v542 = vpack.c.b16 %v458, %v454
      %v543 = vpack.c.b16 %v459, %v455
      %v544 = vpack.c.b16 %v460, %v456
      %v545 = vpack.c.b16 %v465, %v461
      %v546 = vpack.c.b16 %v466, %v462
      %v547 = vpack.c.b16 %v467, %v463
      %v548 = vpack.c.b16 %v468, %v464
      %v549 = vpack.c.b16 %v473, %v469
      %v550 = vpack.c.b16 %v474, %v470
      %v551 = vpack.c.b16 %v475, %v471
      %v552 = vpack.c.b16 %v476, %v472
      %v553 = vpack.c.b16 %v481, %v477
      %v554 = vpack.c.b16 %v482, %v478
      %v555 = vpack.c.b16 %v483, %v479
      %v556 = vpack.c.b16 %v484, %v480
      %v557 = vpack.c.b16 %v489, %v485
      %v558 = vpack.c.b16 %v490, %v486
      %v559 = vpack.c.b16 %v491, %v487
      %v560 = vpack.c.b16 %v492, %v488
      %v561 = vpack.c.b16 %v497, %v493
      %v562 = vpack.c.b16 %v498, %v494
      %v563 = vpack.c.b16 %v499, %v495
      %v564 = vpack.c.b16 %v500, %v496
      %629 = vmatpush.bf16.msra.mxu0 %v529
      %630 = vmatpush.bf16.msra.mxu0 %v525
      %631 = vmatpush.bf16.msra.mxu0 %v521
      %632 = vmatpush.bf16.msra.mxu0 %v517
      %633 = vmatpush.bf16.msra.mxu0 %v513
      %634 = vmatpush.bf16.msra.mxu0 %v509
      %635 = vmatpush.bf16.msra.mxu0 %v505
      %636 = vmatpush.bf16.msra.mxu0 %v501
      %637 = vmatmul.bf16.gmra.mxu0 %v305
      %v638 = vpop.f32.mrf.mxu0
      %v639 = vadd.f32 0.0, %v638
      %v640 = vpop.f32.mrf.mxu0
      %641 = vdwg.mxu0
      %642 = vmatpush.bf16.msra.mxu0 %v561
      %643 = vmatpush.bf16.msra.mxu0 %v557
      %644 = vmatpush.bf16.msra.mxu0 %v553
      %645 = vmatpush.bf16.msra.mxu0 %v549
      %646 = vmatpush.bf16.msra.mxu0 %v545
      %647 = vmatpush.bf16.msra.mxu0 %v541
      %648 = vmatpush.bf16.msra.mxu0 %v537
      %649 = vmatpush.bf16.msra.mxu0 %v533
      %650 = vmatmul.bf16.gmra.mxu0 %v306
      %v651 = vpop.f32.mrf.mxu0
      %v652 = vadd.f32 %v639, %v651
      %v653 = vpop.f32.mrf.mxu0
      %654 = vdwg.mxu0
      %655 = vmatpush.bf16.msra.mxu0 %v530
      %656 = vmatpush.bf16.msra.mxu0 %v526
      %657 = vmatpush.bf16.msra.mxu0 %v522
      %658 = vmatpush.bf16.msra.mxu0 %v518
      %659 = vmatpush.bf16.msra.mxu0 %v514
      %660 = vmatpush.bf16.msra.mxu0 %v510
      %661 = vmatpush.bf16.msra.mxu0 %v506
      %662 = vmatpush.bf16.msra.mxu0 %v502
      %663 = vmatmul.bf16.gmra.mxu0 %v305
      %v664 = vpop.f32.mrf.mxu0
      %v665 = vadd.f32 0.0, %v664
      %v666 = vpop.f32.mrf.mxu0
      %667 = vdwg.mxu0
      %668 = vmatpush.bf16.msra.mxu0 %v562
      %669 = vmatpush.bf16.msra.mxu0 %v558
      %670 = vmatpush.bf16.msra.mxu0 %v554
      %671 = vmatpush.bf16.msra.mxu0 %v550
      %672 = vmatpush.bf16.msra.mxu0 %v546
      %673 = vmatpush.bf16.msra.mxu0 %v542
      %674 = vmatpush.bf16.msra.mxu0 %v538
      %675 = vmatpush.bf16.msra.mxu0 %v534
      %676 = vmatmul.bf16.gmra.mxu0 %v306
      %v677 = vpop.f32.mrf.mxu0
      %v678 = vadd.f32 %v665, %v677
      %v679 = vpop.f32.mrf.mxu0
      %680 = vdwg.mxu0
      %681 = vmatpush.bf16.msra.mxu0 %v531
      %682 = vmatpush.bf16.msra.mxu0 %v527
      %683 = vmatpush.bf16.msra.mxu0 %v523
      %684 = vmatpush.bf16.msra.mxu0 %v519
      %685 = vmatpush.bf16.msra.mxu0 %v515
      %686 = vmatpush.bf16.msra.mxu0 %v511
      %687 = vmatpush.bf16.msra.mxu0 %v507
      %688 = vmatpush.bf16.msra.mxu0 %v503
      %689 = vmatmul.bf16.gmra.mxu0 %v305
      %v690 = vpop.f32.mrf.mxu0
      %v691 = vadd.f32 0.0, %v690
      %v692 = vpop.f32.mrf.mxu0
      %693 = vdwg.mxu0
      %694 = vmatpush.bf16.msra.mxu0 %v563
      %695 = vmatpush.bf16.msra.mxu0 %v559
      %696 = vmatpush.bf16.msra.mxu0 %v555
      %697 = vmatpush.bf16.msra.mxu0 %v551
      %698 = vmatpush.bf16.msra.mxu0 %v547
      %699 = vmatpush.bf16.msra.mxu0 %v543
      %700 = vmatpush.bf16.msra.mxu0 %v539
      %701 = vmatpush.bf16.msra.mxu0 %v535
      %702 = vmatmul.bf16.gmra.mxu0 %v306
      %v703 = vpop.f32.mrf.mxu0
      %v704 = vadd.f32 %v691, %v703
      %v705 = vpop.f32.mrf.mxu0
      %706 = vdwg.mxu0
      %707 = vmatpush.bf16.msra.mxu0 %v532
      %708 = vmatpush.bf16.msra.mxu0 %v528
      %709 = vmatpush.bf16.msra.mxu0 %v524
      %710 = vmatpush.bf16.msra.mxu0 %v520
      %711 = vmatpush.bf16.msra.mxu0 %v516
      %712 = vmatpush.bf16.msra.mxu0 %v512
      %713 = vmatpush.bf16.msra.mxu0 %v508
      %714 = vmatpush.bf16.msra.mxu0 %v504
      %715 = vmatmul.bf16.gmra.mxu0 %v305
      %v716 = vpop.f32.mrf.mxu0
      %v717 = vadd.f32 0.0, %v716
      %v718 = vpop.f32.mrf.mxu0
      %719 = vdwg.mxu0
      %720 = vmatpush.bf16.msra.mxu0 %v564
      %721 = vmatpush.bf16.msra.mxu0 %v560
      %722 = vmatpush.bf16.msra.mxu0 %v556
      %723 = vmatpush.bf16.msra.mxu0 %v552
      %724 = vmatpush.bf16.msra.mxu0 %v548
      %725 = vmatpush.bf16.msra.mxu0 %v544
      %726 = vmatpush.bf16.msra.mxu0 %v540
      %727 = vmatpush.bf16.msra.mxu0 %v536
      %728 = vmatmul.bf16.gmra.mxu0 %v306
      %v729 = vpop.f32.mrf.mxu0
      %v730 = vadd.f32 %v717, %v729
      %v731 = vpop.f32.mrf.mxu0
      %732 = vdwg.mxu0
      %v734 = vunpack.c.l.b16 %v169
      %v735 = vunpack.c.h.b16 %v169
      %v736 = vpack.c.b16 %v734, %v734
      %v737 = vpack.c.b16 %v735, %v735
      %v804 = vunpack.c.l.b16 %v170
      %v805 = vunpack.c.h.b16 %v170
      %v806 = vunpack.c.l.b16 %v171
      %v807 = vunpack.c.h.b16 %v171
      %v808 = vunpack.c.l.b16 %v172
      %v809 = vunpack.c.h.b16 %v172
      %v810 = vunpack.c.l.b16 %v173
      %v811 = vunpack.c.h.b16 %v173
      %v812 = vunpack.c.l.b16 %v174
      %v813 = vunpack.c.h.b16 %v174
      %v814 = vunpack.c.l.b16 %v175
      %v815 = vunpack.c.h.b16 %v175
      %v816 = vunpack.c.l.b16 %v176
      %v817 = vunpack.c.h.b16 %v176
      %v818 = vunpack.c.l.b16 %v177
      %v819 = vunpack.c.h.b16 %v177
      %v820 = vunpack.c.l.b16 %v178
      %v821 = vunpack.c.h.b16 %v178
      %v822 = vunpack.c.l.b16 %v179
      %v823 = vunpack.c.h.b16 %v179
      %v824 = vunpack.c.l.b16 %v180
      %v825 = vunpack.c.h.b16 %v180
      %v826 = vunpack.c.l.b16 %v181
      %v827 = vunpack.c.h.b16 %v181
      %v828 = vunpack.c.l.b16 %v182
      %v829 = vunpack.c.h.b16 %v182
      %v830 = vunpack.c.l.b16 %v183
      %v831 = vunpack.c.h.b16 %v183
      %v832 = vunpack.c.l.b16 %v184
      %v833 = vunpack.c.h.b16 %v184
      %v834 = vunpack.c.l.b16 %v185
      %v835 = vunpack.c.h.b16 %v185
      %v836 = vunpack.c.l.b16 %v186
      %v837 = vunpack.c.h.b16 %v186
      %v838 = vunpack.c.l.b16 %v187
      %v839 = vunpack.c.h.b16 %v187
      %v840 = vunpack.c.l.b16 %v188
      %v841 = vunpack.c.h.b16 %v188
      %v842 = vunpack.c.l.b16 %v189
      %v843 = vunpack.c.h.b16 %v189
      %v844 = vunpack.c.l.b16 %v190
      %v845 = vunpack.c.h.b16 %v190
      %v846 = vunpack.c.l.b16 %v191
      %v847 = vunpack.c.h.b16 %v191
      %v848 = vunpack.c.l.b16 %v192
      %v849 = vunpack.c.h.b16 %v192
      %v850 = vunpack.c.l.b16 %v193
      %v851 = vunpack.c.h.b16 %v193
      %v852 = vunpack.c.l.b16 %v194
      %v853 = vunpack.c.h.b16 %v194
      %v854 = vunpack.c.l.b16 %v195
      %v855 = vunpack.c.h.b16 %v195
      %v856 = vunpack.c.l.b16 %v196
      %v857 = vunpack.c.h.b16 %v196
      %v858 = vunpack.c.l.b16 %v197
      %v859 = vunpack.c.h.b16 %v197
      %v860 = vunpack.c.l.b16 %v198
      %v861 = vunpack.c.h.b16 %v198
      %v862 = vunpack.c.l.b16 %v199
      %v863 = vunpack.c.h.b16 %v199
      %v864 = vunpack.c.l.b16 %v200
      %v865 = vunpack.c.h.b16 %v200
      %v866 = vunpack.c.l.b16 %v201
      %v867 = vunpack.c.h.b16 %v201
      %v868 = vunpack.c.l.b16 %v202
      %v869 = vunpack.c.h.b16 %v202
      %v870 = vunpack.c.l.b16 %v203
      %v871 = vunpack.c.h.b16 %v203
      %v872 = vunpack.c.l.b16 %v204
      %v873 = vunpack.c.h.b16 %v204
      %v874 = vunpack.c.l.b16 %v205
      %v875 = vunpack.c.h.b16 %v205
      %v876 = vunpack.c.l.b16 %v206
      %v877 = vunpack.c.h.b16 %v206
      %v878 = vunpack.c.l.b16 %v207
      %v879 = vunpack.c.h.b16 %v207
      %v880 = vunpack.c.l.b16 %v208
      %v881 = vunpack.c.h.b16 %v208
      %v882 = vunpack.c.l.b16 %v209
      %v883 = vunpack.c.h.b16 %v209
      %v884 = vunpack.c.l.b16 %v210
      %v885 = vunpack.c.h.b16 %v210
      %v886 = vunpack.c.l.b16 %v211
      %v887 = vunpack.c.h.b16 %v211
      %v888 = vunpack.c.l.b16 %v212
      %v889 = vunpack.c.h.b16 %v212
      %v890 = vunpack.c.l.b16 %v213
      %v891 = vunpack.c.h.b16 %v213
      %v892 = vunpack.c.l.b16 %v214
      %v893 = vunpack.c.h.b16 %v214
      %v894 = vunpack.c.l.b16 %v215
      %v895 = vunpack.c.h.b16 %v215
      %v896 = vunpack.c.l.b16 %v216
      %v897 = vunpack.c.h.b16 %v216
      %v898 = vunpack.c.l.b16 %v217
      %v899 = vunpack.c.h.b16 %v217
      %v900 = vunpack.c.l.b16 %v218
      %v901 = vunpack.c.h.b16 %v218
      %v902 = vunpack.c.l.b16 %v219
      %v903 = vunpack.c.h.b16 %v219
      %v904 = vunpack.c.l.b16 %v220
      %v905 = vunpack.c.h.b16 %v220
      %v906 = vunpack.c.l.b16 %v221
      %v907 = vunpack.c.h.b16 %v221
      %v908 = vunpack.c.l.b16 %v222
      %v909 = vunpack.c.h.b16 %v222
      %v910 = vunpack.c.l.b16 %v223
      %v911 = vunpack.c.h.b16 %v223
      %v912 = vunpack.c.l.b16 %v224
      %v913 = vunpack.c.h.b16 %v224
      %v914 = vunpack.c.l.b16 %v225
      %v915 = vunpack.c.h.b16 %v225
      %v916 = vunpack.c.l.b16 %v226
      %v917 = vunpack.c.h.b16 %v226
      %v918 = vunpack.c.l.b16 %v227
      %v919 = vunpack.c.h.b16 %v227
      %v920 = vunpack.c.l.b16 %v228
      %v921 = vunpack.c.h.b16 %v228
      %v922 = vunpack.c.l.b16 %v229
      %v923 = vunpack.c.h.b16 %v229
      %v924 = vunpack.c.l.b16 %v230
      %v925 = vunpack.c.h.b16 %v230
      %v926 = vunpack.c.l.b16 %v231
      %v927 = vunpack.c.h.b16 %v231
      %v928 = vunpack.c.l.b16 %v232
      %v929 = vunpack.c.h.b16 %v232
      %v930 = vunpack.c.l.b16 %v233
      %v931 = vunpack.c.h.b16 %v233
      %v932 = vpack.c.b16 %v808, %v804
      %v933 = vpack.c.b16 %v809, %v805
      %v934 = vpack.c.b16 %v810, %v806
      %v935 = vpack.c.b16 %v811, %v807
      %v936 = vpack.c.b16 %v816, %v812
      %v937 = vpack.c.b16 %v817, %v813
      %v938 = vpack.c.b16 %v818, %v814
      %v939 = vpack.c.b16 %v819, %v815
      %v940 = vpack.c.b16 %v824, %v820
      %v941 = vpack.c.b16 %v825, %v821
      %v942 = vpack.c.b16 %v826, %v822
      %v943 = vpack.c.b16 %v827, %v823
      %v944 = vpack.c.b16 %v832, %v828
      %v945 = vpack.c.b16 %v833, %v829
      %v946 = vpack.c.b16 %v834, %v830
      %v947 = vpack.c.b16 %v835, %v831
      %v948 = vpack.c.b16 %v840, %v836
      %v949 = vpack.c.b16 %v841, %v837
      %v950 = vpack.c.b16 %v842, %v838
      %v951 = vpack.c.b16 %v843, %v839
      %v952 = vpack.c.b16 %v848, %v844
      %v953 = vpack.c.b16 %v849, %v845
      %v954 = vpack.c.b16 %v850, %v846
      %v955 = vpack.c.b16 %v851, %v847
      %v956 = vpack.c.b16 %v856, %v852
      %v957 = vpack.c.b16 %v857, %v853
      %v958 = vpack.c.b16 %v858, %v854
      %v959 = vpack.c.b16 %v859, %v855
      %v960 = vpack.c.b16 %v864, %v860
      %v961 = vpack.c.b16 %v865, %v861
      %v962 = vpack.c.b16 %v866, %v862
      %v963 = vpack.c.b16 %v867, %v863
      %v964 = vpack.c.b16 %v872, %v868
      %v965 = vpack.c.b16 %v873, %v869
      %v966 = vpack.c.b16 %v874, %v870
      %v967 = vpack.c.b16 %v875, %v871
      %v968 = vpack.c.b16 %v880, %v876
      %v969 = vpack.c.b16 %v881, %v877
      %v970 = vpack.c.b16 %v882, %v878
      %v971 = vpack.c.b16 %v883, %v879
      %v972 = vpack.c.b16 %v888, %v884
      %v973 = vpack.c.b16 %v889, %v885
      %v974 = vpack.c.b16 %v890, %v886
      %v975 = vpack.c.b16 %v891, %v887
      %v976 = vpack.c.b16 %v896, %v892
      %v977 = vpack.c.b16 %v897, %v893
      %v978 = vpack.c.b16 %v898, %v894
      %v979 = vpack.c.b16 %v899, %v895
      %v980 = vpack.c.b16 %v904, %v900
      %v981 = vpack.c.b16 %v905, %v901
      %v982 = vpack.c.b16 %v906, %v902
      %v983 = vpack.c.b16 %v907, %v903
      %v984 = vpack.c.b16 %v912, %v908
      %v985 = vpack.c.b16 %v913, %v909
      %v986 = vpack.c.b16 %v914, %v910
      %v987 = vpack.c.b16 %v915, %v911
      %v988 = vpack.c.b16 %v920, %v916
      %v989 = vpack.c.b16 %v921, %v917
      %v990 = vpack.c.b16 %v922, %v918
      %v991 = vpack.c.b16 %v923, %v919
      %v992 = vpack.c.b16 %v928, %v924
      %v993 = vpack.c.b16 %v929, %v925
      %v994 = vpack.c.b16 %v930, %v926
      %v995 = vpack.c.b16 %v931, %v927
      %1060 = vmatpush.bf16.msra.mxu0 %v960
      %1061 = vmatpush.bf16.msra.mxu0 %v956
      %1062 = vmatpush.bf16.msra.mxu0 %v952
      %1063 = vmatpush.bf16.msra.mxu0 %v948
      %1064 = vmatpush.bf16.msra.mxu0 %v944
      %1065 = vmatpush.bf16.msra.mxu0 %v940
      %1066 = vmatpush.bf16.msra.mxu0 %v936
      %1067 = vmatpush.bf16.msra.mxu0 %v932
      %1068 = vmatmul.bf16.gmra.mxu0 %v736
      %v1069 = vpop.f32.mrf.mxu0
      %v1070 = vadd.f32 %v652, %v1069
      %v1071 = vpop.f32.mrf.mxu0
      %1072 = vdwg.mxu0
      %1073 = vmatpush.bf16.msra.mxu0 %v992
      %1074 = vmatpush.bf16.msra.mxu0 %v988
      %1075 = vmatpush.bf16.msra.mxu0 %v984
      %1076 = vmatpush.bf16.msra.mxu0 %v980
      %1077 = vmatpush.bf16.msra.mxu0 %v976
      %1078 = vmatpush.bf16.msra.mxu0 %v972
      %1079 = vmatpush.bf16.msra.mxu0 %v968
      %1080 = vmatpush.bf16.msra.mxu0 %v964
      %1081 = vmatmul.bf16.gmra.mxu0 %v737
      %v1082 = vpop.f32.mrf.mxu0
      %v1083 = vadd.f32 %v1070, %v1082
      %v1084 = vpop.f32.mrf.mxu0
      %1085 = vdwg.mxu0
      %1086 = vmatpush.bf16.msra.mxu0 %v961
      %1087 = vmatpush.bf16.msra.mxu0 %v957
      %1088 = vmatpush.bf16.msra.mxu0 %v953
      %1089 = vmatpush.bf16.msra.mxu0 %v949
      %1090 = vmatpush.bf16.msra.mxu0 %v945
      %1091 = vmatpush.bf16.msra.mxu0 %v941
      %1092 = vmatpush.bf16.msra.mxu0 %v937
      %1093 = vmatpush.bf16.msra.mxu0 %v933
      %1094 = vmatmul.bf16.gmra.mxu0 %v736
      %v1095 = vpop.f32.mrf.mxu0
      %v1096 = vadd.f32 %v678, %v1095
      %v1097 = vpop.f32.mrf.mxu0
      %1098 = vdwg.mxu0
      %1099 = vmatpush.bf16.msra.mxu0 %v993
      %1100 = vmatpush.bf16.msra.mxu0 %v989
      %1101 = vmatpush.bf16.msra.mxu0 %v985
      %1102 = vmatpush.bf16.msra.mxu0 %v981
      %1103 = vmatpush.bf16.msra.mxu0 %v977
      %1104 = vmatpush.bf16.msra.mxu0 %v973
      %1105 = vmatpush.bf16.msra.mxu0 %v969
      %1106 = vmatpush.bf16.msra.mxu0 %v965
      %1107 = vmatmul.bf16.gmra.mxu0 %v737
      %v1108 = vpop.f32.mrf.mxu0
      %v1109 = vadd.f32 %v1096, %v1108
      %v1110 = vpop.f32.mrf.mxu0
      %1111 = vdwg.mxu0
      %1112 = vmatpush.bf16.msra.mxu0 %v962
      %1113 = vmatpush.bf16.msra.mxu0 %v958
      %1114 = vmatpush.bf16.msra.mxu0 %v954
      %1115 = vmatpush.bf16.msra.mxu0 %v950
      %1116 = vmatpush.bf16.msra.mxu0 %v946
      %1117 = vmatpush.bf16.msra.mxu0 %v942
      %1118 = vmatpush.bf16.msra.mxu0 %v938
      %1119 = vmatpush.bf16.msra.mxu0 %v934
      %1120 = vmatmul.bf16.gmra.mxu0 %v736
      %v1121 = vpop.f32.mrf.mxu0
      %v1122 = vadd.f32 %v704, %v1121
      %v1123 = vpop.f32.mrf.mxu0
      %1124 = vdwg.mxu0
      %1125 = vmatpush.bf16.msra.mxu0 %v994
      %1126 = vmatpush.bf16.msra.mxu0 %v990
      %1127 = vmatpush.bf16.msra.mxu0 %v986
      %1128 = vmatpush.bf16.msra.mxu0 %v982
      %1129 = vmatpush.bf16.msra.mxu0 %v978
      %1130 = vmatpush.bf16.msra.mxu0 %v974
      %1131 = vmatpush.bf16.msra.mxu0 %v970
      %1132 = vmatpush.bf16.msra.mxu0 %v966
      %1133 = vmatmul.bf16.gmra.mxu0 %v737
      %v1134 = vpop.f32.mrf.mxu0
      %v1135 = vadd.f32 %v1122, %v1134
      %v1136 = vpop.f32.mrf.mxu0
      %1137 = vdwg.mxu0
      %1138 = vmatpush.bf16.msra.mxu0 %v963
      %1139 = vmatpush.bf16.msra.mxu0 %v959
      %1140 = vmatpush.bf16.msra.mxu0 %v955
      %1141 = vmatpush.bf16.msra.mxu0 %v951
      %1142 = vmatpush.bf16.msra.mxu0 %v947
      %1143 = vmatpush.bf16.msra.mxu0 %v943
      %1144 = vmatpush.bf16.msra.mxu0 %v939
      %1145 = vmatpush.bf16.msra.mxu0 %v935
      %1146 = vmatmul.bf16.gmra.mxu0 %v736
      %v1147 = vpop.f32.mrf.mxu0
      %v1148 = vadd.f32 %v730, %v1147
      %v1149 = vpop.f32.mrf.mxu0
      %1150 = vdwg.mxu0
      %1151 = vmatpush.bf16.msra.mxu0 %v995
      %1152 = vmatpush.bf16.msra.mxu0 %v991
      %1153 = vmatpush.bf16.msra.mxu0 %v987
      %1154 = vmatpush.bf16.msra.mxu0 %v983
      %1155 = vmatpush.bf16.msra.mxu0 %v979
      %1156 = vmatpush.bf16.msra.mxu0 %v975
      %1157 = vmatpush.bf16.msra.mxu0 %v971
      %1158 = vmatpush.bf16.msra.mxu0 %v967
      %1159 = vmatmul.bf16.gmra.mxu0 %v737
      %v1160 = vpop.f32.mrf.mxu0
      %v1161 = vadd.f32 %v1148, %v1160
      %v1162 = vpop.f32.mrf.mxu0
      %1163 = vdwg.mxu0
      %v1164 = vld [vmem:[%s164] sm:$0x33]
      %s1165 = scalar_lea.vmem %s1, 1024
      %v1166 = vld [vmem:[%s1165] sm:$0xff]
      %v1167 = vld [vmem:[%s1165 + $0x8] sm:$0xff]
      %v1168 = vld [vmem:[%s1165 + $0x10] sm:$0xff]
      %v1169 = vld [vmem:[%s1165 + $0x18] sm:$0xff]
      %v1170 = vld [vmem:[%s1165 + $0x20] sm:$0xff]
      %v1171 = vld [vmem:[%s1165 + $0x28] sm:$0xff]
      %v1172 = vld [vmem:[%s1165 + $0x30] sm:$0xff]
      %v1173 = vld [vmem:[%s1165 + $0x38] sm:$0xff]
      %v1174 = vld [vmem:[%s1165 + $0x40] sm:$0xff]
      %v1175 = vld [vmem:[%s1165 + $0x48] sm:$0xff]
      %v1176 = vld [vmem:[%s1165 + $0x50] sm:$0xff]
      %v1177 = vld [vmem:[%s1165 + $0x58] sm:$0xff]
      %v1178 = vld [vmem:[%s1165 + $0x60] sm:$0xff]
      %v1179 = vld [vmem:[%s1165 + $0x68] sm:$0xff]
      %v1180 = vld [vmem:[%s1165 + $0x70] sm:$0xff]
      %v1181 = vld [vmem:[%s1165 + $0x78] sm:$0xff]
      %v1182 = vld [vmem:[%s1165 + $0x80] sm:$0xff]
      %v1183 = vld [vmem:[%s1165 + $0x88] sm:$0xff]
      %v1184 = vld [vmem:[%s1165 + $0x90] sm:$0xff]
      %v1185 = vld [vmem:[%s1165 + $0x98] sm:$0xff]
      %v1186 = vld [vmem:[%s1165 + $0xa0] sm:$0xff]
      %v1187 = vld [vmem:[%s1165 + $0xa8] sm:$0xff]
      %v1188 = vld [vmem:[%s1165 + $0xb0] sm:$0xff]
      %v1189 = vld [vmem:[%s1165 + $0xb8] sm:$0xff]
      %v1190 = vld [vmem:[%s1165 + $0xc0] sm:$0xff]
      %v1191 = vld [vmem:[%s1165 + $0xc8] sm:$0xff]
      %v1192 = vld [vmem:[%s1165 + $0xd0] sm:$0xff]
      %v1193 = vld [vmem:[%s1165 + $0xd8] sm:$0xff]
      %v1194 = vld [vmem:[%s1165 + $0xe0] sm:$0xff]
      %v1195 = vld [vmem:[%s1165 + $0xe8] sm:$0xff]
      %v1196 = vld [vmem:[%s1165 + $0xf0] sm:$0xff]
      %v1197 = vld [vmem:[%s1165 + $0xf8] sm:$0xff]
      %v1198 = vld [vmem:[%s1165 + $0x100] sm:$0xff]
      %v1199 = vld [vmem:[%s1165 + $0x108] sm:$0xff]
      %v1200 = vld [vmem:[%s1165 + $0x110] sm:$0xff]
      %v1201 = vld [vmem:[%s1165 + $0x118] sm:$0xff]
      %v1202 = vld [vmem:[%s1165 + $0x120] sm:$0xff]
      %v1203 = vld [vmem:[%s1165 + $0x128] sm:$0xff]
      %v1204 = vld [vmem:[%s1165 + $0x130] sm:$0xff]
      %v1205 = vld [vmem:[%s1165 + $0x138] sm:$0xff]
      %v1206 = vld [vmem:[%s1165 + $0x140] sm:$0xff]
      %v1207 = vld [vmem:[%s1165 + $0x148] sm:$0xff]
      %v1208 = vld [vmem:[%s1165 + $0x150] sm:$0xff]
      %v1209 = vld [vmem:[%s1165 + $0x158] sm:$0xff]
      %v1210 = vld [vmem:[%s1165 + $0x160] sm:$0xff]
      %v1211 = vld [vmem:[%s1165 + $0x168] sm:$0xff]
      %v1212 = vld [vmem:[%s1165 + $0x170] sm:$0xff]
      %v1213 = vld [vmem:[%s1165 + $0x178] sm:$0xff]
      %v1214 = vld [vmem:[%s1165 + $0x180] sm:$0xff]
      %v1215 = vld [vmem:[%s1165 + $0x188] sm:$0xff]
      %v1216 = vld [vmem:[%s1165 + $0x190] sm:$0xff]
      %v1217 = vld [vmem:[%s1165 + $0x198] sm:$0xff]
      %v1218 = vld [vmem:[%s1165 + $0x1a0] sm:$0xff]
      %v1219 = vld [vmem:[%s1165 + $0x1a8] sm:$0xff]
      %v1220 = vld [vmem:[%s1165 + $0x1b0] sm:$0xff]
      %v1221 = vld [vmem:[%s1165 + $0x1b8] sm:$0xff]
      %v1222 = vld [vmem:[%s1165 + $0x1c0] sm:$0xff]
      %v1223 = vld [vmem:[%s1165 + $0x1c8] sm:$0xff]
      %v1224 = vld [vmem:[%s1165 + $0x1d0] sm:$0xff]
      %v1225 = vld [vmem:[%s1165 + $0x1d8] sm:$0xff]
      %v1226 = vld [vmem:[%s1165 + $0x1e0] sm:$0xff]
      %v1227 = vld [vmem:[%s1165 + $0x1e8] sm:$0xff]
      %v1228 = vld [vmem:[%s1165 + $0x1f0] sm:$0xff]
      %v1229 = vld [vmem:[%s1165 + $0x1f8] sm:$0xff]
      %v1231 = vunpack.c.l.b16 %v1164
      %v1232 = vunpack.c.h.b16 %v1164
      %v1233 = vpack.c.b16 %v1231, %v1231
      %v1234 = vpack.c.b16 %v1232, %v1232
      %v1236 = vshrl.u32 %v1233, 16
      %v1238 = vshll.u32 %v1233, 16
      %v1240 = vrot.slane %v1238, 1
      %v1241 = vor.u32 %v1236, %v1240
      %v1243 = vshrl.u32 %v1234, 16
      %v1245 = vshll.u32 %v1234, 16
      %v1247 = vrot.slane %v1245, 1
      %v1248 = vor.u32 %v1243, %v1247
      %v1315 = vunpack.c.l.b16 %v1166
      %v1316 = vunpack.c.h.b16 %v1166
      %v1317 = vunpack.c.l.b16 %v1167
      %v1318 = vunpack.c.h.b16 %v1167
      %v1319 = vunpack.c.l.b16 %v1168
      %v1320 = vunpack.c.h.b16 %v1168
      %v1321 = vunpack.c.l.b16 %v1169
      %v1322 = vunpack.c.h.b16 %v1169
      %v1323 = vunpack.c.l.b16 %v1170
      %v1324 = vunpack.c.h.b16 %v1170
      %v1325 = vunpack.c.l.b16 %v1171
      %v1326 = vunpack.c.h.b16 %v1171
      %v1327 = vunpack.c.l.b16 %v1172
      %v1328 = vunpack.c.h.b16 %v1172
      %v1329 = vunpack.c.l.b16 %v1173
      %v1330 = vunpack.c.h.b16 %v1173
      %v1331 = vunpack.c.l.b16 %v1174
      %v1332 = vunpack.c.h.b16 %v1174
      %v1333 = vunpack.c.l.b16 %v1175
      %v1334 = vunpack.c.h.b16 %v1175
      %v1335 = vunpack.c.l.b16 %v1176
      %v1336 = vunpack.c.h.b16 %v1176
      %v1337 = vunpack.c.l.b16 %v1177
      %v1338 = vunpack.c.h.b16 %v1177
      %v1339 = vunpack.c.l.b16 %v1178
      %v1340 = vunpack.c.h.b16 %v1178
      %v1341 = vunpack.c.l.b16 %v1179
      %v1342 = vunpack.c.h.b16 %v1179
      %v1343 = vunpack.c.l.b16 %v1180
      %v1344 = vunpack.c.h.b16 %v1180
      %v1345 = vunpack.c.l.b16 %v1181
      %v1346 = vunpack.c.h.b16 %v1181
      %v1347 = vunpack.c.l.b16 %v1182
      %v1348 = vunpack.c.h.b16 %v1182
      %v1349 = vunpack.c.l.b16 %v1183
      %v1350 = vunpack.c.h.b16 %v1183
      %v1351 = vunpack.c.l.b16 %v1184
      %v1352 = vunpack.c.h.b16 %v1184
      %v1353 = vunpack.c.l.b16 %v1185
      %v1354 = vunpack.c.h.b16 %v1185
      %v1355 = vunpack.c.l.b16 %v1186
      %v1356 = vunpack.c.h.b16 %v1186
      %v1357 = vunpack.c.l.b16 %v1187
      %v1358 = vunpack.c.h.b16 %v1187
      %v1359 = vunpack.c.l.b16 %v1188
      %v1360 = vunpack.c.h.b16 %v1188
      %v1361 = vunpack.c.l.b16 %v1189
      %v1362 = vunpack.c.h.b16 %v1189
      %v1363 = vunpack.c.l.b16 %v1190
      %v1364 = vunpack.c.h.b16 %v1190
      %v1365 = vunpack.c.l.b16 %v1191
      %v1366 = vunpack.c.h.b16 %v1191
      %v1367 = vunpack.c.l.b16 %v1192
      %v1368 = vunpack.c.h.b16 %v1192
      %v1369 = vunpack.c.l.b16 %v1193
      %v1370 = vunpack.c.h.b16 %v1193
      %v1371 = vunpack.c.l.b16 %v1194
      %v1372 = vunpack.c.h.b16 %v1194
      %v1373 = vunpack.c.l.b16 %v1195
      %v1374 = vunpack.c.h.b16 %v1195
      %v1375 = vunpack.c.l.b16 %v1196
      %v1376 = vunpack.c.h.b16 %v1196
      %v1377 = vunpack.c.l.b16 %v1197
      %v1378 = vunpack.c.h.b16 %v1197
      %v1379 = vunpack.c.l.b16 %v1198
      %v1380 = vunpack.c.h.b16 %v1198
      %v1381 = vunpack.c.l.b16 %v1199
      %v1382 = vunpack.c.h.b16 %v1199
      %v1383 = vunpack.c.l.b16 %v1200
      %v1384 = vunpack.c.h.b16 %v1200
      %v1385 = vunpack.c.l.b16 %v1201
      %v1386 = vunpack.c.h.b16 %v1201
      %v1387 = vunpack.c.l.b16 %v1202
      %v1388 = vunpack.c.h.b16 %v1202
      %v1389 = vunpack.c.l.b16 %v1203
      %v1390 = vunpack.c.h.b16 %v1203
      %v1391 = vunpack.c.l.b16 %v1204
      %v1392 = vunpack.c.h.b16 %v1204
      %v1393 = vunpack.c.l.b16 %v1205
      %v1394 = vunpack.c.h.b16 %v1205
      %v1395 = vunpack.c.l.b16 %v1206
      %v1396 = vunpack.c.h.b16 %v1206
      %v1397 = vunpack.c.l.b16 %v1207
      %v1398 = vunpack.c.h.b16 %v1207
      %v1399 = vunpack.c.l.b16 %v1208
      %v1400 = vunpack.c.h.b16 %v1208
      %v1401 = vunpack.c.l.b16 %v1209
      %v1402 = vunpack.c.h.b16 %v1209
      %v1403 = vunpack.c.l.b16 %v1210
      %v1404 = vunpack.c.h.b16 %v1210
      %v1405 = vunpack.c.l.b16 %v1211
      %v1406 = vunpack.c.h.b16 %v1211
      %v1407 = vunpack.c.l.b16 %v1212
      %v1408 = vunpack.c.h.b16 %v1212
      %v1409 = vunpack.c.l.b16 %v1213
      %v1410 = vunpack.c.h.b16 %v1213
      %v1411 = vunpack.c.l.b16 %v1214
      %v1412 = vunpack.c.h.b16 %v1214
      %v1413 = vunpack.c.l.b16 %v1215
      %v1414 = vunpack.c.h.b16 %v1215
      %v1415 = vunpack.c.l.b16 %v1216
      %v1416 = vunpack.c.h.b16 %v1216
      %v1417 = vunpack.c.l.b16 %v1217
      %v1418 = vunpack.c.h.b16 %v1217
      %v1419 = vunpack.c.l.b16 %v1218
      %v1420 = vunpack.c.h.b16 %v1218
      %v1421 = vunpack.c.l.b16 %v1219
      %v1422 = vunpack.c.h.b16 %v1219
      %v1423 = vunpack.c.l.b16 %v1220
      %v1424 = vunpack.c.h.b16 %v1220
      %v1425 = vunpack.c.l.b16 %v1221
      %v1426 = vunpack.c.h.b16 %v1221
      %v1427 = vunpack.c.l.b16 %v1222
      %v1428 = vunpack.c.h.b16 %v1222
      %v1429 = vunpack.c.l.b16 %v1223
      %v1430 = vunpack.c.h.b16 %v1223
      %v1431 = vunpack.c.l.b16 %v1224
      %v1432 = vunpack.c.h.b16 %v1224
      %v1433 = vunpack.c.l.b16 %v1225
      %v1434 = vunpack.c.h.b16 %v1225
      %v1435 = vunpack.c.l.b16 %v1226
      %v1436 = vunpack.c.h.b16 %v1226
      %v1437 = vunpack.c.l.b16 %v1227
      %v1438 = vunpack.c.h.b16 %v1227
      %v1439 = vunpack.c.l.b16 %v1228
      %v1440 = vunpack.c.h.b16 %v1228
      %v1441 = vunpack.c.l.b16 %v1229
      %v1442 = vunpack.c.h.b16 %v1229
      %v1443 = vpack.c.b16 %v1319, %v1315
      %v1444 = vpack.c.b16 %v1320, %v1316
      %v1445 = vpack.c.b16 %v1321, %v1317
      %v1446 = vpack.c.b16 %v1322, %v1318
      %v1447 = vpack.c.b16 %v1327, %v1323
      %v1448 = vpack.c.b16 %v1328, %v1324
      %v1449 = vpack.c.b16 %v1329, %v1325
      %v1450 = vpack.c.b16 %v1330, %v1326
      %v1451 = vpack.c.b16 %v1335, %v1331
      %v1452 = vpack.c.b16 %v1336, %v1332
      %v1453 = vpack.c.b16 %v1337, %v1333
      %v1454 = vpack.c.b16 %v1338, %v1334
      %v1455 = vpack.c.b16 %v1343, %v1339
      %v1456 = vpack.c.b16 %v1344, %v1340
      %v1457 = vpack.c.b16 %v1345, %v1341
      %v1458 = vpack.c.b16 %v1346, %v1342
      %v1459 = vpack.c.b16 %v1351, %v1347
      %v1460 = vpack.c.b16 %v1352, %v1348
      %v1461 = vpack.c.b16 %v1353, %v1349
      %v1462 = vpack.c.b16 %v1354, %v1350
      %v1463 = vpack.c.b16 %v1359, %v1355
      %v1464 = vpack.c.b16 %v1360, %v1356
      %v1465 = vpack.c.b16 %v1361, %v1357
      %v1466 = vpack.c.b16 %v1362, %v1358
      %v1467 = vpack.c.b16 %v1367, %v1363
      %v1468 = vpack.c.b16 %v1368, %v1364
      %v1469 = vpack.c.b16 %v1369, %v1365
      %v1470 = vpack.c.b16 %v1370, %v1366
      %v1471 = vpack.c.b16 %v1375, %v1371
      %v1472 = vpack.c.b16 %v1376, %v1372
      %v1473 = vpack.c.b16 %v1377, %v1373
      %v1474 = vpack.c.b16 %v1378, %v1374
      %v1475 = vpack.c.b16 %v1383, %v1379
      %v1476 = vpack.c.b16 %v1384, %v1380
      %v1477 = vpack.c.b16 %v1385, %v1381
      %v1478 = vpack.c.b16 %v1386, %v1382
      %v1479 = vpack.c.b16 %v1391, %v1387
      %v1480 = vpack.c.b16 %v1392, %v1388
      %v1481 = vpack.c.b16 %v1393, %v1389
      %v1482 = vpack.c.b16 %v1394, %v1390
      %v1483 = vpack.c.b16 %v1399, %v1395
      %v1484 = vpack.c.b16 %v1400, %v1396
      %v1485 = vpack.c.b16 %v1401, %v1397
      %v1486 = vpack.c.b16 %v1402, %v1398
      %v1487 = vpack.c.b16 %v1407, %v1403
      %v1488 = vpack.c.b16 %v1408, %v1404
      %v1489 = vpack.c.b16 %v1409, %v1405
      %v1490 = vpack.c.b16 %v1410, %v1406
      %v1491 = vpack.c.b16 %v1415, %v1411
      %v1492 = vpack.c.b16 %v1416, %v1412
      %v1493 = vpack.c.b16 %v1417, %v1413
      %v1494 = vpack.c.b16 %v1418, %v1414
      %v1495 = vpack.c.b16 %v1423, %v1419
      %v1496 = vpack.c.b16 %v1424, %v1420
      %v1497 = vpack.c.b16 %v1425, %v1421
      %v1498 = vpack.c.b16 %v1426, %v1422
      %v1499 = vpack.c.b16 %v1431, %v1427
      %v1500 = vpack.c.b16 %v1432, %v1428
      %v1501 = vpack.c.b16 %v1433, %v1429
      %v1502 = vpack.c.b16 %v1434, %v1430
      %v1503 = vpack.c.b16 %v1439, %v1435
      %v1504 = vpack.c.b16 %v1440, %v1436
      %v1505 = vpack.c.b16 %v1441, %v1437
      %v1506 = vpack.c.b16 %v1442, %v1438
      %1571 = vmatpush.bf16.msra.mxu0 %v1471
      %1572 = vmatpush.bf16.msra.mxu0 %v1467
      %1573 = vmatpush.bf16.msra.mxu0 %v1463
      %1574 = vmatpush.bf16.msra.mxu0 %v1459
      %1575 = vmatpush.bf16.msra.mxu0 %v1455
      %1576 = vmatpush.bf16.msra.mxu0 %v1451
      %1577 = vmatpush.bf16.msra.mxu0 %v1447
      %1578 = vmatpush.bf16.msra.mxu0 %v1443
      %1579 = vmatmul.bf16.gmra.mxu0 %v1241
      %v1580 = vpop.f32.mrf.mxu0
      %v1581 = vadd.f32 0.0, %v1580
      %v1582 = vpop.f32.mrf.mxu0
      %1583 = vdwg.mxu0
      %1584 = vmatpush.bf16.msra.mxu0 %v1503
      %1585 = vmatpush.bf16.msra.mxu0 %v1499
      %1586 = vmatpush.bf16.msra.mxu0 %v1495
      %1587 = vmatpush.bf16.msra.mxu0 %v1491
      %1588 = vmatpush.bf16.msra.mxu0 %v1487
      %1589 = vmatpush.bf16.msra.mxu0 %v1483
      %1590 = vmatpush.bf16.msra.mxu0 %v1479
      %1591 = vmatpush.bf16.msra.mxu0 %v1475
      %1592 = vmatmul.bf16.gmra.mxu0 %v1248
      %v1593 = vpop.f32.mrf.mxu0
      %v1594 = vadd.f32 %v1581, %v1593
      %v1595 = vpop.f32.mrf.mxu0
      %1596 = vdwg.mxu0
      %1597 = vmatpush.bf16.msra.mxu0 %v1472
      %1598 = vmatpush.bf16.msra.mxu0 %v1468
      %1599 = vmatpush.bf16.msra.mxu0 %v1464
      %1600 = vmatpush.bf16.msra.mxu0 %v1460
      %1601 = vmatpush.bf16.msra.mxu0 %v1456
      %1602 = vmatpush.bf16.msra.mxu0 %v1452
      %1603 = vmatpush.bf16.msra.mxu0 %v1448
      %1604 = vmatpush.bf16.msra.mxu0 %v1444
      %1605 = vmatmul.bf16.gmra.mxu0 %v1241
      %v1606 = vpop.f32.mrf.mxu0
      %v1607 = vadd.f32 0.0, %v1606
      %v1608 = vpop.f32.mrf.mxu0
      %1609 = vdwg.mxu0
      %1610 = vmatpush.bf16.msra.mxu0 %v1504
      %1611 = vmatpush.bf16.msra.mxu0 %v1500
      %1612 = vmatpush.bf16.msra.mxu0 %v1496
      %1613 = vmatpush.bf16.msra.mxu0 %v1492
      %1614 = vmatpush.bf16.msra.mxu0 %v1488
      %1615 = vmatpush.bf16.msra.mxu0 %v1484
      %1616 = vmatpush.bf16.msra.mxu0 %v1480
      %1617 = vmatpush.bf16.msra.mxu0 %v1476
      %1618 = vmatmul.bf16.gmra.mxu0 %v1248
      %v1619 = vpop.f32.mrf.mxu0
      %v1620 = vadd.f32 %v1607, %v1619
      %v1621 = vpop.f32.mrf.mxu0
      %1622 = vdwg.mxu0
      %1623 = vmatpush.bf16.msra.mxu0 %v1473
      %1624 = vmatpush.bf16.msra.mxu0 %v1469
      %1625 = vmatpush.bf16.msra.mxu0 %v1465
      %1626 = vmatpush.bf16.msra.mxu0 %v1461
      %1627 = vmatpush.bf16.msra.mxu0 %v1457
      %1628 = vmatpush.bf16.msra.mxu0 %v1453
      %1629 = vmatpush.bf16.msra.mxu0 %v1449
      %1630 = vmatpush.bf16.msra.mxu0 %v1445
      %1631 = vmatmul.bf16.gmra.mxu0 %v1241
      %v1632 = vpop.f32.mrf.mxu0
      %v1633 = vadd.f32 0.0, %v1632
      %v1634 = vpop.f32.mrf.mxu0
      %1635 = vdwg.mxu0
      %1636 = vmatpush.bf16.msra.mxu0 %v1505
      %1637 = vmatpush.bf16.msra.mxu0 %v1501
      %1638 = vmatpush.bf16.msra.mxu0 %v1497
      %1639 = vmatpush.bf16.msra.mxu0 %v1493
      %1640 = vmatpush.bf16.msra.mxu0 %v1489
      %1641 = vmatpush.bf16.msra.mxu0 %v1485
      %1642 = vmatpush.bf16.msra.mxu0 %v1481
      %1643 = vmatpush.bf16.msra.mxu0 %v1477
      %1644 = vmatmul.bf16.gmra.mxu0 %v1248
      %v1645 = vpop.f32.mrf.mxu0
      %v1646 = vadd.f32 %v1633, %v1645
      %v1647 = vpop.f32.mrf.mxu0
      %1648 = vdwg.mxu0
      %1649 = vmatpush.bf16.msra.mxu0 %v1474
      %1650 = vmatpush.bf16.msra.mxu0 %v1470
      %1651 = vmatpush.bf16.msra.mxu0 %v1466
      %1652 = vmatpush.bf16.msra.mxu0 %v1462
      %1653 = vmatpush.bf16.msra.mxu0 %v1458
      %1654 = vmatpush.bf16.msra.mxu0 %v1454
      %1655 = vmatpush.bf16.msra.mxu0 %v1450
      %1656 = vmatpush.bf16.msra.mxu0 %v1446
      %1657 = vmatmul.bf16.gmra.mxu0 %v1241
      %v1658 = vpop.f32.mrf.mxu0
      %v1659 = vadd.f32 0.0, %v1658
      %v1660 = vpop.f32.mrf.mxu0
      %1661 = vdwg.mxu0
      %1662 = vmatpush.bf16.msra.mxu0 %v1506
      %1663 = vmatpush.bf16.msra.mxu0 %v1502
      %1664 = vmatpush.bf16.msra.mxu0 %v1498
      %1665 = vmatpush.bf16.msra.mxu0 %v1494
      %1666 = vmatpush.bf16.msra.mxu0 %v1490
      %1667 = vmatpush.bf16.msra.mxu0 %v1486
      %1668 = vmatpush.bf16.msra.mxu0 %v1482
      %1669 = vmatpush.bf16.msra.mxu0 %v1478
      %1670 = vmatmul.bf16.gmra.mxu0 %v1248
      %v1671 = vpop.f32.mrf.mxu0
      %v1672 = vadd.f32 %v1659, %v1671
      %v1673 = vpop.f32.mrf.mxu0
      %1674 = vdwg.mxu0
      %v1675 = vadd.f32 %v1083, %v1594
      %v1676 = vadd.f32 %v1109, %v1620
      %v1677 = vadd.f32 %v1135, %v1646
      %v1678 = vadd.f32 %v1161, %v1672
      %v1679 = vld [vmem:[%s164 + $0x8] sm:$0x44]
      %s1680 = scalar_lea.vmem %s1, 1536
      %v1681 = vld [vmem:[%s1680] sm:$0xff]
      %v1682 = vld [vmem:[%s1680 + $0x8] sm:$0xff]
      %v1683 = vld [vmem:[%s1680 + $0x10] sm:$0xff]
      %v1684 = vld [vmem:[%s1680 + $0x18] sm:$0xff]
      %v1685 = vld [vmem:[%s1680 + $0x20] sm:$0xff]
      %v1686 = vld [vmem:[%s1680 + $0x28] sm:$0xff]
      %v1687 = vld [vmem:[%s1680 + $0x30] sm:$0xff]
      %v1688 = vld [vmem:[%s1680 + $0x38] sm:$0xff]
      %v1689 = vld [vmem:[%s1680 + $0x40] sm:$0xff]
      %v1690 = vld [vmem:[%s1680 + $0x48] sm:$0xff]
      %v1691 = vld [vmem:[%s1680 + $0x50] sm:$0xff]
      %v1692 = vld [vmem:[%s1680 + $0x58] sm:$0xff]
      %v1693 = vld [vmem:[%s1680 + $0x60] sm:$0xff]
      %v1694 = vld [vmem:[%s1680 + $0x68] sm:$0xff]
      %v1695 = vld [vmem:[%s1680 + $0x70] sm:$0xff]
      %v1696 = vld [vmem:[%s1680 + $0x78] sm:$0xff]
      %v1697 = vld [vmem:[%s1680 + $0x80] sm:$0xff]
      %v1698 = vld [vmem:[%s1680 + $0x88] sm:$0xff]
      %v1699 = vld [vmem:[%s1680 + $0x90] sm:$0xff]
      %v1700 = vld [vmem:[%s1680 + $0x98] sm:$0xff]
      %v1701 = vld [vmem:[%s1680 + $0xa0] sm:$0xff]
      %v1702 = vld [vmem:[%s1680 + $0xa8] sm:$0xff]
      %v1703 = vld [vmem:[%s1680 + $0xb0] sm:$0xff]
      %v1704 = vld [vmem:[%s1680 + $0xb8] sm:$0xff]
      %v1705 = vld [vmem:[%s1680 + $0xc0] sm:$0xff]
      %v1706 = vld [vmem:[%s1680 + $0xc8] sm:$0xff]
      %v1707 = vld [vmem:[%s1680 + $0xd0] sm:$0xff]
      %v1708 = vld [vmem:[%s1680 + $0xd8] sm:$0xff]
      %v1709 = vld [vmem:[%s1680 + $0xe0] sm:$0xff]
      %v1710 = vld [vmem:[%s1680 + $0xe8] sm:$0xff]
      %v1711 = vld [vmem:[%s1680 + $0xf0] sm:$0xff]
      %v1712 = vld [vmem:[%s1680 + $0xf8] sm:$0xff]
      %v1713 = vld [vmem:[%s1680 + $0x100] sm:$0xff]
      %v1714 = vld [vmem:[%s1680 + $0x108] sm:$0xff]
      %v1715 = vld [vmem:[%s1680 + $0x110] sm:$0xff]
      %v1716 = vld [vmem:[%s1680 + $0x118] sm:$0xff]
      %v1717 = vld [vmem:[%s1680 + $0x120] sm:$0xff]
      %v1718 = vld [vmem:[%s1680 + $0x128] sm:$0xff]
      %v1719 = vld [vmem:[%s1680 + $0x130] sm:$0xff]
      %v1720 = vld [vmem:[%s1680 + $0x138] sm:$0xff]
      %v1721 = vld [vmem:[%s1680 + $0x140] sm:$0xff]
      %v1722 = vld [vmem:[%s1680 + $0x148] sm:$0xff]
      %v1723 = vld [vmem:[%s1680 + $0x150] sm:$0xff]
      %v1724 = vld [vmem:[%s1680 + $0x158] sm:$0xff]
      %v1725 = vld [vmem:[%s1680 + $0x160] sm:$0xff]
      %v1726 = vld [vmem:[%s1680 + $0x168] sm:$0xff]
      %v1727 = vld [vmem:[%s1680 + $0x170] sm:$0xff]
      %v1728 = vld [vmem:[%s1680 + $0x178] sm:$0xff]
      %v1729 = vld [vmem:[%s1680 + $0x180] sm:$0xff]
      %v1730 = vld [vmem:[%s1680 + $0x188] sm:$0xff]
      %v1731 = vld [vmem:[%s1680 + $0x190] sm:$0xff]
      %v1732 = vld [vmem:[%s1680 + $0x198] sm:$0xff]
      %v1733 = vld [vmem:[%s1680 + $0x1a0] sm:$0xff]
      %v1734 = vld [vmem:[%s1680 + $0x1a8] sm:$0xff]
      %v1735 = vld [vmem:[%s1680 + $0x1b0] sm:$0xff]
      %v1736 = vld [vmem:[%s1680 + $0x1b8] sm:$0xff]
      %v1737 = vld [vmem:[%s1680 + $0x1c0] sm:$0xff]
      %v1738 = vld [vmem:[%s1680 + $0x1c8] sm:$0xff]
      %v1739 = vld [vmem:[%s1680 + $0x1d0] sm:$0xff]
      %v1740 = vld [vmem:[%s1680 + $0x1d8] sm:$0xff]
      %v1741 = vld [vmem:[%s1680 + $0x1e0] sm:$0xff]
      %v1742 = vld [vmem:[%s1680 + $0x1e8] sm:$0xff]
      %v1743 = vld [vmem:[%s1680 + $0x1f0] sm:$0xff]
      %v1744 = vld [vmem:[%s1680 + $0x1f8] sm:$0xff]
      %v1746 = vunpack.c.l.b16 %v1679
      %v1747 = vunpack.c.h.b16 %v1679
      %v1748 = vpack.c.b16 %v1746, %v1746
      %v1749 = vpack.c.b16 %v1747, %v1747
      %v1750 = vrot.slane %v1748, 2
      %v1751 = vrot.slane %v1749, 2
      %v1818 = vunpack.c.l.b16 %v1681
      %v1819 = vunpack.c.h.b16 %v1681
      %v1820 = vunpack.c.l.b16 %v1682
      %v1821 = vunpack.c.h.b16 %v1682
      %v1822 = vunpack.c.l.b16 %v1683
      %v1823 = vunpack.c.h.b16 %v1683
      %v1824 = vunpack.c.l.b16 %v1684
      %v1825 = vunpack.c.h.b16 %v1684
      %v1826 = vunpack.c.l.b16 %v1685
      %v1827 = vunpack.c.h.b16 %v1685
      %v1828 = vunpack.c.l.b16 %v1686
      %v1829 = vunpack.c.h.b16 %v1686
      %v1830 = vunpack.c.l.b16 %v1687
      %v1831 = vunpack.c.h.b16 %v1687
      %v1832 = vunpack.c.l.b16 %v1688
      %v1833 = vunpack.c.h.b16 %v1688
      %v1834 = vunpack.c.l.b16 %v1689
      %v1835 = vunpack.c.h.b16 %v1689
      %v1836 = vunpack.c.l.b16 %v1690
      %v1837 = vunpack.c.h.b16 %v1690
      %v1838 = vunpack.c.l.b16 %v1691
      %v1839 = vunpack.c.h.b16 %v1691
      %v1840 = vunpack.c.l.b16 %v1692
      %v1841 = vunpack.c.h.b16 %v1692
      %v1842 = vunpack.c.l.b16 %v1693
      %v1843 = vunpack.c.h.b16 %v1693
      %v1844 = vunpack.c.l.b16 %v1694
      %v1845 = vunpack.c.h.b16 %v1694
      %v1846 = vunpack.c.l.b16 %v1695
      %v1847 = vunpack.c.h.b16 %v1695
      %v1848 = vunpack.c.l.b16 %v1696
      %v1849 = vunpack.c.h.b16 %v1696
      %v1850 = vunpack.c.l.b16 %v1697
      %v1851 = vunpack.c.h.b16 %v1697
      %v1852 = vunpack.c.l.b16 %v1698
      %v1853 = vunpack.c.h.b16 %v1698
      %v1854 = vunpack.c.l.b16 %v1699
      %v1855 = vunpack.c.h.b16 %v1699
      %v1856 = vunpack.c.l.b16 %v1700
      %v1857 = vunpack.c.h.b16 %v1700
      %v1858 = vunpack.c.l.b16 %v1701
      %v1859 = vunpack.c.h.b16 %v1701
      %v1860 = vunpack.c.l.b16 %v1702
      %v1861 = vunpack.c.h.b16 %v1702
      %v1862 = vunpack.c.l.b16 %v1703
      %v1863 = vunpack.c.h.b16 %v1703
      %v1864 = vunpack.c.l.b16 %v1704
      %v1865 = vunpack.c.h.b16 %v1704
      %v1866 = vunpack.c.l.b16 %v1705
      %v1867 = vunpack.c.h.b16 %v1705
      %v1868 = vunpack.c.l.b16 %v1706
      %v1869 = vunpack.c.h.b16 %v1706
      %v1870 = vunpack.c.l.b16 %v1707
      %v1871 = vunpack.c.h.b16 %v1707
      %v1872 = vunpack.c.l.b16 %v1708
      %v1873 = vunpack.c.h.b16 %v1708
      %v1874 = vunpack.c.l.b16 %v1709
      %v1875 = vunpack.c.h.b16 %v1709
      %v1876 = vunpack.c.l.b16 %v1710
      %v1877 = vunpack.c.h.b16 %v1710
      %v1878 = vunpack.c.l.b16 %v1711
      %v1879 = vunpack.c.h.b16 %v1711
      %v1880 = vunpack.c.l.b16 %v1712
      %v1881 = vunpack.c.h.b16 %v1712
      %v1882 = vunpack.c.l.b16 %v1713
      %v1883 = vunpack.c.h.b16 %v1713
      %v1884 = vunpack.c.l.b16 %v1714
      %v1885 = vunpack.c.h.b16 %v1714
      %v1886 = vunpack.c.l.b16 %v1715
      %v1887 = vunpack.c.h.b16 %v1715
      %v1888 = vunpack.c.l.b16 %v1716
      %v1889 = vunpack.c.h.b16 %v1716
      %v1890 = vunpack.c.l.b16 %v1717
      %v1891 = vunpack.c.h.b16 %v1717
      %v1892 = vunpack.c.l.b16 %v1718
      %v1893 = vunpack.c.h.b16 %v1718
      %v1894 = vunpack.c.l.b16 %v1719
      %v1895 = vunpack.c.h.b16 %v1719
      %v1896 = vunpack.c.l.b16 %v1720
      %v1897 = vunpack.c.h.b16 %v1720
      %v1898 = vunpack.c.l.b16 %v1721
      %v1899 = vunpack.c.h.b16 %v1721
      %v1900 = vunpack.c.l.b16 %v1722
      %v1901 = vunpack.c.h.b16 %v1722
      %v1902 = vunpack.c.l.b16 %v1723
      %v1903 = vunpack.c.h.b16 %v1723
      %v1904 = vunpack.c.l.b16 %v1724
      %v1905 = vunpack.c.h.b16 %v1724
      %v1906 = vunpack.c.l.b16 %v1725
      %v1907 = vunpack.c.h.b16 %v1725
      %v1908 = vunpack.c.l.b16 %v1726
      %v1909 = vunpack.c.h.b16 %v1726
      %v1910 = vunpack.c.l.b16 %v1727
      %v1911 = vunpack.c.h.b16 %v1727
      %v1912 = vunpack.c.l.b16 %v1728
      %v1913 = vunpack.c.h.b16 %v1728
      %v1914 = vunpack.c.l.b16 %v1729
      %v1915 = vunpack.c.h.b16 %v1729
      %v1916 = vunpack.c.l.b16 %v1730
      %v1917 = vunpack.c.h.b16 %v1730
      %v1918 = vunpack.c.l.b16 %v1731
      %v1919 = vunpack.c.h.b16 %v1731
      %v1920 = vunpack.c.l.b16 %v1732
      %v1921 = vunpack.c.h.b16 %v1732
      %v1922 = vunpack.c.l.b16 %v1733
      %v1923 = vunpack.c.h.b16 %v1733
      %v1924 = vunpack.c.l.b16 %v1734
      %v1925 = vunpack.c.h.b16 %v1734
      %v1926 = vunpack.c.l.b16 %v1735
      %v1927 = vunpack.c.h.b16 %v1735
      %v1928 = vunpack.c.l.b16 %v1736
      %v1929 = vunpack.c.h.b16 %v1736
      %v1930 = vunpack.c.l.b16 %v1737
      %v1931 = vunpack.c.h.b16 %v1737
      %v1932 = vunpack.c.l.b16 %v1738
      %v1933 = vunpack.c.h.b16 %v1738
      %v1934 = vunpack.c.l.b16 %v1739
      %v1935 = vunpack.c.h.b16 %v1739
      %v1936 = vunpack.c.l.b16 %v1740
      %v1937 = vunpack.c.h.b16 %v1740
      %v1938 = vunpack.c.l.b16 %v1741
      %v1939 = vunpack.c.h.b16 %v1741
      %v1940 = vunpack.c.l.b16 %v1742
      %v1941 = vunpack.c.h.b16 %v1742
      %v1942 = vunpack.c.l.b16 %v1743
      %v1943 = vunpack.c.h.b16 %v1743
      %v1944 = vunpack.c.l.b16 %v1744
      %v1945 = vunpack.c.h.b16 %v1744
      %v1946 = vpack.c.b16 %v1822, %v1818
      %v1947 = vpack.c.b16 %v1823, %v1819
      %v1948 = vpack.c.b16 %v1824, %v1820
      %v1949 = vpack.c.b16 %v1825, %v1821
      %v1950 = vpack.c.b16 %v1830, %v1826
      %v1951 = vpack.c.b16 %v1831, %v1827
      %v1952 = vpack.c.b16 %v1832, %v1828
      %v1953 = vpack.c.b16 %v1833, %v1829
      %v1954 = vpack.c.b16 %v1838, %v1834
      %v1955 = vpack.c.b16 %v1839, %v1835
      %v1956 = vpack.c.b16 %v1840, %v1836
      %v1957 = vpack.c.b16 %v1841, %v1837
      %v1958 = vpack.c.b16 %v1846, %v1842
      %v1959 = vpack.c.b16 %v1847, %v1843
      %v1960 = vpack.c.b16 %v1848, %v1844
      %v1961 = vpack.c.b16 %v1849, %v1845
      %v1962 = vpack.c.b16 %v1854, %v1850
      %v1963 = vpack.c.b16 %v1855, %v1851
      %v1964 = vpack.c.b16 %v1856, %v1852
      %v1965 = vpack.c.b16 %v1857, %v1853
      %v1966 = vpack.c.b16 %v1862, %v1858
      %v1967 = vpack.c.b16 %v1863, %v1859
      %v1968 = vpack.c.b16 %v1864, %v1860
      %v1969 = vpack.c.b16 %v1865, %v1861
      %v1970 = vpack.c.b16 %v1870, %v1866
      %v1971 = vpack.c.b16 %v1871, %v1867
      %v1972 = vpack.c.b16 %v1872, %v1868
      %v1973 = vpack.c.b16 %v1873, %v1869
      %v1974 = vpack.c.b16 %v1878, %v1874
      %v1975 = vpack.c.b16 %v1879, %v1875
      %v1976 = vpack.c.b16 %v1880, %v1876
      %v1977 = vpack.c.b16 %v1881, %v1877
      %v1978 = vpack.c.b16 %v1886, %v1882
      %v1979 = vpack.c.b16 %v1887, %v1883
      %v1980 = vpack.c.b16 %v1888, %v1884
      %v1981 = vpack.c.b16 %v1889, %v1885
      %v1982 = vpack.c.b16 %v1894, %v1890
      %v1983 = vpack.c.b16 %v1895, %v1891
      %v1984 = vpack.c.b16 %v1896, %v1892
      %v1985 = vpack.c.b16 %v1897, %v1893
      %v1986 = vpack.c.b16 %v1902, %v1898
      %v1987 = vpack.c.b16 %v1903, %v1899
      %v1988 = vpack.c.b16 %v1904, %v1900
      %v1989 = vpack.c.b16 %v1905, %v1901
      %v1990 = vpack.c.b16 %v1910, %v1906
      %v1991 = vpack.c.b16 %v1911, %v1907
      %v1992 = vpack.c.b16 %v1912, %v1908
      %v1993 = vpack.c.b16 %v1913, %v1909
      %v1994 = vpack.c.b16 %v1918, %v1914
      %v1995 = vpack.c.b16 %v1919, %v1915
      %v1996 = vpack.c.b16 %v1920, %v1916
      %v1997 = vpack.c.b16 %v1921, %v1917
      %v1998 = vpack.c.b16 %v1926, %v1922
      %v1999 = vpack.c.b16 %v1927, %v1923
      %v2000 = vpack.c.b16 %v1928, %v1924
      %v2001 = vpack.c.b16 %v1929, %v1925
      %v2002 = vpack.c.b16 %v1934, %v1930
      %v2003 = vpack.c.b16 %v1935, %v1931
      %v2004 = vpack.c.b16 %v1936, %v1932
      %v2005 = vpack.c.b16 %v1937, %v1933
      %v2006 = vpack.c.b16 %v1942, %v1938
      %v2007 = vpack.c.b16 %v1943, %v1939
      %v2008 = vpack.c.b16 %v1944, %v1940
      %v2009 = vpack.c.b16 %v1945, %v1941
      %2074 = vmatpush.bf16.msra.mxu0 %v1974
      %2075 = vmatpush.bf16.msra.mxu0 %v1970
      %2076 = vmatpush.bf16.msra.mxu0 %v1966
      %2077 = vmatpush.bf16.msra.mxu0 %v1962
      %2078 = vmatpush.bf16.msra.mxu0 %v1958
      %2079 = vmatpush.bf16.msra.mxu0 %v1954
      %2080 = vmatpush.bf16.msra.mxu0 %v1950
      %2081 = vmatpush.bf16.msra.mxu0 %v1946
      %2082 = vmatmul.bf16.gmra.mxu0 %v1750
      %v2083 = vpop.f32.mrf.mxu0
      %v2084 = vadd.f32 0.0, %v2083
      %v2085 = vpop.f32.mrf.mxu0
      %2086 = vdwg.mxu0
      %2087 = vmatpush.bf16.msra.mxu0 %v2006
      %2088 = vmatpush.bf16.msra.mxu0 %v2002
      %2089 = vmatpush.bf16.msra.mxu0 %v1998
      %2090 = vmatpush.bf16.msra.mxu0 %v1994
      %2091 = vmatpush.bf16.msra.mxu0 %v1990
      %2092 = vmatpush.bf16.msra.mxu0 %v1986
      %2093 = vmatpush.bf16.msra.mxu0 %v1982
      %2094 = vmatpush.bf16.msra.mxu0 %v1978
      %2095 = vmatmul.bf16.gmra.mxu0 %v1751
      %v2096 = vpop.f32.mrf.mxu0
      %v2097 = vadd.f32 %v2084, %v2096
      %v2098 = vpop.f32.mrf.mxu0
      %2099 = vdwg.mxu0
      %2100 = vmatpush.bf16.msra.mxu0 %v1975
      %2101 = vmatpush.bf16.msra.mxu0 %v1971
      %2102 = vmatpush.bf16.msra.mxu0 %v1967
      %2103 = vmatpush.bf16.msra.mxu0 %v1963
      %2104 = vmatpush.bf16.msra.mxu0 %v1959
      %2105 = vmatpush.bf16.msra.mxu0 %v1955
      %2106 = vmatpush.bf16.msra.mxu0 %v1951
      %2107 = vmatpush.bf16.msra.mxu0 %v1947
      %2108 = vmatmul.bf16.gmra.mxu0 %v1750
      %v2109 = vpop.f32.mrf.mxu0
      %v2110 = vadd.f32 0.0, %v2109
      %v2111 = vpop.f32.mrf.mxu0
      %2112 = vdwg.mxu0
      %2113 = vmatpush.bf16.msra.mxu0 %v2007
      %2114 = vmatpush.bf16.msra.mxu0 %v2003
      %2115 = vmatpush.bf16.msra.mxu0 %v1999
      %2116 = vmatpush.bf16.msra.mxu0 %v1995
      %2117 = vmatpush.bf16.msra.mxu0 %v1991
      %2118 = vmatpush.bf16.msra.mxu0 %v1987
      %2119 = vmatpush.bf16.msra.mxu0 %v1983
      %2120 = vmatpush.bf16.msra.mxu0 %v1979
      %2121 = vmatmul.bf16.gmra.mxu0 %v1751
      %v2122 = vpop.f32.mrf.mxu0
      %v2123 = vadd.f32 %v2110, %v2122
      %v2124 = vpop.f32.mrf.mxu0
      %2125 = vdwg.mxu0
      %2126 = vmatpush.bf16.msra.mxu0 %v1976
      %2127 = vmatpush.bf16.msra.mxu0 %v1972
      %2128 = vmatpush.bf16.msra.mxu0 %v1968
      %2129 = vmatpush.bf16.msra.mxu0 %v1964
      %2130 = vmatpush.bf16.msra.mxu0 %v1960
      %2131 = vmatpush.bf16.msra.mxu0 %v1956
      %2132 = vmatpush.bf16.msra.mxu0 %v1952
      %2133 = vmatpush.bf16.msra.mxu0 %v1948
      %2134 = vmatmul.bf16.gmra.mxu0 %v1750
      %v2135 = vpop.f32.mrf.mxu0
      %v2136 = vadd.f32 0.0, %v2135
      %v2137 = vpop.f32.mrf.mxu0
      %2138 = vdwg.mxu0
      %2139 = vmatpush.bf16.msra.mxu0 %v2008
      %2140 = vmatpush.bf16.msra.mxu0 %v2004
      %2141 = vmatpush.bf16.msra.mxu0 %v2000
      %2142 = vmatpush.bf16.msra.mxu0 %v1996
      %2143 = vmatpush.bf16.msra.mxu0 %v1992
      %2144 = vmatpush.bf16.msra.mxu0 %v1988
      %2145 = vmatpush.bf16.msra.mxu0 %v1984
      %2146 = vmatpush.bf16.msra.mxu0 %v1980
      %2147 = vmatmul.bf16.gmra.mxu0 %v1751
      %v2148 = vpop.f32.mrf.mxu0
      %v2149 = vadd.f32 %v2136, %v2148
      %v2150 = vpop.f32.mrf.mxu0
      %2151 = vdwg.mxu0
      %2152 = vmatpush.bf16.msra.mxu0 %v1977
      %2153 = vmatpush.bf16.msra.mxu0 %v1973
      %2154 = vmatpush.bf16.msra.mxu0 %v1969
      %2155 = vmatpush.bf16.msra.mxu0 %v1965
      %2156 = vmatpush.bf16.msra.mxu0 %v1961
      %2157 = vmatpush.bf16.msra.mxu0 %v1957
      %2158 = vmatpush.bf16.msra.mxu0 %v1953
      %2159 = vmatpush.bf16.msra.mxu0 %v1949
      %2160 = vmatmul.bf16.gmra.mxu0 %v1750
      %v2161 = vpop.f32.mrf.mxu0
      %v2162 = vadd.f32 0.0, %v2161
      %v2163 = vpop.f32.mrf.mxu0
      %2164 = vdwg.mxu0
      %2165 = vmatpush.bf16.msra.mxu0 %v2009
      %2166 = vmatpush.bf16.msra.mxu0 %v2005
      %2167 = vmatpush.bf16.msra.mxu0 %v2001
      %2168 = vmatpush.bf16.msra.mxu0 %v1997
      %2169 = vmatpush.bf16.msra.mxu0 %v1993
      %2170 = vmatpush.bf16.msra.mxu0 %v1989
      %2171 = vmatpush.bf16.msra.mxu0 %v1985
      %2172 = vmatpush.bf16.msra.mxu0 %v1981
      %2173 = vmatmul.bf16.gmra.mxu0 %v1751
      %v2174 = vpop.f32.mrf.mxu0
      %v2175 = vadd.f32 %v2162, %v2174
      %v2176 = vpop.f32.mrf.mxu0
      %2177 = vdwg.mxu0
      %v2178 = vadd.f32 %v1675, %v2097
      %v2179 = vadd.f32 %v1676, %v2123
      %v2180 = vadd.f32 %v1677, %v2149
      %v2181 = vadd.f32 %v1678, %v2175
      %v2182 = vld [vmem:[%s164 + $0x10] sm:$0x22]
      %s2183 = scalar_lea.vmem %s1, 2048
      %v2184 = vld [vmem:[%s2183] sm:$0xff]
      %v2185 = vld [vmem:[%s2183 + $0x8] sm:$0xff]
      %v2186 = vld [vmem:[%s2183 + $0x10] sm:$0xff]
      %v2187 = vld [vmem:[%s2183 + $0x18] sm:$0xff]
      %v2188 = vld [vmem:[%s2183 + $0x20] sm:$0xff]
      %v2189 = vld [vmem:[%s2183 + $0x28] sm:$0xff]
      %v2190 = vld [vmem:[%s2183 + $0x30] sm:$0xff]
      %v2191 = vld [vmem:[%s2183 + $0x38] sm:$0xff]
      %v2192 = vld [vmem:[%s2183 + $0x40] sm:$0xff]
      %v2193 = vld [vmem:[%s2183 + $0x48] sm:$0xff]
      %v2194 = vld [vmem:[%s2183 + $0x50] sm:$0xff]
      %v2195 = vld [vmem:[%s2183 + $0x58] sm:$0xff]
      %v2196 = vld [vmem:[%s2183 + $0x60] sm:$0xff]
      %v2197 = vld [vmem:[%s2183 + $0x68] sm:$0xff]
      %v2198 = vld [vmem:[%s2183 + $0x70] sm:$0xff]
      %v2199 = vld [vmem:[%s2183 + $0x78] sm:$0xff]
      %v2200 = vld [vmem:[%s2183 + $0x80] sm:$0xff]
      %v2201 = vld [vmem:[%s2183 + $0x88] sm:$0xff]
      %v2202 = vld [vmem:[%s2183 + $0x90] sm:$0xff]
      %v2203 = vld [vmem:[%s2183 + $0x98] sm:$0xff]
      %v2204 = vld [vmem:[%s2183 + $0xa0] sm:$0xff]
      %v2205 = vld [vmem:[%s2183 + $0xa8] sm:$0xff]
      %v2206 = vld [vmem:[%s2183 + $0xb0] sm:$0xff]
      %v2207 = vld [vmem:[%s2183 + $0xb8] sm:$0xff]
      %v2208 = vld [vmem:[%s2183 + $0xc0] sm:$0xff]
      %v2209 = vld [vmem:[%s2183 + $0xc8] sm:$0xff]
      %v2210 = vld [vmem:[%s2183 + $0xd0] sm:$0xff]
      %v2211 = vld [vmem:[%s2183 + $0xd8] sm:$0xff]
      %v2212 = vld [vmem:[%s2183 + $0xe0] sm:$0xff]
      %v2213 = vld [vmem:[%s2183 + $0xe8] sm:$0xff]
      %v2214 = vld [vmem:[%s2183 + $0xf0] sm:$0xff]
      %v2215 = vld [vmem:[%s2183 + $0xf8] sm:$0xff]
      %v2216 = vld [vmem:[%s2183 + $0x100] sm:$0xff]
      %v2217 = vld [vmem:[%s2183 + $0x108] sm:$0xff]
      %v2218 = vld [vmem:[%s2183 + $0x110] sm:$0xff]
      %v2219 = vld [vmem:[%s2183 + $0x118] sm:$0xff]
      %v2220 = vld [vmem:[%s2183 + $0x120] sm:$0xff]
      %v2221 = vld [vmem:[%s2183 + $0x128] sm:$0xff]
      %v2222 = vld [vmem:[%s2183 + $0x130] sm:$0xff]
      %v2223 = vld [vmem:[%s2183 + $0x138] sm:$0xff]
      %v2224 = vld [vmem:[%s2183 + $0x140] sm:$0xff]
      %v2225 = vld [vmem:[%s2183 + $0x148] sm:$0xff]
      %v2226 = vld [vmem:[%s2183 + $0x150] sm:$0xff]
      %v2227 = vld [vmem:[%s2183 + $0x158] sm:$0xff]
      %v2228 = vld [vmem:[%s2183 + $0x160] sm:$0xff]
      %v2229 = vld [vmem:[%s2183 + $0x168] sm:$0xff]
      %v2230 = vld [vmem:[%s2183 + $0x170] sm:$0xff]
      %v2231 = vld [vmem:[%s2183 + $0x178] sm:$0xff]
      %v2232 = vld [vmem:[%s2183 + $0x180] sm:$0xff]
      %v2233 = vld [vmem:[%s2183 + $0x188] sm:$0xff]
      %v2234 = vld [vmem:[%s2183 + $0x190] sm:$0xff]
      %v2235 = vld [vmem:[%s2183 + $0x198] sm:$0xff]
      %v2236 = vld [vmem:[%s2183 + $0x1a0] sm:$0xff]
      %v2237 = vld [vmem:[%s2183 + $0x1a8] sm:$0xff]
      %v2238 = vld [vmem:[%s2183 + $0x1b0] sm:$0xff]
      %v2239 = vld [vmem:[%s2183 + $0x1b8] sm:$0xff]
      %v2240 = vld [vmem:[%s2183 + $0x1c0] sm:$0xff]
      %v2241 = vld [vmem:[%s2183 + $0x1c8] sm:$0xff]
      %v2242 = vld [vmem:[%s2183 + $0x1d0] sm:$0xff]
      %v2243 = vld [vmem:[%s2183 + $0x1d8] sm:$0xff]
      %v2244 = vld [vmem:[%s2183 + $0x1e0] sm:$0xff]
      %v2245 = vld [vmem:[%s2183 + $0x1e8] sm:$0xff]
      %v2246 = vld [vmem:[%s2183 + $0x1f0] sm:$0xff]
      %v2247 = vld [vmem:[%s2183 + $0x1f8] sm:$0xff]
      %v2249 = vunpack.c.l.b16 %v2182
      %v2250 = vunpack.c.h.b16 %v2182
      %v2251 = vpack.c.b16 %v2249, %v2249
      %v2252 = vpack.c.b16 %v2250, %v2250
      %v2253 = vrot.slane %v2251, 1
      %v2254 = vrot.slane %v2252, 1
      %v2321 = vunpack.c.l.b16 %v2184
      %v2322 = vunpack.c.h.b16 %v2184
      %v2323 = vunpack.c.l.b16 %v2185
      %v2324 = vunpack.c.h.b16 %v2185
      %v2325 = vunpack.c.l.b16 %v2186
      %v2326 = vunpack.c.h.b16 %v2186
      %v2327 = vunpack.c.l.b16 %v2187
      %v2328 = vunpack.c.h.b16 %v2187
      %v2329 = vunpack.c.l.b16 %v2188
      %v2330 = vunpack.c.h.b16 %v2188
      %v2331 = vunpack.c.l.b16 %v2189
      %v2332 = vunpack.c.h.b16 %v2189
      %v2333 = vunpack.c.l.b16 %v2190
      %v2334 = vunpack.c.h.b16 %v2190
      %v2335 = vunpack.c.l.b16 %v2191
      %v2336 = vunpack.c.h.b16 %v2191
      %v2337 = vunpack.c.l.b16 %v2192
      %v2338 = vunpack.c.h.b16 %v2192
      %v2339 = vunpack.c.l.b16 %v2193
      %v2340 = vunpack.c.h.b16 %v2193
      %v2341 = vunpack.c.l.b16 %v2194
      %v2342 = vunpack.c.h.b16 %v2194
      %v2343 = vunpack.c.l.b16 %v2195
      %v2344 = vunpack.c.h.b16 %v2195
      %v2345 = vunpack.c.l.b16 %v2196
      %v2346 = vunpack.c.h.b16 %v2196
      %v2347 = vunpack.c.l.b16 %v2197
      %v2348 = vunpack.c.h.b16 %v2197
      %v2349 = vunpack.c.l.b16 %v2198
      %v2350 = vunpack.c.h.b16 %v2198
      %v2351 = vunpack.c.l.b16 %v2199
      %v2352 = vunpack.c.h.b16 %v2199
      %v2353 = vunpack.c.l.b16 %v2200
      %v2354 = vunpack.c.h.b16 %v2200
      %v2355 = vunpack.c.l.b16 %v2201
      %v2356 = vunpack.c.h.b16 %v2201
      %v2357 = vunpack.c.l.b16 %v2202
      %v2358 = vunpack.c.h.b16 %v2202
      %v2359 = vunpack.c.l.b16 %v2203
      %v2360 = vunpack.c.h.b16 %v2203
      %v2361 = vunpack.c.l.b16 %v2204
      %v2362 = vunpack.c.h.b16 %v2204
      %v2363 = vunpack.c.l.b16 %v2205
      %v2364 = vunpack.c.h.b16 %v2205
      %v2365 = vunpack.c.l.b16 %v2206
      %v2366 = vunpack.c.h.b16 %v2206
      %v2367 = vunpack.c.l.b16 %v2207
      %v2368 = vunpack.c.h.b16 %v2207
      %v2369 = vunpack.c.l.b16 %v2208
      %v2370 = vunpack.c.h.b16 %v2208
      %v2371 = vunpack.c.l.b16 %v2209
      %v2372 = vunpack.c.h.b16 %v2209
      %v2373 = vunpack.c.l.b16 %v2210
      %v2374 = vunpack.c.h.b16 %v2210
      %v2375 = vunpack.c.l.b16 %v2211
      %v2376 = vunpack.c.h.b16 %v2211
      %v2377 = vunpack.c.l.b16 %v2212
      %v2378 = vunpack.c.h.b16 %v2212
      %v2379 = vunpack.c.l.b16 %v2213
      %v2380 = vunpack.c.h.b16 %v2213
      %v2381 = vunpack.c.l.b16 %v2214
      %v2382 = vunpack.c.h.b16 %v2214
      %v2383 = vunpack.c.l.b16 %v2215
      %v2384 = vunpack.c.h.b16 %v2215
      %v2385 = vunpack.c.l.b16 %v2216
      %v2386 = vunpack.c.h.b16 %v2216
      %v2387 = vunpack.c.l.b16 %v2217
      %v2388 = vunpack.c.h.b16 %v2217
      %v2389 = vunpack.c.l.b16 %v2218
      %v2390 = vunpack.c.h.b16 %v2218
      %v2391 = vunpack.c.l.b16 %v2219
      %v2392 = vunpack.c.h.b16 %v2219
      %v2393 = vunpack.c.l.b16 %v2220
      %v2394 = vunpack.c.h.b16 %v2220
      %v2395 = vunpack.c.l.b16 %v2221
      %v2396 = vunpack.c.h.b16 %v2221
      %v2397 = vunpack.c.l.b16 %v2222
      %v2398 = vunpack.c.h.b16 %v2222
      %v2399 = vunpack.c.l.b16 %v2223
      %v2400 = vunpack.c.h.b16 %v2223
      %v2401 = vunpack.c.l.b16 %v2224
      %v2402 = vunpack.c.h.b16 %v2224
      %v2403 = vunpack.c.l.b16 %v2225
      %v2404 = vunpack.c.h.b16 %v2225
      %v2405 = vunpack.c.l.b16 %v2226
      %v2406 = vunpack.c.h.b16 %v2226
      %v2407 = vunpack.c.l.b16 %v2227
      %v2408 = vunpack.c.h.b16 %v2227
      %v2409 = vunpack.c.l.b16 %v2228
      %v2410 = vunpack.c.h.b16 %v2228
      %v2411 = vunpack.c.l.b16 %v2229
      %v2412 = vunpack.c.h.b16 %v2229
      %v2413 = vunpack.c.l.b16 %v2230
      %v2414 = vunpack.c.h.b16 %v2230
      %v2415 = vunpack.c.l.b16 %v2231
      %v2416 = vunpack.c.h.b16 %v2231
      %v2417 = vunpack.c.l.b16 %v2232
      %v2418 = vunpack.c.h.b16 %v2232
      %v2419 = vunpack.c.l.b16 %v2233
      %v2420 = vunpack.c.h.b16 %v2233
      %v2421 = vunpack.c.l.b16 %v2234
      %v2422 = vunpack.c.h.b16 %v2234
      %v2423 = vunpack.c.l.b16 %v2235
      %v2424 = vunpack.c.h.b16 %v2235
      %v2425 = vunpack.c.l.b16 %v2236
      %v2426 = vunpack.c.h.b16 %v2236
      %v2427 = vunpack.c.l.b16 %v2237
      %v2428 = vunpack.c.h.b16 %v2237
      %v2429 = vunpack.c.l.b16 %v2238
      %v2430 = vunpack.c.h.b16 %v2238
      %v2431 = vunpack.c.l.b16 %v2239
      %v2432 = vunpack.c.h.b16 %v2239
      %v2433 = vunpack.c.l.b16 %v2240
      %v2434 = vunpack.c.h.b16 %v2240
      %v2435 = vunpack.c.l.b16 %v2241
      %v2436 = vunpack.c.h.b16 %v2241
      %v2437 = vunpack.c.l.b16 %v2242
      %v2438 = vunpack.c.h.b16 %v2242
      %v2439 = vunpack.c.l.b16 %v2243
      %v2440 = vunpack.c.h.b16 %v2243
      %v2441 = vunpack.c.l.b16 %v2244
      %v2442 = vunpack.c.h.b16 %v2244
      %v2443 = vunpack.c.l.b16 %v2245
      %v2444 = vunpack.c.h.b16 %v2245
      %v2445 = vunpack.c.l.b16 %v2246
      %v2446 = vunpack.c.h.b16 %v2246
      %v2447 = vunpack.c.l.b16 %v2247
      %v2448 = vunpack.c.h.b16 %v2247
      %v2449 = vpack.c.b16 %v2325, %v2321
      %v2450 = vpack.c.b16 %v2326, %v2322
      %v2451 = vpack.c.b16 %v2327, %v2323
      %v2452 = vpack.c.b16 %v2328, %v2324
      %v2453 = vpack.c.b16 %v2333, %v2329
      %v2454 = vpack.c.b16 %v2334, %v2330
      %v2455 = vpack.c.b16 %v2335, %v2331
      %v2456 = vpack.c.b16 %v2336, %v2332
      %v2457 = vpack.c.b16 %v2341, %v2337
      %v2458 = vpack.c.b16 %v2342, %v2338
      %v2459 = vpack.c.b16 %v2343, %v2339
      %v2460 = vpack.c.b16 %v2344, %v2340
      %v2461 = vpack.c.b16 %v2349, %v2345
      %v2462 = vpack.c.b16 %v2350, %v2346
      %v2463 = vpack.c.b16 %v2351, %v2347
      %v2464 = vpack.c.b16 %v2352, %v2348
      %v2465 = vpack.c.b16 %v2357, %v2353
      %v2466 = vpack.c.b16 %v2358, %v2354
      %v2467 = vpack.c.b16 %v2359, %v2355
      %v2468 = vpack.c.b16 %v2360, %v2356
      %v2469 = vpack.c.b16 %v2365, %v2361
      %v2470 = vpack.c.b16 %v2366, %v2362
      %v2471 = vpack.c.b16 %v2367, %v2363
      %v2472 = vpack.c.b16 %v2368, %v2364
      %v2473 = vpack.c.b16 %v2373, %v2369
      %v2474 = vpack.c.b16 %v2374, %v2370
      %v2475 = vpack.c.b16 %v2375, %v2371
      %v2476 = vpack.c.b16 %v2376, %v2372
      %v2477 = vpack.c.b16 %v2381, %v2377
      %v2478 = vpack.c.b16 %v2382, %v2378
      %v2479 = vpack.c.b16 %v2383, %v2379
      %v2480 = vpack.c.b16 %v2384, %v2380
      %v2481 = vpack.c.b16 %v2389, %v2385
      %v2482 = vpack.c.b16 %v2390, %v2386
      %v2483 = vpack.c.b16 %v2391, %v2387
      %v2484 = vpack.c.b16 %v2392, %v2388
      %v2485 = vpack.c.b16 %v2397, %v2393
      %v2486 = vpack.c.b16 %v2398, %v2394
      %v2487 = vpack.c.b16 %v2399, %v2395
      %v2488 = vpack.c.b16 %v2400, %v2396
      %v2489 = vpack.c.b16 %v2405, %v2401
      %v2490 = vpack.c.b16 %v2406, %v2402
      %v2491 = vpack.c.b16 %v2407, %v2403
      %v2492 = vpack.c.b16 %v2408, %v2404
      %v2493 = vpack.c.b16 %v2413, %v2409
      %v2494 = vpack.c.b16 %v2414, %v2410
      %v2495 = vpack.c.b16 %v2415, %v2411
      %v2496 = vpack.c.b16 %v2416, %v2412
      %v2497 = vpack.c.b16 %v2421, %v2417
      %v2498 = vpack.c.b16 %v2422, %v2418
      %v2499 = vpack.c.b16 %v2423, %v2419
      %v2500 = vpack.c.b16 %v2424, %v2420
      %v2501 = vpack.c.b16 %v2429, %v2425
      %v2502 = vpack.c.b16 %v2430, %v2426
      %v2503 = vpack.c.b16 %v2431, %v2427
      %v2504 = vpack.c.b16 %v2432, %v2428
      %v2505 = vpack.c.b16 %v2437, %v2433
      %v2506 = vpack.c.b16 %v2438, %v2434
      %v2507 = vpack.c.b16 %v2439, %v2435
      %v2508 = vpack.c.b16 %v2440, %v2436
      %v2509 = vpack.c.b16 %v2445, %v2441
      %v2510 = vpack.c.b16 %v2446, %v2442
      %v2511 = vpack.c.b16 %v2447, %v2443
      %v2512 = vpack.c.b16 %v2448, %v2444
      %2577 = vmatpush.bf16.msra.mxu0 %v2477
      %2578 = vmatpush.bf16.msra.mxu0 %v2473
      %2579 = vmatpush.bf16.msra.mxu0 %v2469
      %2580 = vmatpush.bf16.msra.mxu0 %v2465
      %2581 = vmatpush.bf16.msra.mxu0 %v2461
      %2582 = vmatpush.bf16.msra.mxu0 %v2457
      %2583 = vmatpush.bf16.msra.mxu0 %v2453
      %2584 = vmatpush.bf16.msra.mxu0 %v2449
      %2585 = vmatmul.bf16.gmra.mxu0 %v2253
      %v2586 = vpop.f32.mrf.mxu0
      %v2587 = vadd.f32 0.0, %v2586
      %v2588 = vpop.f32.mrf.mxu0
      %2589 = vdwg.mxu0
      %2590 = vmatpush.bf16.msra.mxu0 %v2509
      %2591 = vmatpush.bf16.msra.mxu0 %v2505
      %2592 = vmatpush.bf16.msra.mxu0 %v2501
      %2593 = vmatpush.bf16.msra.mxu0 %v2497
      %2594 = vmatpush.bf16.msra.mxu0 %v2493
      %2595 = vmatpush.bf16.msra.mxu0 %v2489
      %2596 = vmatpush.bf16.msra.mxu0 %v2485
      %2597 = vmatpush.bf16.msra.mxu0 %v2481
      %2598 = vmatmul.bf16.gmra.mxu0 %v2254
      %v2599 = vpop.f32.mrf.mxu0
      %v2600 = vadd.f32 %v2587, %v2599
      %v2601 = vpop.f32.mrf.mxu0
      %2602 = vdwg.mxu0
      %2603 = vmatpush.bf16.msra.mxu0 %v2478
      %2604 = vmatpush.bf16.msra.mxu0 %v2474
      %2605 = vmatpush.bf16.msra.mxu0 %v2470
      %2606 = vmatpush.bf16.msra.mxu0 %v2466
      %2607 = vmatpush.bf16.msra.mxu0 %v2462
      %2608 = vmatpush.bf16.msra.mxu0 %v2458
      %2609 = vmatpush.bf16.msra.mxu0 %v2454
      %2610 = vmatpush.bf16.msra.mxu0 %v2450
      %2611 = vmatmul.bf16.gmra.mxu0 %v2253
      %v2612 = vpop.f32.mrf.mxu0
      %v2613 = vadd.f32 0.0, %v2612
      %v2614 = vpop.f32.mrf.mxu0
      %2615 = vdwg.mxu0
      %2616 = vmatpush.bf16.msra.mxu0 %v2510
      %2617 = vmatpush.bf16.msra.mxu0 %v2506
      %2618 = vmatpush.bf16.msra.mxu0 %v2502
      %2619 = vmatpush.bf16.msra.mxu0 %v2498
      %2620 = vmatpush.bf16.msra.mxu0 %v2494
      %2621 = vmatpush.bf16.msra.mxu0 %v2490
      %2622 = vmatpush.bf16.msra.mxu0 %v2486
      %2623 = vmatpush.bf16.msra.mxu0 %v2482
      %2624 = vmatmul.bf16.gmra.mxu0 %v2254
      %v2625 = vpop.f32.mrf.mxu0
      %v2626 = vadd.f32 %v2613, %v2625
      %v2627 = vpop.f32.mrf.mxu0
      %2628 = vdwg.mxu0
      %2629 = vmatpush.bf16.msra.mxu0 %v2479
      %2630 = vmatpush.bf16.msra.mxu0 %v2475
      %2631 = vmatpush.bf16.msra.mxu0 %v2471
      %2632 = vmatpush.bf16.msra.mxu0 %v2467
      %2633 = vmatpush.bf16.msra.mxu0 %v2463
      %2634 = vmatpush.bf16.msra.mxu0 %v2459
      %2635 = vmatpush.bf16.msra.mxu0 %v2455
      %2636 = vmatpush.bf16.msra.mxu0 %v2451
      %2637 = vmatmul.bf16.gmra.mxu0 %v2253
      %v2638 = vpop.f32.mrf.mxu0
      %v2639 = vadd.f32 0.0, %v2638
      %v2640 = vpop.f32.mrf.mxu0
      %2641 = vdwg.mxu0
      %2642 = vmatpush.bf16.msra.mxu0 %v2511
      %2643 = vmatpush.bf16.msra.mxu0 %v2507
      %2644 = vmatpush.bf16.msra.mxu0 %v2503
      %2645 = vmatpush.bf16.msra.mxu0 %v2499
      %2646 = vmatpush.bf16.msra.mxu0 %v2495
      %2647 = vmatpush.bf16.msra.mxu0 %v2491
      %2648 = vmatpush.bf16.msra.mxu0 %v2487
      %2649 = vmatpush.bf16.msra.mxu0 %v2483
      %2650 = vmatmul.bf16.gmra.mxu0 %v2254
      %v2651 = vpop.f32.mrf.mxu0
      %v2652 = vadd.f32 %v2639, %v2651
      %v2653 = vpop.f32.mrf.mxu0
      %2654 = vdwg.mxu0
      %2655 = vmatpush.bf16.msra.mxu0 %v2480
      %2656 = vmatpush.bf16.msra.mxu0 %v2476
      %2657 = vmatpush.bf16.msra.mxu0 %v2472
      %2658 = vmatpush.bf16.msra.mxu0 %v2468
      %2659 = vmatpush.bf16.msra.mxu0 %v2464
      %2660 = vmatpush.bf16.msra.mxu0 %v2460
      %2661 = vmatpush.bf16.msra.mxu0 %v2456
      %2662 = vmatpush.bf16.msra.mxu0 %v2452
      %2663 = vmatmul.bf16.gmra.mxu0 %v2253
      %v2664 = vpop.f32.mrf.mxu0
      %v2665 = vadd.f32 0.0, %v2664
      %v2666 = vpop.f32.mrf.mxu0
      %2667 = vdwg.mxu0
      %2668 = vmatpush.bf16.msra.mxu0 %v2512
      %2669 = vmatpush.bf16.msra.mxu0 %v2508
      %2670 = vmatpush.bf16.msra.mxu0 %v2504
      %2671 = vmatpush.bf16.msra.mxu0 %v2500
      %2672 = vmatpush.bf16.msra.mxu0 %v2496
      %2673 = vmatpush.bf16.msra.mxu0 %v2492
      %2674 = vmatpush.bf16.msra.mxu0 %v2488
      %2675 = vmatpush.bf16.msra.mxu0 %v2484
      %2676 = vmatmul.bf16.gmra.mxu0 %v2254
      %v2677 = vpop.f32.mrf.mxu0
      %v2678 = vadd.f32 %v2665, %v2677
      %v2679 = vpop.f32.mrf.mxu0
      %2680 = vdwg.mxu0
      %v2681 = vadd.f32 %v2178, %v2600
      %v2682 = vadd.f32 %v2179, %v2626
      %v2683 = vadd.f32 %v2180, %v2652
      %v2684 = vadd.f32 %v2181, %v2678
      %v2685 = vld [vmem:[%s164 + $0x8] sm:$0xcc]
      %s2686 = scalar_lea.vmem %s1, 2560
      %v2687 = vld [vmem:[%s2686] sm:$0xff]
      %v2688 = vld [vmem:[%s2686 + $0x8] sm:$0xff]
      %v2689 = vld [vmem:[%s2686 + $0x10] sm:$0xff]
      %v2690 = vld [vmem:[%s2686 + $0x18] sm:$0xff]
      %v2691 = vld [vmem:[%s2686 + $0x20] sm:$0xff]
      %v2692 = vld [vmem:[%s2686 + $0x28] sm:$0xff]
      %v2693 = vld [vmem:[%s2686 + $0x30] sm:$0xff]
      %v2694 = vld [vmem:[%s2686 + $0x38] sm:$0xff]
      %v2695 = vld [vmem:[%s2686 + $0x40] sm:$0xff]
      %v2696 = vld [vmem:[%s2686 + $0x48] sm:$0xff]
      %v2697 = vld [vmem:[%s2686 + $0x50] sm:$0xff]
      %v2698 = vld [vmem:[%s2686 + $0x58] sm:$0xff]
      %v2699 = vld [vmem:[%s2686 + $0x60] sm:$0xff]
      %v2700 = vld [vmem:[%s2686 + $0x68] sm:$0xff]
      %v2701 = vld [vmem:[%s2686 + $0x70] sm:$0xff]
      %v2702 = vld [vmem:[%s2686 + $0x78] sm:$0xff]
      %v2703 = vld [vmem:[%s2686 + $0x80] sm:$0xff]
      %v2704 = vld [vmem:[%s2686 + $0x88] sm:$0xff]
      %v2705 = vld [vmem:[%s2686 + $0x90] sm:$0xff]
      %v2706 = vld [vmem:[%s2686 + $0x98] sm:$0xff]
      %v2707 = vld [vmem:[%s2686 + $0xa0] sm:$0xff]
      %v2708 = vld [vmem:[%s2686 + $0xa8] sm:$0xff]
      %v2709 = vld [vmem:[%s2686 + $0xb0] sm:$0xff]
      %v2710 = vld [vmem:[%s2686 + $0xb8] sm:$0xff]
      %v2711 = vld [vmem:[%s2686 + $0xc0] sm:$0xff]
      %v2712 = vld [vmem:[%s2686 + $0xc8] sm:$0xff]
      %v2713 = vld [vmem:[%s2686 + $0xd0] sm:$0xff]
      %v2714 = vld [vmem:[%s2686 + $0xd8] sm:$0xff]
      %v2715 = vld [vmem:[%s2686 + $0xe0] sm:$0xff]
      %v2716 = vld [vmem:[%s2686 + $0xe8] sm:$0xff]
      %v2717 = vld [vmem:[%s2686 + $0xf0] sm:$0xff]
      %v2718 = vld [vmem:[%s2686 + $0xf8] sm:$0xff]
      %v2719 = vld [vmem:[%s2686 + $0x100] sm:$0xff]
      %v2720 = vld [vmem:[%s2686 + $0x108] sm:$0xff]
      %v2721 = vld [vmem:[%s2686 + $0x110] sm:$0xff]
      %v2722 = vld [vmem:[%s2686 + $0x118] sm:$0xff]
      %v2723 = vld [vmem:[%s2686 + $0x120] sm:$0xff]
      %v2724 = vld [vmem:[%s2686 + $0x128] sm:$0xff]
      %v2725 = vld [vmem:[%s2686 + $0x130] sm:$0xff]
      %v2726 = vld [vmem:[%s2686 + $0x138] sm:$0xff]
      %v2727 = vld [vmem:[%s2686 + $0x140] sm:$0xff]
      %v2728 = vld [vmem:[%s2686 + $0x148] sm:$0xff]
      %v2729 = vld [vmem:[%s2686 + $0x150] sm:$0xff]
      %v2730 = vld [vmem:[%s2686 + $0x158] sm:$0xff]
      %v2731 = vld [vmem:[%s2686 + $0x160] sm:$0xff]
      %v2732 = vld [vmem:[%s2686 + $0x168] sm:$0xff]
      %v2733 = vld [vmem:[%s2686 + $0x170] sm:$0xff]
      %v2734 = vld [vmem:[%s2686 + $0x178] sm:$0xff]
      %v2735 = vld [vmem:[%s2686 + $0x180] sm:$0xff]
      %v2736 = vld [vmem:[%s2686 + $0x188] sm:$0xff]
      %v2737 = vld [vmem:[%s2686 + $0x190] sm:$0xff]
      %v2738 = vld [vmem:[%s2686 + $0x198] sm:$0xff]
      %v2739 = vld [vmem:[%s2686 + $0x1a0] sm:$0xff]
      %v2740 = vld [vmem:[%s2686 + $0x1a8] sm:$0xff]
      %v2741 = vld [vmem:[%s2686 + $0x1b0] sm:$0xff]
      %v2742 = vld [vmem:[%s2686 + $0x1b8] sm:$0xff]
      %v2743 = vld [vmem:[%s2686 + $0x1c0] sm:$0xff]
      %v2744 = vld [vmem:[%s2686 + $0x1c8] sm:$0xff]
      %v2745 = vld [vmem:[%s2686 + $0x1d0] sm:$0xff]
      %v2746 = vld [vmem:[%s2686 + $0x1d8] sm:$0xff]
      %v2747 = vld [vmem:[%s2686 + $0x1e0] sm:$0xff]
      %v2748 = vld [vmem:[%s2686 + $0x1e8] sm:$0xff]
      %v2749 = vld [vmem:[%s2686 + $0x1f0] sm:$0xff]
      %v2750 = vld [vmem:[%s2686 + $0x1f8] sm:$0xff]
      %v2752 = vunpack.c.l.b16 %v2685
      %v2753 = vunpack.c.h.b16 %v2685
      %v2754 = vpack.c.b16 %v2752, %v2752
      %v2755 = vpack.c.b16 %v2753, %v2753
      %v2757 = vshrl.u32 %v2754, 16
      %v2759 = vrot.slane %v2757, 2
      %v2760 = vshll.u32 %v2754, 16
      %v2762 = vrot.slane %v2760, 3
      %v2763 = vor.u32 %v2759, %v2762
      %v2765 = vshrl.u32 %v2755, 16
      %v2767 = vrot.slane %v2765, 2
      %v2768 = vshll.u32 %v2755, 16
      %v2770 = vrot.slane %v2768, 3
      %v2771 = vor.u32 %v2767, %v2770
      %v2838 = vunpack.c.l.b16 %v2687
      %v2839 = vunpack.c.h.b16 %v2687
      %v2840 = vunpack.c.l.b16 %v2688
      %v2841 = vunpack.c.h.b16 %v2688
      %v2842 = vunpack.c.l.b16 %v2689
      %v2843 = vunpack.c.h.b16 %v2689
      %v2844 = vunpack.c.l.b16 %v2690
      %v2845 = vunpack.c.h.b16 %v2690
      %v2846 = vunpack.c.l.b16 %v2691
      %v2847 = vunpack.c.h.b16 %v2691
      %v2848 = vunpack.c.l.b16 %v2692
      %v2849 = vunpack.c.h.b16 %v2692
      %v2850 = vunpack.c.l.b16 %v2693
      %v2851 = vunpack.c.h.b16 %v2693
      %v2852 = vunpack.c.l.b16 %v2694
      %v2853 = vunpack.c.h.b16 %v2694
      %v2854 = vunpack.c.l.b16 %v2695
      %v2855 = vunpack.c.h.b16 %v2695
      %v2856 = vunpack.c.l.b16 %v2696
      %v2857 = vunpack.c.h.b16 %v2696
      %v2858 = vunpack.c.l.b16 %v2697
      %v2859 = vunpack.c.h.b16 %v2697
      %v2860 = vunpack.c.l.b16 %v2698
      %v2861 = vunpack.c.h.b16 %v2698
      %v2862 = vunpack.c.l.b16 %v2699
      %v2863 = vunpack.c.h.b16 %v2699
      %v2864 = vunpack.c.l.b16 %v2700
      %v2865 = vunpack.c.h.b16 %v2700
      %v2866 = vunpack.c.l.b16 %v2701
      %v2867 = vunpack.c.h.b16 %v2701
      %v2868 = vunpack.c.l.b16 %v2702
      %v2869 = vunpack.c.h.b16 %v2702
      %v2870 = vunpack.c.l.b16 %v2703
      %v2871 = vunpack.c.h.b16 %v2703
      %v2872 = vunpack.c.l.b16 %v2704
      %v2873 = vunpack.c.h.b16 %v2704
      %v2874 = vunpack.c.l.b16 %v2705
      %v2875 = vunpack.c.h.b16 %v2705
      %v2876 = vunpack.c.l.b16 %v2706
      %v2877 = vunpack.c.h.b16 %v2706
      %v2878 = vunpack.c.l.b16 %v2707
      %v2879 = vunpack.c.h.b16 %v2707
      %v2880 = vunpack.c.l.b16 %v2708
      %v2881 = vunpack.c.h.b16 %v2708
      %v2882 = vunpack.c.l.b16 %v2709
      %v2883 = vunpack.c.h.b16 %v2709
      %v2884 = vunpack.c.l.b16 %v2710
      %v2885 = vunpack.c.h.b16 %v2710
      %v2886 = vunpack.c.l.b16 %v2711
      %v2887 = vunpack.c.h.b16 %v2711
      %v2888 = vunpack.c.l.b16 %v2712
      %v2889 = vunpack.c.h.b16 %v2712
      %v2890 = vunpack.c.l.b16 %v2713
      %v2891 = vunpack.c.h.b16 %v2713
      %v2892 = vunpack.c.l.b16 %v2714
      %v2893 = vunpack.c.h.b16 %v2714
      %v2894 = vunpack.c.l.b16 %v2715
      %v2895 = vunpack.c.h.b16 %v2715
      %v2896 = vunpack.c.l.b16 %v2716
      %v2897 = vunpack.c.h.b16 %v2716
      %v2898 = vunpack.c.l.b16 %v2717
      %v2899 = vunpack.c.h.b16 %v2717
      %v2900 = vunpack.c.l.b16 %v2718
      %v2901 = vunpack.c.h.b16 %v2718
      %v2902 = vunpack.c.l.b16 %v2719
      %v2903 = vunpack.c.h.b16 %v2719
      %v2904 = vunpack.c.l.b16 %v2720
      %v2905 = vunpack.c.h.b16 %v2720
      %v2906 = vunpack.c.l.b16 %v2721
      %v2907 = vunpack.c.h.b16 %v2721
      %v2908 = vunpack.c.l.b16 %v2722
      %v2909 = vunpack.c.h.b16 %v2722
      %v2910 = vunpack.c.l.b16 %v2723
      %v2911 = vunpack.c.h.b16 %v2723
      %v2912 = vunpack.c.l.b16 %v2724
      %v2913 = vunpack.c.h.b16 %v2724
      %v2914 = vunpack.c.l.b16 %v2725
      %v2915 = vunpack.c.h.b16 %v2725
      %v2916 = vunpack.c.l.b16 %v2726
      %v2917 = vunpack.c.h.b16 %v2726
      %v2918 = vunpack.c.l.b16 %v2727
      %v2919 = vunpack.c.h.b16 %v2727
      %v2920 = vunpack.c.l.b16 %v2728
      %v2921 = vunpack.c.h.b16 %v2728
      %v2922 = vunpack.c.l.b16 %v2729
      %v2923 = vunpack.c.h.b16 %v2729
      %v2924 = vunpack.c.l.b16 %v2730
      %v2925 = vunpack.c.h.b16 %v2730
      %v2926 = vunpack.c.l.b16 %v2731
      %v2927 = vunpack.c.h.b16 %v2731
      %v2928 = vunpack.c.l.b16 %v2732
      %v2929 = vunpack.c.h.b16 %v2732
      %v2930 = vunpack.c.l.b16 %v2733
      %v2931 = vunpack.c.h.b16 %v2733
      %v2932 = vunpack.c.l.b16 %v2734
      %v2933 = vunpack.c.h.b16 %v2734
      %v2934 = vunpack.c.l.b16 %v2735
      %v2935 = vunpack.c.h.b16 %v2735
      %v2936 = vunpack.c.l.b16 %v2736
      %v2937 = vunpack.c.h.b16 %v2736
      %v2938 = vunpack.c.l.b16 %v2737
      %v2939 = vunpack.c.h.b16 %v2737
      %v2940 = vunpack.c.l.b16 %v2738
      %v2941 = vunpack.c.h.b16 %v2738
      %v2942 = vunpack.c.l.b16 %v2739
      %v2943 = vunpack.c.h.b16 %v2739
      %v2944 = vunpack.c.l.b16 %v2740
      %v2945 = vunpack.c.h.b16 %v2740
      %v2946 = vunpack.c.l.b16 %v2741
      %v2947 = vunpack.c.h.b16 %v2741
      %v2948 = vunpack.c.l.b16 %v2742
      %v2949 = vunpack.c.h.b16 %v2742
      %v2950 = vunpack.c.l.b16 %v2743
      %v2951 = vunpack.c.h.b16 %v2743
      %v2952 = vunpack.c.l.b16 %v2744
      %v2953 = vunpack.c.h.b16 %v2744
      %v2954 = vunpack.c.l.b16 %v2745
      %v2955 = vunpack.c.h.b16 %v2745
      %v2956 = vunpack.c.l.b16 %v2746
      %v2957 = vunpack.c.h.b16 %v2746
      %v2958 = vunpack.c.l.b16 %v2747
      %v2959 = vunpack.c.h.b16 %v2747
      %v2960 = vunpack.c.l.b16 %v2748
      %v2961 = vunpack.c.h.b16 %v2748
      %v2962 = vunpack.c.l.b16 %v2749
      %v2963 = vunpack.c.h.b16 %v2749
      %v2964 = vunpack.c.l.b16 %v2750
      %v2965 = vunpack.c.h.b16 %v2750
      %v2966 = vpack.c.b16 %v2842, %v2838
      %v2967 = vpack.c.b16 %v2843, %v2839
      %v2968 = vpack.c.b16 %v2844, %v2840
      %v2969 = vpack.c.b16 %v2845, %v2841
      %v2970 = vpack.c.b16 %v2850, %v2846
      %v2971 = vpack.c.b16 %v2851, %v2847
      %v2972 = vpack.c.b16 %v2852, %v2848
      %v2973 = vpack.c.b16 %v2853, %v2849
      %v2974 = vpack.c.b16 %v2858, %v2854
      %v2975 = vpack.c.b16 %v2859, %v2855
      %v2976 = vpack.c.b16 %v2860, %v2856
      %v2977 = vpack.c.b16 %v2861, %v2857
      %v2978 = vpack.c.b16 %v2866, %v2862
      %v2979 = vpack.c.b16 %v2867, %v2863
      %v2980 = vpack.c.b16 %v2868, %v2864
      %v2981 = vpack.c.b16 %v2869, %v2865
      %v2982 = vpack.c.b16 %v2874, %v2870
      %v2983 = vpack.c.b16 %v2875, %v2871
      %v2984 = vpack.c.b16 %v2876, %v2872
      %v2985 = vpack.c.b16 %v2877, %v2873
      %v2986 = vpack.c.b16 %v2882, %v2878
      %v2987 = vpack.c.b16 %v2883, %v2879
      %v2988 = vpack.c.b16 %v2884, %v2880
      %v2989 = vpack.c.b16 %v2885, %v2881
      %v2990 = vpack.c.b16 %v2890, %v2886
      %v2991 = vpack.c.b16 %v2891, %v2887
      %v2992 = vpack.c.b16 %v2892, %v2888
      %v2993 = vpack.c.b16 %v2893, %v2889
      %v2994 = vpack.c.b16 %v2898, %v2894
      %v2995 = vpack.c.b16 %v2899, %v2895
      %v2996 = vpack.c.b16 %v2900, %v2896
      %v2997 = vpack.c.b16 %v2901, %v2897
      %v2998 = vpack.c.b16 %v2906, %v2902
      %v2999 = vpack.c.b16 %v2907, %v2903
      %v3000 = vpack.c.b16 %v2908, %v2904
      %v3001 = vpack.c.b16 %v2909, %v2905
      %v3002 = vpack.c.b16 %v2914, %v2910
      %v3003 = vpack.c.b16 %v2915, %v2911
      %v3004 = vpack.c.b16 %v2916, %v2912
      %v3005 = vpack.c.b16 %v2917, %v2913
      %v3006 = vpack.c.b16 %v2922, %v2918
      %v3007 = vpack.c.b16 %v2923, %v2919
      %v3008 = vpack.c.b16 %v2924, %v2920
      %v3009 = vpack.c.b16 %v2925, %v2921
      %v3010 = vpack.c.b16 %v2930, %v2926
      %v3011 = vpack.c.b16 %v2931, %v2927
      %v3012 = vpack.c.b16 %v2932, %v2928
      %v3013 = vpack.c.b16 %v2933, %v2929
      %v3014 = vpack.c.b16 %v2938, %v2934
      %v3015 = vpack.c.b16 %v2939, %v2935
      %v3016 = vpack.c.b16 %v2940, %v2936
      %v3017 = vpack.c.b16 %v2941, %v2937
      %v3018 = vpack.c.b16 %v2946, %v2942
      %v3019 = vpack.c.b16 %v2947, %v2943
      %v3020 = vpack.c.b16 %v2948, %v2944
      %v3021 = vpack.c.b16 %v2949, %v2945
      %v3022 = vpack.c.b16 %v2954, %v2950
      %v3023 = vpack.c.b16 %v2955, %v2951
      %v3024 = vpack.c.b16 %v2956, %v2952
      %v3025 = vpack.c.b16 %v2957, %v2953
      %v3026 = vpack.c.b16 %v2962, %v2958
      %v3027 = vpack.c.b16 %v2963, %v2959
      %v3028 = vpack.c.b16 %v2964, %v2960
      %v3029 = vpack.c.b16 %v2965, %v2961
      %3094 = vmatpush.bf16.msra.mxu0 %v2994
      %3095 = vmatpush.bf16.msra.mxu0 %v2990
      %3096 = vmatpush.bf16.msra.mxu0 %v2986
      %3097 = vmatpush.bf16.msra.mxu0 %v2982
      %3098 = vmatpush.bf16.msra.mxu0 %v2978
      %3099 = vmatpush.bf16.msra.mxu0 %v2974
      %3100 = vmatpush.bf16.msra.mxu0 %v2970
      %3101 = vmatpush.bf16.msra.mxu0 %v2966
      %3102 = vmatmul.bf16.gmra.mxu0 %v2763
      %v3103 = vpop.f32.mrf.mxu0
      %v3104 = vadd.f32 0.0, %v3103
      %v3105 = vpop.f32.mrf.mxu0
      %3106 = vdwg.mxu0
      %3107 = vmatpush.bf16.msra.mxu0 %v3026
      %3108 = vmatpush.bf16.msra.mxu0 %v3022
      %3109 = vmatpush.bf16.msra.mxu0 %v3018
      %3110 = vmatpush.bf16.msra.mxu0 %v3014
      %3111 = vmatpush.bf16.msra.mxu0 %v3010
      %3112 = vmatpush.bf16.msra.mxu0 %v3006
      %3113 = vmatpush.bf16.msra.mxu0 %v3002
      %3114 = vmatpush.bf16.msra.mxu0 %v2998
      %3115 = vmatmul.bf16.gmra.mxu0 %v2771
      %v3116 = vpop.f32.mrf.mxu0
      %v3117 = vadd.f32 %v3104, %v3116
      %v3118 = vpop.f32.mrf.mxu0
      %3119 = vdwg.mxu0
      %3120 = vmatpush.bf16.msra.mxu0 %v2995
      %3121 = vmatpush.bf16.msra.mxu0 %v2991
      %3122 = vmatpush.bf16.msra.mxu0 %v2987
      %3123 = vmatpush.bf16.msra.mxu0 %v2983
      %3124 = vmatpush.bf16.msra.mxu0 %v2979
      %3125 = vmatpush.bf16.msra.mxu0 %v2975
      %3126 = vmatpush.bf16.msra.mxu0 %v2971
      %3127 = vmatpush.bf16.msra.mxu0 %v2967
      %3128 = vmatmul.bf16.gmra.mxu0 %v2763
      %v3129 = vpop.f32.mrf.mxu0
      %v3130 = vadd.f32 0.0, %v3129
      %v3131 = vpop.f32.mrf.mxu0
      %3132 = vdwg.mxu0
      %3133 = vmatpush.bf16.msra.mxu0 %v3027
      %3134 = vmatpush.bf16.msra.mxu0 %v3023
      %3135 = vmatpush.bf16.msra.mxu0 %v3019
      %3136 = vmatpush.bf16.msra.mxu0 %v3015
      %3137 = vmatpush.bf16.msra.mxu0 %v3011
      %3138 = vmatpush.bf16.msra.mxu0 %v3007
      %3139 = vmatpush.bf16.msra.mxu0 %v3003
      %3140 = vmatpush.bf16.msra.mxu0 %v2999
      %3141 = vmatmul.bf16.gmra.mxu0 %v2771
      %v3142 = vpop.f32.mrf.mxu0
      %v3143 = vadd.f32 %v3130, %v3142
      %v3144 = vpop.f32.mrf.mxu0
      %3145 = vdwg.mxu0
      %3146 = vmatpush.bf16.msra.mxu0 %v2996
      %3147 = vmatpush.bf16.msra.mxu0 %v2992
      %3148 = vmatpush.bf16.msra.mxu0 %v2988
      %3149 = vmatpush.bf16.msra.mxu0 %v2984
      %3150 = vmatpush.bf16.msra.mxu0 %v2980
      %3151 = vmatpush.bf16.msra.mxu0 %v2976
      %3152 = vmatpush.bf16.msra.mxu0 %v2972
      %3153 = vmatpush.bf16.msra.mxu0 %v2968
      %3154 = vmatmul.bf16.gmra.mxu0 %v2763
      %v3155 = vpop.f32.mrf.mxu0
      %v3156 = vadd.f32 0.0, %v3155
      %v3157 = vpop.f32.mrf.mxu0
      %3158 = vdwg.mxu0
      %3159 = vmatpush.bf16.msra.mxu0 %v3028
      %3160 = vmatpush.bf16.msra.mxu0 %v3024
      %3161 = vmatpush.bf16.msra.mxu0 %v3020
      %3162 = vmatpush.bf16.msra.mxu0 %v3016
      %3163 = vmatpush.bf16.msra.mxu0 %v3012
      %3164 = vmatpush.bf16.msra.mxu0 %v3008
      %3165 = vmatpush.bf16.msra.mxu0 %v3004
      %3166 = vmatpush.bf16.msra.mxu0 %v3000
      %3167 = vmatmul.bf16.gmra.mxu0 %v2771
      %v3168 = vpop.f32.mrf.mxu0
      %v3169 = vadd.f32 %v3156, %v3168
      %v3170 = vpop.f32.mrf.mxu0
      %3171 = vdwg.mxu0
      %3172 = vmatpush.bf16.msra.mxu0 %v2997
      %3173 = vmatpush.bf16.msra.mxu0 %v2993
      %3174 = vmatpush.bf16.msra.mxu0 %v2989
      %3175 = vmatpush.bf16.msra.mxu0 %v2985
      %3176 = vmatpush.bf16.msra.mxu0 %v2981
      %3177 = vmatpush.bf16.msra.mxu0 %v2977
      %3178 = vmatpush.bf16.msra.mxu0 %v2973
      %3179 = vmatpush.bf16.msra.mxu0 %v2969
      %3180 = vmatmul.bf16.gmra.mxu0 %v2763
      %v3181 = vpop.f32.mrf.mxu0
      %v3182 = vadd.f32 0.0, %v3181
      %v3183 = vpop.f32.mrf.mxu0
      %3184 = vdwg.mxu0
      %3185 = vmatpush.bf16.msra.mxu0 %v3029
      %3186 = vmatpush.bf16.msra.mxu0 %v3025
      %3187 = vmatpush.bf16.msra.mxu0 %v3021
      %3188 = vmatpush.bf16.msra.mxu0 %v3017
      %3189 = vmatpush.bf16.msra.mxu0 %v3013
      %3190 = vmatpush.bf16.msra.mxu0 %v3009
      %3191 = vmatpush.bf16.msra.mxu0 %v3005
      %3192 = vmatpush.bf16.msra.mxu0 %v3001
      %3193 = vmatmul.bf16.gmra.mxu0 %v2771
      %v3194 = vpop.f32.mrf.mxu0
      %v3195 = vadd.f32 %v3182, %v3194
      %v3196 = vpop.f32.mrf.mxu0
      %3197 = vdwg.mxu0
      %v3198 = vadd.f32 %v2681, %v3117
      %v3199 = vadd.f32 %v2682, %v3143
      %v3200 = vadd.f32 %v2683, %v3169
      %v3201 = vadd.f32 %v2684, %v3195
      %v3202 = vld [vmem:[%s164] sm:$0x22]
      %s3203 = scalar_lea.vmem %s1, 3072
      %v3204 = vld [vmem:[%s3203] sm:$0xff]
      %v3205 = vld [vmem:[%s3203 + $0x8] sm:$0xff]
      %v3206 = vld [vmem:[%s3203 + $0x10] sm:$0xff]
      %v3207 = vld [vmem:[%s3203 + $0x18] sm:$0xff]
      %v3208 = vld [vmem:[%s3203 + $0x20] sm:$0xff]
      %v3209 = vld [vmem:[%s3203 + $0x28] sm:$0xff]
      %v3210 = vld [vmem:[%s3203 + $0x30] sm:$0xff]
      %v3211 = vld [vmem:[%s3203 + $0x38] sm:$0xff]
      %v3212 = vld [vmem:[%s3203 + $0x40] sm:$0xff]
      %v3213 = vld [vmem:[%s3203 + $0x48] sm:$0xff]
      %v3214 = vld [vmem:[%s3203 + $0x50] sm:$0xff]
      %v3215 = vld [vmem:[%s3203 + $0x58] sm:$0xff]
      %v3216 = vld [vmem:[%s3203 + $0x60] sm:$0xff]
      %v3217 = vld [vmem:[%s3203 + $0x68] sm:$0xff]
      %v3218 = vld [vmem:[%s3203 + $0x70] sm:$0xff]
      %v3219 = vld [vmem:[%s3203 + $0x78] sm:$0xff]
      %v3220 = vld [vmem:[%s3203 + $0x80] sm:$0xff]
      %v3221 = vld [vmem:[%s3203 + $0x88] sm:$0xff]
      %v3222 = vld [vmem:[%s3203 + $0x90] sm:$0xff]
      %v3223 = vld [vmem:[%s3203 + $0x98] sm:$0xff]
      %v3224 = vld [vmem:[%s3203 + $0xa0] sm:$0xff]
      %v3225 = vld [vmem:[%s3203 + $0xa8] sm:$0xff]
      %v3226 = vld [vmem:[%s3203 + $0xb0] sm:$0xff]
      %v3227 = vld [vmem:[%s3203 + $0xb8] sm:$0xff]
      %v3228 = vld [vmem:[%s3203 + $0xc0] sm:$0xff]
      %v3229 = vld [vmem:[%s3203 + $0xc8] sm:$0xff]
      %v3230 = vld [vmem:[%s3203 + $0xd0] sm:$0xff]
      %v3231 = vld [vmem:[%s3203 + $0xd8] sm:$0xff]
      %v3232 = vld [vmem:[%s3203 + $0xe0] sm:$0xff]
      %v3233 = vld [vmem:[%s3203 + $0xe8] sm:$0xff]
      %v3234 = vld [vmem:[%s3203 + $0xf0] sm:$0xff]
      %v3235 = vld [vmem:[%s3203 + $0xf8] sm:$0xff]
      %v3236 = vld [vmem:[%s3203 + $0x100] sm:$0xff]
      %v3237 = vld [vmem:[%s3203 + $0x108] sm:$0xff]
      %v3238 = vld [vmem:[%s3203 + $0x110] sm:$0xff]
      %v3239 = vld [vmem:[%s3203 + $0x118] sm:$0xff]
      %v3240 = vld [vmem:[%s3203 + $0x120] sm:$0xff]
      %v3241 = vld [vmem:[%s3203 + $0x128] sm:$0xff]
      %v3242 = vld [vmem:[%s3203 + $0x130] sm:$0xff]
      %v3243 = vld [vmem:[%s3203 + $0x138] sm:$0xff]
      %v3244 = vld [vmem:[%s3203 + $0x140] sm:$0xff]
      %v3245 = vld [vmem:[%s3203 + $0x148] sm:$0xff]
      %v3246 = vld [vmem:[%s3203 + $0x150] sm:$0xff]
      %v3247 = vld [vmem:[%s3203 + $0x158] sm:$0xff]
      %v3248 = vld [vmem:[%s3203 + $0x160] sm:$0xff]
      %v3249 = vld [vmem:[%s3203 + $0x168] sm:$0xff]
      %v3250 = vld [vmem:[%s3203 + $0x170] sm:$0xff]
      %v3251 = vld [vmem:[%s3203 + $0x178] sm:$0xff]
      %v3252 = vld [vmem:[%s3203 + $0x180] sm:$0xff]
      %v3253 = vld [vmem:[%s3203 + $0x188] sm:$0xff]
      %v3254 = vld [vmem:[%s3203 + $0x190] sm:$0xff]
      %v3255 = vld [vmem:[%s3203 + $0x198] sm:$0xff]
      %v3256 = vld [vmem:[%s3203 + $0x1a0] sm:$0xff]
      %v3257 = vld [vmem:[%s3203 + $0x1a8] sm:$0xff]
      %v3258 = vld [vmem:[%s3203 + $0x1b0] sm:$0xff]
      %v3259 = vld [vmem:[%s3203 + $0x1b8] sm:$0xff]
      %v3260 = vld [vmem:[%s3203 + $0x1c0] sm:$0xff]
      %v3261 = vld [vmem:[%s3203 + $0x1c8] sm:$0xff]
      %v3262 = vld [vmem:[%s3203 + $0x1d0] sm:$0xff]
      %v3263 = vld [vmem:[%s3203 + $0x1d8] sm:$0xff]
      %v3264 = vld [vmem:[%s3203 + $0x1e0] sm:$0xff]
      %v3265 = vld [vmem:[%s3203 + $0x1e8] sm:$0xff]
      %v3266 = vld [vmem:[%s3203 + $0x1f0] sm:$0xff]
      %v3267 = vld [vmem:[%s3203 + $0x1f8] sm:$0xff]
      %v3269 = vunpack.c.l.b16 %v3202
      %v3270 = vunpack.c.h.b16 %v3202
      %v3271 = vpack.c.b16 %v3269, %v3269
      %v3272 = vpack.c.b16 %v3270, %v3270
      %v3273 = vrot.slane %v3271, 1
      %v3274 = vrot.slane %v3272, 1
      %v3341 = vunpack.c.l.b16 %v3204
      %v3342 = vunpack.c.h.b16 %v3204
      %v3343 = vunpack.c.l.b16 %v3205
      %v3344 = vunpack.c.h.b16 %v3205
      %v3345 = vunpack.c.l.b16 %v3206
      %v3346 = vunpack.c.h.b16 %v3206
      %v3347 = vunpack.c.l.b16 %v3207
      %v3348 = vunpack.c.h.b16 %v3207
      %v3349 = vunpack.c.l.b16 %v3208
      %v3350 = vunpack.c.h.b16 %v3208
      %v3351 = vunpack.c.l.b16 %v3209
      %v3352 = vunpack.c.h.b16 %v3209
      %v3353 = vunpack.c.l.b16 %v3210
      %v3354 = vunpack.c.h.b16 %v3210
      %v3355 = vunpack.c.l.b16 %v3211
      %v3356 = vunpack.c.h.b16 %v3211
      %v3357 = vunpack.c.l.b16 %v3212
      %v3358 = vunpack.c.h.b16 %v3212
      %v3359 = vunpack.c.l.b16 %v3213
      %v3360 = vunpack.c.h.b16 %v3213
      %v3361 = vunpack.c.l.b16 %v3214
      %v3362 = vunpack.c.h.b16 %v3214
      %v3363 = vunpack.c.l.b16 %v3215
      %v3364 = vunpack.c.h.b16 %v3215
      %v3365 = vunpack.c.l.b16 %v3216
      %v3366 = vunpack.c.h.b16 %v3216
      %v3367 = vunpack.c.l.b16 %v3217
      %v3368 = vunpack.c.h.b16 %v3217
      %v3369 = vunpack.c.l.b16 %v3218
      %v3370 = vunpack.c.h.b16 %v3218
      %v3371 = vunpack.c.l.b16 %v3219
      %v3372 = vunpack.c.h.b16 %v3219
      %v3373 = vunpack.c.l.b16 %v3220
      %v3374 = vunpack.c.h.b16 %v3220
      %v3375 = vunpack.c.l.b16 %v3221
      %v3376 = vunpack.c.h.b16 %v3221
      %v3377 = vunpack.c.l.b16 %v3222
      %v3378 = vunpack.c.h.b16 %v3222
      %v3379 = vunpack.c.l.b16 %v3223
      %v3380 = vunpack.c.h.b16 %v3223
      %v3381 = vunpack.c.l.b16 %v3224
      %v3382 = vunpack.c.h.b16 %v3224
      %v3383 = vunpack.c.l.b16 %v3225
      %v3384 = vunpack.c.h.b16 %v3225
      %v3385 = vunpack.c.l.b16 %v3226
      %v3386 = vunpack.c.h.b16 %v3226
      %v3387 = vunpack.c.l.b16 %v3227
      %v3388 = vunpack.c.h.b16 %v3227
      %v3389 = vunpack.c.l.b16 %v3228
      %v3390 = vunpack.c.h.b16 %v3228
      %v3391 = vunpack.c.l.b16 %v3229
      %v3392 = vunpack.c.h.b16 %v3229
      %v3393 = vunpack.c.l.b16 %v3230
      %v3394 = vunpack.c.h.b16 %v3230
      %v3395 = vunpack.c.l.b16 %v3231
      %v3396 = vunpack.c.h.b16 %v3231
      %v3397 = vunpack.c.l.b16 %v3232
      %v3398 = vunpack.c.h.b16 %v3232
      %v3399 = vunpack.c.l.b16 %v3233
      %v3400 = vunpack.c.h.b16 %v3233
      %v3401 = vunpack.c.l.b16 %v3234
      %v3402 = vunpack.c.h.b16 %v3234
      %v3403 = vunpack.c.l.b16 %v3235
      %v3404 = vunpack.c.h.b16 %v3235
      %v3405 = vunpack.c.l.b16 %v3236
      %v3406 = vunpack.c.h.b16 %v3236
      %v3407 = vunpack.c.l.b16 %v3237
      %v3408 = vunpack.c.h.b16 %v3237
      %v3409 = vunpack.c.l.b16 %v3238
      %v3410 = vunpack.c.h.b16 %v3238
      %v3411 = vunpack.c.l.b16 %v3239
      %v3412 = vunpack.c.h.b16 %v3239
      %v3413 = vunpack.c.l.b16 %v3240
      %v3414 = vunpack.c.h.b16 %v3240
      %v3415 = vunpack.c.l.b16 %v3241
      %v3416 = vunpack.c.h.b16 %v3241
      %v3417 = vunpack.c.l.b16 %v3242
      %v3418 = vunpack.c.h.b16 %v3242
      %v3419 = vunpack.c.l.b16 %v3243
      %v3420 = vunpack.c.h.b16 %v3243
      %v3421 = vunpack.c.l.b16 %v3244
      %v3422 = vunpack.c.h.b16 %v3244
      %v3423 = vunpack.c.l.b16 %v3245
      %v3424 = vunpack.c.h.b16 %v3245
      %v3425 = vunpack.c.l.b16 %v3246
      %v3426 = vunpack.c.h.b16 %v3246
      %v3427 = vunpack.c.l.b16 %v3247
      %v3428 = vunpack.c.h.b16 %v3247
      %v3429 = vunpack.c.l.b16 %v3248
      %v3430 = vunpack.c.h.b16 %v3248
      %v3431 = vunpack.c.l.b16 %v3249
      %v3432 = vunpack.c.h.b16 %v3249
      %v3433 = vunpack.c.l.b16 %v3250
      %v3434 = vunpack.c.h.b16 %v3250
      %v3435 = vunpack.c.l.b16 %v3251
      %v3436 = vunpack.c.h.b16 %v3251
      %v3437 = vunpack.c.l.b16 %v3252
      %v3438 = vunpack.c.h.b16 %v3252
      %v3439 = vunpack.c.l.b16 %v3253
      %v3440 = vunpack.c.h.b16 %v3253
      %v3441 = vunpack.c.l.b16 %v3254
      %v3442 = vunpack.c.h.b16 %v3254
      %v3443 = vunpack.c.l.b16 %v3255
      %v3444 = vunpack.c.h.b16 %v3255
      %v3445 = vunpack.c.l.b16 %v3256
      %v3446 = vunpack.c.h.b16 %v3256
      %v3447 = vunpack.c.l.b16 %v3257
      %v3448 = vunpack.c.h.b16 %v3257
      %v3449 = vunpack.c.l.b16 %v3258
      %v3450 = vunpack.c.h.b16 %v3258
      %v3451 = vunpack.c.l.b16 %v3259
      %v3452 = vunpack.c.h.b16 %v3259
      %v3453 = vunpack.c.l.b16 %v3260
      %v3454 = vunpack.c.h.b16 %v3260
      %v3455 = vunpack.c.l.b16 %v3261
      %v3456 = vunpack.c.h.b16 %v3261
      %v3457 = vunpack.c.l.b16 %v3262
      %v3458 = vunpack.c.h.b16 %v3262
      %v3459 = vunpack.c.l.b16 %v3263
      %v3460 = vunpack.c.h.b16 %v3263
      %v3461 = vunpack.c.l.b16 %v3264
      %v3462 = vunpack.c.h.b16 %v3264
      %v3463 = vunpack.c.l.b16 %v3265
      %v3464 = vunpack.c.h.b16 %v3265
      %v3465 = vunpack.c.l.b16 %v3266
      %v3466 = vunpack.c.h.b16 %v3266
      %v3467 = vunpack.c.l.b16 %v3267
      %v3468 = vunpack.c.h.b16 %v3267
      %v3469 = vpack.c.b16 %v3345, %v3341
      %v3470 = vpack.c.b16 %v3346, %v3342
      %v3471 = vpack.c.b16 %v3347, %v3343
      %v3472 = vpack.c.b16 %v3348, %v3344
      %v3473 = vpack.c.b16 %v3353, %v3349
      %v3474 = vpack.c.b16 %v3354, %v3350
      %v3475 = vpack.c.b16 %v3355, %v3351
      %v3476 = vpack.c.b16 %v3356, %v3352
      %v3477 = vpack.c.b16 %v3361, %v3357
      %v3478 = vpack.c.b16 %v3362, %v3358
      %v3479 = vpack.c.b16 %v3363, %v3359
      %v3480 = vpack.c.b16 %v3364, %v3360
      %v3481 = vpack.c.b16 %v3369, %v3365
      %v3482 = vpack.c.b16 %v3370, %v3366
      %v3483 = vpack.c.b16 %v3371, %v3367
      %v3484 = vpack.c.b16 %v3372, %v3368
      %v3485 = vpack.c.b16 %v3377, %v3373
      %v3486 = vpack.c.b16 %v3378, %v3374
      %v3487 = vpack.c.b16 %v3379, %v3375
      %v3488 = vpack.c.b16 %v3380, %v3376
      %v3489 = vpack.c.b16 %v3385, %v3381
      %v3490 = vpack.c.b16 %v3386, %v3382
      %v3491 = vpack.c.b16 %v3387, %v3383
      %v3492 = vpack.c.b16 %v3388, %v3384
      %v3493 = vpack.c.b16 %v3393, %v3389
      %v3494 = vpack.c.b16 %v3394, %v3390
      %v3495 = vpack.c.b16 %v3395, %v3391
      %v3496 = vpack.c.b16 %v3396, %v3392
      %v3497 = vpack.c.b16 %v3401, %v3397
      %v3498 = vpack.c.b16 %v3402, %v3398
      %v3499 = vpack.c.b16 %v3403, %v3399
      %v3500 = vpack.c.b16 %v3404, %v3400
      %v3501 = vpack.c.b16 %v3409, %v3405
      %v3502 = vpack.c.b16 %v3410, %v3406
      %v3503 = vpack.c.b16 %v3411, %v3407
      %v3504 = vpack.c.b16 %v3412, %v3408
      %v3505 = vpack.c.b16 %v3417, %v3413
      %v3506 = vpack.c.b16 %v3418, %v3414
      %v3507 = vpack.c.b16 %v3419, %v3415
      %v3508 = vpack.c.b16 %v3420, %v3416
      %v3509 = vpack.c.b16 %v3425, %v3421
      %v3510 = vpack.c.b16 %v3426, %v3422
      %v3511 = vpack.c.b16 %v3427, %v3423
      %v3512 = vpack.c.b16 %v3428, %v3424
      %v3513 = vpack.c.b16 %v3433, %v3429
      %v3514 = vpack.c.b16 %v3434, %v3430
      %v3515 = vpack.c.b16 %v3435, %v3431
      %v3516 = vpack.c.b16 %v3436, %v3432
      %v3517 = vpack.c.b16 %v3441, %v3437
      %v3518 = vpack.c.b16 %v3442, %v3438
      %v3519 = vpack.c.b16 %v3443, %v3439
      %v3520 = vpack.c.b16 %v3444, %v3440
      %v3521 = vpack.c.b16 %v3449, %v3445
      %v3522 = vpack.c.b16 %v3450, %v3446
      %v3523 = vpack.c.b16 %v3451, %v3447
      %v3524 = vpack.c.b16 %v3452, %v3448
      %v3525 = vpack.c.b16 %v3457, %v3453
      %v3526 = vpack.c.b16 %v3458, %v3454
      %v3527 = vpack.c.b16 %v3459, %v3455
      %v3528 = vpack.c.b16 %v3460, %v3456
      %v3529 = vpack.c.b16 %v3465, %v3461
      %v3530 = vpack.c.b16 %v3466, %v3462
      %v3531 = vpack.c.b16 %v3467, %v3463
      %v3532 = vpack.c.b16 %v3468, %v3464
      %3597 = vmatpush.bf16.msra.mxu0 %v3497
      %3598 = vmatpush.bf16.msra.mxu0 %v3493
      %3599 = vmatpush.bf16.msra.mxu0 %v3489
      %3600 = vmatpush.bf16.msra.mxu0 %v3485
      %3601 = vmatpush.bf16.msra.mxu0 %v3481
      %3602 = vmatpush.bf16.msra.mxu0 %v3477
      %3603 = vmatpush.bf16.msra.mxu0 %v3473
      %3604 = vmatpush.bf16.msra.mxu0 %v3469
      %3605 = vmatmul.bf16.gmra.mxu0 %v3273
      %v3606 = vpop.f32.mrf.mxu0
      %v3607 = vadd.f32 0.0, %v3606
      %v3608 = vpop.f32.mrf.mxu0
      %3609 = vdwg.mxu0
      %3610 = vmatpush.bf16.msra.mxu0 %v3529
      %3611 = vmatpush.bf16.msra.mxu0 %v3525
      %3612 = vmatpush.bf16.msra.mxu0 %v3521
      %3613 = vmatpush.bf16.msra.mxu0 %v3517
      %3614 = vmatpush.bf16.msra.mxu0 %v3513
      %3615 = vmatpush.bf16.msra.mxu0 %v3509
      %3616 = vmatpush.bf16.msra.mxu0 %v3505
      %3617 = vmatpush.bf16.msra.mxu0 %v3501
      %3618 = vmatmul.bf16.gmra.mxu0 %v3274
      %v3619 = vpop.f32.mrf.mxu0
      %v3620 = vadd.f32 %v3607, %v3619
      %v3621 = vpop.f32.mrf.mxu0
      %3622 = vdwg.mxu0
      %3623 = vmatpush.bf16.msra.mxu0 %v3498
      %3624 = vmatpush.bf16.msra.mxu0 %v3494
      %3625 = vmatpush.bf16.msra.mxu0 %v3490
      %3626 = vmatpush.bf16.msra.mxu0 %v3486
      %3627 = vmatpush.bf16.msra.mxu0 %v3482
      %3628 = vmatpush.bf16.msra.mxu0 %v3478
      %3629 = vmatpush.bf16.msra.mxu0 %v3474
      %3630 = vmatpush.bf16.msra.mxu0 %v3470
      %3631 = vmatmul.bf16.gmra.mxu0 %v3273
      %v3632 = vpop.f32.mrf.mxu0
      %v3633 = vadd.f32 0.0, %v3632
      %v3634 = vpop.f32.mrf.mxu0
      %3635 = vdwg.mxu0
      %3636 = vmatpush.bf16.msra.mxu0 %v3530
      %3637 = vmatpush.bf16.msra.mxu0 %v3526
      %3638 = vmatpush.bf16.msra.mxu0 %v3522
      %3639 = vmatpush.bf16.msra.mxu0 %v3518
      %3640 = vmatpush.bf16.msra.mxu0 %v3514
      %3641 = vmatpush.bf16.msra.mxu0 %v3510
      %3642 = vmatpush.bf16.msra.mxu0 %v3506
      %3643 = vmatpush.bf16.msra.mxu0 %v3502
      %3644 = vmatmul.bf16.gmra.mxu0 %v3274
      %v3645 = vpop.f32.mrf.mxu0
      %v3646 = vadd.f32 %v3633, %v3645
      %v3647 = vpop.f32.mrf.mxu0
      %3648 = vdwg.mxu0
      %3649 = vmatpush.bf16.msra.mxu0 %v3499
      %3650 = vmatpush.bf16.msra.mxu0 %v3495
      %3651 = vmatpush.bf16.msra.mxu0 %v3491
      %3652 = vmatpush.bf16.msra.mxu0 %v3487
      %3653 = vmatpush.bf16.msra.mxu0 %v3483
      %3654 = vmatpush.bf16.msra.mxu0 %v3479
      %3655 = vmatpush.bf16.msra.mxu0 %v3475
      %3656 = vmatpush.bf16.msra.mxu0 %v3471
      %3657 = vmatmul.bf16.gmra.mxu0 %v3273
      %v3658 = vpop.f32.mrf.mxu0
      %v3659 = vadd.f32 0.0, %v3658
      %v3660 = vpop.f32.mrf.mxu0
      %3661 = vdwg.mxu0
      %3662 = vmatpush.bf16.msra.mxu0 %v3531
      %3663 = vmatpush.bf16.msra.mxu0 %v3527
      %3664 = vmatpush.bf16.msra.mxu0 %v3523
      %3665 = vmatpush.bf16.msra.mxu0 %v3519
      %3666 = vmatpush.bf16.msra.mxu0 %v3515
      %3667 = vmatpush.bf16.msra.mxu0 %v3511
      %3668 = vmatpush.bf16.msra.mxu0 %v3507
      %3669 = vmatpush.bf16.msra.mxu0 %v3503
      %3670 = vmatmul.bf16.gmra.mxu0 %v3274
      %v3671 = vpop.f32.mrf.mxu0
      %v3672 = vadd.f32 %v3659, %v3671
      %v3673 = vpop.f32.mrf.mxu0
      %3674 = vdwg.mxu0
      %3675 = vmatpush.bf16.msra.mxu0 %v3500
      %3676 = vmatpush.bf16.msra.mxu0 %v3496
      %3677 = vmatpush.bf16.msra.mxu0 %v3492
      %3678 = vmatpush.bf16.msra.mxu0 %v3488
      %3679 = vmatpush.bf16.msra.mxu0 %v3484
      %3680 = vmatpush.bf16.msra.mxu0 %v3480
      %3681 = vmatpush.bf16.msra.mxu0 %v3476
      %3682 = vmatpush.bf16.msra.mxu0 %v3472
      %3683 = vmatmul.bf16.gmra.mxu0 %v3273
      %v3684 = vpop.f32.mrf.mxu0
      %v3685 = vadd.f32 0.0, %v3684
      %v3686 = vpop.f32.mrf.mxu0
      %3687 = vdwg.mxu0
      %3688 = vmatpush.bf16.msra.mxu0 %v3532
      %3689 = vmatpush.bf16.msra.mxu0 %v3528
      %3690 = vmatpush.bf16.msra.mxu0 %v3524
      %3691 = vmatpush.bf16.msra.mxu0 %v3520
      %3692 = vmatpush.bf16.msra.mxu0 %v3516
      %3693 = vmatpush.bf16.msra.mxu0 %v3512
      %3694 = vmatpush.bf16.msra.mxu0 %v3508
      %3695 = vmatpush.bf16.msra.mxu0 %v3504
      %3696 = vmatmul.bf16.gmra.mxu0 %v3274
      %v3697 = vpop.f32.mrf.mxu0
      %v3698 = vadd.f32 %v3685, %v3697
      %v3699 = vpop.f32.mrf.mxu0
      %3700 = vdwg.mxu0
      %v3701 = vadd.f32 %v3198, %v3620
      %v3702 = vadd.f32 %v3199, %v3646
      %v3703 = vadd.f32 %v3200, %v3672
      %v3704 = vadd.f32 %v3201, %v3698
      %v3705 = vld [vmem:[%s164 + $0x8] sm:$0x11]
      %s3706 = scalar_lea.vmem %s1, 3584
      %v3707 = vld [vmem:[%s3706] sm:$0xff]
      %v3708 = vld [vmem:[%s3706 + $0x8] sm:$0xff]
      %v3709 = vld [vmem:[%s3706 + $0x10] sm:$0xff]
      %v3710 = vld [vmem:[%s3706 + $0x18] sm:$0xff]
      %v3711 = vld [vmem:[%s3706 + $0x20] sm:$0xff]
      %v3712 = vld [vmem:[%s3706 + $0x28] sm:$0xff]
      %v3713 = vld [vmem:[%s3706 + $0x30] sm:$0xff]
      %v3714 = vld [vmem:[%s3706 + $0x38] sm:$0xff]
      %v3715 = vld [vmem:[%s3706 + $0x40] sm:$0xff]
      %v3716 = vld [vmem:[%s3706 + $0x48] sm:$0xff]
      %v3717 = vld [vmem:[%s3706 + $0x50] sm:$0xff]
      %v3718 = vld [vmem:[%s3706 + $0x58] sm:$0xff]
      %v3719 = vld [vmem:[%s3706 + $0x60] sm:$0xff]
      %v3720 = vld [vmem:[%s3706 + $0x68] sm:$0xff]
      %v3721 = vld [vmem:[%s3706 + $0x70] sm:$0xff]
      %v3722 = vld [vmem:[%s3706 + $0x78] sm:$0xff]
      %v3723 = vld [vmem:[%s3706 + $0x80] sm:$0xff]
      %v3724 = vld [vmem:[%s3706 + $0x88] sm:$0xff]
      %v3725 = vld [vmem:[%s3706 + $0x90] sm:$0xff]
      %v3726 = vld [vmem:[%s3706 + $0x98] sm:$0xff]
      %v3727 = vld [vmem:[%s3706 + $0xa0] sm:$0xff]
      %v3728 = vld [vmem:[%s3706 + $0xa8] sm:$0xff]
      %v3729 = vld [vmem:[%s3706 + $0xb0] sm:$0xff]
      %v3730 = vld [vmem:[%s3706 + $0xb8] sm:$0xff]
      %v3731 = vld [vmem:[%s3706 + $0xc0] sm:$0xff]
      %v3732 = vld [vmem:[%s3706 + $0xc8] sm:$0xff]
      %v3733 = vld [vmem:[%s3706 + $0xd0] sm:$0xff]
      %v3734 = vld [vmem:[%s3706 + $0xd8] sm:$0xff]
      %v3735 = vld [vmem:[%s3706 + $0xe0] sm:$0xff]
      %v3736 = vld [vmem:[%s3706 + $0xe8] sm:$0xff]
      %v3737 = vld [vmem:[%s3706 + $0xf0] sm:$0xff]
      %v3738 = vld [vmem:[%s3706 + $0xf8] sm:$0xff]
      %v3739 = vld [vmem:[%s3706 + $0x100] sm:$0xff]
      %v3740 = vld [vmem:[%s3706 + $0x108] sm:$0xff]
      %v3741 = vld [vmem:[%s3706 + $0x110] sm:$0xff]
      %v3742 = vld [vmem:[%s3706 + $0x118] sm:$0xff]
      %v3743 = vld [vmem:[%s3706 + $0x120] sm:$0xff]
      %v3744 = vld [vmem:[%s3706 + $0x128] sm:$0xff]
      %v3745 = vld [vmem:[%s3706 + $0x130] sm:$0xff]
      %v3746 = vld [vmem:[%s3706 + $0x138] sm:$0xff]
      %v3747 = vld [vmem:[%s3706 + $0x140] sm:$0xff]
      %v3748 = vld [vmem:[%s3706 + $0x148] sm:$0xff]
      %v3749 = vld [vmem:[%s3706 + $0x150] sm:$0xff]
      %v3750 = vld [vmem:[%s3706 + $0x158] sm:$0xff]
      %v3751 = vld [vmem:[%s3706 + $0x160] sm:$0xff]
      %v3752 = vld [vmem:[%s3706 + $0x168] sm:$0xff]
      %v3753 = vld [vmem:[%s3706 + $0x170] sm:$0xff]
      %v3754 = vld [vmem:[%s3706 + $0x178] sm:$0xff]
      %v3755 = vld [vmem:[%s3706 + $0x180] sm:$0xff]
      %v3756 = vld [vmem:[%s3706 + $0x188] sm:$0xff]
      %v3757 = vld [vmem:[%s3706 + $0x190] sm:$0xff]
      %v3758 = vld [vmem:[%s3706 + $0x198] sm:$0xff]
      %v3759 = vld [vmem:[%s3706 + $0x1a0] sm:$0xff]
      %v3760 = vld [vmem:[%s3706 + $0x1a8] sm:$0xff]
      %v3761 = vld [vmem:[%s3706 + $0x1b0] sm:$0xff]
      %v3762 = vld [vmem:[%s3706 + $0x1b8] sm:$0xff]
      %v3763 = vld [vmem:[%s3706 + $0x1c0] sm:$0xff]
      %v3764 = vld [vmem:[%s3706 + $0x1c8] sm:$0xff]
      %v3765 = vld [vmem:[%s3706 + $0x1d0] sm:$0xff]
      %v3766 = vld [vmem:[%s3706 + $0x1d8] sm:$0xff]
      %v3767 = vld [vmem:[%s3706 + $0x1e0] sm:$0xff]
      %v3768 = vld [vmem:[%s3706 + $0x1e8] sm:$0xff]
      %v3769 = vld [vmem:[%s3706 + $0x1f0] sm:$0xff]
      %v3770 = vld [vmem:[%s3706 + $0x1f8] sm:$0xff]
      %v3772 = vunpack.c.l.b16 %v3705
      %v3773 = vunpack.c.h.b16 %v3705
      %v3774 = vpack.c.b16 %v3772, %v3772
      %v3775 = vpack.c.b16 %v3773, %v3773
      %v3842 = vunpack.c.l.b16 %v3707
      %v3843 = vunpack.c.h.b16 %v3707
      %v3844 = vunpack.c.l.b16 %v3708
      %v3845 = vunpack.c.h.b16 %v3708
      %v3846 = vunpack.c.l.b16 %v3709
      %v3847 = vunpack.c.h.b16 %v3709
      %v3848 = vunpack.c.l.b16 %v3710
      %v3849 = vunpack.c.h.b16 %v3710
      %v3850 = vunpack.c.l.b16 %v3711
      %v3851 = vunpack.c.h.b16 %v3711
      %v3852 = vunpack.c.l.b16 %v3712
      %v3853 = vunpack.c.h.b16 %v3712
      %v3854 = vunpack.c.l.b16 %v3713
      %v3855 = vunpack.c.h.b16 %v3713
      %v3856 = vunpack.c.l.b16 %v3714
      %v3857 = vunpack.c.h.b16 %v3714
      %v3858 = vunpack.c.l.b16 %v3715
      %v3859 = vunpack.c.h.b16 %v3715
      %v3860 = vunpack.c.l.b16 %v3716
      %v3861 = vunpack.c.h.b16 %v3716
      %v3862 = vunpack.c.l.b16 %v3717
      %v3863 = vunpack.c.h.b16 %v3717
      %v3864 = vunpack.c.l.b16 %v3718
      %v3865 = vunpack.c.h.b16 %v3718
      %v3866 = vunpack.c.l.b16 %v3719
      %v3867 = vunpack.c.h.b16 %v3719
      %v3868 = vunpack.c.l.b16 %v3720
      %v3869 = vunpack.c.h.b16 %v3720
      %v3870 = vunpack.c.l.b16 %v3721
      %v3871 = vunpack.c.h.b16 %v3721
      %v3872 = vunpack.c.l.b16 %v3722
      %v3873 = vunpack.c.h.b16 %v3722
      %v3874 = vunpack.c.l.b16 %v3723
      %v3875 = vunpack.c.h.b16 %v3723
      %v3876 = vunpack.c.l.b16 %v3724
      %v3877 = vunpack.c.h.b16 %v3724
      %v3878 = vunpack.c.l.b16 %v3725
      %v3879 = vunpack.c.h.b16 %v3725
      %v3880 = vunpack.c.l.b16 %v3726
      %v3881 = vunpack.c.h.b16 %v3726
      %v3882 = vunpack.c.l.b16 %v3727
      %v3883 = vunpack.c.h.b16 %v3727
      %v3884 = vunpack.c.l.b16 %v3728
      %v3885 = vunpack.c.h.b16 %v3728
      %v3886 = vunpack.c.l.b16 %v3729
      %v3887 = vunpack.c.h.b16 %v3729
      %v3888 = vunpack.c.l.b16 %v3730
      %v3889 = vunpack.c.h.b16 %v3730
      %v3890 = vunpack.c.l.b16 %v3731
      %v3891 = vunpack.c.h.b16 %v3731
      %v3892 = vunpack.c.l.b16 %v3732
      %v3893 = vunpack.c.h.b16 %v3732
      %v3894 = vunpack.c.l.b16 %v3733
      %v3895 = vunpack.c.h.b16 %v3733
      %v3896 = vunpack.c.l.b16 %v3734
      %v3897 = vunpack.c.h.b16 %v3734
      %v3898 = vunpack.c.l.b16 %v3735
      %v3899 = vunpack.c.h.b16 %v3735
      %v3900 = vunpack.c.l.b16 %v3736
      %v3901 = vunpack.c.h.b16 %v3736
      %v3902 = vunpack.c.l.b16 %v3737
      %v3903 = vunpack.c.h.b16 %v3737
      %v3904 = vunpack.c.l.b16 %v3738
      %v3905 = vunpack.c.h.b16 %v3738
      %v3906 = vunpack.c.l.b16 %v3739
      %v3907 = vunpack.c.h.b16 %v3739
      %v3908 = vunpack.c.l.b16 %v3740
      %v3909 = vunpack.c.h.b16 %v3740
      %v3910 = vunpack.c.l.b16 %v3741
      %v3911 = vunpack.c.h.b16 %v3741
      %v3912 = vunpack.c.l.b16 %v3742
      %v3913 = vunpack.c.h.b16 %v3742
      %v3914 = vunpack.c.l.b16 %v3743
      %v3915 = vunpack.c.h.b16 %v3743
      %v3916 = vunpack.c.l.b16 %v3744
      %v3917 = vunpack.c.h.b16 %v3744
      %v3918 = vunpack.c.l.b16 %v3745
      %v3919 = vunpack.c.h.b16 %v3745
      %v3920 = vunpack.c.l.b16 %v3746
      %v3921 = vunpack.c.h.b16 %v3746
      %v3922 = vunpack.c.l.b16 %v3747
      %v3923 = vunpack.c.h.b16 %v3747
      %v3924 = vunpack.c.l.b16 %v3748
      %v3925 = vunpack.c.h.b16 %v3748
      %v3926 = vunpack.c.l.b16 %v3749
      %v3927 = vunpack.c.h.b16 %v3749
      %v3928 = vunpack.c.l.b16 %v3750
      %v3929 = vunpack.c.h.b16 %v3750
      %v3930 = vunpack.c.l.b16 %v3751
      %v3931 = vunpack.c.h.b16 %v3751
      %v3932 = vunpack.c.l.b16 %v3752
      %v3933 = vunpack.c.h.b16 %v3752
      %v3934 = vunpack.c.l.b16 %v3753
      %v3935 = vunpack.c.h.b16 %v3753
      %v3936 = vunpack.c.l.b16 %v3754
      %v3937 = vunpack.c.h.b16 %v3754
      %v3938 = vunpack.c.l.b16 %v3755
      %v3939 = vunpack.c.h.b16 %v3755
      %v3940 = vunpack.c.l.b16 %v3756
      %v3941 = vunpack.c.h.b16 %v3756
      %v3942 = vunpack.c.l.b16 %v3757
      %v3943 = vunpack.c.h.b16 %v3757
      %v3944 = vunpack.c.l.b16 %v3758
      %v3945 = vunpack.c.h.b16 %v3758
      %v3946 = vunpack.c.l.b16 %v3759
      %v3947 = vunpack.c.h.b16 %v3759
      %v3948 = vunpack.c.l.b16 %v3760
      %v3949 = vunpack.c.h.b16 %v3760
      %v3950 = vunpack.c.l.b16 %v3761
      %v3951 = vunpack.c.h.b16 %v3761
      %v3952 = vunpack.c.l.b16 %v3762
      %v3953 = vunpack.c.h.b16 %v3762
      %v3954 = vunpack.c.l.b16 %v3763
      %v3955 = vunpack.c.h.b16 %v3763
      %v3956 = vunpack.c.l.b16 %v3764
      %v3957 = vunpack.c.h.b16 %v3764
      %v3958 = vunpack.c.l.b16 %v3765
      %v3959 = vunpack.c.h.b16 %v3765
      %v3960 = vunpack.c.l.b16 %v3766
      %v3961 = vunpack.c.h.b16 %v3766
      %v3962 = vunpack.c.l.b16 %v3767
      %v3963 = vunpack.c.h.b16 %v3767
      %v3964 = vunpack.c.l.b16 %v3768
      %v3965 = vunpack.c.h.b16 %v3768
      %v3966 = vunpack.c.l.b16 %v3769
      %v3967 = vunpack.c.h.b16 %v3769
      %v3968 = vunpack.c.l.b16 %v3770
      %v3969 = vunpack.c.h.b16 %v3770
      %v3970 = vpack.c.b16 %v3846, %v3842
      %v3971 = vpack.c.b16 %v3847, %v3843
      %v3972 = vpack.c.b16 %v3848, %v3844
      %v3973 = vpack.c.b16 %v3849, %v3845
      %v3974 = vpack.c.b16 %v3854, %v3850
      %v3975 = vpack.c.b16 %v3855, %v3851
      %v3976 = vpack.c.b16 %v3856, %v3852
      %v3977 = vpack.c.b16 %v3857, %v3853
      %v3978 = vpack.c.b16 %v3862, %v3858
      %v3979 = vpack.c.b16 %v3863, %v3859
      %v3980 = vpack.c.b16 %v3864, %v3860
      %v3981 = vpack.c.b16 %v3865, %v3861
      %v3982 = vpack.c.b16 %v3870, %v3866
      %v3983 = vpack.c.b16 %v3871, %v3867
      %v3984 = vpack.c.b16 %v3872, %v3868
      %v3985 = vpack.c.b16 %v3873, %v3869
      %v3986 = vpack.c.b16 %v3878, %v3874
      %v3987 = vpack.c.b16 %v3879, %v3875
      %v3988 = vpack.c.b16 %v3880, %v3876
      %v3989 = vpack.c.b16 %v3881, %v3877
      %v3990 = vpack.c.b16 %v3886, %v3882
      %v3991 = vpack.c.b16 %v3887, %v3883
      %v3992 = vpack.c.b16 %v3888, %v3884
      %v3993 = vpack.c.b16 %v3889, %v3885
      %v3994 = vpack.c.b16 %v3894, %v3890
      %v3995 = vpack.c.b16 %v3895, %v3891
      %v3996 = vpack.c.b16 %v3896, %v3892
      %v3997 = vpack.c.b16 %v3897, %v3893
      %v3998 = vpack.c.b16 %v3902, %v3898
      %v3999 = vpack.c.b16 %v3903, %v3899
      %v4000 = vpack.c.b16 %v3904, %v3900
      %v4001 = vpack.c.b16 %v3905, %v3901
      %v4002 = vpack.c.b16 %v3910, %v3906
      %v4003 = vpack.c.b16 %v3911, %v3907
      %v4004 = vpack.c.b16 %v3912, %v3908
      %v4005 = vpack.c.b16 %v3913, %v3909
      %v4006 = vpack.c.b16 %v3918, %v3914
      %v4007 = vpack.c.b16 %v3919, %v3915
      %v4008 = vpack.c.b16 %v3920, %v3916
      %v4009 = vpack.c.b16 %v3921, %v3917
      %v4010 = vpack.c.b16 %v3926, %v3922
      %v4011 = vpack.c.b16 %v3927, %v3923
      %v4012 = vpack.c.b16 %v3928, %v3924
      %v4013 = vpack.c.b16 %v3929, %v3925
      %v4014 = vpack.c.b16 %v3934, %v3930
      %v4015 = vpack.c.b16 %v3935, %v3931
      %v4016 = vpack.c.b16 %v3936, %v3932
      %v4017 = vpack.c.b16 %v3937, %v3933
      %v4018 = vpack.c.b16 %v3942, %v3938
      %v4019 = vpack.c.b16 %v3943, %v3939
      %v4020 = vpack.c.b16 %v3944, %v3940
      %v4021 = vpack.c.b16 %v3945, %v3941
      %v4022 = vpack.c.b16 %v3950, %v3946
      %v4023 = vpack.c.b16 %v3951, %v3947
      %v4024 = vpack.c.b16 %v3952, %v3948
      %v4025 = vpack.c.b16 %v3953, %v3949
      %v4026 = vpack.c.b16 %v3958, %v3954
      %v4027 = vpack.c.b16 %v3959, %v3955
      %v4028 = vpack.c.b16 %v3960, %v3956
      %v4029 = vpack.c.b16 %v3961, %v3957
      %v4030 = vpack.c.b16 %v3966, %v3962
      %v4031 = vpack.c.b16 %v3967, %v3963
      %v4032 = vpack.c.b16 %v3968, %v3964
      %v4033 = vpack.c.b16 %v3969, %v3965
      %4098 = vmatpush.bf16.msra.mxu0 %v3998
      %4099 = vmatpush.bf16.msra.mxu0 %v3994
      %4100 = vmatpush.bf16.msra.mxu0 %v3990
      %4101 = vmatpush.bf16.msra.mxu0 %v3986
      %4102 = vmatpush.bf16.msra.mxu0 %v3982
      %4103 = vmatpush.bf16.msra.mxu0 %v3978
      %4104 = vmatpush.bf16.msra.mxu0 %v3974
      %4105 = vmatpush.bf16.msra.mxu0 %v3970
      %4106 = vmatmul.bf16.gmra.mxu0 %v3774
      %v4107 = vpop.f32.mrf.mxu0
      %v4108 = vadd.f32 0.0, %v4107
      %v4109 = vpop.f32.mrf.mxu0
      %4110 = vdwg.mxu0
      %4111 = vmatpush.bf16.msra.mxu0 %v4030
      %4112 = vmatpush.bf16.msra.mxu0 %v4026
      %4113 = vmatpush.bf16.msra.mxu0 %v4022
      %4114 = vmatpush.bf16.msra.mxu0 %v4018
      %4115 = vmatpush.bf16.msra.mxu0 %v4014
      %4116 = vmatpush.bf16.msra.mxu0 %v4010
      %4117 = vmatpush.bf16.msra.mxu0 %v4006
      %4118 = vmatpush.bf16.msra.mxu0 %v4002
      %4119 = vmatmul.bf16.gmra.mxu0 %v3775
      %v4120 = vpop.f32.mrf.mxu0
      %v4121 = vadd.f32 %v4108, %v4120
      %v4122 = vpop.f32.mrf.mxu0
      %4123 = vdwg.mxu0
      %4124 = vmatpush.bf16.msra.mxu0 %v3999
      %4125 = vmatpush.bf16.msra.mxu0 %v3995
      %4126 = vmatpush.bf16.msra.mxu0 %v3991
      %4127 = vmatpush.bf16.msra.mxu0 %v3987
      %4128 = vmatpush.bf16.msra.mxu0 %v3983
      %4129 = vmatpush.bf16.msra.mxu0 %v3979
      %4130 = vmatpush.bf16.msra.mxu0 %v3975
      %4131 = vmatpush.bf16.msra.mxu0 %v3971
      %4132 = vmatmul.bf16.gmra.mxu0 %v3774
      %v4133 = vpop.f32.mrf.mxu0
      %v4134 = vadd.f32 0.0, %v4133
      %v4135 = vpop.f32.mrf.mxu0
      %4136 = vdwg.mxu0
      %4137 = vmatpush.bf16.msra.mxu0 %v4031
      %4138 = vmatpush.bf16.msra.mxu0 %v4027
      %4139 = vmatpush.bf16.msra.mxu0 %v4023
      %4140 = vmatpush.bf16.msra.mxu0 %v4019
      %4141 = vmatpush.bf16.msra.mxu0 %v4015
      %4142 = vmatpush.bf16.msra.mxu0 %v4011
      %4143 = vmatpush.bf16.msra.mxu0 %v4007
      %4144 = vmatpush.bf16.msra.mxu0 %v4003
      %4145 = vmatmul.bf16.gmra.mxu0 %v3775
      %v4146 = vpop.f32.mrf.mxu0
      %v4147 = vadd.f32 %v4134, %v4146
      %v4148 = vpop.f32.mrf.mxu0
      %4149 = vdwg.mxu0
      %4150 = vmatpush.bf16.msra.mxu0 %v4000
      %4151 = vmatpush.bf16.msra.mxu0 %v3996
      %4152 = vmatpush.bf16.msra.mxu0 %v3992
      %4153 = vmatpush.bf16.msra.mxu0 %v3988
      %4154 = vmatpush.bf16.msra.mxu0 %v3984
      %4155 = vmatpush.bf16.msra.mxu0 %v3980
      %4156 = vmatpush.bf16.msra.mxu0 %v3976
      %4157 = vmatpush.bf16.msra.mxu0 %v3972
      %4158 = vmatmul.bf16.gmra.mxu0 %v3774
      %v4159 = vpop.f32.mrf.mxu0
      %v4160 = vadd.f32 0.0, %v4159
      %v4161 = vpop.f32.mrf.mxu0
      %4162 = vdwg.mxu0
      %4163 = vmatpush.bf16.msra.mxu0 %v4032
      %4164 = vmatpush.bf16.msra.mxu0 %v4028
      %4165 = vmatpush.bf16.msra.mxu0 %v4024
      %4166 = vmatpush.bf16.msra.mxu0 %v4020
      %4167 = vmatpush.bf16.msra.mxu0 %v4016
      %4168 = vmatpush.bf16.msra.mxu0 %v4012
      %4169 = vmatpush.bf16.msra.mxu0 %v4008
      %4170 = vmatpush.bf16.msra.mxu0 %v4004
      %4171 = vmatmul.bf16.gmra.mxu0 %v3775
      %v4172 = vpop.f32.mrf.mxu0
      %v4173 = vadd.f32 %v4160, %v4172
      %v4174 = vpop.f32.mrf.mxu0
      %4175 = vdwg.mxu0
      %4176 = vmatpush.bf16.msra.mxu0 %v4001
      %4177 = vmatpush.bf16.msra.mxu0 %v3997
      %4178 = vmatpush.bf16.msra.mxu0 %v3993
      %4179 = vmatpush.bf16.msra.mxu0 %v3989
      %4180 = vmatpush.bf16.msra.mxu0 %v3985
      %4181 = vmatpush.bf16.msra.mxu0 %v3981
      %4182 = vmatpush.bf16.msra.mxu0 %v3977
      %4183 = vmatpush.bf16.msra.mxu0 %v3973
      %4184 = vmatmul.bf16.gmra.mxu0 %v3774
      %v4185 = vpop.f32.mrf.mxu0
      %v4186 = vadd.f32 0.0, %v4185
      %v4187 = vpop.f32.mrf.mxu0
      %4188 = vdwg.mxu0
      %4189 = vmatpush.bf16.msra.mxu0 %v4033
      %4190 = vmatpush.bf16.msra.mxu0 %v4029
      %4191 = vmatpush.bf16.msra.mxu0 %v4025
      %4192 = vmatpush.bf16.msra.mxu0 %v4021
      %4193 = vmatpush.bf16.msra.mxu0 %v4017
      %4194 = vmatpush.bf16.msra.mxu0 %v4013
      %4195 = vmatpush.bf16.msra.mxu0 %v4009
      %4196 = vmatpush.bf16.msra.mxu0 %v4005
      %4197 = vmatmul.bf16.gmra.mxu0 %v3775
      %v4198 = vpop.f32.mrf.mxu0
      %v4199 = vadd.f32 %v4186, %v4198
      %v4200 = vpop.f32.mrf.mxu0
      %4201 = vdwg.mxu0
      %v4202 = vadd.f32 %v3701, %v4121
      %v4203 = vadd.f32 %v3702, %v4147
      %v4204 = vadd.f32 %v3703, %v4173
      %v4205 = vadd.f32 %v3704, %v4199
      %v4206 = vld [vmem:[%s164] sm:$0x66]
      %s4207 = scalar_lea.vmem %s1, 4096
      %v4208 = vld [vmem:[%s4207] sm:$0xff]
      %v4209 = vld [vmem:[%s4207 + $0x8] sm:$0xff]
      %v4210 = vld [vmem:[%s4207 + $0x10] sm:$0xff]
      %v4211 = vld [vmem:[%s4207 + $0x18] sm:$0xff]
      %v4212 = vld [vmem:[%s4207 + $0x20] sm:$0xff]
      %v4213 = vld [vmem:[%s4207 + $0x28] sm:$0xff]
      %v4214 = vld [vmem:[%s4207 + $0x30] sm:$0xff]
      %v4215 = vld [vmem:[%s4207 + $0x38] sm:$0xff]
      %v4216 = vld [vmem:[%s4207 + $0x40] sm:$0xff]
      %v4217 = vld [vmem:[%s4207 + $0x48] sm:$0xff]
      %v4218 = vld [vmem:[%s4207 + $0x50] sm:$0xff]
      %v4219 = vld [vmem:[%s4207 + $0x58] sm:$0xff]
      %v4220 = vld [vmem:[%s4207 + $0x60] sm:$0xff]
      %v4221 = vld [vmem:[%s4207 + $0x68] sm:$0xff]
      %v4222 = vld [vmem:[%s4207 + $0x70] sm:$0xff]
      %v4223 = vld [vmem:[%s4207 + $0x78] sm:$0xff]
      %v4224 = vld [vmem:[%s4207 + $0x80] sm:$0xff]
      %v4225 = vld [vmem:[%s4207 + $0x88] sm:$0xff]
      %v4226 = vld [vmem:[%s4207 + $0x90] sm:$0xff]
      %v4227 = vld [vmem:[%s4207 + $0x98] sm:$0xff]
      %v4228 = vld [vmem:[%s4207 + $0xa0] sm:$0xff]
      %v4229 = vld [vmem:[%s4207 + $0xa8] sm:$0xff]
      %v4230 = vld [vmem:[%s4207 + $0xb0] sm:$0xff]
      %v4231 = vld [vmem:[%s4207 + $0xb8] sm:$0xff]
      %v4232 = vld [vmem:[%s4207 + $0xc0] sm:$0xff]
      %v4233 = vld [vmem:[%s4207 + $0xc8] sm:$0xff]
      %v4234 = vld [vmem:[%s4207 + $0xd0] sm:$0xff]
      %v4235 = vld [vmem:[%s4207 + $0xd8] sm:$0xff]
      %v4236 = vld [vmem:[%s4207 + $0xe0] sm:$0xff]
      %v4237 = vld [vmem:[%s4207 + $0xe8] sm:$0xff]
      %v4238 = vld [vmem:[%s4207 + $0xf0] sm:$0xff]
      %v4239 = vld [vmem:[%s4207 + $0xf8] sm:$0xff]
      %v4240 = vld [vmem:[%s4207 + $0x100] sm:$0xff]
      %v4241 = vld [vmem:[%s4207 + $0x108] sm:$0xff]
      %v4242 = vld [vmem:[%s4207 + $0x110] sm:$0xff]
      %v4243 = vld [vmem:[%s4207 + $0x118] sm:$0xff]
      %v4244 = vld [vmem:[%s4207 + $0x120] sm:$0xff]
      %v4245 = vld [vmem:[%s4207 + $0x128] sm:$0xff]
      %v4246 = vld [vmem:[%s4207 + $0x130] sm:$0xff]
      %v4247 = vld [vmem:[%s4207 + $0x138] sm:$0xff]
      %v4248 = vld [vmem:[%s4207 + $0x140] sm:$0xff]
      %v4249 = vld [vmem:[%s4207 + $0x148] sm:$0xff]
      %v4250 = vld [vmem:[%s4207 + $0x150] sm:$0xff]
      %v4251 = vld [vmem:[%s4207 + $0x158] sm:$0xff]
      %v4252 = vld [vmem:[%s4207 + $0x160] sm:$0xff]
      %v4253 = vld [vmem:[%s4207 + $0x168] sm:$0xff]
      %v4254 = vld [vmem:[%s4207 + $0x170] sm:$0xff]
      %v4255 = vld [vmem:[%s4207 + $0x178] sm:$0xff]
      %v4256 = vld [vmem:[%s4207 + $0x180] sm:$0xff]
      %v4257 = vld [vmem:[%s4207 + $0x188] sm:$0xff]
      %v4258 = vld [vmem:[%s4207 + $0x190] sm:$0xff]
      %v4259 = vld [vmem:[%s4207 + $0x198] sm:$0xff]
      %v4260 = vld [vmem:[%s4207 + $0x1a0] sm:$0xff]
      %v4261 = vld [vmem:[%s4207 + $0x1a8] sm:$0xff]
      %v4262 = vld [vmem:[%s4207 + $0x1b0] sm:$0xff]
      %v4263 = vld [vmem:[%s4207 + $0x1b8] sm:$0xff]
      %v4264 = vld [vmem:[%s4207 + $0x1c0] sm:$0xff]
      %v4265 = vld [vmem:[%s4207 + $0x1c8] sm:$0xff]
      %v4266 = vld [vmem:[%s4207 + $0x1d0] sm:$0xff]
      %v4267 = vld [vmem:[%s4207 + $0x1d8] sm:$0xff]
      %v4268 = vld [vmem:[%s4207 + $0x1e0] sm:$0xff]
      %v4269 = vld [vmem:[%s4207 + $0x1e8] sm:$0xff]
      %v4270 = vld [vmem:[%s4207 + $0x1f0] sm:$0xff]
      %v4271 = vld [vmem:[%s4207 + $0x1f8] sm:$0xff]
      %v4273 = vunpack.c.l.b16 %v4206
      %v4274 = vunpack.c.h.b16 %v4206
      %v4275 = vpack.c.b16 %v4273, %v4273
      %v4276 = vpack.c.b16 %v4274, %v4274
      %v4278 = vshrl.u32 %v4275, 16
      %v4280 = vrot.slane %v4278, 1
      %v4281 = vshll.u32 %v4275, 16
      %v4283 = vrot.slane %v4281, 2
      %v4284 = vor.u32 %v4280, %v4283
      %v4286 = vshrl.u32 %v4276, 16
      %v4288 = vrot.slane %v4286, 1
      %v4289 = vshll.u32 %v4276, 16
      %v4291 = vrot.slane %v4289, 2
      %v4292 = vor.u32 %v4288, %v4291
      %v4359 = vunpack.c.l.b16 %v4208
      %v4360 = vunpack.c.h.b16 %v4208
      %v4361 = vunpack.c.l.b16 %v4209
      %v4362 = vunpack.c.h.b16 %v4209
      %v4363 = vunpack.c.l.b16 %v4210
      %v4364 = vunpack.c.h.b16 %v4210
      %v4365 = vunpack.c.l.b16 %v4211
      %v4366 = vunpack.c.h.b16 %v4211
      %v4367 = vunpack.c.l.b16 %v4212
      %v4368 = vunpack.c.h.b16 %v4212
      %v4369 = vunpack.c.l.b16 %v4213
      %v4370 = vunpack.c.h.b16 %v4213
      %v4371 = vunpack.c.l.b16 %v4214
      %v4372 = vunpack.c.h.b16 %v4214
      %v4373 = vunpack.c.l.b16 %v4215
      %v4374 = vunpack.c.h.b16 %v4215
      %v4375 = vunpack.c.l.b16 %v4216
      %v4376 = vunpack.c.h.b16 %v4216
      %v4377 = vunpack.c.l.b16 %v4217
      %v4378 = vunpack.c.h.b16 %v4217
      %v4379 = vunpack.c.l.b16 %v4218
      %v4380 = vunpack.c.h.b16 %v4218
      %v4381 = vunpack.c.l.b16 %v4219
      %v4382 = vunpack.c.h.b16 %v4219
      %v4383 = vunpack.c.l.b16 %v4220
      %v4384 = vunpack.c.h.b16 %v4220
      %v4385 = vunpack.c.l.b16 %v4221
      %v4386 = vunpack.c.h.b16 %v4221
      %v4387 = vunpack.c.l.b16 %v4222
      %v4388 = vunpack.c.h.b16 %v4222
      %v4389 = vunpack.c.l.b16 %v4223
      %v4390 = vunpack.c.h.b16 %v4223
      %v4391 = vunpack.c.l.b16 %v4224
      %v4392 = vunpack.c.h.b16 %v4224
      %v4393 = vunpack.c.l.b16 %v4225
      %v4394 = vunpack.c.h.b16 %v4225
      %v4395 = vunpack.c.l.b16 %v4226
      %v4396 = vunpack.c.h.b16 %v4226
      %v4397 = vunpack.c.l.b16 %v4227
      %v4398 = vunpack.c.h.b16 %v4227
      %v4399 = vunpack.c.l.b16 %v4228
      %v4400 = vunpack.c.h.b16 %v4228
      %v4401 = vunpack.c.l.b16 %v4229
      %v4402 = vunpack.c.h.b16 %v4229
      %v4403 = vunpack.c.l.b16 %v4230
      %v4404 = vunpack.c.h.b16 %v4230
      %v4405 = vunpack.c.l.b16 %v4231
      %v4406 = vunpack.c.h.b16 %v4231
      %v4407 = vunpack.c.l.b16 %v4232
      %v4408 = vunpack.c.h.b16 %v4232
      %v4409 = vunpack.c.l.b16 %v4233
      %v4410 = vunpack.c.h.b16 %v4233
      %v4411 = vunpack.c.l.b16 %v4234
      %v4412 = vunpack.c.h.b16 %v4234
      %v4413 = vunpack.c.l.b16 %v4235
      %v4414 = vunpack.c.h.b16 %v4235
      %v4415 = vunpack.c.l.b16 %v4236
      %v4416 = vunpack.c.h.b16 %v4236
      %v4417 = vunpack.c.l.b16 %v4237
      %v4418 = vunpack.c.h.b16 %v4237
      %v4419 = vunpack.c.l.b16 %v4238
      %v4420 = vunpack.c.h.b16 %v4238
      %v4421 = vunpack.c.l.b16 %v4239
      %v4422 = vunpack.c.h.b16 %v4239
      %v4423 = vunpack.c.l.b16 %v4240
      %v4424 = vunpack.c.h.b16 %v4240
      %v4425 = vunpack.c.l.b16 %v4241
      %v4426 = vunpack.c.h.b16 %v4241
      %v4427 = vunpack.c.l.b16 %v4242
      %v4428 = vunpack.c.h.b16 %v4242
      %v4429 = vunpack.c.l.b16 %v4243
      %v4430 = vunpack.c.h.b16 %v4243
      %v4431 = vunpack.c.l.b16 %v4244
      %v4432 = vunpack.c.h.b16 %v4244
      %v4433 = vunpack.c.l.b16 %v4245
      %v4434 = vunpack.c.h.b16 %v4245
      %v4435 = vunpack.c.l.b16 %v4246
      %v4436 = vunpack.c.h.b16 %v4246
      %v4437 = vunpack.c.l.b16 %v4247
      %v4438 = vunpack.c.h.b16 %v4247
      %v4439 = vunpack.c.l.b16 %v4248
      %v4440 = vunpack.c.h.b16 %v4248
      %v4441 = vunpack.c.l.b16 %v4249
      %v4442 = vunpack.c.h.b16 %v4249
      %v4443 = vunpack.c.l.b16 %v4250
      %v4444 = vunpack.c.h.b16 %v4250
      %v4445 = vunpack.c.l.b16 %v4251
      %v4446 = vunpack.c.h.b16 %v4251
      %v4447 = vunpack.c.l.b16 %v4252
      %v4448 = vunpack.c.h.b16 %v4252
      %v4449 = vunpack.c.l.b16 %v4253
      %v4450 = vunpack.c.h.b16 %v4253
      %v4451 = vunpack.c.l.b16 %v4254
      %v4452 = vunpack.c.h.b16 %v4254
      %v4453 = vunpack.c.l.b16 %v4255
      %v4454 = vunpack.c.h.b16 %v4255
      %v4455 = vunpack.c.l.b16 %v4256
      %v4456 = vunpack.c.h.b16 %v4256
      %v4457 = vunpack.c.l.b16 %v4257
      %v4458 = vunpack.c.h.b16 %v4257
      %v4459 = vunpack.c.l.b16 %v4258
      %v4460 = vunpack.c.h.b16 %v4258
      %v4461 = vunpack.c.l.b16 %v4259
      %v4462 = vunpack.c.h.b16 %v4259
      %v4463 = vunpack.c.l.b16 %v4260
      %v4464 = vunpack.c.h.b16 %v4260
      %v4465 = vunpack.c.l.b16 %v4261
      %v4466 = vunpack.c.h.b16 %v4261
      %v4467 = vunpack.c.l.b16 %v4262
      %v4468 = vunpack.c.h.b16 %v4262
      %v4469 = vunpack.c.l.b16 %v4263
      %v4470 = vunpack.c.h.b16 %v4263
      %v4471 = vunpack.c.l.b16 %v4264
      %v4472 = vunpack.c.h.b16 %v4264
      %v4473 = vunpack.c.l.b16 %v4265
      %v4474 = vunpack.c.h.b16 %v4265
      %v4475 = vunpack.c.l.b16 %v4266
      %v4476 = vunpack.c.h.b16 %v4266
      %v4477 = vunpack.c.l.b16 %v4267
      %v4478 = vunpack.c.h.b16 %v4267
      %v4479 = vunpack.c.l.b16 %v4268
      %v4480 = vunpack.c.h.b16 %v4268
      %v4481 = vunpack.c.l.b16 %v4269
      %v4482 = vunpack.c.h.b16 %v4269
      %v4483 = vunpack.c.l.b16 %v4270
      %v4484 = vunpack.c.h.b16 %v4270
      %v4485 = vunpack.c.l.b16 %v4271
      %v4486 = vunpack.c.h.b16 %v4271
      %v4487 = vpack.c.b16 %v4363, %v4359
      %v4488 = vpack.c.b16 %v4364, %v4360
      %v4489 = vpack.c.b16 %v4365, %v4361
      %v4490 = vpack.c.b16 %v4366, %v4362
      %v4491 = vpack.c.b16 %v4371, %v4367
      %v4492 = vpack.c.b16 %v4372, %v4368
      %v4493 = vpack.c.b16 %v4373, %v4369
      %v4494 = vpack.c.b16 %v4374, %v4370
      %v4495 = vpack.c.b16 %v4379, %v4375
      %v4496 = vpack.c.b16 %v4380, %v4376
      %v4497 = vpack.c.b16 %v4381, %v4377
      %v4498 = vpack.c.b16 %v4382, %v4378
      %v4499 = vpack.c.b16 %v4387, %v4383
      %v4500 = vpack.c.b16 %v4388, %v4384
      %v4501 = vpack.c.b16 %v4389, %v4385
      %v4502 = vpack.c.b16 %v4390, %v4386
      %v4503 = vpack.c.b16 %v4395, %v4391
      %v4504 = vpack.c.b16 %v4396, %v4392
      %v4505 = vpack.c.b16 %v4397, %v4393
      %v4506 = vpack.c.b16 %v4398, %v4394
      %v4507 = vpack.c.b16 %v4403, %v4399
      %v4508 = vpack.c.b16 %v4404, %v4400
      %v4509 = vpack.c.b16 %v4405, %v4401
      %v4510 = vpack.c.b16 %v4406, %v4402
      %v4511 = vpack.c.b16 %v4411, %v4407
      %v4512 = vpack.c.b16 %v4412, %v4408
      %v4513 = vpack.c.b16 %v4413, %v4409
      %v4514 = vpack.c.b16 %v4414, %v4410
      %v4515 = vpack.c.b16 %v4419, %v4415
      %v4516 = vpack.c.b16 %v4420, %v4416
      %v4517 = vpack.c.b16 %v4421, %v4417
      %v4518 = vpack.c.b16 %v4422, %v4418
      %v4519 = vpack.c.b16 %v4427, %v4423
      %v4520 = vpack.c.b16 %v4428, %v4424
      %v4521 = vpack.c.b16 %v4429, %v4425
      %v4522 = vpack.c.b16 %v4430, %v4426
      %v4523 = vpack.c.b16 %v4435, %v4431
      %v4524 = vpack.c.b16 %v4436, %v4432
      %v4525 = vpack.c.b16 %v4437, %v4433
      %v4526 = vpack.c.b16 %v4438, %v4434
      %v4527 = vpack.c.b16 %v4443, %v4439
      %v4528 = vpack.c.b16 %v4444, %v4440
      %v4529 = vpack.c.b16 %v4445, %v4441
      %v4530 = vpack.c.b16 %v4446, %v4442
      %v4531 = vpack.c.b16 %v4451, %v4447
      %v4532 = vpack.c.b16 %v4452, %v4448
      %v4533 = vpack.c.b16 %v4453, %v4449
      %v4534 = vpack.c.b16 %v4454, %v4450
      %v4535 = vpack.c.b16 %v4459, %v4455
      %v4536 = vpack.c.b16 %v4460, %v4456
      %v4537 = vpack.c.b16 %v4461, %v4457
      %v4538 = vpack.c.b16 %v4462, %v4458
      %v4539 = vpack.c.b16 %v4467, %v4463
      %v4540 = vpack.c.b16 %v4468, %v4464
      %v4541 = vpack.c.b16 %v4469, %v4465
      %v4542 = vpack.c.b16 %v4470, %v4466
      %v4543 = vpack.c.b16 %v4475, %v4471
      %v4544 = vpack.c.b16 %v4476, %v4472
      %v4545 = vpack.c.b16 %v4477, %v4473
      %v4546 = vpack.c.b16 %v4478, %v4474
      %v4547 = vpack.c.b16 %v4483, %v4479
      %v4548 = vpack.c.b16 %v4484, %v4480
      %v4549 = vpack.c.b16 %v4485, %v4481
      %v4550 = vpack.c.b16 %v4486, %v4482
      %4615 = vmatpush.bf16.msra.mxu0 %v4515
      %4616 = vmatpush.bf16.msra.mxu0 %v4511
      %4617 = vmatpush.bf16.msra.mxu0 %v4507
      %4618 = vmatpush.bf16.msra.mxu0 %v4503
      %4619 = vmatpush.bf16.msra.mxu0 %v4499
      %4620 = vmatpush.bf16.msra.mxu0 %v4495
      %4621 = vmatpush.bf16.msra.mxu0 %v4491
      %4622 = vmatpush.bf16.msra.mxu0 %v4487
      %4623 = vmatmul.bf16.gmra.mxu0 %v4284
      %v4624 = vpop.f32.mrf.mxu0
      %v4625 = vadd.f32 0.0, %v4624
      %v4626 = vpop.f32.mrf.mxu0
      %4627 = vdwg.mxu0
      %4628 = vmatpush.bf16.msra.mxu0 %v4547
      %4629 = vmatpush.bf16.msra.mxu0 %v4543
      %4630 = vmatpush.bf16.msra.mxu0 %v4539
      %4631 = vmatpush.bf16.msra.mxu0 %v4535
      %4632 = vmatpush.bf16.msra.mxu0 %v4531
      %4633 = vmatpush.bf16.msra.mxu0 %v4527
      %4634 = vmatpush.bf16.msra.mxu0 %v4523
      %4635 = vmatpush.bf16.msra.mxu0 %v4519
      %4636 = vmatmul.bf16.gmra.mxu0 %v4292
      %v4637 = vpop.f32.mrf.mxu0
      %v4638 = vadd.f32 %v4625, %v4637
      %v4639 = vpop.f32.mrf.mxu0
      %4640 = vdwg.mxu0
      %4641 = vmatpush.bf16.msra.mxu0 %v4516
      %4642 = vmatpush.bf16.msra.mxu0 %v4512
      %4643 = vmatpush.bf16.msra.mxu0 %v4508
      %4644 = vmatpush.bf16.msra.mxu0 %v4504
      %4645 = vmatpush.bf16.msra.mxu0 %v4500
      %4646 = vmatpush.bf16.msra.mxu0 %v4496
      %4647 = vmatpush.bf16.msra.mxu0 %v4492
      %4648 = vmatpush.bf16.msra.mxu0 %v4488
      %4649 = vmatmul.bf16.gmra.mxu0 %v4284
      %v4650 = vpop.f32.mrf.mxu0
      %v4651 = vadd.f32 0.0, %v4650
      %v4652 = vpop.f32.mrf.mxu0
      %4653 = vdwg.mxu0
      %4654 = vmatpush.bf16.msra.mxu0 %v4548
      %4655 = vmatpush.bf16.msra.mxu0 %v4544
      %4656 = vmatpush.bf16.msra.mxu0 %v4540
      %4657 = vmatpush.bf16.msra.mxu0 %v4536
      %4658 = vmatpush.bf16.msra.mxu0 %v4532
      %4659 = vmatpush.bf16.msra.mxu0 %v4528
      %4660 = vmatpush.bf16.msra.mxu0 %v4524
      %4661 = vmatpush.bf16.msra.mxu0 %v4520
      %4662 = vmatmul.bf16.gmra.mxu0 %v4292
      %v4663 = vpop.f32.mrf.mxu0
      %v4664 = vadd.f32 %v4651, %v4663
      %v4665 = vpop.f32.mrf.mxu0
      %4666 = vdwg.mxu0
      %4667 = vmatpush.bf16.msra.mxu0 %v4517
      %4668 = vmatpush.bf16.msra.mxu0 %v4513
      %4669 = vmatpush.bf16.msra.mxu0 %v4509
      %4670 = vmatpush.bf16.msra.mxu0 %v4505
      %4671 = vmatpush.bf16.msra.mxu0 %v4501
      %4672 = vmatpush.bf16.msra.mxu0 %v4497
      %4673 = vmatpush.bf16.msra.mxu0 %v4493
      %4674 = vmatpush.bf16.msra.mxu0 %v4489
      %4675 = vmatmul.bf16.gmra.mxu0 %v4284
      %v4676 = vpop.f32.mrf.mxu0
      %v4677 = vadd.f32 0.0, %v4676
      %v4678 = vpop.f32.mrf.mxu0
      %4679 = vdwg.mxu0
      %4680 = vmatpush.bf16.msra.mxu0 %v4549
      %4681 = vmatpush.bf16.msra.mxu0 %v4545
      %4682 = vmatpush.bf16.msra.mxu0 %v4541
      %4683 = vmatpush.bf16.msra.mxu0 %v4537
      %4684 = vmatpush.bf16.msra.mxu0 %v4533
      %4685 = vmatpush.bf16.msra.mxu0 %v4529
      %4686 = vmatpush.bf16.msra.mxu0 %v4525
      %4687 = vmatpush.bf16.msra.mxu0 %v4521
      %4688 = vmatmul.bf16.gmra.mxu0 %v4292
      %v4689 = vpop.f32.mrf.mxu0
      %v4690 = vadd.f32 %v4677, %v4689
      %v4691 = vpop.f32.mrf.mxu0
      %4692 = vdwg.mxu0
      %4693 = vmatpush.bf16.msra.mxu0 %v4518
      %4694 = vmatpush.bf16.msra.mxu0 %v4514
      %4695 = vmatpush.bf16.msra.mxu0 %v4510
      %4696 = vmatpush.bf16.msra.mxu0 %v4506
      %4697 = vmatpush.bf16.msra.mxu0 %v4502
      %4698 = vmatpush.bf16.msra.mxu0 %v4498
      %4699 = vmatpush.bf16.msra.mxu0 %v4494
      %4700 = vmatpush.bf16.msra.mxu0 %v4490
      %4701 = vmatmul.bf16.gmra.mxu0 %v4284
      %v4702 = vpop.f32.mrf.mxu0
      %v4703 = vadd.f32 0.0, %v4702
      %v4704 = vpop.f32.mrf.mxu0
      %4705 = vdwg.mxu0
      %4706 = vmatpush.bf16.msra.mxu0 %v4550
      %4707 = vmatpush.bf16.msra.mxu0 %v4546
      %4708 = vmatpush.bf16.msra.mxu0 %v4542
      %4709 = vmatpush.bf16.msra.mxu0 %v4538
      %4710 = vmatpush.bf16.msra.mxu0 %v4534
      %4711 = vmatpush.bf16.msra.mxu0 %v4530
      %4712 = vmatpush.bf16.msra.mxu0 %v4526
      %4713 = vmatpush.bf16.msra.mxu0 %v4522
      %4714 = vmatmul.bf16.gmra.mxu0 %v4292
      %v4715 = vpop.f32.mrf.mxu0
      %v4716 = vadd.f32 %v4703, %v4715
      %v4717 = vpop.f32.mrf.mxu0
      %4718 = vdwg.mxu0
      %v4719 = vadd.f32 %v4202, %v4638
      %v4720 = vadd.f32 %v4203, %v4664
      %v4721 = vadd.f32 %v4204, %v4690
      %v4722 = vadd.f32 %v4205, %v4716
      %v4723 = vld [vmem:[%s2] sm:$0xf]
      %v4725 = vperm.slane %v4723, 0
      %v4726 = vperm.slane %v4723, 1
      %v4727 = vperm.slane %v4723, 2
      %v4728 = vperm.slane %v4723, 3
      %v4733 = vadd.f32 %v4719, %v4725
      %v4734 = vadd.f32 %v4720, %v4726
      %v4735 = vadd.f32 %v4721, %v4727
      %v4736 = vadd.f32 %v4722, %v4728
      %v4737 = vmax.f32 %v4733, 0.0
      %v4738 = vmax.f32 %v4734, 0.0
      %v4739 = vmax.f32 %v4735, 0.0
      %v4740 = vmax.f32 %v4736, 0.0
      %v4741 = vpack.c.bf16 %v4738, %v4737
      %v4742 = vpack.c.bf16 %v4740, %v4739
      %v4745 = vrot.slane %v4741, 3
      %v4746 = vrot.slane %v4742, 6
      %v4747 = vrot.slane %v4742, 1
      %vm4748 = vcmask 1040384
      %v4751 = vsel %vm4748, %v4741, %v4745
      %vm4752 = vcmask 1042434
      %v4755 = vsel %vm4752, %v4746, %v4747
      %vm4756 = vcmask 1041408
      %v4757 = vsel %vm4756, %v4751, %v4755
      %4759 = vst [vmem:[%s168] sm:$0xf] %v4757
      %p4760 = scmp.lt.s32.totalorder %s14, 1
      %s4761 = scalar_select %p4760, %s14, 1
      %s4762 = smul.addr %s4761, 4
      %s4763 = scalar_lea.vmem %s3, %s4762
      // Predicated region
      $region33: #{resnet6_forward.12} parent=31 // pred_check
        %p4764 = pneg %p100
      $region34: #{resnet6_forward.12} parent=31 // pred_check_branch
        %4766 = sbr.rel (%p4764) target = $region36
      $region35: #{resnet6_forward.12} parent=31 // pred_region
        _
      $region36: #{resnet6_forward.12} parent=31 // pred_fallthru
        _
    $region32: #{resnet6_forward.12} parent=5 // pred_fallthru
      _
    %p4767 = scmp.le.s32.totalorder 2, %s9
    // Predicated region
    $region37: #{resnet6_forward.12} parent=5 // pred_check
      %p4768 = pneg %p4767
    $region38: #{resnet6_forward.12} parent=5 // pred_check_branch
      %4770 = sbr.rel (%p4768) target = $region40
    $region39: #{resnet6_forward.12} parent=5 // pred_region
      %s4771 = ssub.s32 %s9, 2
      // Predicated region
      $region41: #{resnet6_forward.12} parent=39 // pred_check
        %p4772 = pneg %p106
      $region42: #{resnet6_forward.12} parent=39 // pred_check_branch
        %4774 = sbr.rel (%p4772) target = $region44
      $region43: #{resnet6_forward.12} parent=39 // pred_region
        %p4775 = scmp.lt.s32.totalorder %s15, 1
        %s4776 = scalar_select %p4775, %s15, 1
        %s4777 = smul.addr %s4776, 4
        %s4778 = scalar_lea.vmem %s3, %s4777
      $region44: #{resnet6_forward.12} parent=39 // pred_fallthru
        _
    $region40: #{resnet6_forward.12} parent=5 // pred_fallthru
      _
  $region6: #{resnet6_forward.12} parent=0 // loop_footer
    %s13 = sadd.s32 1, %s9
  $region7: #{resnet6_forward.12} parent=0 // loop_footer_branch
    %8 = sbr.rel target = $region3
  $region8: #{resnet6_forward.12} parent=0 // loop_exit
    _

</llo_original>
